<compile_context>
chip_gen: v5e
topology: v5e:2x2
jax: 0.10.0
libtpu: 0.0.40
codegen_flags: <defaults>
</compile_context>

<pallas_src>
import functools

import jax
import jax.numpy as jnp
from jax.experimental import pallas as pl
from jax.experimental.pallas import tpu as pltpu

N_VAE_DIS = 16


# ---------------------------------------------------------------------------
# Core Pallas kernels: tiled matmul (bf16 operands, f32 accumulate) + bias +
# optional ReLU epilogue.  Drives every conv / sub-pixel deconv layer.
# ---------------------------------------------------------------------------
def _mm_bias_act_kernel(x_ref, w_ref, b_ref, o_ref, *, act):
    y = jnp.dot(x_ref[...], w_ref[...], preferred_element_type=jnp.float32)
    y = y + b_ref[...]
    if act == "relu":
        y = jnp.maximum(y, 0.0)
    o_ref[...] = y.astype(o_ref.dtype)


def _mm_bias_act_t_kernel(x_ref, w_ref, b_ref, o_ref, *, act):
    # Same as above, but the (tile_m, N) result is transposed (XLU slot, cheap)
    # before the store so the output lane dim is tile_m (dense) instead of a
    # narrow, masked N.  Used for the final decoder layer (N = 12).
    y = jnp.dot(x_ref[...], w_ref[...], preferred_element_type=jnp.float32)
    y = y + b_ref[...]
    if act == "relu":
        y = jnp.maximum(y, 0.0)
    o_ref[...] = y.T.astype(o_ref.dtype)


def _pick_tile_m(m, cap=1024):
    if m <= cap:
        return m
    for t in (1024, 512, 256, 128, 64, 32, 16):
        if m % t == 0:
            return t
    return m


def matmul_bias_act(x_bf16, w_bf16, b_row_f32, act="none",
                    out_dtype=jnp.float32):
    """act(x @ w + b); x:(M,K) bf16, w:(K,N) bf16, b:(1,N) f32 -> (M,N)."""
    M, K = x_bf16.shape
    N = w_bf16.shape[1]
    tile_m = _pick_tile_m(M)            # every layer's M divides its tile
    return pl.pallas_call(
        functools.partial(_mm_bias_act_kernel, act=act),
        out_shape=jax.ShapeDtypeStruct((M, N), out_dtype),
        grid=(M // tile_m,),
        in_specs=[
            pl.BlockSpec((tile_m, K), lambda i: (i, 0)),
            pl.BlockSpec((K, N), lambda i: (0, 0)),
            pl.BlockSpec((1, N), lambda i: (0, 0)),
        ],
        out_specs=pl.BlockSpec((tile_m, N), lambda i: (i, 0)),
        compiler_params=pltpu.CompilerParams(
            dimension_semantics=("parallel",)),
    )(x_bf16, w_bf16, b_row_f32)


def matmul_bias_act_t(x_bf16, w_bf16, b_row_f32, act="none"):
    """act(x @ w + b) stored transposed: (N, M) f32 with M on lanes."""
    M, K = x_bf16.shape
    N = w_bf16.shape[1]
    tile_m = _pick_tile_m(M)
    return pl.pallas_call(
        functools.partial(_mm_bias_act_t_kernel, act=act),
        out_shape=jax.ShapeDtypeStruct((N, M), jnp.float32),
        grid=(M // tile_m,),
        in_specs=[
            pl.BlockSpec((tile_m, K), lambda i: (i, 0)),
            pl.BlockSpec((K, N), lambda i: (0, 0)),
            pl.BlockSpec((1, N), lambda i: (0, 0)),
        ],
        out_specs=pl.BlockSpec((N, tile_m), lambda i: (0, i)),
        compiler_params=pltpu.CompilerParams(
            dimension_semantics=("parallel",)),
    )(x_bf16, w_bf16, b_row_f32)


# ---------------------------------------------------------------------------
# im2col (plain-JAX glue, bf16) + conv / sub-pixel deconv wrappers.
# ---------------------------------------------------------------------------
def _im2col(x, k, stride, pad):
    n, h, w, c = x.shape
    xp = jnp.pad(x, ((0, 0), (pad, pad), (pad, pad), (0, 0))) if pad else x
    ho = (h + 2 * pad - k) // stride + 1
    wo = (w + 2 * pad - k) // stride + 1
    patches = []
    for di in range(k):
        for dj in range(k):
            patches.append(
                xp[:, di:di + (ho - 1) * stride + 1:stride,
                      dj:dj + (wo - 1) * stride + 1:stride, :])
    cols = jnp.stack(patches, axis=3)                 # (n, ho, wo, k*k, c)
    return cols.reshape(n * ho * wo, k * k * c), ho, wo


def conv2d(x_nhwc, w_mat, b_row, k, stride, pad, act, out_dtype=jnp.float32):
    n = x_nhwc.shape[0]
    cols, ho, wo = _im2col(x_nhwc.astype(jnp.bfloat16), k, stride, pad)
    y = matmul_bias_act(cols, w_mat, b_row, act=act, out_dtype=out_dtype)
    return y.reshape(n, ho, wo, -1)


def conv_transpose2d_s2(x_nhwc, w_mat, b_row, cout, act,
                        out_dtype=jnp.float32):
    """ConvTranspose2d(k=4, stride=2, pad=1) via sub-pixel decomposition.

    One 3x3 stride-1 conv on the (un-dilated) padded input produces all four
    stride phases (N = 4*Cout); a depth-to-space interleave restores the 2x
    upsampled map.  ReLU commutes with the interleave, so it stays fused in
    the matmul epilogue.
    """
    n, h, w, _ = x_nhwc.shape
    cols, _, _ = _im2col(x_nhwc.astype(jnp.bfloat16), 3, 1, 1)  # (n*h*w, 9*cin)
    y = matmul_bias_act(cols, w_mat, b_row, act=act,
                        out_dtype=out_dtype)                    # (n*h*w, 4*cout)
    y = y.reshape(n, h, w, 2, 2, cout)
    return jnp.transpose(y, (0, 1, 3, 2, 4, 5)).reshape(n, 2 * h, 2 * w, cout)


def conv_transpose2d_s2_final_nchw(x_nhwc, w_mat, b_row, cout):
    """Last decoder layer: same sub-pixel deconv, but computed with the
    transposed-store kernel (lane-dense output) and assembled straight into
    NCHW.  No activation (matches the module)."""
    n, h, w, _ = x_nhwc.shape
    cols, _, _ = _im2col(x_nhwc.astype(jnp.bfloat16), 3, 1, 1)
    y = matmul_bias_act_t(cols, w_mat, b_row, act="none")       # (4*cout, n*h*w)
    y = y.reshape(2, 2, cout, n, h, w)                          # (rh,rw,co,n,p,q)
    y = jnp.transpose(y, (3, 2, 4, 0, 5, 1))                    # (n,co,p,rh,q,rw)
    return y.reshape(n, cout, 2 * h, 2 * w)                     # NCHW


# ---------------------------------------------------------------------------
# Fused latent kernel: e5-conv(=Linear 1024->256)+ReLU -> Linear(256,32) ->
# reparameterize -> Linear(16,256)+ReLU -> ConvTranspose(256,64,4) on a 1x1
# map (=Linear 256->1024)+ReLU -> classifier head (Linear/BN/LeakyReLU x2,
# Linear, Sigmoid).  BatchNorm1d uses batch statistics (training mode); the
# whole batch lives in one un-gridded block so the stats are exact.
# ---------------------------------------------------------------------------
def _latent_kernel(h4_ref, eps_ref,
                   w5_ref, b5_ref,
                   wmu_ref, bmu_ref, wlv_ref, blv_ref,
                   wdfc_ref, bdfc_ref,
                   wd1_ref, bd1_ref,
                   c1w_ref, c1b_ref, g1_ref, be1_ref,
                   c2w_ref, c2b_ref, g2_ref, be2_ref,
                   c3w_ref, c3b_ref,
                   mu_ref, logvar_ref, d1_ref, c_ref):
    eps_bn = 1e-5
    # encoder tail
    h5 = jnp.dot(h4_ref[...], w5_ref[...],
                 preferred_element_type=jnp.float32) + b5_ref[...]
    h5 = jnp.maximum(h5, 0.0)
    mu = jnp.dot(h5, wmu_ref[...],
                 preferred_element_type=jnp.float32) + bmu_ref[...]
    logvar = jnp.dot(h5, wlv_ref[...],
                     preferred_element_type=jnp.float32) + blv_ref[...]
    mu_ref[...] = mu
    logvar_ref[...] = logvar
    # reparameterize
    z = mu + eps_ref[...] * jnp.exp(0.5 * logvar)
    # decoder head
    d = jnp.dot(z, wdfc_ref[...],
                preferred_element_type=jnp.float32) + bdfc_ref[...]
    d = jnp.maximum(d, 0.0)
    d1 = jnp.dot(d, wd1_ref[...],
                 preferred_element_type=jnp.float32) + bd1_ref[...]
    d1_ref[...] = jnp.maximum(d1, 0.0)
    # classifier head on z[:, :1]; the Linear(1,32) is lifted to a (16,32)
    # matrix whose rows 1..15 are zero -> no in-kernel lane slicing needed.
    h = jnp.dot(z, c1w_ref[...],
                preferred_element_type=jnp.float32) + c1b_ref[...]
    mean = jnp.mean(h, axis=0, keepdims=True)
    var = jnp.mean((h - mean) ** 2, axis=0, keepdims=True)
    h = (h - mean) * jax.lax.rsqrt(var + eps_bn) * g1_ref[...] + be1_ref[...]
    h = jnp.where(h >= 0, h, 0.2 * h)
    h = jnp.dot(h, c2w_ref[...],
                preferred_element_type=jnp.float32) + c2b_ref[...]
    mean = jnp.mean(h, axis=0, keepdims=True)
    var = jnp.mean((h - mean) ** 2, axis=0, keepdims=True)
    h = (h - mean) * jax.lax.rsqrt(var + eps_bn) * g2_ref[...] + be2_ref[...]
    h = jnp.where(h >= 0, h, 0.2 * h)
    h = jnp.dot(h, c3w_ref[...],
                preferred_element_type=jnp.float32) + c3b_ref[...]
    c_ref[...] = jax.nn.sigmoid(h)


def latent_forward(h4, eps, p):
    B = h4.shape[0]
    return pl.pallas_call(
        _latent_kernel,
        out_shape=(
            jax.ShapeDtypeStruct((B, N_VAE_DIS), jnp.float32),   # mu
            jax.ShapeDtypeStruct((B, N_VAE_DIS), jnp.float32),   # logvar
            jax.ShapeDtypeStruct((B, 1024), jnp.float32),        # d1 (B,4,4,64)
            jax.ShapeDtypeStruct((B, 1), jnp.float32),           # classifier
        ),
    )(h4, eps,
      p["e5_w"], p["e5_b"],
      p["efc_wmu"], p["efc_bmu"], p["efc_wlv"], p["efc_blv"],
      p["dfc_w"], p["dfc_b"],
      p["d1_w"], p["d1_b"],
      p["c1_w"], p["c1_b"], p["bn1_g"], p["bn1_b"],
      p["c2_w"], p["c2_b"], p["bn2_g"], p["bn2_b"],
      p["c3_w"], p["c3_b"])


# ---------------------------------------------------------------------------
# Parameter init (PyTorch layouts) + one-time prep into kernel-ready layouts.
# ---------------------------------------------------------------------------
def init_params(key):
    def w(k, shape, scale=0.05):
        return scale * jax.random.normal(k, shape, dtype=jnp.float32)

    keys = iter(jax.random.split(key, 32))
    p = {}
    enc = [(32, 3), (32, 32), (64, 32), (64, 64), (256, 64)]
    for i, (co, ci) in enumerate(enc, 1):
        p[f"e{i}_w"] = w(next(keys), (co, ci, 4, 4))
        p[f"e{i}_b"] = w(next(keys), (co,))
    p["efc_w"] = w(next(keys), (2 * N_VAE_DIS, 256))   # Linear(256, 32)
    p["efc_b"] = w(next(keys), (2 * N_VAE_DIS,))
    p["dfc_w"] = w(next(keys), (256, N_VAE_DIS))       # Linear(16, 256)
    p["dfc_b"] = w(next(keys), (256,))
    dec = [(256, 64), (64, 64), (64, 32), (32, 32), (32, 3)]
    for i, (ci, co) in enumerate(dec, 1):
        p[f"d{i}_w"] = w(next(keys), (ci, co, 4, 4))
        p[f"d{i}_b"] = w(next(keys), (co,))
    p["c1_w"] = w(next(keys), (32, 1)); p["c1_b"] = w(next(keys), (32,))
    p["bn1_g"] = jnp.ones((32,), jnp.float32); p["bn1_b"] = jnp.zeros((32,), jnp.float32)
    p["c2_w"] = w(next(keys), (32, 32)); p["c2_b"] = w(next(keys), (32,))
    p["bn2_g"] = jnp.ones((32,), jnp.float32); p["bn2_b"] = jnp.zeros((32,), jnp.float32)
    p["c3_w"] = w(next(keys), (1, 32)); p["c3_b"] = w(next(keys), (1,))
    return p


def _conv_weight_to_mat(w_oikk):
    co, ci, k, _ = w_oikk.shape
    return jnp.transpose(w_oikk, (2, 3, 1, 0)).reshape(k * k * ci, co)


def _subpixel_deconv_weight(w_iokk, b):
    """(Cin,Cout,4,4) stride-2 pad-1 deconv -> (9*Cin, 4*Cout) phase matrix.

    out[2p+rh, 2q+rw, co] = sum_{th,tw,ci} xp[p+th, q+tw, ci] * W[(th,tw,ci),
    (rh,rw,co)] where xp is the input padded by 1 and W picks kernel tap
    (kh,kw) = (3+rh-2*th, 3+rw-2*tw) when in range (zero otherwise).
    """
    cin, cout, k, _ = w_iokk.shape
    taps = []
    for th in range(3):
        for tw in range(3):
            cols = []
            for rh in range(2):
                for rw in range(2):
                    kh = 3 + rh - 2 * th
                    kw = 3 + rw - 2 * tw
                    if 0 <= kh < k and 0 <= kw < k:
                        cols.append(w_iokk[:, :, kh, kw])
                    else:
                        cols.append(jnp.zeros((cin, cout), w_iokk.dtype))
            taps.append(jnp.concatenate(cols, axis=1))           # (cin, 4*cout)
    w_mat = jnp.concatenate(taps, axis=0)                        # (9*cin, 4*cout)
    b_row = jnp.tile(b, 4).reshape(1, -1)                        # bias per (rh,rw,co)
    return w_mat, b_row


def prepare_params(p):
    q = {}
    # encoder convs e1-e4 -> (16*Cin, Cout) bf16 matmul weights
    for i in range(1, 5):
        q[f"e{i}_w"] = _conv_weight_to_mat(p[f"e{i}_w"]).astype(jnp.bfloat16)
        q[f"e{i}_b"] = p[f"e{i}_b"].reshape(1, -1).astype(jnp.float32)
    # e5: Conv2d(64,256,4,stride=1,pad=0) on a 4x4 map == Linear(1024,256)
    q["e5_w"] = _conv_weight_to_mat(p["e5_w"])                   # (1024, 256)
    q["e5_b"] = p["e5_b"].reshape(1, -1)
    # encoder fc, pre-split into mu / logvar halves
    q["efc_wmu"] = p["efc_w"][:N_VAE_DIS].T
    q["efc_wlv"] = p["efc_w"][N_VAE_DIS:].T
    q["efc_bmu"] = p["efc_b"][:N_VAE_DIS].reshape(1, -1)
    q["efc_blv"] = p["efc_b"][N_VAE_DIS:].reshape(1, -1)
    # decoder fc
    q["dfc_w"] = p["dfc_w"].T
    q["dfc_b"] = p["dfc_b"].reshape(1, -1)
    # d1: ConvTranspose2d(256,64,4) on a 1x1 map == Linear(256, 4*4*64)
    q["d1_w"] = jnp.transpose(p["d1_w"], (0, 2, 3, 1)).reshape(256, 1024)
    q["d1_b"] = jnp.tile(p["d1_b"], 16).reshape(1, -1)
    # d2-d5: stride-2 4x4 deconvs as sub-pixel 4-phase 3x3 stride-1 convs
    for i in range(2, 6):
        w_mat, b_row = _subpixel_deconv_weight(p[f"d{i}_w"], p[f"d{i}_b"])
        q[f"d{i}_w"] = w_mat.astype(jnp.bfloat16)
        q[f"d{i}_b"] = b_row.astype(jnp.float32)
    # classifier: lift Linear(1,32) to (16,32) acting on z (only row 0 non-zero)
    q["c1_w"] = jnp.zeros((N_VAE_DIS, 32), jnp.float32).at[0].set(p["c1_w"][:, 0])
    q["c1_b"] = p["c1_b"].reshape(1, -1)
    q["bn1_g"] = p["bn1_g"].reshape(1, -1); q["bn1_b"] = p["bn1_b"].reshape(1, -1)
    q["c2_w"] = p["c2_w"].T
    q["c2_b"] = p["c2_b"].reshape(1, -1)
    q["bn2_g"] = p["bn2_g"].reshape(1, -1); q["bn2_b"] = p["bn2_b"].reshape(1, -1)
    q["c3_w"] = p["c3_w"].T
    q["c3_b"] = p["c3_b"].reshape(1, -1)
    return q


# ---------------------------------------------------------------------------
# Full forward pass (mirrors suGuidedVAE.forward)
# ---------------------------------------------------------------------------
def forward(params, x_nchw, eps_key):
    p = params
    bf16 = jnp.bfloat16
    x = jnp.transpose(x_nchw, (0, 2, 3, 1))                          # NCHW -> NHWC
    # --- encoder (stride-2 4x4 convs); mid layers stored bf16 ---
    h = conv2d(x, p["e1_w"], p["e1_b"], 4, 2, 1, "relu", bf16)       # 64 -> 32
    h = conv2d(h, p["e2_w"], p["e2_b"], 4, 2, 1, "relu", bf16)       # 32 -> 16
    h = conv2d(h, p["e3_w"], p["e3_b"], 4, 2, 1, "relu", bf16)       # 16 -> 8
    h = conv2d(h, p["e4_w"], p["e4_b"], 4, 2, 1, "relu", jnp.float32)  # 8 -> 4
    h4 = h.reshape(h.shape[0], -1)                                   # (B, 1024) f32
    # --- fused latent block (e5 + fc + reparam + fc + d1 + classifier) ---
    eps = jax.random.normal(eps_key, (h4.shape[0], N_VAE_DIS), jnp.float32)
    mu, logvar, d1, c = latent_forward(h4, eps, p)
    d = d1.reshape(h4.shape[0], 4, 4, 64)                            # NHWC (B,4,4,64)
    # --- decoder (stride-2 4x4 deconvs, sub-pixel form) ---
    d = conv_transpose2d_s2(d, p["d2_w"], p["d2_b"], 64, "relu", bf16)  # 4  -> 8
    d = conv_transpose2d_s2(d, p["d3_w"], p["d3_b"], 32, "relu", bf16)  # 8  -> 16
    d = conv_transpose2d_s2(d, p["d4_w"], p["d4_b"], 32, "relu", bf16)  # 16 -> 32
    recon = conv_transpose2d_s2_final_nchw(d, p["d5_w"], p["d5_b"], 3)  # 32 -> 64, NCHW
    return recon, mu, logvar, c


if __name__ == "__main__":
    key = jax.random.PRNGKey(0)
    kx, keps = jax.random.split(key)
    params = prepare_params(init_params(jax.random.PRNGKey(42)))
    # encoder geometry (four stride-2 4x4 convs + a 4x4 valid conv) -> 64x64 input
    x = jax.random.normal(kx, (2, 3, 64, 64), dtype=jnp.float32)
    fwd = jax.jit(forward)
    recon, mu, logvar, c = fwd(params, x, keps)
    jax.block_until_ready((recon, mu, logvar, c))
    assert recon.shape == (2, 3, 64, 64)
    assert mu.shape == (2, N_VAE_DIS) and logvar.shape == (2, N_VAE_DIS)
    assert c.shape == (2, 1)
    assert bool(jnp.all(jnp.isfinite(recon))) and bool(jnp.all(jnp.isfinite(c)))
    print("KERNEL_OK")
</pallas_src>

<mosaic_0001>
module attributes {stable_mosaic.version = 11 : i64} {
  func.func @_mm_bias_act_kernel(%arg0: i32, %arg1: memref<1024x48xbf16, #tpu.memory_space<vmem>>, %arg2: memref<48x32xbf16, #tpu.memory_space<vmem>>, %arg3: memref<1x32xf32, #tpu.memory_space<vmem>>, %arg4: memref<1024x32xbf16, #tpu.memory_space<vmem>>) attributes {dimension_semantics = [#tpu.dimension_semantics<parallel>], iteration_bounds = array<i64: 2>, scalar_prefetch = 0 : i64, scratch_operands = 0 : i64, tpu.core_type = #tpu.core_type<tc>, window_params = [{transform_indices = @transform_0, window_bounds = array<i64: 1024, 48>}, {pipeline_mode = #tpu.pipeline_mode<synchronous>, transform_indices = @transform_1, window_bounds = array<i64: 48, 32>}, {pipeline_mode = #tpu.pipeline_mode<synchronous>, transform_indices = @transform_2, window_bounds = array<i64: 1, 32>}, {transform_indices = @transform_3, window_bounds = array<i64: 1024, 32>}]} {
    %c0 = arith.constant 0 : index
    %c0_0 = arith.constant 0 : index
    %0 = vector.load %arg1[%c0, %c0_0] : memref<1024x48xbf16, #tpu.memory_space<vmem>>, vector<1024x48xbf16>
    %c0_1 = arith.constant 0 : index
    %c0_2 = arith.constant 0 : index
    %1 = vector.load %arg2[%c0_1, %c0_2] : memref<48x32xbf16, #tpu.memory_space<vmem>>, vector<48x32xbf16>
    %cst = arith.constant dense<0.000000e+00> : vector<1024x32xf32>
    %2 = tpu.matmul %0, %1, %cst {dimension_numbers = #tpu.dot_dimension_numbers<[1], [0], [0], [1], [0, 0, 1, 1], [], []>} : vector<1024x48xbf16>, vector<48x32xbf16>, vector<1024x32xf32> -> vector<1024x32xf32>
    %c0_3 = arith.constant 0 : index
    %c0_4 = arith.constant 0 : index
    %3 = vector.load %arg3[%c0_3, %c0_4] : memref<1x32xf32, #tpu.memory_space<vmem>>, vector<1x32xf32>
    %4 = vector.broadcast %3 : vector<1x32xf32> to vector<1024x32xf32>
    %5 = arith.addf %2, %4 : vector<1024x32xf32>
    %cst_5 = arith.constant 0.000000e+00 : f32
    %6 = vector.broadcast %cst_5 : f32 to vector<1024x32xf32>
    %7 = arith.maximumf %5, %6 : vector<1024x32xf32>
    %8 = arith.truncf %7 : vector<1024x32xf32> to vector<1024x32xbf16>
    %c0_6 = arith.constant 0 : index
    %c0_7 = arith.constant 0 : index
    %9 = vector.load %arg4[%c0_6, %c0_7] : memref<1024x32xbf16, #tpu.memory_space<vmem>>, vector<1024x32xbf16>
    tpu.vector_store %arg4[%c0_6, %c0_7], %8 {strides = array<i32>} : memref<1024x32xbf16, #tpu.memory_space<vmem>>, vector<1024x32xbf16>,
    return
  }
  func.func @transform_0(%arg0: i32) -> (i32, i32) {
    %c0_i32 = arith.constant 0 : i32
    %c0_i32_0 = arith.constant 0 : i32
    return %arg0, %c0_i32 : i32, i32
  }
  func.func @transform_1(%arg0: i32) -> (i32, i32) {
    %c0_i32 = arith.constant 0 : i32
    %c0_i32_0 = arith.constant 0 : i32
    %c0_i32_1 = arith.constant 0 : i32
    return %c0_i32, %c0_i32_0 : i32, i32
  }
  func.func @transform_2(%arg0: i32) -> (i32, i32) {
    %c0_i32 = arith.constant 0 : i32
    %c0_i32_0 = arith.constant 0 : i32
    %c0_i32_1 = arith.constant 0 : i32
    return %c0_i32, %c0_i32_0 : i32, i32
  }
  func.func @transform_3(%arg0: i32) -> (i32, i32) {
    %c0_i32 = arith.constant 0 : i32
    %c0_i32_0 = arith.constant 0 : i32
    return %arg0, %c0_i32 : i32, i32
  }
}

module attributes {stable_mosaic.version = 11 : i64} {
  func.func @_mm_bias_act_kernel(%arg0: i32, %arg1: memref<512x512xbf16, #tpu.memory_space<vmem>>, %arg2: memref<512x32xbf16, #tpu.memory_space<vmem>>, %arg3: memref<1x32xf32, #tpu.memory_space<vmem>>, %arg4: memref<512x32xbf16, #tpu.memory_space<vmem>>) attributes {dimension_semantics = [#tpu.dimension_semantics<parallel>], iteration_bounds = array<i64: 1>, scalar_prefetch = 0 : i64, scratch_operands = 0 : i64, tpu.core_type = #tpu.core_type<tc>, window_params = [{transform_indices = @transform_0, window_bounds = array<i64: 512, 512>}, {pipeline_mode = #tpu.pipeline_mode<synchronous>, transform_indices = @transform_1, window_bounds = array<i64: 512, 32>}, {pipeline_mode = #tpu.pipeline_mode<synchronous>, transform_indices = @transform_2, window_bounds = array<i64: 1, 32>}, {transform_indices = @transform_3, window_bounds = array<i64: 512, 32>}]} {
    %c0 = arith.constant 0 : index
    %c0_0 = arith.constant 0 : index
    %0 = vector.load %arg1[%c0, %c0_0] : memref<512x512xbf16, #tpu.memory_space<vmem>>, vector<512x512xbf16>
    %c0_1 = arith.constant 0 : index
    %c0_2 = arith.constant 0 : index
    %1 = vector.load %arg2[%c0_1, %c0_2] : memref<512x32xbf16, #tpu.memory_space<vmem>>, vector<512x32xbf16>
    %cst = arith.constant dense<0.000000e+00> : vector<512x32xf32>
    %2 = tpu.matmul %0, %1, %cst {dimension_numbers = #tpu.dot_dimension_numbers<[1], [0], [0], [1], [0, 0, 1, 1], [], []>} : vector<512x512xbf16>, vector<512x32xbf16>, vector<512x32xf32> -> vector<512x32xf32>
    %c0_3 = arith.constant 0 : index
    %c0_4 = arith.constant 0 : index
    %3 = vector.load %arg3[%c0_3, %c0_4] : memref<1x32xf32, #tpu.memory_space<vmem>>, vector<1x32xf32>
    %4 = vector.broadcast %3 : vector<1x32xf32> to vector<512x32xf32>
    %5 = arith.addf %2, %4 : vector<512x32xf32>
    %cst_5 = arith.constant 0.000000e+00 : f32
    %6 = vector.broadcast %cst_5 : f32 to vector<512x32xf32>
    %7 = arith.maximumf %5, %6 : vector<512x32xf32>
    %8 = arith.truncf %7 : vector<512x32xf32> to vector<512x32xbf16>
    %c0_6 = arith.constant 0 : index
    %c0_7 = arith.constant 0 : index
    %9 = vector.load %arg4[%c0_6, %c0_7] : memref<512x32xbf16, #tpu.memory_space<vmem>>, vector<512x32xbf16>
    tpu.vector_store %arg4[%c0_6, %c0_7], %8 {strides = array<i32>} : memref<512x32xbf16, #tpu.memory_space<vmem>>, vector<512x32xbf16>,
    return
  }
  func.func @transform_0(%arg0: i32) -> (i32, i32) {
    %c0_i32 = arith.constant 0 : i32
    %c0_i32_0 = arith.constant 0 : i32
    return %arg0, %c0_i32 : i32, i32
  }
  func.func @transform_1(%arg0: i32) -> (i32, i32) {
    %c0_i32 = arith.constant 0 : i32
    %c0_i32_0 = arith.constant 0 : i32
    %c0_i32_1 = arith.constant 0 : i32
    return %c0_i32, %c0_i32_0 : i32, i32
  }
  func.func @transform_2(%arg0: i32) -> (i32, i32) {
    %c0_i32 = arith.constant 0 : i32
    %c0_i32_0 = arith.constant 0 : i32
    %c0_i32_1 = arith.constant 0 : i32
    return %c0_i32, %c0_i32_0 : i32, i32
  }
  func.func @transform_3(%arg0: i32) -> (i32, i32) {
    %c0_i32 = arith.constant 0 : i32
    %c0_i32_0 = arith.constant 0 : i32
    return %arg0, %c0_i32 : i32, i32
  }
}

module attributes {stable_mosaic.version = 11 : i64} {
  func.func @_mm_bias_act_kernel(%arg0: i32, %arg1: memref<128x512xbf16, #tpu.memory_space<vmem>>, %arg2: memref<512x64xbf16, #tpu.memory_space<vmem>>, %arg3: memref<1x64xf32, #tpu.memory_space<vmem>>, %arg4: memref<128x64xbf16, #tpu.memory_space<vmem>>) attributes {dimension_semantics = [#tpu.dimension_semantics<parallel>], iteration_bounds = array<i64: 1>, scalar_prefetch = 0 : i64, scratch_operands = 0 : i64, tpu.core_type = #tpu.core_type<tc>, window_params = [{transform_indices = @transform_0, window_bounds = array<i64: 128, 512>}, {pipeline_mode = #tpu.pipeline_mode<synchronous>, transform_indices = @transform_1, window_bounds = array<i64: 512, 64>}, {pipeline_mode = #tpu.pipeline_mode<synchronous>, transform_indices = @transform_2, window_bounds = array<i64: 1, 64>}, {transform_indices = @transform_3, window_bounds = array<i64: 128, 64>}]} {
    %c0 = arith.constant 0 : index
    %c0_0 = arith.constant 0 : index
    %0 = vector.load %arg1[%c0, %c0_0] : memref<128x512xbf16, #tpu.memory_space<vmem>>, vector<128x512xbf16>
    %c0_1 = arith.constant 0 : index
    %c0_2 = arith.constant 0 : index
    %1 = vector.load %arg2[%c0_1, %c0_2] : memref<512x64xbf16, #tpu.memory_space<vmem>>, vector<512x64xbf16>
    %cst = arith.constant dense<0.000000e+00> : vector<128x64xf32>
    %2 = tpu.matmul %0, %1, %cst {dimension_numbers = #tpu.dot_dimension_numbers<[1], [0], [0], [1], [0, 0, 1, 1], [], []>} : vector<128x512xbf16>, vector<512x64xbf16>, vector<128x64xf32> -> vector<128x64xf32>
    %c0_3 = arith.constant 0 : index
    %c0_4 = arith.constant 0 : index
    %3 = vector.load %arg3[%c0_3, %c0_4] : memref<1x64xf32, #tpu.memory_space<vmem>>, vector<1x64xf32>
    %4 = vector.broadcast %3 : vector<1x64xf32> to vector<128x64xf32>
    %5 = arith.addf %2, %4 : vector<128x64xf32>
    %cst_5 = arith.constant 0.000000e+00 : f32
    %6 = vector.broadcast %cst_5 : f32 to vector<128x64xf32>
    %7 = arith.maximumf %5, %6 : vector<128x64xf32>
    %8 = arith.truncf %7 : vector<128x64xf32> to vector<128x64xbf16>
    %c0_6 = arith.constant 0 : index
    %c0_7 = arith.constant 0 : index
    %9 = vector.load %arg4[%c0_6, %c0_7] : memref<128x64xbf16, #tpu.memory_space<vmem>>, vector<128x64xbf16>
    tpu.vector_store %arg4[%c0_6, %c0_7], %8 {strides = array<i32>} : memref<128x64xbf16, #tpu.memory_space<vmem>>, vector<128x64xbf16>,
    return
  }
  func.func @transform_0(%arg0: i32) -> (i32, i32) {
    %c0_i32 = arith.constant 0 : i32
    %c0_i32_0 = arith.constant 0 : i32
    return %arg0, %c0_i32 : i32, i32
  }
  func.func @transform_1(%arg0: i32) -> (i32, i32) {
    %c0_i32 = arith.constant 0 : i32
    %c0_i32_0 = arith.constant 0 : i32
    %c0_i32_1 = arith.constant 0 : i32
    return %c0_i32, %c0_i32_0 : i32, i32
  }
  func.func @transform_2(%arg0: i32) -> (i32, i32) {
    %c0_i32 = arith.constant 0 : i32
    %c0_i32_0 = arith.constant 0 : i32
    %c0_i32_1 = arith.constant 0 : i32
    return %c0_i32, %c0_i32_0 : i32, i32
  }
  func.func @transform_3(%arg0: i32) -> (i32, i32) {
    %c0_i32 = arith.constant 0 : i32
    %c0_i32_0 = arith.constant 0 : i32
    return %arg0, %c0_i32 : i32, i32
  }
}

module attributes {stable_mosaic.version = 11 : i64} {
  func.func @_mm_bias_act_kernel(%arg0: i32, %arg1: memref<32x1024xbf16, #tpu.memory_space<vmem>>, %arg2: memref<1024x64xbf16, #tpu.memory_space<vmem>>, %arg3: memref<1x64xf32, #tpu.memory_space<vmem>>, %arg4: memref<32x64xf32, #tpu.memory_space<vmem>>) attributes {dimension_semantics = [#tpu.dimension_semantics<parallel>], iteration_bounds = array<i64: 1>, scalar_prefetch = 0 : i64, scratch_operands = 0 : i64, tpu.core_type = #tpu.core_type<tc>, window_params = [{transform_indices = @transform_0, window_bounds = array<i64: 32, 1024>}, {pipeline_mode = #tpu.pipeline_mode<synchronous>, transform_indices = @transform_1, window_bounds = array<i64: 1024, 64>}, {pipeline_mode = #tpu.pipeline_mode<synchronous>, transform_indices = @transform_2, window_bounds = array<i64: 1, 64>}, {transform_indices = @transform_3, window_bounds = array<i64: 32, 64>}]} {
    %c0 = arith.constant 0 : index
    %c0_0 = arith.constant 0 : index
    %0 = vector.load %arg1[%c0, %c0_0] : memref<32x1024xbf16, #tpu.memory_space<vmem>>, vector<32x1024xbf16>
    %c0_1 = arith.constant 0 : index
    %c0_2 = arith.constant 0 : index
    %1 = vector.load %arg2[%c0_1, %c0_2] : memref<1024x64xbf16, #tpu.memory_space<vmem>>, vector<1024x64xbf16>
    %cst = arith.constant dense<0.000000e+00> : vector<32x64xf32>
    %2 = tpu.matmul %0, %1, %cst {dimension_numbers = #tpu.dot_dimension_numbers<[1], [0], [0], [1], [0, 0, 1, 1], [], []>} : vector<32x1024xbf16>, vector<1024x64xbf16>, vector<32x64xf32> -> vector<32x64xf32>
    %c0_3 = arith.constant 0 : index
    %c0_4 = arith.constant 0 : index
    %3 = vector.load %arg3[%c0_3, %c0_4] : memref<1x64xf32, #tpu.memory_space<vmem>>, vector<1x64xf32>
    %4 = vector.broadcast %3 : vector<1x64xf32> to vector<32x64xf32>
    %5 = arith.addf %2, %4 : vector<32x64xf32>
    %cst_5 = arith.constant 0.000000e+00 : f32
    %6 = vector.broadcast %cst_5 : f32 to vector<32x64xf32>
    %7 = arith.maximumf %5, %6 : vector<32x64xf32>
    %c0_6 = arith.constant 0 : index
    %c0_7 = arith.constant 0 : index
    %8 = vector.load %arg4[%c0_6, %c0_7] : memref<32x64xf32, #tpu.memory_space<vmem>>, vector<32x64xf32>
    tpu.vector_store %arg4[%c0_6, %c0_7], %7 {strides = array<i32>} : memref<32x64xf32, #tpu.memory_space<vmem>>, vector<32x64xf32>,
    return
  }
  func.func @transform_0(%arg0: i32) -> (i32, i32) {
    %c0_i32 = arith.constant 0 : i32
    %c0_i32_0 = arith.constant 0 : i32
    return %arg0, %c0_i32 : i32, i32
  }
  func.func @transform_1(%arg0: i32) -> (i32, i32) {
    %c0_i32 = arith.constant 0 : i32
    %c0_i32_0 = arith.constant 0 : i32
    %c0_i32_1 = arith.constant 0 : i32
    return %c0_i32, %c0_i32_0 : i32, i32
  }
  func.func @transform_2(%arg0: i32) -> (i32, i32) {
    %c0_i32 = arith.constant 0 : i32
    %c0_i32_0 = arith.constant 0 : i32
    %c0_i32_1 = arith.constant 0 : i32
    return %c0_i32, %c0_i32_0 : i32, i32
  }
  func.func @transform_3(%arg0: i32) -> (i32, i32) {
    %c0_i32 = arith.constant 0 : i32
    %c0_i32_0 = arith.constant 0 : i32
    return %arg0, %c0_i32 : i32, i32
  }
}

module attributes {stable_mosaic.version = 11 : i64} {
  func.func @_latent_kernel(%arg0: memref<2x1024xf32, #tpu.memory_space<vmem>>, %arg1: memref<2x16xf32, #tpu.memory_space<vmem>>, %arg2: memref<1024x256xf32, #tpu.memory_space<vmem>>, %arg3: memref<1x256xf32, #tpu.memory_space<vmem>>, %arg4: memref<256x16xf32, #tpu.memory_space<vmem>>, %arg5: memref<1x16xf32, #tpu.memory_space<vmem>>, %arg6: memref<256x16xf32, #tpu.memory_space<vmem>>, %arg7: memref<1x16xf32, #tpu.memory_space<vmem>>, %arg8: memref<16x256xf32, #tpu.memory_space<vmem>>, %arg9: memref<1x256xf32, #tpu.memory_space<vmem>>, %arg10: memref<256x1024xf32, #tpu.memory_space<vmem>>, %arg11: memref<1x1024xf32, #tpu.memory_space<vmem>>, %arg12: memref<16x32xf32, #tpu.memory_space<vmem>>, %arg13: memref<1x32xf32, #tpu.memory_space<vmem>>, %arg14: memref<1x32xf32, #tpu.memory_space<vmem>>, %arg15: memref<1x32xf32, #tpu.memory_space<vmem>>, %arg16: memref<32x32xf32, #tpu.memory_space<vmem>>, %arg17: memref<1x32xf32, #tpu.memory_space<vmem>>, %arg18: memref<1x32xf32, #tpu.memory_space<vmem>>, %arg19: memref<1x32xf32, #tpu.memory_space<vmem>>, %arg20: memref<32x1xf32, #tpu.memory_space<vmem>>, %arg21: memref<1x1xf32, #tpu.memory_space<vmem>>, %arg22: memref<2x16xf32, #tpu.memory_space<vmem>>, %arg23: memref<2x16xf32, #tpu.memory_space<vmem>>, %arg24: memref<2x1024xf32, #tpu.memory_space<vmem>>, %arg25: memref<2x1xf32, #tpu.memory_space<vmem>>) attributes {dimension_semantics = [], scalar_prefetch = 0 : i64, scratch_operands = 0 : i64, tpu.core_type = #tpu.core_type<tc>} {
    %c0 = arith.constant 0 : index
    %c0_0 = arith.constant 0 : index
    %0 = vector.load %arg0[%c0, %c0_0] : memref<2x1024xf32, #tpu.memory_space<vmem>>, vector<2x1024xf32>
    %c0_1 = arith.constant 0 : index
    %c0_2 = arith.constant 0 : index
    %1 = vector.load %arg2[%c0_1, %c0_2] : memref<1024x256xf32, #tpu.memory_space<vmem>>, vector<1024x256xf32>
    %cst = arith.constant dense<0.000000e+00> : vector<2x256xf32>
    %2 = tpu.matmul %0, %1, %cst {dimension_numbers = #tpu.dot_dimension_numbers<[1], [0], [0], [1], [0, 0, 1, 1], [], []>} : vector<2x1024xf32>, vector<1024x256xf32>, vector<2x256xf32> -> vector<2x256xf32>
    %c0_3 = arith.constant 0 : index
    %c0_4 = arith.constant 0 : index
    %3 = vector.load %arg3[%c0_3, %c0_4] : memref<1x256xf32, #tpu.memory_space<vmem>>, vector<1x256xf32>
    %4 = vector.broadcast %3 : vector<1x256xf32> to vector<2x256xf32>
    %5 = arith.addf %2, %4 : vector<2x256xf32>
    %cst_5 = arith.constant 0.000000e+00 : f32
    %6 = vector.broadcast %cst_5 : f32 to vector<2x256xf32>
    %7 = arith.maximumf %5, %6 : vector<2x256xf32>
    %c0_6 = arith.constant 0 : index
    %c0_7 = arith.constant 0 : index
    %8 = vector.load %arg4[%c0_6, %c0_7] : memref<256x16xf32, #tpu.memory_space<vmem>>, vector<256x16xf32>
    %cst_8 = arith.constant dense<0.000000e+00> : vector<2x16xf32>
    %9 = tpu.matmul %7, %8, %cst_8 {dimension_numbers = #tpu.dot_dimension_numbers<[1], [0], [0], [1], [0, 0, 1, 1], [], []>} : vector<2x256xf32>, vector<256x16xf32>, vector<2x16xf32> -> vector<2x16xf32>
    %c0_9 = arith.constant 0 : index
    %c0_10 = arith.constant 0 : index
    %10 = vector.load %arg5[%c0_9, %c0_10] : memref<1x16xf32, #tpu.memory_space<vmem>>, vector<1x16xf32>
    %11 = vector.broadcast %10 : vector<1x16xf32> to vector<2x16xf32>
    %12 = arith.addf %9, %11 : vector<2x16xf32>
    %c0_11 = arith.constant 0 : index
    %c0_12 = arith.constant 0 : index
    %13 = vector.load %arg6[%c0_11, %c0_12] : memref<256x16xf32, #tpu.memory_space<vmem>>, vector<256x16xf32>
    %cst_13 = arith.constant dense<0.000000e+00> : vector<2x16xf32>
    %14 = tpu.matmul %7, %13, %cst_13 {dimension_numbers = #tpu.dot_dimension_numbers<[1], [0], [0], [1], [0, 0, 1, 1], [], []>} : vector<2x256xf32>, vector<256x16xf32>, vector<2x16xf32> -> vector<2x16xf32>
    %c0_14 = arith.constant 0 : index
    %c0_15 = arith.constant 0 : index
    %15 = vector.load %arg7[%c0_14, %c0_15] : memref<1x16xf32, #tpu.memory_space<vmem>>, vector<1x16xf32>
    %16 = vector.broadcast %15 : vector<1x16xf32> to vector<2x16xf32>
    %17 = arith.addf %14, %16 : vector<2x16xf32>
    %c0_16 = arith.constant 0 : index
    %c0_17 = arith.constant 0 : index
    %18 = vector.load %arg22[%c0_16, %c0_17] : memref<2x16xf32, #tpu.memory_space<vmem>>, vector<2x16xf32>
    tpu.vector_store %arg22[%c0_16, %c0_17], %12 {strides = array<i32>} : memref<2x16xf32, #tpu.memory_space<vmem>>, vector<2x16xf32>,
    %c0_18 = arith.constant 0 : index
    %c0_19 = arith.constant 0 : index
    %19 = vector.load %arg23[%c0_18, %c0_19] : memref<2x16xf32, #tpu.memory_space<vmem>>, vector<2x16xf32>
    tpu.vector_store %arg23[%c0_18, %c0_19], %17 {strides = array<i32>} : memref<2x16xf32, #tpu.memory_space<vmem>>, vector<2x16xf32>,
    %c0_20 = arith.constant 0 : index
    %c0_21 = arith.constant 0 : index
    %20 = vector.load %arg1[%c0_20, %c0_21] : memref<2x16xf32, #tpu.memory_space<vmem>>, vector<2x16xf32>
    %cst_22 = arith.constant 5.000000e-01 : f32
    %21 = vector.broadcast %cst_22 : f32 to vector<2x16xf32>
    %22 = arith.mulf %21, %17 : vector<2x16xf32>
    %23 = math.exp %22 : vector<2x16xf32>
    %24 = arith.mulf %20, %23 : vector<2x16xf32>
    %25 = arith.addf %12, %24 : vector<2x16xf32>
    %c0_23 = arith.constant 0 : index
    %c0_24 = arith.constant 0 : index
    %26 = vector.load %arg8[%c0_23, %c0_24] : memref<16x256xf32, #tpu.memory_space<vmem>>, vector<16x256xf32>
    %cst_25 = arith.constant dense<0.000000e+00> : vector<2x256xf32>
    %27 = tpu.matmul %25, %26, %cst_25 {dimension_numbers = #tpu.dot_dimension_numbers<[1], [0], [0], [1], [0, 0, 1, 1], [], []>} : vector<2x16xf32>, vector<16x256xf32>, vector<2x256xf32> -> vector<2x256xf32>
    %c0_26 = arith.constant 0 : index
    %c0_27 = arith.constant 0 : index
    %28 = vector.load %arg9[%c0_26, %c0_27] : memref<1x256xf32, #tpu.memory_space<vmem>>, vector<1x256xf32>
    %29 = vector.broadcast %28 : vector<1x256xf32> to vector<2x256xf32>
    %30 = arith.addf %27, %29 : vector<2x256xf32>
    %cst_28 = arith.constant 0.000000e+00 : f32
    %31 = vector.broadcast %cst_28 : f32 to vector<2x256xf32>
    %32 = arith.maximumf %30, %31 : vector<2x256xf32>
    %c0_29 = arith.constant 0 : index
    %c0_30 = arith.constant 0 : index
    %33 = vector.load %arg10[%c0_29, %c0_30] : memref<256x1024xf32, #tpu.memory_space<vmem>>, vector<256x1024xf32>
    %cst_31 = arith.constant dense<0.000000e+00> : vector<2x1024xf32>
    %34 = tpu.matmul %32, %33, %cst_31 {dimension_numbers = #tpu.dot_dimension_numbers<[1], [0], [0], [1], [0, 0, 1, 1], [], []>} : vector<2x256xf32>, vector<256x1024xf32>, vector<2x1024xf32> -> vector<2x1024xf32>
    %c0_32 = arith.constant 0 : index
    %c0_33 = arith.constant 0 : index
    %35 = vector.load %arg11[%c0_32, %c0_33] : memref<1x1024xf32, #tpu.memory_space<vmem>>, vector<1x1024xf32>
    %36 = vector.broadcast %35 : vector<1x1024xf32> to vector<2x1024xf32>
    %37 = arith.addf %34, %36 : vector<2x1024xf32>
    %cst_34 = arith.constant 0.000000e+00 : f32
    %38 = vector.broadcast %cst_34 : f32 to vector<2x1024xf32>
    %39 = arith.maximumf %37, %38 : vector<2x1024xf32>
    %c0_35 = arith.constant 0 : index
    %c0_36 = arith.constant 0 : index
    %40 = vector.load %arg24[%c0_35, %c0_36] : memref<2x1024xf32, #tpu.memory_space<vmem>>, vector<2x1024xf32>
    tpu.vector_store %arg24[%c0_35, %c0_36], %39 {strides = array<i32>} : memref<2x1024xf32, #tpu.memory_space<vmem>>, vector<2x1024xf32>,
    %c0_37 = arith.constant 0 : index
    %c0_38 = arith.constant 0 : index
    %41 = vector.load %arg12[%c0_37, %c0_38] : memref<16x32xf32, #tpu.memory_space<vmem>>, vector<16x32xf32>
    %cst_39 = arith.constant dense<0.000000e+00> : vector<2x32xf32>
    %42 = tpu.matmul %25, %41, %cst_39 {dimension_numbers = #tpu.dot_dimension_numbers<[1], [0], [0], [1], [0, 0, 1, 1], [], []>} : vector<2x16xf32>, vector<16x32xf32>, vector<2x32xf32> -> vector<2x32xf32>
    %c0_40 = arith.constant 0 : index
    %c0_41 = arith.constant 0 : index
    %43 = vector.load %arg13[%c0_40, %c0_41] : memref<1x32xf32, #tpu.memory_space<vmem>>, vector<1x32xf32>
    %44 = vector.broadcast %43 : vector<1x32xf32> to vector<2x32xf32>
    %45 = arith.addf %42, %44 : vector<2x32xf32>
    %cst_42 = arith.constant dense<0.000000e+00> : vector<32xf32>
    %46 = vector.multi_reduction <add>, %45, %cst_42 [0] : vector<2x32xf32> to vector<32xf32>
    %47 = vector.shape_cast %46 : vector<32xf32> to vector<1x32xf32>
    %cst_43 = arith.constant 2.000000e+00 : f32
    %48 = vector.broadcast %cst_43 : f32 to vector<1x32xf32>
    %49 = arith.divf %47, %48 : vector<1x32xf32>
    %50 = vector.broadcast %49 : vector<1x32xf32> to vector<2x32xf32>
    %51 = arith.subf %45, %50 : vector<2x32xf32>
    %52 = arith.mulf %51, %51 : vector<2x32xf32>
    %cst_44 = arith.constant dense<0.000000e+00> : vector<32xf32>
    %53 = vector.multi_reduction <add>, %52, %cst_44 [0] : vector<2x32xf32> to vector<32xf32>
    %54 = vector.shape_cast %53 : vector<32xf32> to vector<1x32xf32>
    %cst_45 = arith.constant 2.000000e+00 : f32
    %55 = vector.broadcast %cst_45 : f32 to vector<1x32xf32>
    %56 = arith.divf %54, %55 : vector<1x32xf32>
    %57 = vector.broadcast %49 : vector<1x32xf32> to vector<2x32xf32>
    %58 = arith.subf %45, %57 : vector<2x32xf32>
    %cst_46 = arith.constant 9.99999974E-6 : f32
    %59 = vector.broadcast %cst_46 : f32 to vector<1x32xf32>
    %60 = arith.addf %56, %59 : vector<1x32xf32>
    %61 = math.rsqrt %60 : vector<1x32xf32>
    %62 = vector.broadcast %61 : vector<1x32xf32> to vector<2x32xf32>
    %63 = arith.mulf %58, %62 : vector<2x32xf32>
    %c0_47 = arith.constant 0 : index
    %c0_48 = arith.constant 0 : index
    %64 = vector.load %arg14[%c0_47, %c0_48] : memref<1x32xf32, #tpu.memory_space<vmem>>, vector<1x32xf32>
    %65 = vector.broadcast %64 : vector<1x32xf32> to vector<2x32xf32>
    %66 = arith.mulf %63, %65 : vector<2x32xf32>
    %c0_49 = arith.constant 0 : index
    %c0_50 = arith.constant 0 : index
    %67 = vector.load %arg15[%c0_49, %c0_50] : memref<1x32xf32, #tpu.memory_space<vmem>>, vector<1x32xf32>
    %68 = vector.broadcast %67 : vector<1x32xf32> to vector<2x32xf32>
    %69 = arith.addf %66, %68 : vector<2x32xf32>
    %cst_51 = arith.constant 0.000000e+00 : f32
    %70 = vector.broadcast %cst_51 : f32 to vector<2x32xf32>
    %71 = arith.cmpf oge, %69, %70 : vector<2x32xf32>
    %cst_52 = arith.constant 2.000000e-01 : f32
    %72 = vector.broadcast %cst_52 : f32 to vector<2x32xf32>
    %73 = arith.mulf %72, %69 : vector<2x32xf32>
    %74 = arith.select %71, %69, %73 : vector<2x32xi1>, vector<2x32xf32>
    %c0_53 = arith.constant 0 : index
    %c0_54 = arith.constant 0 : index
    %75 = vector.load %arg16[%c0_53, %c0_54] : memref<32x32xf32, #tpu.memory_space<vmem>>, vector<32x32xf32>
    %cst_55 = arith.constant dense<0.000000e+00> : vector<2x32xf32>
    %76 = tpu.matmul %74, %75, %cst_55 {dimension_numbers = #tpu.dot_dimension_numbers<[1], [0], [0], [1], [0, 0, 1, 1], [], []>} : vector<2x32xf32>, vector<32x32xf32>, vector<2x32xf32> -> vector<2x32xf32>
    %c0_56 = arith.constant 0 : index
    %c0_57 = arith.constant 0 : index
    %77 = vector.load %arg17[%c0_56, %c0_57] : memref<1x32xf32, #tpu.memory_space<vmem>>, vector<1x32xf32>
    %78 = vector.broadcast %77 : vector<1x32xf32> to vector<2x32xf32>
    %79 = arith.addf %76, %78 : vector<2x32xf32>
    %cst_58 = arith.constant dense<0.000000e+00> : vector<32xf32>
    %80 = vector.multi_reduction <add>, %79, %cst_58 [0] : vector<2x32xf32> to vector<32xf32>
    %81 = vector.shape_cast %80 : vector<32xf32> to vector<1x32xf32>
    %cst_59 = arith.constant 2.000000e+00 : f32
    %82 = vector.broadcast %cst_59 : f32 to vector<1x32xf32>
    %83 = arith.divf %81, %82 : vector<1x32xf32>
    %84 = vector.broadcast %83 : vector<1x32xf32> to vector<2x32xf32>
    %85 = arith.subf %79, %84 : vector<2x32xf32>
    %86 = arith.mulf %85, %85 : vector<2x32xf32>
    %cst_60 = arith.constant dense<0.000000e+00> : vector<32xf32>
    %87 = vector.multi_reduction <add>, %86, %cst_60 [0] : vector<2x32xf32> to vector<32xf32>
    %88 = vector.shape_cast %87 : vector<32xf32> to vector<1x32xf32>
    %cst_61 = arith.constant 2.000000e+00 : f32
    %89 = vector.broadcast %cst_61 : f32 to vector<1x32xf32>
    %90 = arith.divf %88, %89 : vector<1x32xf32>
    %91 = vector.broadcast %83 : vector<1x32xf32> to vector<2x32xf32>
    %92 = arith.subf %79, %91 : vector<2x32xf32>
    %cst_62 = arith.constant 9.99999974E-6 : f32
    %93 = vector.broadcast %cst_62 : f32 to vector<1x32xf32>
    %94 = arith.addf %90, %93 : vector<1x32xf32>
    %95 = math.rsqrt %94 : vector<1x32xf32>
    %96 = vector.broadcast %95 : vector<1x32xf32> to vector<2x32xf32>
    %97 = arith.mulf %92, %96 : vector<2x32xf32>
    %c0_63 = arith.constant 0 : index
    %c0_64 = arith.constant 0 : index
    %98 = vector.load %arg18[%c0_63, %c0_64] : memref<1x32xf32, #tpu.memory_space<vmem>>, vector<1x32xf32>
    %99 = vector.broadcast %98 : vector<1x32xf32> to vector<2x32xf32>
    %100 = arith.mulf %97, %99 : vector<2x32xf32>
    %c0_65 = arith.constant 0 : index
    %c0_66 = arith.constant 0 : index
    %101 = vector.load %arg19[%c0_65, %c0_66] : memref<1x32xf32, #tpu.memory_space<vmem>>, vector<1x32xf32>
    %102 = vector.broadcast %101 : vector<1x32xf32> to vector<2x32xf32>
    %103 = arith.addf %100, %102 : vector<2x32xf32>
    %cst_67 = arith.constant 0.000000e+00 : f32
    %104 = vector.broadcast %cst_67 : f32 to vector<2x32xf32>
    %105 = arith.cmpf oge, %103, %104 : vector<2x32xf32>
    %cst_68 = arith.constant 2.000000e-01 : f32
    %106 = vector.broadcast %cst_68 : f32 to vector<2x32xf32>
    %107 = arith.mulf %106, %103 : vector<2x32xf32>
    %108 = arith.select %105, %103, %107 : vector<2x32xi1>, vector<2x32xf32>
    %c0_69 = arith.constant 0 : index
    %c0_70 = arith.constant 0 : index
    %109 = vector.load %arg20[%c0_69, %c0_70] : memref<32x1xf32, #tpu.memory_space<vmem>>, vector<32x1xf32>
    %cst_71 = arith.constant dense<0.000000e+00> : vector<2x1xf32>
    %110 = tpu.matmul %108, %109, %cst_71 {dimension_numbers = #tpu.dot_dimension_numbers<[1], [0], [0], [1], [0, 0, 1, 1], [], []>} : vector<2x32xf32>, vector<32x1xf32>, vector<2x1xf32> -> vector<2x1xf32>
    %c0_72 = arith.constant 0 : index
    %c0_73 = arith.constant 0 : index
    %111 = vector.load %arg21[%c0_72, %c0_73] : memref<1x1xf32, #tpu.memory_space<vmem>>, vector<1x1xf32>
    %112 = vector.broadcast %111 : vector<1x1xf32> to vector<2x1xf32>
    %113 = arith.addf %110, %112 : vector<2x1xf32>
    %114 = arith.negf %113 : vector<2x1xf32>
    %115 = math.exp %114 : vector<2x1xf32>
    %cst_74 = arith.constant 1.000000e+00 : f32
    %116 = vector.broadcast %cst_74 : f32 to vector<2x1xf32>
    %117 = arith.addf %116, %115 : vector<2x1xf32>
    %118 = arith.divf %116, %117 : vector<2x1xf32>
    %c0_75 = arith.constant 0 : index
    %c0_76 = arith.constant 0 : index
    %119 = vector.load %arg25[%c0_75, %c0_76] : memref<2x1xf32, #tpu.memory_space<vmem>>, vector<2x1xf32>
    tpu.vector_store %arg25[%c0_75, %c0_76], %118 {strides = array<i32>} : memref<2x1xf32, #tpu.memory_space<vmem>>, vector<2x1xf32>,
    return
  }
}

module attributes {stable_mosaic.version = 11 : i64} {
  func.func @_mm_bias_act_kernel(%arg0: i32, %arg1: memref<32x576xbf16, #tpu.memory_space<vmem>>, %arg2: memref<576x256xbf16, #tpu.memory_space<vmem>>, %arg3: memref<1x256xf32, #tpu.memory_space<vmem>>, %arg4: memref<32x256xbf16, #tpu.memory_space<vmem>>) attributes {dimension_semantics = [#tpu.dimension_semantics<parallel>], iteration_bounds = array<i64: 1>, scalar_prefetch = 0 : i64, scratch_operands = 0 : i64, tpu.core_type = #tpu.core_type<tc>, window_params = [{transform_indices = @transform_0, window_bounds = array<i64: 32, 576>}, {pipeline_mode = #tpu.pipeline_mode<synchronous>, transform_indices = @transform_1, window_bounds = array<i64: 576, 256>}, {pipeline_mode = #tpu.pipeline_mode<synchronous>, transform_indices = @transform_2, window_bounds = array<i64: 1, 256>}, {transform_indices = @transform_3, window_bounds = array<i64: 32, 256>}]} {
    %c0 = arith.constant 0 : index
    %c0_0 = arith.constant 0 : index
    %0 = vector.load %arg1[%c0, %c0_0] : memref<32x576xbf16, #tpu.memory_space<vmem>>, vector<32x576xbf16>
    %c0_1 = arith.constant 0 : index
    %c0_2 = arith.constant 0 : index
    %1 = vector.load %arg2[%c0_1, %c0_2] : memref<576x256xbf16, #tpu.memory_space<vmem>>, vector<576x256xbf16>
    %cst = arith.constant dense<0.000000e+00> : vector<32x256xf32>
    %2 = tpu.matmul %0, %1, %cst {dimension_numbers = #tpu.dot_dimension_numbers<[1], [0], [0], [1], [0, 0, 1, 1], [], []>} : vector<32x576xbf16>, vector<576x256xbf16>, vector<32x256xf32> -> vector<32x256xf32>
    %c0_3 = arith.constant 0 : index
    %c0_4 = arith.constant 0 : index
    %3 = vector.load %arg3[%c0_3, %c0_4] : memref<1x256xf32, #tpu.memory_space<vmem>>, vector<1x256xf32>
    %4 = vector.broadcast %3 : vector<1x256xf32> to vector<32x256xf32>
    %5 = arith.addf %2, %4 : vector<32x256xf32>
    %cst_5 = arith.constant 0.000000e+00 : f32
    %6 = vector.broadcast %cst_5 : f32 to vector<32x256xf32>
    %7 = arith.maximumf %5, %6 : vector<32x256xf32>
    %8 = arith.truncf %7 : vector<32x256xf32> to vector<32x256xbf16>
    %c0_6 = arith.constant 0 : index
    %c0_7 = arith.constant 0 : index
    %9 = vector.load %arg4[%c0_6, %c0_7] : memref<32x256xbf16, #tpu.memory_space<vmem>>, vector<32x256xbf16>
    tpu.vector_store %arg4[%c0_6, %c0_7], %8 {strides = array<i32>} : memref<32x256xbf16, #tpu.memory_space<vmem>>, vector<32x256xbf16>,
    return
  }
  func.func @transform_0(%arg0: i32) -> (i32, i32) {
    %c0_i32 = arith.constant 0 : i32
    %c0_i32_0 = arith.constant 0 : i32
    return %arg0, %c0_i32 : i32, i32
  }
  func.func @transform_1(%arg0: i32) -> (i32, i32) {
    %c0_i32 = arith.constant 0 : i32
    %c0_i32_0 = arith.constant 0 : i32
    %c0_i32_1 = arith.constant 0 : i32
    return %c0_i32, %c0_i32_0 : i32, i32
  }
  func.func @transform_2(%arg0: i32) -> (i32, i32) {
    %c0_i32 = arith.constant 0 : i32
    %c0_i32_0 = arith.constant 0 : i32
    %c0_i32_1 = arith.constant 0 : i32
    return %c0_i32, %c0_i32_0 : i32, i32
  }
  func.func @transform_3(%arg0: i32) -> (i32, i32) {
    %c0_i32 = arith.constant 0 : i32
    %c0_i32_0 = arith.constant 0 : i32
    return %arg0, %c0_i32 : i32, i32
  }
}

module attributes {stable_mosaic.version = 11 : i64} {
  func.func @_mm_bias_act_kernel(%arg0: i32, %arg1: memref<128x576xbf16, #tpu.memory_space<vmem>>, %arg2: memref<576x128xbf16, #tpu.memory_space<vmem>>, %arg3: memref<1x128xf32, #tpu.memory_space<vmem>>, %arg4: memref<128x128xbf16, #tpu.memory_space<vmem>>) attributes {dimension_semantics = [#tpu.dimension_semantics<parallel>], iteration_bounds = array<i64: 1>, scalar_prefetch = 0 : i64, scratch_operands = 0 : i64, tpu.core_type = #tpu.core_type<tc>, window_params = [{transform_indices = @transform_0, window_bounds = array<i64: 128, 576>}, {pipeline_mode = #tpu.pipeline_mode<synchronous>, transform_indices = @transform_1, window_bounds = array<i64: 576, 128>}, {pipeline_mode = #tpu.pipeline_mode<synchronous>, transform_indices = @transform_2, window_bounds = array<i64: 1, 128>}, {transform_indices = @transform_3, window_bounds = array<i64: 128, 128>}]} {
    %c0 = arith.constant 0 : index
    %c0_0 = arith.constant 0 : index
    %0 = vector.load %arg1[%c0, %c0_0] : memref<128x576xbf16, #tpu.memory_space<vmem>>, vector<128x576xbf16>
    %c0_1 = arith.constant 0 : index
    %c0_2 = arith.constant 0 : index
    %1 = vector.load %arg2[%c0_1, %c0_2] : memref<576x128xbf16, #tpu.memory_space<vmem>>, vector<576x128xbf16>
    %cst = arith.constant dense<0.000000e+00> : vector<128x128xf32>
    %2 = tpu.matmul %0, %1, %cst {dimension_numbers = #tpu.dot_dimension_numbers<[1], [0], [0], [1], [0, 0, 1, 1], [], []>} : vector<128x576xbf16>, vector<576x128xbf16>, vector<128x128xf32> -> vector<128x128xf32>
    %c0_3 = arith.constant 0 : index
    %c0_4 = arith.constant 0 : index
    %3 = vector.load %arg3[%c0_3, %c0_4] : memref<1x128xf32, #tpu.memory_space<vmem>>, vector<1x128xf32>
    %4 = vector.broadcast %3 : vector<1x128xf32> to vector<128x128xf32>
    %5 = arith.addf %2, %4 : vector<128x128xf32>
    %cst_5 = arith.constant 0.000000e+00 : f32
    %6 = vector.broadcast %cst_5 : f32 to vector<128x128xf32>
    %7 = arith.maximumf %5, %6 : vector<128x128xf32>
    %8 = arith.truncf %7 : vector<128x128xf32> to vector<128x128xbf16>
    %c0_6 = arith.constant 0 : index
    %c0_7 = arith.constant 0 : index
    %9 = vector.load %arg4[%c0_6, %c0_7] : memref<128x128xbf16, #tpu.memory_space<vmem>>, vector<128x128xbf16>
    tpu.vector_store %arg4[%c0_6, %c0_7], %8 {strides = array<i32>} : memref<128x128xbf16, #tpu.memory_space<vmem>>, vector<128x128xbf16>,
    return
  }
  func.func @transform_0(%arg0: i32) -> (i32, i32) {
    %c0_i32 = arith.constant 0 : i32
    %c0_i32_0 = arith.constant 0 : i32
    return %arg0, %c0_i32 : i32, i32
  }
  func.func @transform_1(%arg0: i32) -> (i32, i32) {
    %c0_i32 = arith.constant 0 : i32
    %c0_i32_0 = arith.constant 0 : i32
    %c0_i32_1 = arith.constant 0 : i32
    return %c0_i32, %c0_i32_0 : i32, i32
  }
  func.func @transform_2(%arg0: i32) -> (i32, i32) {
    %c0_i32 = arith.constant 0 : i32
    %c0_i32_0 = arith.constant 0 : i32
    %c0_i32_1 = arith.constant 0 : i32
    return %c0_i32, %c0_i32_0 : i32, i32
  }
  func.func @transform_3(%arg0: i32) -> (i32, i32) {
    %c0_i32 = arith.constant 0 : i32
    %c0_i32_0 = arith.constant 0 : i32
    return %arg0, %c0_i32 : i32, i32
  }
}

module attributes {stable_mosaic.version = 11 : i64} {
  func.func @_mm_bias_act_kernel(%arg0: i32, %arg1: memref<512x288xbf16, #tpu.memory_space<vmem>>, %arg2: memref<288x128xbf16, #tpu.memory_space<vmem>>, %arg3: memref<1x128xf32, #tpu.memory_space<vmem>>, %arg4: memref<512x128xbf16, #tpu.memory_space<vmem>>) attributes {dimension_semantics = [#tpu.dimension_semantics<parallel>], iteration_bounds = array<i64: 1>, scalar_prefetch = 0 : i64, scratch_operands = 0 : i64, tpu.core_type = #tpu.core_type<tc>, window_params = [{transform_indices = @transform_0, window_bounds = array<i64: 512, 288>}, {pipeline_mode = #tpu.pipeline_mode<synchronous>, transform_indices = @transform_1, window_bounds = array<i64: 288, 128>}, {pipeline_mode = #tpu.pipeline_mode<synchronous>, transform_indices = @transform_2, window_bounds = array<i64: 1, 128>}, {transform_indices = @transform_3, window_bounds = array<i64: 512, 128>}]} {
    %c0 = arith.constant 0 : index
    %c0_0 = arith.constant 0 : index
    %0 = vector.load %arg1[%c0, %c0_0] : memref<512x288xbf16, #tpu.memory_space<vmem>>, vector<512x288xbf16>
    %c0_1 = arith.constant 0 : index
    %c0_2 = arith.constant 0 : index
    %1 = vector.load %arg2[%c0_1, %c0_2] : memref<288x128xbf16, #tpu.memory_space<vmem>>, vector<288x128xbf16>
    %cst = arith.constant dense<0.000000e+00> : vector<512x128xf32>
    %2 = tpu.matmul %0, %1, %cst {dimension_numbers = #tpu.dot_dimension_numbers<[1], [0], [0], [1], [0, 0, 1, 1], [], []>} : vector<512x288xbf16>, vector<288x128xbf16>, vector<512x128xf32> -> vector<512x128xf32>
    %c0_3 = arith.constant 0 : index
    %c0_4 = arith.constant 0 : index
    %3 = vector.load %arg3[%c0_3, %c0_4] : memref<1x128xf32, #tpu.memory_space<vmem>>, vector<1x128xf32>
    %4 = vector.broadcast %3 : vector<1x128xf32> to vector<512x128xf32>
    %5 = arith.addf %2, %4 : vector<512x128xf32>
    %cst_5 = arith.constant 0.000000e+00 : f32
    %6 = vector.broadcast %cst_5 : f32 to vector<512x128xf32>
    %7 = arith.maximumf %5, %6 : vector<512x128xf32>
    %8 = arith.truncf %7 : vector<512x128xf32> to vector<512x128xbf16>
    %c0_6 = arith.constant 0 : index
    %c0_7 = arith.constant 0 : index
    %9 = vector.load %arg4[%c0_6, %c0_7] : memref<512x128xbf16, #tpu.memory_space<vmem>>, vector<512x128xbf16>
    tpu.vector_store %arg4[%c0_6, %c0_7], %8 {strides = array<i32>} : memref<512x128xbf16, #tpu.memory_space<vmem>>, vector<512x128xbf16>,
    return
  }
  func.func @transform_0(%arg0: i32) -> (i32, i32) {
    %c0_i32 = arith.constant 0 : i32
    %c0_i32_0 = arith.constant 0 : i32
    return %arg0, %c0_i32 : i32, i32
  }
  func.func @transform_1(%arg0: i32) -> (i32, i32) {
    %c0_i32 = arith.constant 0 : i32
    %c0_i32_0 = arith.constant 0 : i32
    %c0_i32_1 = arith.constant 0 : i32
    return %c0_i32, %c0_i32_0 : i32, i32
  }
  func.func @transform_2(%arg0: i32) -> (i32, i32) {
    %c0_i32 = arith.constant 0 : i32
    %c0_i32_0 = arith.constant 0 : i32
    %c0_i32_1 = arith.constant 0 : i32
    return %c0_i32, %c0_i32_0 : i32, i32
  }
  func.func @transform_3(%arg0: i32) -> (i32, i32) {
    %c0_i32 = arith.constant 0 : i32
    %c0_i32_0 = arith.constant 0 : i32
    return %arg0, %c0_i32 : i32, i32
  }
}

module attributes {stable_mosaic.version = 11 : i64} {
  func.func @_mm_bias_act_t_kernel(%arg0: i32, %arg1: memref<1024x288xbf16, #tpu.memory_space<vmem>>, %arg2: memref<288x12xbf16, #tpu.memory_space<vmem>>, %arg3: memref<1x12xf32, #tpu.memory_space<vmem>>, %arg4: memref<12x1024xf32, #tpu.memory_space<vmem>>) attributes {dimension_semantics = [#tpu.dimension_semantics<parallel>], iteration_bounds = array<i64: 2>, scalar_prefetch = 0 : i64, scratch_operands = 0 : i64, tpu.core_type = #tpu.core_type<tc>, window_params = [{transform_indices = @transform_0, window_bounds = array<i64: 1024, 288>}, {pipeline_mode = #tpu.pipeline_mode<synchronous>, transform_indices = @transform_1, window_bounds = array<i64: 288, 12>}, {pipeline_mode = #tpu.pipeline_mode<synchronous>, transform_indices = @transform_2, window_bounds = array<i64: 1, 12>}, {transform_indices = @transform_3, window_bounds = array<i64: 12, 1024>}]} {
    %c0 = arith.constant 0 : index
    %c0_0 = arith.constant 0 : index
    %0 = vector.load %arg1[%c0, %c0_0] : memref<1024x288xbf16, #tpu.memory_space<vmem>>, vector<1024x288xbf16>
    %c0_1 = arith.constant 0 : index
    %c0_2 = arith.constant 0 : index
    %1 = vector.load %arg2[%c0_1, %c0_2] : memref<288x12xbf16, #tpu.memory_space<vmem>>, vector<288x12xbf16>
    %cst = arith.constant dense<0.000000e+00> : vector<1024x12xf32>
    %2 = tpu.matmul %0, %1, %cst {dimension_numbers = #tpu.dot_dimension_numbers<[1], [0], [0], [1], [0, 0, 1, 1], [], []>} : vector<1024x288xbf16>, vector<288x12xbf16>, vector<1024x12xf32> -> vector<1024x12xf32>
    %c0_3 = arith.constant 0 : index
    %c0_4 = arith.constant 0 : index
    %3 = vector.load %arg3[%c0_3, %c0_4] : memref<1x12xf32, #tpu.memory_space<vmem>>, vector<1x12xf32>
    %4 = vector.broadcast %3 : vector<1x12xf32> to vector<1024x12xf32>
    %5 = arith.addf %2, %4 : vector<1024x12xf32>
    %6 = tpu.transpose %5, [1, 0] : vector<1024x12xf32> -> vector<12x1024xf32>
    %c0_5 = arith.constant 0 : index
    %c0_6 = arith.constant 0 : index
    %7 = vector.load %arg4[%c0_5, %c0_6] : memref<12x1024xf32, #tpu.memory_space<vmem>>, vector<12x1024xf32>
    tpu.vector_store %arg4[%c0_5, %c0_6], %6 {strides = array<i32>} : memref<12x1024xf32, #tpu.memory_space<vmem>>, vector<12x1024xf32>,
    return
  }
  func.func @transform_0(%arg0: i32) -> (i32, i32) {
    %c0_i32 = arith.constant 0 : i32
    %c0_i32_0 = arith.constant 0 : i32
    return %arg0, %c0_i32 : i32, i32
  }
  func.func @transform_1(%arg0: i32) -> (i32, i32) {
    %c0_i32 = arith.constant 0 : i32
    %c0_i32_0 = arith.constant 0 : i32
    %c0_i32_1 = arith.constant 0 : i32
    return %c0_i32, %c0_i32_0 : i32, i32
  }
  func.func @transform_2(%arg0: i32) -> (i32, i32) {
    %c0_i32 = arith.constant 0 : i32
    %c0_i32_0 = arith.constant 0 : i32
    %c0_i32_1 = arith.constant 0 : i32
    return %c0_i32, %c0_i32_0 : i32, i32
  }
  func.func @transform_3(%arg0: i32) -> (i32, i32) {
    %c0_i32 = arith.constant 0 : i32
    %c0_i32_0 = arith.constant 0 : i32
    return %c0_i32, %arg0 : i32, i32
  }
}

</mosaic_0001>

<llo_original>
// kernel: forward.9
$region0: #{forward.9}
  #allocation0 [shape = 'u32[]', space=smem, size = 0x4, offset = 0x4, fixed_abs, tag = 'smem constant byte address 0x4 - core index']
  #allocation1 [shape = 'u32[72,128]{1,0:T(1,128)}', space=vmem, size = 0x9000, scoped, tag = 'internal scratch']
  %s0 = inlined_call_operand.vmem [shape: bf16[2048,48], index: 0, kind: input, shape index: {}]
  %s1 = inlined_call_operand.vmem [shape: bf16[48,32], index: 1, kind: input, shape index: {}]
  %s2 = inlined_call_operand.vmem [shape: f32[1,32], index: 2, kind: input, shape index: {}]
  %s3 = inlined_call_operand.vmem [shape: bf16[2048,32], index: 3, kind: output, shape index: {}]
  %s4 = sld [smem:[#allocation0]]
  $region45: #{forward.9} parent=0
    _
  %s6 = ssub.s32 1, %s4
  %s7 = scalar_select 0, %s6, %s4
  loop: start=0, step=1, limit=4
  $region2: #{forward.9} parent=0 // loop_pre_header
    _
  $region3: #{forward.9} parent=0 // loop_header
    %s9 = sphi 0, %s13
    %p10 = scmp.ge.s32.totalorder %s9, 4
    %s19 = sphi 0, %s21
    %s22 = sphi 0, %s19
    %s23 = sphi 0, %s22
    %s39 = sphi 0, %s23
    %s43 = sphi 0, %s43
    %s45 = sphi 0, %s43
    %s46 = sphi 0, %s45
    %s60 = sphi 0, %s46
    %s64 = sphi 0, %s64
    %s66 = sphi 0, %s64
    %s67 = sphi 0, %s66
    %s81 = sphi 0, %s67
    %s87 = sphi 0, %s89
    %s90 = sphi 0, %s87
    %s91 = sphi 0, %s90
    %s107 = sphi 0, %s91
  $region4: #{forward.9} parent=0 // loop_header_branch
    %12 = sbr.rel (%p10) target = $region8
  $region5: #{forward.9} parent=0 // loop_body
    %s14 = ssub.s32 %s9, 1
    %s15 = ssub.s32 %s9, 2
    %s16 = sadd.s32 %s9, 1
    %s17 = ssub.s32 %s9, %s16
    %p18 = scmp.eq.s32.totalorder %s17, 0
    %s20 = sadd.s32 %s19, 1
    %s21 = scalar_select %p18, %s19, %s20
    %p24 = pneg %p18
    %p25 = scmp.eq.s32.totalorder %s9, 1
    %p26 = por %p24, %p25
    %p27 = scmp.ne.s32.totalorder %s19, %s22
    %p28 = scmp.eq.s32.totalorder %s9, 0
    %p29 = por %p27, %p28
    %p30 = scmp.ne.s32.totalorder %s19, %s22
    %p31 = scmp.eq.s32.totalorder %s14, 1
    %p32 = por %p30, %p31
    %p33 = scmp.ne.s32.totalorder %s22, %s23
    %p34 = scmp.eq.s32.totalorder %s14, 0
    %p35 = por %p33, %p34
    %p36 = scmp.ne.s32.totalorder %s22, %s23
    %p37 = scmp.eq.s32.totalorder %s15, 1
    %p38 = por %p36, %p37
    %p40 = scmp.ne.s32.totalorder %s23, %s39
    %p41 = scmp.eq.s32.totalorder %s15, 0
    %p42 = por %p40, %p41
    %s44 = sadd.s32 %s43, 1
    %p47 = scmp.eq.s32.totalorder %s9, 1
    %p48 = scmp.ne.s32.totalorder %s43, %s45
    %p49 = scmp.eq.s32.totalorder %s9, 0
    %p50 = por %p48, %p49
    %p51 = scmp.ne.s32.totalorder %s43, %s45
    %p52 = scmp.eq.s32.totalorder %s14, 1
    %p53 = por %p51, %p52
    %p54 = scmp.ne.s32.totalorder %s45, %s46
    %p55 = scmp.eq.s32.totalorder %s14, 0
    %p56 = por %p54, %p55
    %p57 = scmp.ne.s32.totalorder %s45, %s46
    %p58 = scmp.eq.s32.totalorder %s15, 1
    %p59 = por %p57, %p58
    %p61 = scmp.ne.s32.totalorder %s46, %s60
    %p62 = scmp.eq.s32.totalorder %s15, 0
    %p63 = por %p61, %p62
    %s65 = sadd.s32 %s64, 1
    %p68 = scmp.eq.s32.totalorder %s9, 1
    %p69 = scmp.ne.s32.totalorder %s64, %s66
    %p70 = scmp.eq.s32.totalorder %s9, 0
    %p71 = por %p69, %p70
    %p72 = scmp.ne.s32.totalorder %s64, %s66
    %p73 = scmp.eq.s32.totalorder %s14, 1
    %p74 = por %p72, %p73
    %p75 = scmp.ne.s32.totalorder %s66, %s67
    %p76 = scmp.eq.s32.totalorder %s14, 0
    %p77 = por %p75, %p76
    %p78 = scmp.ne.s32.totalorder %s66, %s67
    %p79 = scmp.eq.s32.totalorder %s15, 1
    %p80 = por %p78, %p79
    %p82 = scmp.ne.s32.totalorder %s67, %s81
    %p83 = scmp.eq.s32.totalorder %s15, 0
    %p84 = por %p82, %p83
    %s85 = ssub.s32 %s9, %s16
    %p86 = scmp.eq.s32.totalorder %s85, 0
    %s88 = sadd.s32 %s87, 1
    %s89 = scalar_select %p86, %s87, %s88
    %p92 = pneg %p86
    %p93 = scmp.eq.s32.totalorder %s9, 1
    %p94 = por %p92, %p93
    %p95 = scmp.ne.s32.totalorder %s87, %s90
    %p96 = scmp.eq.s32.totalorder %s9, 0
    %p97 = por %p95, %p96
    %p98 = scmp.ne.s32.totalorder %s87, %s90
    %p99 = scmp.eq.s32.totalorder %s14, 1
    %p100 = por %p98, %p99
    %p101 = scmp.ne.s32.totalorder %s90, %s91
    %p102 = scmp.eq.s32.totalorder %s14, 0
    %p103 = por %p101, %p102
    %p104 = scmp.ne.s32.totalorder %s90, %s91
    %p105 = scmp.eq.s32.totalorder %s15, 1
    %p106 = por %p104, %p105
    %p108 = scmp.ne.s32.totalorder %s91, %s107
    %p109 = scmp.eq.s32.totalorder %s15, 0
    %p110 = por %p108, %p109
    %p111 = scmp.le.s32.totalorder 1, %s9
    %p112 = scmp.lt.s32.totalorder %s9, 3
    %p113 = pnand %p111, %p112
    %p114 = pneg %p113
    // Predicated region
    $region9: #{forward.9} parent=5 // pred_check
      _
    $region10: #{forward.9} parent=5 // pred_check_branch
      %116 = sbr.rel (%p113) target = $region12
    $region11: #{forward.9} parent=5 // pred_region
      %s117 = ssub.s32 %s9, 1
      // Predicated region
      $region13: #{forward.9} parent=11 // pred_check
        %p118 = pneg %p56
      $region14: #{forward.9} parent=11 // pred_check_branch
        %120 = sbr.rel (%p118) target = $region16
      $region15: #{forward.9} parent=11 // pred_region
        _
      $region16: #{forward.9} parent=11 // pred_fallthru
        _
      // Predicated region
      $region17: #{forward.9} parent=11 // pred_check
        %p121 = pneg %p77
      $region18: #{forward.9} parent=11 // pred_check_branch
        %123 = sbr.rel (%p121) target = $region20
      $region19: #{forward.9} parent=11 // pred_region
        _
      $region20: #{forward.9} parent=11 // pred_fallthru
        _
    $region12: #{forward.9} parent=5 // pred_fallthru
      _
    %p124 = scmp.lt.s32.totalorder %s9, 2
    // Predicated region
    $region21: #{forward.9} parent=5 // pred_check
      %p125 = pneg %p124
    $region22: #{forward.9} parent=5 // pred_check_branch
      %127 = sbr.rel (%p125) target = $region24
    $region23: #{forward.9} parent=5 // pred_region
      // Predicated region
      $region25: #{forward.9} parent=23 // pred_check
        %p128 = pneg %p29
      $region26: #{forward.9} parent=23 // pred_check_branch
        %130 = sbr.rel (%p128) target = $region28
      $region27: #{forward.9} parent=23 // pred_region
        %s131 = smul.u32 128, %s9
        %p132 = scmp.lt.s32.totalorder %s131, 255
        %s133 = scalar_select %p132, %s131, 255
        %s134 = smul.addr %s133, 4
        %s135 = scalar_lea.vmem %s0, %s134
        %s136 = smul.u32 128, %s9
      $region28: #{forward.9} parent=23 // pred_fallthru
        _
    $region24: #{forward.9} parent=5 // pred_fallthru
      _
    %p137 = scmp.le.s32.totalorder 1, %s9
    %p138 = scmp.lt.s32.totalorder %s9, 3
    %p139 = pnand %p137, %p138
    %p140 = pneg %p139
    // Predicated region
    $region29: #{forward.9} parent=5 // pred_check
      _
    $region30: #{forward.9} parent=5 // pred_check_branch
      %142 = sbr.rel (%p139) target = $region32
    $region31: #{forward.9} parent=5 // pred_region
      %s143 = ssub.s32 %s9, 1
      %s144 = smul.u32 128, %s14
      %p145 = scmp.lt.s32.totalorder %s144, 255
      %s146 = scalar_select %p145, %s144, 255
      %s147 = smul.addr %s146, 4
      %s148 = scalar_lea.vmem %s0, %s147
      %p149 = pneg %p35
      %p150 = pneg %p32
      %p151 = pneg %p56
      %p152 = pneg %p53
      %p153 = pneg %p77
      %p154 = pneg %p74
      %p155 = pneg %p103
      %p156 = pneg %p100
      %s157 = smul.u32 128, %s14
      %p158 = scmp.lt.s32.totalorder %s157, 255
      %s159 = scalar_select %p158, %s157, 255
      %s160 = smul.addr %s159, 4
      %s161 = scalar_lea.vmem %s3, %s160
      %s162 = smul.u32 128, %s14
      %p163 = scmp.lt.s32.totalorder %s162, 255
      %s164 = scalar_select %p163, %s162, 255
      %s165 = smul.addr %s164, 4
      %s166 = scalar_lea.vmem %s0, %s165
      %s167 = smul.u32 128, %s14
      %s168 = smul.u32 128, %s14
      %p169 = scmp.lt.s32.totalorder %s168, 255
      %s170 = scalar_select %p169, %s168, 255
      %s171 = smul.addr %s170, 4
      %s172 = scalar_lea.vmem %s3, %s171
      %s173 = smul.u32 128, %s14
      %v175 = vld [vmem:[%s166] sm:$0xf]
      %v176 = vld [vmem:[%s166 + $0x4] sm:$0xf]
      %v177 = vld [vmem:[%s166 + $0x8] sm:$0xf]
      %v178 = vld [vmem:[%s166 + $0xc] sm:$0xf]
      %v179 = vld [vmem:[%s166 + $0x10] sm:$0xf]
      %v180 = vld [vmem:[%s166 + $0x14] sm:$0xf]
      %v181 = vld [vmem:[%s166 + $0x18] sm:$0xf]
      %v182 = vld [vmem:[%s166 + $0x1c] sm:$0xf]
      %v183 = vld [vmem:[%s166 + $0x20] sm:$0xf]
      %v184 = vld [vmem:[%s166 + $0x24] sm:$0xf]
      %v185 = vld [vmem:[%s166 + $0x28] sm:$0xf]
      %v186 = vld [vmem:[%s166 + $0x2c] sm:$0xf]
      %v187 = vld [vmem:[%s166 + $0x30] sm:$0xf]
      %v188 = vld [vmem:[%s166 + $0x34] sm:$0xf]
      %v189 = vld [vmem:[%s166 + $0x38] sm:$0xf]
      %v190 = vld [vmem:[%s166 + $0x3c] sm:$0xf]
      %v191 = vld [vmem:[%s166 + $0x40] sm:$0xf]
      %v192 = vld [vmem:[%s166 + $0x44] sm:$0xf]
      %v193 = vld [vmem:[%s166 + $0x48] sm:$0xf]
      %v194 = vld [vmem:[%s166 + $0x4c] sm:$0xf]
      %v195 = vld [vmem:[%s166 + $0x50] sm:$0xf]
      %v196 = vld [vmem:[%s166 + $0x54] sm:$0xf]
      %v197 = vld [vmem:[%s166 + $0x58] sm:$0xf]
      %v198 = vld [vmem:[%s166 + $0x5c] sm:$0xf]
      %v199 = vld [vmem:[%s166 + $0x60] sm:$0xf]
      %v200 = vld [vmem:[%s166 + $0x64] sm:$0xf]
      %v201 = vld [vmem:[%s166 + $0x68] sm:$0xf]
      %v202 = vld [vmem:[%s166 + $0x6c] sm:$0xf]
      %v203 = vld [vmem:[%s166 + $0x70] sm:$0xf]
      %v204 = vld [vmem:[%s166 + $0x74] sm:$0xf]
      %v205 = vld [vmem:[%s166 + $0x78] sm:$0xf]
      %v206 = vld [vmem:[%s166 + $0x7c] sm:$0xf]
      %v207 = vld [vmem:[%s166 + $0x80] sm:$0xf]
      %v208 = vld [vmem:[%s166 + $0x84] sm:$0xf]
      %v209 = vld [vmem:[%s166 + $0x88] sm:$0xf]
      %v210 = vld [vmem:[%s166 + $0x8c] sm:$0xf]
      %v211 = vld [vmem:[%s166 + $0x90] sm:$0xf]
      %v212 = vld [vmem:[%s166 + $0x94] sm:$0xf]
      %v213 = vld [vmem:[%s166 + $0x98] sm:$0xf]
      %v214 = vld [vmem:[%s166 + $0x9c] sm:$0xf]
      %v215 = vld [vmem:[%s166 + $0xa0] sm:$0xf]
      %v216 = vld [vmem:[%s166 + $0xa4] sm:$0xf]
      %v217 = vld [vmem:[%s166 + $0xa8] sm:$0xf]
      %v218 = vld [vmem:[%s166 + $0xac] sm:$0xf]
      %v219 = vld [vmem:[%s166 + $0xb0] sm:$0xf]
      %v220 = vld [vmem:[%s166 + $0xb4] sm:$0xf]
      %v221 = vld [vmem:[%s166 + $0xb8] sm:$0xf]
      %v222 = vld [vmem:[%s166 + $0xbc] sm:$0xf]
      %v223 = vld [vmem:[%s166 + $0xc0] sm:$0xf]
      %v224 = vld [vmem:[%s166 + $0xc4] sm:$0xf]
      %v225 = vld [vmem:[%s166 + $0xc8] sm:$0xf]
      %v226 = vld [vmem:[%s166 + $0xcc] sm:$0xf]
      %v227 = vld [vmem:[%s166 + $0xd0] sm:$0xf]
      %v228 = vld [vmem:[%s166 + $0xd4] sm:$0xf]
      %v229 = vld [vmem:[%s166 + $0xd8] sm:$0xf]
      %v230 = vld [vmem:[%s166 + $0xdc] sm:$0xf]
      %v231 = vld [vmem:[%s166 + $0xe0] sm:$0xf]
      %v232 = vld [vmem:[%s166 + $0xe4] sm:$0xf]
      %v233 = vld [vmem:[%s166 + $0xe8] sm:$0xf]
      %v234 = vld [vmem:[%s166 + $0xec] sm:$0xf]
      %v235 = vld [vmem:[%s166 + $0xf0] sm:$0xf]
      %v236 = vld [vmem:[%s166 + $0xf4] sm:$0xf]
      %v237 = vld [vmem:[%s166 + $0xf8] sm:$0xf]
      %v238 = vld [vmem:[%s166 + $0xfc] sm:$0xf]
      %v239 = vld [vmem:[%s166 + $0x100] sm:$0xf]
      %v240 = vld [vmem:[%s166 + $0x104] sm:$0xf]
      %v241 = vld [vmem:[%s166 + $0x108] sm:$0xf]
      %v242 = vld [vmem:[%s166 + $0x10c] sm:$0xf]
      %v243 = vld [vmem:[%s166 + $0x110] sm:$0xf]
      %v244 = vld [vmem:[%s166 + $0x114] sm:$0xf]
      %v245 = vld [vmem:[%s166 + $0x118] sm:$0xf]
      %v246 = vld [vmem:[%s166 + $0x11c] sm:$0xf]
      %v247 = vld [vmem:[%s166 + $0x120] sm:$0xf]
      %v248 = vld [vmem:[%s166 + $0x124] sm:$0xf]
      %v249 = vld [vmem:[%s166 + $0x128] sm:$0xf]
      %v250 = vld [vmem:[%s166 + $0x12c] sm:$0xf]
      %v251 = vld [vmem:[%s166 + $0x130] sm:$0xf]
      %v252 = vld [vmem:[%s166 + $0x134] sm:$0xf]
      %v253 = vld [vmem:[%s166 + $0x138] sm:$0xf]
      %v254 = vld [vmem:[%s166 + $0x13c] sm:$0xf]
      %v255 = vld [vmem:[%s166 + $0x140] sm:$0xf]
      %v256 = vld [vmem:[%s166 + $0x144] sm:$0xf]
      %v257 = vld [vmem:[%s166 + $0x148] sm:$0xf]
      %v258 = vld [vmem:[%s166 + $0x14c] sm:$0xf]
      %v259 = vld [vmem:[%s166 + $0x150] sm:$0xf]
      %v260 = vld [vmem:[%s166 + $0x154] sm:$0xf]
      %v261 = vld [vmem:[%s166 + $0x158] sm:$0xf]
      %v262 = vld [vmem:[%s166 + $0x15c] sm:$0xf]
      %v263 = vld [vmem:[%s166 + $0x160] sm:$0xf]
      %v264 = vld [vmem:[%s166 + $0x164] sm:$0xf]
      %v265 = vld [vmem:[%s166 + $0x168] sm:$0xf]
      %v266 = vld [vmem:[%s166 + $0x16c] sm:$0xf]
      %v267 = vld [vmem:[%s166 + $0x170] sm:$0xf]
      %v268 = vld [vmem:[%s166 + $0x174] sm:$0xf]
      %v269 = vld [vmem:[%s166 + $0x178] sm:$0xf]
      %v270 = vld [vmem:[%s166 + $0x17c] sm:$0xf]
      %v271 = vld [vmem:[%s166 + $0x180] sm:$0xf]
      %v272 = vld [vmem:[%s166 + $0x184] sm:$0xf]
      %v273 = vld [vmem:[%s166 + $0x188] sm:$0xf]
      %v274 = vld [vmem:[%s166 + $0x18c] sm:$0xf]
      %v275 = vld [vmem:[%s166 + $0x190] sm:$0xf]
      %v276 = vld [vmem:[%s166 + $0x194] sm:$0xf]
      %v277 = vld [vmem:[%s166 + $0x198] sm:$0xf]
      %v278 = vld [vmem:[%s166 + $0x19c] sm:$0xf]
      %v279 = vld [vmem:[%s166 + $0x1a0] sm:$0xf]
      %v280 = vld [vmem:[%s166 + $0x1a4] sm:$0xf]
      %v281 = vld [vmem:[%s166 + $0x1a8] sm:$0xf]
      %v282 = vld [vmem:[%s166 + $0x1ac] sm:$0xf]
      %v283 = vld [vmem:[%s166 + $0x1b0] sm:$0xf]
      %v284 = vld [vmem:[%s166 + $0x1b4] sm:$0xf]
      %v285 = vld [vmem:[%s166 + $0x1b8] sm:$0xf]
      %v286 = vld [vmem:[%s166 + $0x1bc] sm:$0xf]
      %v287 = vld [vmem:[%s166 + $0x1c0] sm:$0xf]
      %v288 = vld [vmem:[%s166 + $0x1c4] sm:$0xf]
      %v289 = vld [vmem:[%s166 + $0x1c8] sm:$0xf]
      %v290 = vld [vmem:[%s166 + $0x1cc] sm:$0xf]
      %v291 = vld [vmem:[%s166 + $0x1d0] sm:$0xf]
      %v292 = vld [vmem:[%s166 + $0x1d4] sm:$0xf]
      %v293 = vld [vmem:[%s166 + $0x1d8] sm:$0xf]
      %v294 = vld [vmem:[%s166 + $0x1dc] sm:$0xf]
      %v295 = vld [vmem:[%s166 + $0x1e0] sm:$0xf]
      %v296 = vld [vmem:[%s166 + $0x1e4] sm:$0xf]
      %v297 = vld [vmem:[%s166 + $0x1e8] sm:$0xf]
      %v298 = vld [vmem:[%s166 + $0x1ec] sm:$0xf]
      %v299 = vld [vmem:[%s166 + $0x1f0] sm:$0xf]
      %v300 = vld [vmem:[%s166 + $0x1f4] sm:$0xf]
      %v301 = vld [vmem:[%s166 + $0x1f8] sm:$0xf]
      %v302 = vld [vmem:[%s166 + $0x1fc] sm:$0xf]
      %v303 = vld [vmem:[%s1] sm:$0xf]
      %v304 = vld [vmem:[%s1 + $0x4] sm:$0xf]
      %v305 = vld [vmem:[%s1 + $0x8] sm:$0xf]
      %v306 = vld [vmem:[%s1 + $0xc] sm:$0xf]
      %v307 = vld [vmem:[%s1 + $0x10] sm:$0xf]
      %v308 = vld [vmem:[%s1 + $0x14] sm:$0xf]
      %v309 = vld [vmem:[%s2] sm:$0x1]
      %v311 = vperm.slane %v309, 0
      %v441 = vunpack.c.l.b16 %v175
      %v442 = vunpack.c.l.b16 %v176
      %v443 = vunpack.c.l.b16 %v177
      %v444 = vunpack.c.l.b16 %v178
      %v445 = vunpack.c.l.b16 %v179
      %v446 = vunpack.c.l.b16 %v180
      %v447 = vunpack.c.l.b16 %v181
      %v448 = vunpack.c.l.b16 %v182
      %v449 = vunpack.c.l.b16 %v183
      %v450 = vunpack.c.l.b16 %v184
      %v451 = vunpack.c.l.b16 %v185
      %v452 = vunpack.c.l.b16 %v186
      %v453 = vunpack.c.l.b16 %v187
      %v454 = vunpack.c.l.b16 %v188
      %v455 = vunpack.c.l.b16 %v189
      %v456 = vunpack.c.l.b16 %v190
      %v457 = vunpack.c.l.b16 %v191
      %v458 = vunpack.c.l.b16 %v192
      %v459 = vunpack.c.l.b16 %v193
      %v460 = vunpack.c.l.b16 %v194
      %v461 = vunpack.c.l.b16 %v195
      %v462 = vunpack.c.l.b16 %v196
      %v463 = vunpack.c.l.b16 %v197
      %v464 = vunpack.c.l.b16 %v198
      %v465 = vunpack.c.l.b16 %v199
      %v466 = vunpack.c.l.b16 %v200
      %v467 = vunpack.c.l.b16 %v201
      %v468 = vunpack.c.l.b16 %v202
      %v469 = vunpack.c.l.b16 %v203
      %v470 = vunpack.c.l.b16 %v204
      %v471 = vunpack.c.l.b16 %v205
      %v472 = vunpack.c.l.b16 %v206
      %v473 = vunpack.c.l.b16 %v207
      %v474 = vunpack.c.l.b16 %v208
      %v475 = vunpack.c.l.b16 %v209
      %v476 = vunpack.c.l.b16 %v210
      %v477 = vunpack.c.l.b16 %v211
      %v478 = vunpack.c.l.b16 %v212
      %v479 = vunpack.c.l.b16 %v213
      %v480 = vunpack.c.l.b16 %v214
      %v481 = vunpack.c.l.b16 %v215
      %v482 = vunpack.c.l.b16 %v216
      %v483 = vunpack.c.l.b16 %v217
      %v484 = vunpack.c.l.b16 %v218
      %v485 = vunpack.c.l.b16 %v219
      %v486 = vunpack.c.l.b16 %v220
      %v487 = vunpack.c.l.b16 %v221
      %v488 = vunpack.c.l.b16 %v222
      %v489 = vunpack.c.l.b16 %v223
      %v490 = vunpack.c.l.b16 %v224
      %v491 = vunpack.c.l.b16 %v225
      %v492 = vunpack.c.l.b16 %v226
      %v493 = vunpack.c.l.b16 %v227
      %v494 = vunpack.c.l.b16 %v228
      %v495 = vunpack.c.l.b16 %v229
      %v496 = vunpack.c.l.b16 %v230
      %v497 = vunpack.c.l.b16 %v231
      %v498 = vunpack.c.l.b16 %v232
      %v499 = vunpack.c.l.b16 %v233
      %v500 = vunpack.c.l.b16 %v234
      %v501 = vunpack.c.l.b16 %v235
      %v502 = vunpack.c.l.b16 %v236
      %v503 = vunpack.c.l.b16 %v237
      %v504 = vunpack.c.l.b16 %v238
      %v505 = vunpack.c.l.b16 %v239
      %v506 = vunpack.c.l.b16 %v240
      %v507 = vunpack.c.l.b16 %v241
      %v508 = vunpack.c.l.b16 %v242
      %v509 = vunpack.c.l.b16 %v243
      %v510 = vunpack.c.l.b16 %v244
      %v511 = vunpack.c.l.b16 %v245
      %v512 = vunpack.c.l.b16 %v246
      %v513 = vunpack.c.l.b16 %v247
      %v514 = vunpack.c.l.b16 %v248
      %v515 = vunpack.c.l.b16 %v249
      %v516 = vunpack.c.l.b16 %v250
      %v517 = vunpack.c.l.b16 %v251
      %v518 = vunpack.c.l.b16 %v252
      %v519 = vunpack.c.l.b16 %v253
      %v520 = vunpack.c.l.b16 %v254
      %v521 = vunpack.c.l.b16 %v255
      %v522 = vunpack.c.l.b16 %v256
      %v523 = vunpack.c.l.b16 %v257
      %v524 = vunpack.c.l.b16 %v258
      %v525 = vunpack.c.l.b16 %v259
      %v526 = vunpack.c.l.b16 %v260
      %v527 = vunpack.c.l.b16 %v261
      %v528 = vunpack.c.l.b16 %v262
      %v529 = vunpack.c.l.b16 %v263
      %v530 = vunpack.c.l.b16 %v264
      %v531 = vunpack.c.l.b16 %v265
      %v532 = vunpack.c.l.b16 %v266
      %v533 = vunpack.c.l.b16 %v267
      %v534 = vunpack.c.l.b16 %v268
      %v535 = vunpack.c.l.b16 %v269
      %v536 = vunpack.c.l.b16 %v270
      %v537 = vunpack.c.l.b16 %v271
      %v538 = vunpack.c.l.b16 %v272
      %v539 = vunpack.c.l.b16 %v273
      %v540 = vunpack.c.l.b16 %v274
      %v541 = vunpack.c.l.b16 %v275
      %v542 = vunpack.c.l.b16 %v276
      %v543 = vunpack.c.l.b16 %v277
      %v544 = vunpack.c.l.b16 %v278
      %v545 = vunpack.c.l.b16 %v279
      %v546 = vunpack.c.l.b16 %v280
      %v547 = vunpack.c.l.b16 %v281
      %v548 = vunpack.c.l.b16 %v282
      %v549 = vunpack.c.l.b16 %v283
      %v550 = vunpack.c.l.b16 %v284
      %v551 = vunpack.c.l.b16 %v285
      %v552 = vunpack.c.l.b16 %v286
      %v553 = vunpack.c.l.b16 %v287
      %v554 = vunpack.c.l.b16 %v288
      %v555 = vunpack.c.l.b16 %v289
      %v556 = vunpack.c.l.b16 %v290
      %v557 = vunpack.c.l.b16 %v291
      %v558 = vunpack.c.l.b16 %v292
      %v559 = vunpack.c.l.b16 %v293
      %v560 = vunpack.c.l.b16 %v294
      %v561 = vunpack.c.l.b16 %v295
      %v562 = vunpack.c.l.b16 %v296
      %v563 = vunpack.c.l.b16 %v297
      %v564 = vunpack.c.l.b16 %v298
      %v565 = vunpack.c.l.b16 %v299
      %v566 = vunpack.c.l.b16 %v300
      %v567 = vunpack.c.l.b16 %v301
      %v568 = vunpack.c.l.b16 %v302
      %v569 = vpack.c.b16 %v442, %v441
      %v570 = vpack.c.b16 %v444, %v443
      %v571 = vpack.c.b16 %v446, %v445
      %v572 = vpack.c.b16 %v448, %v447
      %v573 = vpack.c.b16 %v450, %v449
      %v574 = vpack.c.b16 %v452, %v451
      %v575 = vpack.c.b16 %v454, %v453
      %v576 = vpack.c.b16 %v456, %v455
      %v577 = vpack.c.b16 %v458, %v457
      %v578 = vpack.c.b16 %v460, %v459
      %v579 = vpack.c.b16 %v462, %v461
      %v580 = vpack.c.b16 %v464, %v463
      %v581 = vpack.c.b16 %v466, %v465
      %v582 = vpack.c.b16 %v468, %v467
      %v583 = vpack.c.b16 %v470, %v469
      %v584 = vpack.c.b16 %v472, %v471
      %v585 = vpack.c.b16 %v474, %v473
      %v586 = vpack.c.b16 %v476, %v475
      %v587 = vpack.c.b16 %v478, %v477
      %v588 = vpack.c.b16 %v480, %v479
      %v589 = vpack.c.b16 %v482, %v481
      %v590 = vpack.c.b16 %v484, %v483
      %v591 = vpack.c.b16 %v486, %v485
      %v592 = vpack.c.b16 %v488, %v487
      %v593 = vpack.c.b16 %v490, %v489
      %v594 = vpack.c.b16 %v492, %v491
      %v595 = vpack.c.b16 %v494, %v493
      %v596 = vpack.c.b16 %v496, %v495
      %v597 = vpack.c.b16 %v498, %v497
      %v598 = vpack.c.b16 %v500, %v499
      %v599 = vpack.c.b16 %v502, %v501
      %v600 = vpack.c.b16 %v504, %v503
      %v601 = vpack.c.b16 %v506, %v505
      %v602 = vpack.c.b16 %v508, %v507
      %v603 = vpack.c.b16 %v510, %v509
      %v604 = vpack.c.b16 %v512, %v511
      %v605 = vpack.c.b16 %v514, %v513
      %v606 = vpack.c.b16 %v516, %v515
      %v607 = vpack.c.b16 %v518, %v517
      %v608 = vpack.c.b16 %v520, %v519
      %v609 = vpack.c.b16 %v522, %v521
      %v610 = vpack.c.b16 %v524, %v523
      %v611 = vpack.c.b16 %v526, %v525
      %v612 = vpack.c.b16 %v528, %v527
      %v613 = vpack.c.b16 %v530, %v529
      %v614 = vpack.c.b16 %v532, %v531
      %v615 = vpack.c.b16 %v534, %v533
      %v616 = vpack.c.b16 %v536, %v535
      %v617 = vpack.c.b16 %v538, %v537
      %v618 = vpack.c.b16 %v540, %v539
      %v619 = vpack.c.b16 %v542, %v541
      %v620 = vpack.c.b16 %v544, %v543
      %v621 = vpack.c.b16 %v546, %v545
      %v622 = vpack.c.b16 %v548, %v547
      %v623 = vpack.c.b16 %v550, %v549
      %v624 = vpack.c.b16 %v552, %v551
      %v625 = vpack.c.b16 %v554, %v553
      %v626 = vpack.c.b16 %v556, %v555
      %v627 = vpack.c.b16 %v558, %v557
      %v628 = vpack.c.b16 %v560, %v559
      %v629 = vpack.c.b16 %v562, %v561
      %v630 = vpack.c.b16 %v564, %v563
      %v631 = vpack.c.b16 %v566, %v565
      %v632 = vpack.c.b16 %v568, %v567
      %v639 = vunpack.c.l.b16 %v303
      %v640 = vunpack.c.l.b16 %v304
      %v641 = vunpack.c.l.b16 %v305
      %v642 = vunpack.c.l.b16 %v306
      %v643 = vunpack.c.l.b16 %v307
      %v644 = vunpack.c.l.b16 %v308
      %v645 = vpack.c.b16 %v640, %v639
      %v646 = vpack.c.b16 %v642, %v641
      %v647 = vpack.c.b16 %v644, %v643
      %vm651 = vcmask 392192
      %v653 = vsel %vm651, %v569, 0
      %v656 = vsel %vm651, %v570, 0
      %v659 = vsel %vm651, %v571, 0
      %v662 = vsel %vm651, %v572, 0
      %v665 = vsel %vm651, %v573, 0
      %v668 = vsel %vm651, %v574, 0
      %v671 = vsel %vm651, %v575, 0
      %v674 = vsel %vm651, %v576, 0
      %v677 = vsel %vm651, %v577, 0
      %v680 = vsel %vm651, %v578, 0
      %v683 = vsel %vm651, %v579, 0
      %v686 = vsel %vm651, %v580, 0
      %v689 = vsel %vm651, %v581, 0
      %v692 = vsel %vm651, %v582, 0
      %v695 = vsel %vm651, %v583, 0
      %v698 = vsel %vm651, %v584, 0
      %v701 = vsel %vm651, %v585, 0
      %v704 = vsel %vm651, %v586, 0
      %v707 = vsel %vm651, %v587, 0
      %v710 = vsel %vm651, %v588, 0
      %v713 = vsel %vm651, %v589, 0
      %v716 = vsel %vm651, %v590, 0
      %v719 = vsel %vm651, %v591, 0
      %v722 = vsel %vm651, %v592, 0
      %v725 = vsel %vm651, %v593, 0
      %v728 = vsel %vm651, %v594, 0
      %v731 = vsel %vm651, %v595, 0
      %v734 = vsel %vm651, %v596, 0
      %v737 = vsel %vm651, %v597, 0
      %v740 = vsel %vm651, %v598, 0
      %v743 = vsel %vm651, %v599, 0
      %v746 = vsel %vm651, %v600, 0
      %v749 = vsel %vm651, %v601, 0
      %v752 = vsel %vm651, %v602, 0
      %v755 = vsel %vm651, %v603, 0
      %v758 = vsel %vm651, %v604, 0
      %v761 = vsel %vm651, %v605, 0
      %v764 = vsel %vm651, %v606, 0
      %v767 = vsel %vm651, %v607, 0
      %v770 = vsel %vm651, %v608, 0
      %v773 = vsel %vm651, %v609, 0
      %v776 = vsel %vm651, %v610, 0
      %v779 = vsel %vm651, %v611, 0
      %v782 = vsel %vm651, %v612, 0
      %v785 = vsel %vm651, %v613, 0
      %v788 = vsel %vm651, %v614, 0
      %v791 = vsel %vm651, %v615, 0
      %v794 = vsel %vm651, %v616, 0
      %v797 = vsel %vm651, %v617, 0
      %v800 = vsel %vm651, %v618, 0
      %v803 = vsel %vm651, %v619, 0
      %v806 = vsel %vm651, %v620, 0
      %v809 = vsel %vm651, %v621, 0
      %v812 = vsel %vm651, %v622, 0
      %v815 = vsel %vm651, %v623, 0
      %v818 = vsel %vm651, %v624, 0
      %v821 = vsel %vm651, %v625, 0
      %v824 = vsel %vm651, %v626, 0
      %v827 = vsel %vm651, %v627, 0
      %v830 = vsel %vm651, %v628, 0
      %v833 = vsel %vm651, %v629, 0
      %v836 = vsel %vm651, %v630, 0
      %v839 = vsel %vm651, %v631, 0
      %v842 = vsel %vm651, %v632, 0
      %844 = vmatpush.bf16.msra.mxu0 0
      %845 = vmatpush.bf16.msra.mxu0 0
      %846 = vmatpush.bf16.msra.mxu0 0
      %847 = vmatpush.bf16.msra.mxu0 0
      %848 = vmatpush.bf16.msra.mxu0 0
      %849 = vmatpush.bf16.msra.mxu0 %v647
      %850 = vmatpush.bf16.msra.mxu0 %v646
      %851 = vmatpush.bf16.msra.mxu0 %v645
      %852 = vmatmul.bf16.gmra.mxu0 %v653
      %v853 = vpop.f32.mrf.mxu0
      %v854 = vadd.f32 %v311, %v853
      %v855 = vpop.f32.mrf.mxu0
      %v856 = vadd.f32 %v311, %v855
      %857 = vmatmul.bf16.gmra.mxu0 %v656
      %v858 = vpop.f32.mrf.mxu0
      %v859 = vadd.f32 %v311, %v858
      %v860 = vpop.f32.mrf.mxu0
      %v861 = vadd.f32 %v311, %v860
      %862 = vmatmul.bf16.gmra.mxu0 %v659
      %v863 = vpop.f32.mrf.mxu0
      %v864 = vadd.f32 %v311, %v863
      %v865 = vpop.f32.mrf.mxu0
      %v866 = vadd.f32 %v311, %v865
      %867 = vmatmul.bf16.gmra.mxu0 %v662
      %v868 = vpop.f32.mrf.mxu0
      %v869 = vadd.f32 %v311, %v868
      %v870 = vpop.f32.mrf.mxu0
      %v871 = vadd.f32 %v311, %v870
      %872 = vmatmul.bf16.gmra.mxu0 %v665
      %v873 = vpop.f32.mrf.mxu0
      %v874 = vadd.f32 %v311, %v873
      %v875 = vpop.f32.mrf.mxu0
      %v876 = vadd.f32 %v311, %v875
      %877 = vmatmul.bf16.gmra.mxu0 %v668
      %v878 = vpop.f32.mrf.mxu0
      %v879 = vadd.f32 %v311, %v878
      %v880 = vpop.f32.mrf.mxu0
      %v881 = vadd.f32 %v311, %v880
      %882 = vmatmul.bf16.gmra.mxu0 %v671
      %v883 = vpop.f32.mrf.mxu0
      %v884 = vadd.f32 %v311, %v883
      %v885 = vpop.f32.mrf.mxu0
      %v886 = vadd.f32 %v311, %v885
      %887 = vmatmul.bf16.gmra.mxu0 %v674
      %v888 = vpop.f32.mrf.mxu0
      %v889 = vadd.f32 %v311, %v888
      %v890 = vpop.f32.mrf.mxu0
      %v891 = vadd.f32 %v311, %v890
      %892 = vmatmul.bf16.gmra.mxu0 %v677
      %v893 = vpop.f32.mrf.mxu0
      %v894 = vadd.f32 %v311, %v893
      %v895 = vpop.f32.mrf.mxu0
      %v896 = vadd.f32 %v311, %v895
      %897 = vmatmul.bf16.gmra.mxu0 %v680
      %v898 = vpop.f32.mrf.mxu0
      %v899 = vadd.f32 %v311, %v898
      %v900 = vpop.f32.mrf.mxu0
      %v901 = vadd.f32 %v311, %v900
      %902 = vmatmul.bf16.gmra.mxu0 %v683
      %v903 = vpop.f32.mrf.mxu0
      %v904 = vadd.f32 %v311, %v903
      %v905 = vpop.f32.mrf.mxu0
      %v906 = vadd.f32 %v311, %v905
      %907 = vmatmul.bf16.gmra.mxu0 %v686
      %v908 = vpop.f32.mrf.mxu0
      %v909 = vadd.f32 %v311, %v908
      %v910 = vpop.f32.mrf.mxu0
      %v911 = vadd.f32 %v311, %v910
      %912 = vmatmul.bf16.gmra.mxu0 %v689
      %v913 = vpop.f32.mrf.mxu0
      %v914 = vadd.f32 %v311, %v913
      %v915 = vpop.f32.mrf.mxu0
      %v916 = vadd.f32 %v311, %v915
      %917 = vmatmul.bf16.gmra.mxu0 %v692
      %v918 = vpop.f32.mrf.mxu0
      %v919 = vadd.f32 %v311, %v918
      %v920 = vpop.f32.mrf.mxu0
      %v921 = vadd.f32 %v311, %v920
      %922 = vmatmul.bf16.gmra.mxu0 %v695
      %v923 = vpop.f32.mrf.mxu0
      %v924 = vadd.f32 %v311, %v923
      %v925 = vpop.f32.mrf.mxu0
      %v926 = vadd.f32 %v311, %v925
      %927 = vmatmul.bf16.gmra.mxu0 %v698
      %v928 = vpop.f32.mrf.mxu0
      %v929 = vadd.f32 %v311, %v928
      %v930 = vpop.f32.mrf.mxu0
      %v931 = vadd.f32 %v311, %v930
      %932 = vmatmul.bf16.gmra.mxu0 %v701
      %v933 = vpop.f32.mrf.mxu0
      %v934 = vadd.f32 %v311, %v933
      %v935 = vpop.f32.mrf.mxu0
      %v936 = vadd.f32 %v311, %v935
      %937 = vmatmul.bf16.gmra.mxu0 %v704
      %v938 = vpop.f32.mrf.mxu0
      %v939 = vadd.f32 %v311, %v938
      %v940 = vpop.f32.mrf.mxu0
      %v941 = vadd.f32 %v311, %v940
      %942 = vmatmul.bf16.gmra.mxu0 %v707
      %v943 = vpop.f32.mrf.mxu0
      %v944 = vadd.f32 %v311, %v943
      %v945 = vpop.f32.mrf.mxu0
      %v946 = vadd.f32 %v311, %v945
      %947 = vmatmul.bf16.gmra.mxu0 %v710
      %v948 = vpop.f32.mrf.mxu0
      %v949 = vadd.f32 %v311, %v948
      %v950 = vpop.f32.mrf.mxu0
      %v951 = vadd.f32 %v311, %v950
      %952 = vmatmul.bf16.gmra.mxu0 %v713
      %v953 = vpop.f32.mrf.mxu0
      %v954 = vadd.f32 %v311, %v953
      %v955 = vpop.f32.mrf.mxu0
      %v956 = vadd.f32 %v311, %v955
      %957 = vmatmul.bf16.gmra.mxu0 %v716
      %v958 = vpop.f32.mrf.mxu0
      %v959 = vadd.f32 %v311, %v958
      %v960 = vpop.f32.mrf.mxu0
      %v961 = vadd.f32 %v311, %v960
      %962 = vmatmul.bf16.gmra.mxu0 %v719
      %v963 = vpop.f32.mrf.mxu0
      %v964 = vadd.f32 %v311, %v963
      %v965 = vpop.f32.mrf.mxu0
      %v966 = vadd.f32 %v311, %v965
      %967 = vmatmul.bf16.gmra.mxu0 %v722
      %v968 = vpop.f32.mrf.mxu0
      %v969 = vadd.f32 %v311, %v968
      %v970 = vpop.f32.mrf.mxu0
      %v971 = vadd.f32 %v311, %v970
      %972 = vmatmul.bf16.gmra.mxu0 %v725
      %v973 = vpop.f32.mrf.mxu0
      %v974 = vadd.f32 %v311, %v973
      %v975 = vpop.f32.mrf.mxu0
      %v976 = vadd.f32 %v311, %v975
      %977 = vmatmul.bf16.gmra.mxu0 %v728
      %v978 = vpop.f32.mrf.mxu0
      %v979 = vadd.f32 %v311, %v978
      %v980 = vpop.f32.mrf.mxu0
      %v981 = vadd.f32 %v311, %v980
      %982 = vmatmul.bf16.gmra.mxu0 %v731
      %v983 = vpop.f32.mrf.mxu0
      %v984 = vadd.f32 %v311, %v983
      %v985 = vpop.f32.mrf.mxu0
      %v986 = vadd.f32 %v311, %v985
      %987 = vmatmul.bf16.gmra.mxu0 %v734
      %v988 = vpop.f32.mrf.mxu0
      %v989 = vadd.f32 %v311, %v988
      %v990 = vpop.f32.mrf.mxu0
      %v991 = vadd.f32 %v311, %v990
      %992 = vmatmul.bf16.gmra.mxu0 %v737
      %v993 = vpop.f32.mrf.mxu0
      %v994 = vadd.f32 %v311, %v993
      %v995 = vpop.f32.mrf.mxu0
      %v996 = vadd.f32 %v311, %v995
      %997 = vmatmul.bf16.gmra.mxu0 %v740
      %v998 = vpop.f32.mrf.mxu0
      %v999 = vadd.f32 %v311, %v998
      %v1000 = vpop.f32.mrf.mxu0
      %v1001 = vadd.f32 %v311, %v1000
      %1002 = vmatmul.bf16.gmra.mxu0 %v743
      %v1003 = vpop.f32.mrf.mxu0
      %v1004 = vadd.f32 %v311, %v1003
      %v1005 = vpop.f32.mrf.mxu0
      %v1006 = vadd.f32 %v311, %v1005
      %1007 = vmatmul.bf16.gmra.mxu0 %v746
      %v1008 = vpop.f32.mrf.mxu0
      %v1009 = vadd.f32 %v311, %v1008
      %v1010 = vpop.f32.mrf.mxu0
      %v1011 = vadd.f32 %v311, %v1010
      %1012 = vmatmul.bf16.gmra.mxu0 %v749
      %v1013 = vpop.f32.mrf.mxu0
      %v1014 = vadd.f32 %v311, %v1013
      %v1015 = vpop.f32.mrf.mxu0
      %v1016 = vadd.f32 %v311, %v1015
      %1017 = vmatmul.bf16.gmra.mxu0 %v752
      %v1018 = vpop.f32.mrf.mxu0
      %v1019 = vadd.f32 %v311, %v1018
      %v1020 = vpop.f32.mrf.mxu0
      %v1021 = vadd.f32 %v311, %v1020
      %1022 = vmatmul.bf16.gmra.mxu0 %v755
      %v1023 = vpop.f32.mrf.mxu0
      %v1024 = vadd.f32 %v311, %v1023
      %v1025 = vpop.f32.mrf.mxu0
      %v1026 = vadd.f32 %v311, %v1025
      %1027 = vmatmul.bf16.gmra.mxu0 %v758
      %v1028 = vpop.f32.mrf.mxu0
      %v1029 = vadd.f32 %v311, %v1028
      %v1030 = vpop.f32.mrf.mxu0
      %v1031 = vadd.f32 %v311, %v1030
      %1032 = vmatmul.bf16.gmra.mxu0 %v761
      %v1033 = vpop.f32.mrf.mxu0
      %v1034 = vadd.f32 %v311, %v1033
      %v1035 = vpop.f32.mrf.mxu0
      %v1036 = vadd.f32 %v311, %v1035
      %1037 = vmatmul.bf16.gmra.mxu0 %v764
      %v1038 = vpop.f32.mrf.mxu0
      %v1039 = vadd.f32 %v311, %v1038
      %v1040 = vpop.f32.mrf.mxu0
      %v1041 = vadd.f32 %v311, %v1040
      %1042 = vmatmul.bf16.gmra.mxu0 %v767
      %v1043 = vpop.f32.mrf.mxu0
      %v1044 = vadd.f32 %v311, %v1043
      %v1045 = vpop.f32.mrf.mxu0
      %v1046 = vadd.f32 %v311, %v1045
      %1047 = vmatmul.bf16.gmra.mxu0 %v770
      %v1048 = vpop.f32.mrf.mxu0
      %v1049 = vadd.f32 %v311, %v1048
      %v1050 = vpop.f32.mrf.mxu0
      %v1051 = vadd.f32 %v311, %v1050
      %1052 = vmatmul.bf16.gmra.mxu0 %v773
      %v1053 = vpop.f32.mrf.mxu0
      %v1054 = vadd.f32 %v311, %v1053
      %v1055 = vpop.f32.mrf.mxu0
      %v1056 = vadd.f32 %v311, %v1055
      %1057 = vmatmul.bf16.gmra.mxu0 %v776
      %v1058 = vpop.f32.mrf.mxu0
      %v1059 = vadd.f32 %v311, %v1058
      %v1060 = vpop.f32.mrf.mxu0
      %v1061 = vadd.f32 %v311, %v1060
      %1062 = vmatmul.bf16.gmra.mxu0 %v779
      %v1063 = vpop.f32.mrf.mxu0
      %v1064 = vadd.f32 %v311, %v1063
      %v1065 = vpop.f32.mrf.mxu0
      %v1066 = vadd.f32 %v311, %v1065
      %1067 = vmatmul.bf16.gmra.mxu0 %v782
      %v1068 = vpop.f32.mrf.mxu0
      %v1069 = vadd.f32 %v311, %v1068
      %v1070 = vpop.f32.mrf.mxu0
      %v1071 = vadd.f32 %v311, %v1070
      %1072 = vmatmul.bf16.gmra.mxu0 %v785
      %v1073 = vpop.f32.mrf.mxu0
      %v1074 = vadd.f32 %v311, %v1073
      %v1075 = vpop.f32.mrf.mxu0
      %v1076 = vadd.f32 %v311, %v1075
      %1077 = vmatmul.bf16.gmra.mxu0 %v788
      %v1078 = vpop.f32.mrf.mxu0
      %v1079 = vadd.f32 %v311, %v1078
      %v1080 = vpop.f32.mrf.mxu0
      %v1081 = vadd.f32 %v311, %v1080
      %1082 = vmatmul.bf16.gmra.mxu0 %v791
      %v1083 = vpop.f32.mrf.mxu0
      %v1084 = vadd.f32 %v311, %v1083
      %v1085 = vpop.f32.mrf.mxu0
      %v1086 = vadd.f32 %v311, %v1085
      %1087 = vmatmul.bf16.gmra.mxu0 %v794
      %v1088 = vpop.f32.mrf.mxu0
      %v1089 = vadd.f32 %v311, %v1088
      %v1090 = vpop.f32.mrf.mxu0
      %v1091 = vadd.f32 %v311, %v1090
      %1092 = vmatmul.bf16.gmra.mxu0 %v797
      %v1093 = vpop.f32.mrf.mxu0
      %v1094 = vadd.f32 %v311, %v1093
      %v1095 = vpop.f32.mrf.mxu0
      %v1096 = vadd.f32 %v311, %v1095
      %1097 = vmatmul.bf16.gmra.mxu0 %v800
      %v1098 = vpop.f32.mrf.mxu0
      %v1099 = vadd.f32 %v311, %v1098
      %v1100 = vpop.f32.mrf.mxu0
      %v1101 = vadd.f32 %v311, %v1100
      %1102 = vmatmul.bf16.gmra.mxu0 %v803
      %v1103 = vpop.f32.mrf.mxu0
      %v1104 = vadd.f32 %v311, %v1103
      %v1105 = vpop.f32.mrf.mxu0
      %v1106 = vadd.f32 %v311, %v1105
      %1107 = vmatmul.bf16.gmra.mxu0 %v806
      %v1108 = vpop.f32.mrf.mxu0
      %v1109 = vadd.f32 %v311, %v1108
      %v1110 = vpop.f32.mrf.mxu0
      %v1111 = vadd.f32 %v311, %v1110
      %1112 = vmatmul.bf16.gmra.mxu0 %v809
      %v1113 = vpop.f32.mrf.mxu0
      %v1114 = vadd.f32 %v311, %v1113
      %v1115 = vpop.f32.mrf.mxu0
      %v1116 = vadd.f32 %v311, %v1115
      %1117 = vmatmul.bf16.gmra.mxu0 %v812
      %v1118 = vpop.f32.mrf.mxu0
      %v1119 = vadd.f32 %v311, %v1118
      %v1120 = vpop.f32.mrf.mxu0
      %v1121 = vadd.f32 %v311, %v1120
      %1122 = vmatmul.bf16.gmra.mxu0 %v815
      %v1123 = vpop.f32.mrf.mxu0
      %v1124 = vadd.f32 %v311, %v1123
      %v1125 = vpop.f32.mrf.mxu0
      %v1126 = vadd.f32 %v311, %v1125
      %1127 = vmatmul.bf16.gmra.mxu0 %v818
      %v1128 = vpop.f32.mrf.mxu0
      %v1129 = vadd.f32 %v311, %v1128
      %v1130 = vpop.f32.mrf.mxu0
      %v1131 = vadd.f32 %v311, %v1130
      %1132 = vmatmul.bf16.gmra.mxu0 %v821
      %v1133 = vpop.f32.mrf.mxu0
      %v1134 = vadd.f32 %v311, %v1133
      %v1135 = vpop.f32.mrf.mxu0
      %v1136 = vadd.f32 %v311, %v1135
      %1137 = vmatmul.bf16.gmra.mxu0 %v824
      %v1138 = vpop.f32.mrf.mxu0
      %v1139 = vadd.f32 %v311, %v1138
      %v1140 = vpop.f32.mrf.mxu0
      %v1141 = vadd.f32 %v311, %v1140
      %1142 = vmatmul.bf16.gmra.mxu0 %v827
      %v1143 = vpop.f32.mrf.mxu0
      %v1144 = vadd.f32 %v311, %v1143
      %v1145 = vpop.f32.mrf.mxu0
      %v1146 = vadd.f32 %v311, %v1145
      %1147 = vmatmul.bf16.gmra.mxu0 %v830
      %v1148 = vpop.f32.mrf.mxu0
      %v1149 = vadd.f32 %v311, %v1148
      %v1150 = vpop.f32.mrf.mxu0
      %v1151 = vadd.f32 %v311, %v1150
      %1152 = vmatmul.bf16.gmra.mxu0 %v833
      %v1153 = vpop.f32.mrf.mxu0
      %v1154 = vadd.f32 %v311, %v1153
      %v1155 = vpop.f32.mrf.mxu0
      %v1156 = vadd.f32 %v311, %v1155
      %1157 = vmatmul.bf16.gmra.mxu0 %v836
      %v1158 = vpop.f32.mrf.mxu0
      %v1159 = vadd.f32 %v311, %v1158
      %v1160 = vpop.f32.mrf.mxu0
      %v1161 = vadd.f32 %v311, %v1160
      %1162 = vmatmul.bf16.gmra.mxu0 %v839
      %v1163 = vpop.f32.mrf.mxu0
      %v1164 = vadd.f32 %v311, %v1163
      %v1165 = vpop.f32.mrf.mxu0
      %v1166 = vadd.f32 %v311, %v1165
      %1167 = vmatmul.bf16.gmra.mxu0 %v842
      %v1168 = vpop.f32.mrf.mxu0
      %v1169 = vadd.f32 %v311, %v1168
      %v1170 = vpop.f32.mrf.mxu0
      %v1171 = vadd.f32 %v311, %v1170
      %1172 = vdwg.mxu0
      %v1173 = vmax.f32 %v854, 0.0
      %v1174 = vmax.f32 %v856, 0.0
      %v1175 = vmax.f32 %v859, 0.0
      %v1176 = vmax.f32 %v861, 0.0
      %v1177 = vmax.f32 %v864, 0.0
      %v1178 = vmax.f32 %v866, 0.0
      %v1179 = vmax.f32 %v869, 0.0
      %v1180 = vmax.f32 %v871, 0.0
      %v1181 = vmax.f32 %v874, 0.0
      %v1182 = vmax.f32 %v876, 0.0
      %v1183 = vmax.f32 %v879, 0.0
      %v1184 = vmax.f32 %v881, 0.0
      %v1185 = vmax.f32 %v884, 0.0
      %v1186 = vmax.f32 %v886, 0.0
      %v1187 = vmax.f32 %v889, 0.0
      %v1188 = vmax.f32 %v891, 0.0
      %v1189 = vmax.f32 %v894, 0.0
      %v1190 = vmax.f32 %v896, 0.0
      %v1191 = vmax.f32 %v899, 0.0
      %v1192 = vmax.f32 %v901, 0.0
      %v1193 = vmax.f32 %v904, 0.0
      %v1194 = vmax.f32 %v906, 0.0
      %v1195 = vmax.f32 %v909, 0.0
      %v1196 = vmax.f32 %v911, 0.0
      %v1197 = vmax.f32 %v914, 0.0
      %v1198 = vmax.f32 %v916, 0.0
      %v1199 = vmax.f32 %v919, 0.0
      %v1200 = vmax.f32 %v921, 0.0
      %v1201 = vmax.f32 %v924, 0.0
      %v1202 = vmax.f32 %v926, 0.0
      %v1203 = vmax.f32 %v929, 0.0
      %v1204 = vmax.f32 %v931, 0.0
      %v1205 = vmax.f32 %v934, 0.0
      %v1206 = vmax.f32 %v936, 0.0
      %v1207 = vmax.f32 %v939, 0.0
      %v1208 = vmax.f32 %v941, 0.0
      %v1209 = vmax.f32 %v944, 0.0
      %v1210 = vmax.f32 %v946, 0.0
      %v1211 = vmax.f32 %v949, 0.0
      %v1212 = vmax.f32 %v951, 0.0
      %v1213 = vmax.f32 %v954, 0.0
      %v1214 = vmax.f32 %v956, 0.0
      %v1215 = vmax.f32 %v959, 0.0
      %v1216 = vmax.f32 %v961, 0.0
      %v1217 = vmax.f32 %v964, 0.0
      %v1218 = vmax.f32 %v966, 0.0
      %v1219 = vmax.f32 %v969, 0.0
      %v1220 = vmax.f32 %v971, 0.0
      %v1221 = vmax.f32 %v974, 0.0
      %v1222 = vmax.f32 %v976, 0.0
      %v1223 = vmax.f32 %v979, 0.0
      %v1224 = vmax.f32 %v981, 0.0
      %v1225 = vmax.f32 %v984, 0.0
      %v1226 = vmax.f32 %v986, 0.0
      %v1227 = vmax.f32 %v989, 0.0
      %v1228 = vmax.f32 %v991, 0.0
      %v1229 = vmax.f32 %v994, 0.0
      %v1230 = vmax.f32 %v996, 0.0
      %v1231 = vmax.f32 %v999, 0.0
      %v1232 = vmax.f32 %v1001, 0.0
      %v1233 = vmax.f32 %v1004, 0.0
      %v1234 = vmax.f32 %v1006, 0.0
      %v1235 = vmax.f32 %v1009, 0.0
      %v1236 = vmax.f32 %v1011, 0.0
      %v1237 = vmax.f32 %v1014, 0.0
      %v1238 = vmax.f32 %v1016, 0.0
      %v1239 = vmax.f32 %v1019, 0.0
      %v1240 = vmax.f32 %v1021, 0.0
      %v1241 = vmax.f32 %v1024, 0.0
      %v1242 = vmax.f32 %v1026, 0.0
      %v1243 = vmax.f32 %v1029, 0.0
      %v1244 = vmax.f32 %v1031, 0.0
      %v1245 = vmax.f32 %v1034, 0.0
      %v1246 = vmax.f32 %v1036, 0.0
      %v1247 = vmax.f32 %v1039, 0.0
      %v1248 = vmax.f32 %v1041, 0.0
      %v1249 = vmax.f32 %v1044, 0.0
      %v1250 = vmax.f32 %v1046, 0.0
      %v1251 = vmax.f32 %v1049, 0.0
      %v1252 = vmax.f32 %v1051, 0.0
      %v1253 = vmax.f32 %v1054, 0.0
      %v1254 = vmax.f32 %v1056, 0.0
      %v1255 = vmax.f32 %v1059, 0.0
      %v1256 = vmax.f32 %v1061, 0.0
      %v1257 = vmax.f32 %v1064, 0.0
      %v1258 = vmax.f32 %v1066, 0.0
      %v1259 = vmax.f32 %v1069, 0.0
      %v1260 = vmax.f32 %v1071, 0.0
      %v1261 = vmax.f32 %v1074, 0.0
      %v1262 = vmax.f32 %v1076, 0.0
      %v1263 = vmax.f32 %v1079, 0.0
      %v1264 = vmax.f32 %v1081, 0.0
      %v1265 = vmax.f32 %v1084, 0.0
      %v1266 = vmax.f32 %v1086, 0.0
      %v1267 = vmax.f32 %v1089, 0.0
      %v1268 = vmax.f32 %v1091, 0.0
      %v1269 = vmax.f32 %v1094, 0.0
      %v1270 = vmax.f32 %v1096, 0.0
      %v1271 = vmax.f32 %v1099, 0.0
      %v1272 = vmax.f32 %v1101, 0.0
      %v1273 = vmax.f32 %v1104, 0.0
      %v1274 = vmax.f32 %v1106, 0.0
      %v1275 = vmax.f32 %v1109, 0.0
      %v1276 = vmax.f32 %v1111, 0.0
      %v1277 = vmax.f32 %v1114, 0.0
      %v1278 = vmax.f32 %v1116, 0.0
      %v1279 = vmax.f32 %v1119, 0.0
      %v1280 = vmax.f32 %v1121, 0.0
      %v1281 = vmax.f32 %v1124, 0.0
      %v1282 = vmax.f32 %v1126, 0.0
      %v1283 = vmax.f32 %v1129, 0.0
      %v1284 = vmax.f32 %v1131, 0.0
      %v1285 = vmax.f32 %v1134, 0.0
      %v1286 = vmax.f32 %v1136, 0.0
      %v1287 = vmax.f32 %v1139, 0.0
      %v1288 = vmax.f32 %v1141, 0.0
      %v1289 = vmax.f32 %v1144, 0.0
      %v1290 = vmax.f32 %v1146, 0.0
      %v1291 = vmax.f32 %v1149, 0.0
      %v1292 = vmax.f32 %v1151, 0.0
      %v1293 = vmax.f32 %v1154, 0.0
      %v1294 = vmax.f32 %v1156, 0.0
      %v1295 = vmax.f32 %v1159, 0.0
      %v1296 = vmax.f32 %v1161, 0.0
      %v1297 = vmax.f32 %v1164, 0.0
      %v1298 = vmax.f32 %v1166, 0.0
      %v1299 = vmax.f32 %v1169, 0.0
      %v1300 = vmax.f32 %v1171, 0.0
      %v1301 = vpack.c.bf16 %v1173, %v1173
      %v1302 = vpack.c.bf16 %v1174, %v1174
      %v1303 = vpack.c.bf16 %v1175, %v1175
      %v1304 = vpack.c.bf16 %v1176, %v1176
      %v1305 = vpack.c.bf16 %v1177, %v1177
      %v1306 = vpack.c.bf16 %v1178, %v1178
      %v1307 = vpack.c.bf16 %v1179, %v1179
      %v1308 = vpack.c.bf16 %v1180, %v1180
      %v1309 = vpack.c.bf16 %v1181, %v1181
      %v1310 = vpack.c.bf16 %v1182, %v1182
      %v1311 = vpack.c.bf16 %v1183, %v1183
      %v1312 = vpack.c.bf16 %v1184, %v1184
      %v1313 = vpack.c.bf16 %v1185, %v1185
      %v1314 = vpack.c.bf16 %v1186, %v1186
      %v1315 = vpack.c.bf16 %v1187, %v1187
      %v1316 = vpack.c.bf16 %v1188, %v1188
      %v1317 = vpack.c.bf16 %v1189, %v1189
      %v1318 = vpack.c.bf16 %v1190, %v1190
      %v1319 = vpack.c.bf16 %v1191, %v1191
      %v1320 = vpack.c.bf16 %v1192, %v1192
      %v1321 = vpack.c.bf16 %v1193, %v1193
      %v1322 = vpack.c.bf16 %v1194, %v1194
      %v1323 = vpack.c.bf16 %v1195, %v1195
      %v1324 = vpack.c.bf16 %v1196, %v1196
      %v1325 = vpack.c.bf16 %v1197, %v1197
      %v1326 = vpack.c.bf16 %v1198, %v1198
      %v1327 = vpack.c.bf16 %v1199, %v1199
      %v1328 = vpack.c.bf16 %v1200, %v1200
      %v1329 = vpack.c.bf16 %v1201, %v1201
      %v1330 = vpack.c.bf16 %v1202, %v1202
      %v1331 = vpack.c.bf16 %v1203, %v1203
      %v1332 = vpack.c.bf16 %v1204, %v1204
      %v1333 = vpack.c.bf16 %v1205, %v1205
      %v1334 = vpack.c.bf16 %v1206, %v1206
      %v1335 = vpack.c.bf16 %v1207, %v1207
      %v1336 = vpack.c.bf16 %v1208, %v1208
      %v1337 = vpack.c.bf16 %v1209, %v1209
      %v1338 = vpack.c.bf16 %v1210, %v1210
      %v1339 = vpack.c.bf16 %v1211, %v1211
      %v1340 = vpack.c.bf16 %v1212, %v1212
      %v1341 = vpack.c.bf16 %v1213, %v1213
      %v1342 = vpack.c.bf16 %v1214, %v1214
      %v1343 = vpack.c.bf16 %v1215, %v1215
      %v1344 = vpack.c.bf16 %v1216, %v1216
      %v1345 = vpack.c.bf16 %v1217, %v1217
      %v1346 = vpack.c.bf16 %v1218, %v1218
      %v1347 = vpack.c.bf16 %v1219, %v1219
      %v1348 = vpack.c.bf16 %v1220, %v1220
      %v1349 = vpack.c.bf16 %v1221, %v1221
      %v1350 = vpack.c.bf16 %v1222, %v1222
      %v1351 = vpack.c.bf16 %v1223, %v1223
      %v1352 = vpack.c.bf16 %v1224, %v1224
      %v1353 = vpack.c.bf16 %v1225, %v1225
      %v1354 = vpack.c.bf16 %v1226, %v1226
      %v1355 = vpack.c.bf16 %v1227, %v1227
      %v1356 = vpack.c.bf16 %v1228, %v1228
      %v1357 = vpack.c.bf16 %v1229, %v1229
      %v1358 = vpack.c.bf16 %v1230, %v1230
      %v1359 = vpack.c.bf16 %v1231, %v1231
      %v1360 = vpack.c.bf16 %v1232, %v1232
      %v1361 = vpack.c.bf16 %v1233, %v1233
      %v1362 = vpack.c.bf16 %v1234, %v1234
      %v1363 = vpack.c.bf16 %v1235, %v1235
      %v1364 = vpack.c.bf16 %v1236, %v1236
      %v1365 = vpack.c.bf16 %v1237, %v1237
      %v1366 = vpack.c.bf16 %v1238, %v1238
      %v1367 = vpack.c.bf16 %v1239, %v1239
      %v1368 = vpack.c.bf16 %v1240, %v1240
      %v1369 = vpack.c.bf16 %v1241, %v1241
      %v1370 = vpack.c.bf16 %v1242, %v1242
      %v1371 = vpack.c.bf16 %v1243, %v1243
      %v1372 = vpack.c.bf16 %v1244, %v1244
      %v1373 = vpack.c.bf16 %v1245, %v1245
      %v1374 = vpack.c.bf16 %v1246, %v1246
      %v1375 = vpack.c.bf16 %v1247, %v1247
      %v1376 = vpack.c.bf16 %v1248, %v1248
      %v1377 = vpack.c.bf16 %v1249, %v1249
      %v1378 = vpack.c.bf16 %v1250, %v1250
      %v1379 = vpack.c.bf16 %v1251, %v1251
      %v1380 = vpack.c.bf16 %v1252, %v1252
      %v1381 = vpack.c.bf16 %v1253, %v1253
      %v1382 = vpack.c.bf16 %v1254, %v1254
      %v1383 = vpack.c.bf16 %v1255, %v1255
      %v1384 = vpack.c.bf16 %v1256, %v1256
      %v1385 = vpack.c.bf16 %v1257, %v1257
      %v1386 = vpack.c.bf16 %v1258, %v1258
      %v1387 = vpack.c.bf16 %v1259, %v1259
      %v1388 = vpack.c.bf16 %v1260, %v1260
      %v1389 = vpack.c.bf16 %v1261, %v1261
      %v1390 = vpack.c.bf16 %v1262, %v1262
      %v1391 = vpack.c.bf16 %v1263, %v1263
      %v1392 = vpack.c.bf16 %v1264, %v1264
      %v1393 = vpack.c.bf16 %v1265, %v1265
      %v1394 = vpack.c.bf16 %v1266, %v1266
      %v1395 = vpack.c.bf16 %v1267, %v1267
      %v1396 = vpack.c.bf16 %v1268, %v1268
      %v1397 = vpack.c.bf16 %v1269, %v1269
      %v1398 = vpack.c.bf16 %v1270, %v1270
      %v1399 = vpack.c.bf16 %v1271, %v1271
      %v1400 = vpack.c.bf16 %v1272, %v1272
      %v1401 = vpack.c.bf16 %v1273, %v1273
      %v1402 = vpack.c.bf16 %v1274, %v1274
      %v1403 = vpack.c.bf16 %v1275, %v1275
      %v1404 = vpack.c.bf16 %v1276, %v1276
      %v1405 = vpack.c.bf16 %v1277, %v1277
      %v1406 = vpack.c.bf16 %v1278, %v1278
      %v1407 = vpack.c.bf16 %v1279, %v1279
      %v1408 = vpack.c.bf16 %v1280, %v1280
      %v1409 = vpack.c.bf16 %v1281, %v1281
      %v1410 = vpack.c.bf16 %v1282, %v1282
      %v1411 = vpack.c.bf16 %v1283, %v1283
      %v1412 = vpack.c.bf16 %v1284, %v1284
      %v1413 = vpack.c.bf16 %v1285, %v1285
      %v1414 = vpack.c.bf16 %v1286, %v1286
      %v1415 = vpack.c.bf16 %v1287, %v1287
      %v1416 = vpack.c.bf16 %v1288, %v1288
      %v1417 = vpack.c.bf16 %v1289, %v1289
      %v1418 = vpack.c.bf16 %v1290, %v1290
      %v1419 = vpack.c.bf16 %v1291, %v1291
      %v1420 = vpack.c.bf16 %v1292, %v1292
      %v1421 = vpack.c.bf16 %v1293, %v1293
      %v1422 = vpack.c.bf16 %v1294, %v1294
      %v1423 = vpack.c.bf16 %v1295, %v1295
      %v1424 = vpack.c.bf16 %v1296, %v1296
      %v1425 = vpack.c.bf16 %v1297, %v1297
      %v1426 = vpack.c.bf16 %v1298, %v1298
      %v1427 = vpack.c.bf16 %v1299, %v1299
      %v1428 = vpack.c.bf16 %v1300, %v1300
      %vm1429 = vcmask 257024
      %1430 = vst.msk [vmem:[%s172] sm:$0xf] %vm1429, %v1301
      %1431 = vst.msk [vmem:[%s172 + $0x4] sm:$0xf] %vm1429, %v1302
      %1432 = vst.msk [vmem:[%s172 + $0x8] sm:$0xf] %vm1429, %v1303
      %1433 = vst.msk [vmem:[%s172 + $0xc] sm:$0xf] %vm1429, %v1304
      %1434 = vst.msk [vmem:[%s172 + $0x10] sm:$0xf] %vm1429, %v1305
      %1435 = vst.msk [vmem:[%s172 + $0x14] sm:$0xf] %vm1429, %v1306
      %1436 = vst.msk [vmem:[%s172 + $0x18] sm:$0xf] %vm1429, %v1307
      %1437 = vst.msk [vmem:[%s172 + $0x1c] sm:$0xf] %vm1429, %v1308
      %1438 = vst.msk [vmem:[%s172 + $0x20] sm:$0xf] %vm1429, %v1309
      %1439 = vst.msk [vmem:[%s172 + $0x24] sm:$0xf] %vm1429, %v1310
      %1440 = vst.msk [vmem:[%s172 + $0x28] sm:$0xf] %vm1429, %v1311
      %1441 = vst.msk [vmem:[%s172 + $0x2c] sm:$0xf] %vm1429, %v1312
      %1442 = vst.msk [vmem:[%s172 + $0x30] sm:$0xf] %vm1429, %v1313
      %1443 = vst.msk [vmem:[%s172 + $0x34] sm:$0xf] %vm1429, %v1314
      %1444 = vst.msk [vmem:[%s172 + $0x38] sm:$0xf] %vm1429, %v1315
      %1445 = vst.msk [vmem:[%s172 + $0x3c] sm:$0xf] %vm1429, %v1316
      %1446 = vst.msk [vmem:[%s172 + $0x40] sm:$0xf] %vm1429, %v1317
      %1447 = vst.msk [vmem:[%s172 + $0x44] sm:$0xf] %vm1429, %v1318
      %1448 = vst.msk [vmem:[%s172 + $0x48] sm:$0xf] %vm1429, %v1319
      %1449 = vst.msk [vmem:[%s172 + $0x4c] sm:$0xf] %vm1429, %v1320
      %1450 = vst.msk [vmem:[%s172 + $0x50] sm:$0xf] %vm1429, %v1321
      %1451 = vst.msk [vmem:[%s172 + $0x54] sm:$0xf] %vm1429, %v1322
      %1452 = vst.msk [vmem:[%s172 + $0x58] sm:$0xf] %vm1429, %v1323
      %1453 = vst.msk [vmem:[%s172 + $0x5c] sm:$0xf] %vm1429, %v1324
      %1454 = vst.msk [vmem:[%s172 + $0x60] sm:$0xf] %vm1429, %v1325
      %1455 = vst.msk [vmem:[%s172 + $0x64] sm:$0xf] %vm1429, %v1326
      %1456 = vst.msk [vmem:[%s172 + $0x68] sm:$0xf] %vm1429, %v1327
      %1457 = vst.msk [vmem:[%s172 + $0x6c] sm:$0xf] %vm1429, %v1328
      %1458 = vst.msk [vmem:[%s172 + $0x70] sm:$0xf] %vm1429, %v1329
      %1459 = vst.msk [vmem:[%s172 + $0x74] sm:$0xf] %vm1429, %v1330
      %1460 = vst.msk [vmem:[%s172 + $0x78] sm:$0xf] %vm1429, %v1331
      %1461 = vst.msk [vmem:[%s172 + $0x7c] sm:$0xf] %vm1429, %v1332
      %1462 = vst.msk [vmem:[%s172 + $0x80] sm:$0xf] %vm1429, %v1333
      %1463 = vst.msk [vmem:[%s172 + $0x84] sm:$0xf] %vm1429, %v1334
      %1464 = vst.msk [vmem:[%s172 + $0x88] sm:$0xf] %vm1429, %v1335
      %1465 = vst.msk [vmem:[%s172 + $0x8c] sm:$0xf] %vm1429, %v1336
      %1466 = vst.msk [vmem:[%s172 + $0x90] sm:$0xf] %vm1429, %v1337
      %1467 = vst.msk [vmem:[%s172 + $0x94] sm:$0xf] %vm1429, %v1338
      %1468 = vst.msk [vmem:[%s172 + $0x98] sm:$0xf] %vm1429, %v1339
      %1469 = vst.msk [vmem:[%s172 + $0x9c] sm:$0xf] %vm1429, %v1340
      %1470 = vst.msk [vmem:[%s172 + $0xa0] sm:$0xf] %vm1429, %v1341
      %1471 = vst.msk [vmem:[%s172 + $0xa4] sm:$0xf] %vm1429, %v1342
      %1472 = vst.msk [vmem:[%s172 + $0xa8] sm:$0xf] %vm1429, %v1343
      %1473 = vst.msk [vmem:[%s172 + $0xac] sm:$0xf] %vm1429, %v1344
      %1474 = vst.msk [vmem:[%s172 + $0xb0] sm:$0xf] %vm1429, %v1345
      %1475 = vst.msk [vmem:[%s172 + $0xb4] sm:$0xf] %vm1429, %v1346
      %1476 = vst.msk [vmem:[%s172 + $0xb8] sm:$0xf] %vm1429, %v1347
      %1477 = vst.msk [vmem:[%s172 + $0xbc] sm:$0xf] %vm1429, %v1348
      %1478 = vst.msk [vmem:[%s172 + $0xc0] sm:$0xf] %vm1429, %v1349
      %1479 = vst.msk [vmem:[%s172 + $0xc4] sm:$0xf] %vm1429, %v1350
      %1480 = vst.msk [vmem:[%s172 + $0xc8] sm:$0xf] %vm1429, %v1351
      %1481 = vst.msk [vmem:[%s172 + $0xcc] sm:$0xf] %vm1429, %v1352
      %1482 = vst.msk [vmem:[%s172 + $0xd0] sm:$0xf] %vm1429, %v1353
      %1483 = vst.msk [vmem:[%s172 + $0xd4] sm:$0xf] %vm1429, %v1354
      %1484 = vst.msk [vmem:[%s172 + $0xd8] sm:$0xf] %vm1429, %v1355
      %1485 = vst.msk [vmem:[%s172 + $0xdc] sm:$0xf] %vm1429, %v1356
      %1486 = vst.msk [vmem:[%s172 + $0xe0] sm:$0xf] %vm1429, %v1357
      %1487 = vst.msk [vmem:[%s172 + $0xe4] sm:$0xf] %vm1429, %v1358
      %1488 = vst.msk [vmem:[%s172 + $0xe8] sm:$0xf] %vm1429, %v1359
      %1489 = vst.msk [vmem:[%s172 + $0xec] sm:$0xf] %vm1429, %v1360
      %1490 = vst.msk [vmem:[%s172 + $0xf0] sm:$0xf] %vm1429, %v1361
      %1491 = vst.msk [vmem:[%s172 + $0xf4] sm:$0xf] %vm1429, %v1362
      %1492 = vst.msk [vmem:[%s172 + $0xf8] sm:$0xf] %vm1429, %v1363
      %1493 = vst.msk [vmem:[%s172 + $0xfc] sm:$0xf] %vm1429, %v1364
      %1494 = vst.msk [vmem:[%s172 + $0x100] sm:$0xf] %vm1429, %v1365
      %1495 = vst.msk [vmem:[%s172 + $0x104] sm:$0xf] %vm1429, %v1366
      %1496 = vst.msk [vmem:[%s172 + $0x108] sm:$0xf] %vm1429, %v1367
      %1497 = vst.msk [vmem:[%s172 + $0x10c] sm:$0xf] %vm1429, %v1368
      %1498 = vst.msk [vmem:[%s172 + $0x110] sm:$0xf] %vm1429, %v1369
      %1499 = vst.msk [vmem:[%s172 + $0x114] sm:$0xf] %vm1429, %v1370
      %1500 = vst.msk [vmem:[%s172 + $0x118] sm:$0xf] %vm1429, %v1371
      %1501 = vst.msk [vmem:[%s172 + $0x11c] sm:$0xf] %vm1429, %v1372
      %1502 = vst.msk [vmem:[%s172 + $0x120] sm:$0xf] %vm1429, %v1373
      %1503 = vst.msk [vmem:[%s172 + $0x124] sm:$0xf] %vm1429, %v1374
      %1504 = vst.msk [vmem:[%s172 + $0x128] sm:$0xf] %vm1429, %v1375
      %1505 = vst.msk [vmem:[%s172 + $0x12c] sm:$0xf] %vm1429, %v1376
      %1506 = vst.msk [vmem:[%s172 + $0x130] sm:$0xf] %vm1429, %v1377
      %1507 = vst.msk [vmem:[%s172 + $0x134] sm:$0xf] %vm1429, %v1378
      %1508 = vst.msk [vmem:[%s172 + $0x138] sm:$0xf] %vm1429, %v1379
      %1509 = vst.msk [vmem:[%s172 + $0x13c] sm:$0xf] %vm1429, %v1380
      %1510 = vst.msk [vmem:[%s172 + $0x140] sm:$0xf] %vm1429, %v1381
      %1511 = vst.msk [vmem:[%s172 + $0x144] sm:$0xf] %vm1429, %v1382
      %1512 = vst.msk [vmem:[%s172 + $0x148] sm:$0xf] %vm1429, %v1383
      %1513 = vst.msk [vmem:[%s172 + $0x14c] sm:$0xf] %vm1429, %v1384
      %1514 = vst.msk [vmem:[%s172 + $0x150] sm:$0xf] %vm1429, %v1385
      %1515 = vst.msk [vmem:[%s172 + $0x154] sm:$0xf] %vm1429, %v1386
      %1516 = vst.msk [vmem:[%s172 + $0x158] sm:$0xf] %vm1429, %v1387
      %1517 = vst.msk [vmem:[%s172 + $0x15c] sm:$0xf] %vm1429, %v1388
      %1518 = vst.msk [vmem:[%s172 + $0x160] sm:$0xf] %vm1429, %v1389
      %1519 = vst.msk [vmem:[%s172 + $0x164] sm:$0xf] %vm1429, %v1390
      %1520 = vst.msk [vmem:[%s172 + $0x168] sm:$0xf] %vm1429, %v1391
      %1521 = vst.msk [vmem:[%s172 + $0x16c] sm:$0xf] %vm1429, %v1392
      %1522 = vst.msk [vmem:[%s172 + $0x170] sm:$0xf] %vm1429, %v1393
      %1523 = vst.msk [vmem:[%s172 + $0x174] sm:$0xf] %vm1429, %v1394
      %1524 = vst.msk [vmem:[%s172 + $0x178] sm:$0xf] %vm1429, %v1395
      %1525 = vst.msk [vmem:[%s172 + $0x17c] sm:$0xf] %vm1429, %v1396
      %1526 = vst.msk [vmem:[%s172 + $0x180] sm:$0xf] %vm1429, %v1397
      %1527 = vst.msk [vmem:[%s172 + $0x184] sm:$0xf] %vm1429, %v1398
      %1528 = vst.msk [vmem:[%s172 + $0x188] sm:$0xf] %vm1429, %v1399
      %1529 = vst.msk [vmem:[%s172 + $0x18c] sm:$0xf] %vm1429, %v1400
      %1530 = vst.msk [vmem:[%s172 + $0x190] sm:$0xf] %vm1429, %v1401
      %1531 = vst.msk [vmem:[%s172 + $0x194] sm:$0xf] %vm1429, %v1402
      %1532 = vst.msk [vmem:[%s172 + $0x198] sm:$0xf] %vm1429, %v1403
      %1533 = vst.msk [vmem:[%s172 + $0x19c] sm:$0xf] %vm1429, %v1404
      %1534 = vst.msk [vmem:[%s172 + $0x1a0] sm:$0xf] %vm1429, %v1405
      %1535 = vst.msk [vmem:[%s172 + $0x1a4] sm:$0xf] %vm1429, %v1406
      %1536 = vst.msk [vmem:[%s172 + $0x1a8] sm:$0xf] %vm1429, %v1407
      %1537 = vst.msk [vmem:[%s172 + $0x1ac] sm:$0xf] %vm1429, %v1408
      %1538 = vst.msk [vmem:[%s172 + $0x1b0] sm:$0xf] %vm1429, %v1409
      %1539 = vst.msk [vmem:[%s172 + $0x1b4] sm:$0xf] %vm1429, %v1410
      %1540 = vst.msk [vmem:[%s172 + $0x1b8] sm:$0xf] %vm1429, %v1411
      %1541 = vst.msk [vmem:[%s172 + $0x1bc] sm:$0xf] %vm1429, %v1412
      %1542 = vst.msk [vmem:[%s172 + $0x1c0] sm:$0xf] %vm1429, %v1413
      %1543 = vst.msk [vmem:[%s172 + $0x1c4] sm:$0xf] %vm1429, %v1414
      %1544 = vst.msk [vmem:[%s172 + $0x1c8] sm:$0xf] %vm1429, %v1415
      %1545 = vst.msk [vmem:[%s172 + $0x1cc] sm:$0xf] %vm1429, %v1416
      %1546 = vst.msk [vmem:[%s172 + $0x1d0] sm:$0xf] %vm1429, %v1417
      %1547 = vst.msk [vmem:[%s172 + $0x1d4] sm:$0xf] %vm1429, %v1418
      %1548 = vst.msk [vmem:[%s172 + $0x1d8] sm:$0xf] %vm1429, %v1419
      %1549 = vst.msk [vmem:[%s172 + $0x1dc] sm:$0xf] %vm1429, %v1420
      %1550 = vst.msk [vmem:[%s172 + $0x1e0] sm:$0xf] %vm1429, %v1421
      %1551 = vst.msk [vmem:[%s172 + $0x1e4] sm:$0xf] %vm1429, %v1422
      %1552 = vst.msk [vmem:[%s172 + $0x1e8] sm:$0xf] %vm1429, %v1423
      %1553 = vst.msk [vmem:[%s172 + $0x1ec] sm:$0xf] %vm1429, %v1424
      %1554 = vst.msk [vmem:[%s172 + $0x1f0] sm:$0xf] %vm1429, %v1425
      %1555 = vst.msk [vmem:[%s172 + $0x1f4] sm:$0xf] %vm1429, %v1426
      %1556 = vst.msk [vmem:[%s172 + $0x1f8] sm:$0xf] %vm1429, %v1427
      %1557 = vst.msk [vmem:[%s172 + $0x1fc] sm:$0xf] %vm1429, %v1428
      %s1558 = smul.u32 128, %s14
      %p1559 = scmp.lt.s32.totalorder %s1558, 255
      %s1560 = scalar_select %p1559, %s1558, 255
      %s1561 = smul.addr %s1560, 4
      %s1562 = scalar_lea.vmem %s3, %s1561
      // Predicated region
      $region33: #{forward.9} parent=31 // pred_check
        %p1563 = pneg %p100
      $region34: #{forward.9} parent=31 // pred_check_branch
        %1565 = sbr.rel (%p1563) target = $region36
      $region35: #{forward.9} parent=31 // pred_region
        %s1566 = smul.u32 128, %s14
      $region36: #{forward.9} parent=31 // pred_fallthru
        _
    $region32: #{forward.9} parent=5 // pred_fallthru
      _
    %p1567 = scmp.le.s32.totalorder 2, %s9
    // Predicated region
    $region37: #{forward.9} parent=5 // pred_check
      %p1568 = pneg %p1567
    $region38: #{forward.9} parent=5 // pred_check_branch
      %1570 = sbr.rel (%p1568) target = $region40
    $region39: #{forward.9} parent=5 // pred_region
      %s1571 = ssub.s32 %s9, 2
      // Predicated region
      $region41: #{forward.9} parent=39 // pred_check
        %p1572 = pneg %p106
      $region42: #{forward.9} parent=39 // pred_check_branch
        %1574 = sbr.rel (%p1572) target = $region44
      $region43: #{forward.9} parent=39 // pred_region
        %s1575 = smul.u32 128, %s15
        %p1576 = scmp.lt.s32.totalorder %s1575, 255
        %s1577 = scalar_select %p1576, %s1575, 255
        %s1578 = smul.addr %s1577, 4
        %s1579 = scalar_lea.vmem %s3, %s1578
      $region44: #{forward.9} parent=39 // pred_fallthru
        _
    $region40: #{forward.9} parent=5 // pred_fallthru
      _
  $region6: #{forward.9} parent=0 // loop_footer
    %s13 = sadd.s32 1, %s9
  $region7: #{forward.9} parent=0 // loop_footer_branch
    %8 = sbr.rel target = $region3
  $region8: #{forward.9} parent=0 // loop_exit
    _

// kernel: forward.10
$region0: #{forward.10}
  #allocation0 [shape = 'u32[]', space=smem, size = 0x4, offset = 0x4, fixed_abs, tag = 'smem constant byte address 0x4 - core index']
  #allocation1 [shape = 'u32[72,128]{1,0:T(1,128)}', space=vmem, size = 0x9000, scoped, tag = 'internal scratch']
  %s0 = inlined_call_operand.vmem [shape: bf16[512,512], index: 0, kind: input, shape index: {}]
  %s1 = inlined_call_operand.vmem [shape: bf16[512,32], index: 1, kind: input, shape index: {}]
  %s2 = inlined_call_operand.vmem [shape: f32[1,32], index: 2, kind: input, shape index: {}]
  %s3 = inlined_call_operand.vmem [shape: bf16[512,32], index: 3, kind: output, shape index: {}]
  %s4 = sld [smem:[#allocation0]]
  $region22: #{forward.10} parent=0
    _
  %s6 = ssub.s32 1, %s4
  %s7 = scalar_select 0, %s6, %s4
  // Predicated region
  $region2: #{forward.10} parent=0 // pred_check
    _
  $region3: #{forward.10} parent=0 // pred_check_branch
    %9 = sbr.rel (0) target = $region5
  $region4: #{forward.10} parent=0 // pred_region
    _
  $region5: #{forward.10} parent=0 // pred_fallthru
    _
  // Predicated region
  $region6: #{forward.10} parent=0 // pred_check
    _
  $region7: #{forward.10} parent=0 // pred_check_branch
    %11 = sbr.rel (0) target = $region9
  $region8: #{forward.10} parent=0 // pred_region
    _
  $region9: #{forward.10} parent=0 // pred_fallthru
    _
  // Predicated region
  $region10: #{forward.10} parent=0 // pred_check
    _
  $region11: #{forward.10} parent=0 // pred_check_branch
    %13 = sbr.rel (0) target = $region13
  $region12: #{forward.10} parent=0 // pred_region
    _
  $region13: #{forward.10} parent=0 // pred_fallthru
    _
  %v14 = vld [vmem:[%s0] sm:$0xff]
  %v15 = vld [vmem:[%s0 + $0x8] sm:$0xff]
  %v16 = vld [vmem:[%s0 + $0x10] sm:$0xff]
  %v17 = vld [vmem:[%s0 + $0x18] sm:$0xff]
  %v18 = vld [vmem:[%s0 + $0x20] sm:$0xff]
  %v19 = vld [vmem:[%s0 + $0x28] sm:$0xff]
  %v20 = vld [vmem:[%s0 + $0x30] sm:$0xff]
  %v21 = vld [vmem:[%s0 + $0x38] sm:$0xff]
  %v22 = vld [vmem:[%s0 + $0x40] sm:$0xff]
  %v23 = vld [vmem:[%s0 + $0x48] sm:$0xff]
  %v24 = vld [vmem:[%s0 + $0x50] sm:$0xff]
  %v25 = vld [vmem:[%s0 + $0x58] sm:$0xff]
  %v26 = vld [vmem:[%s0 + $0x60] sm:$0xff]
  %v27 = vld [vmem:[%s0 + $0x68] sm:$0xff]
  %v28 = vld [vmem:[%s0 + $0x70] sm:$0xff]
  %v29 = vld [vmem:[%s0 + $0x78] sm:$0xff]
  %v30 = vld [vmem:[%s0 + $0x80] sm:$0xff]
  %v31 = vld [vmem:[%s0 + $0x88] sm:$0xff]
  %v32 = vld [vmem:[%s0 + $0x90] sm:$0xff]
  %v33 = vld [vmem:[%s0 + $0x98] sm:$0xff]
  %v34 = vld [vmem:[%s0 + $0xa0] sm:$0xff]
  %v35 = vld [vmem:[%s0 + $0xa8] sm:$0xff]
  %v36 = vld [vmem:[%s0 + $0xb0] sm:$0xff]
  %v37 = vld [vmem:[%s0 + $0xb8] sm:$0xff]
  %v38 = vld [vmem:[%s0 + $0xc0] sm:$0xff]
  %v39 = vld [vmem:[%s0 + $0xc8] sm:$0xff]
  %v40 = vld [vmem:[%s0 + $0xd0] sm:$0xff]
  %v41 = vld [vmem:[%s0 + $0xd8] sm:$0xff]
  %v42 = vld [vmem:[%s0 + $0xe0] sm:$0xff]
  %v43 = vld [vmem:[%s0 + $0xe8] sm:$0xff]
  %v44 = vld [vmem:[%s0 + $0xf0] sm:$0xff]
  %v45 = vld [vmem:[%s0 + $0xf8] sm:$0xff]
  %v46 = vld [vmem:[%s0 + $0x100] sm:$0xff]
  %v47 = vld [vmem:[%s0 + $0x108] sm:$0xff]
  %v48 = vld [vmem:[%s0 + $0x110] sm:$0xff]
  %v49 = vld [vmem:[%s0 + $0x118] sm:$0xff]
  %v50 = vld [vmem:[%s0 + $0x120] sm:$0xff]
  %v51 = vld [vmem:[%s0 + $0x128] sm:$0xff]
  %v52 = vld [vmem:[%s0 + $0x130] sm:$0xff]
  %v53 = vld [vmem:[%s0 + $0x138] sm:$0xff]
  %v54 = vld [vmem:[%s0 + $0x140] sm:$0xff]
  %v55 = vld [vmem:[%s0 + $0x148] sm:$0xff]
  %v56 = vld [vmem:[%s0 + $0x150] sm:$0xff]
  %v57 = vld [vmem:[%s0 + $0x158] sm:$0xff]
  %v58 = vld [vmem:[%s0 + $0x160] sm:$0xff]
  %v59 = vld [vmem:[%s0 + $0x168] sm:$0xff]
  %v60 = vld [vmem:[%s0 + $0x170] sm:$0xff]
  %v61 = vld [vmem:[%s0 + $0x178] sm:$0xff]
  %v62 = vld [vmem:[%s0 + $0x180] sm:$0xff]
  %v63 = vld [vmem:[%s0 + $0x188] sm:$0xff]
  %v64 = vld [vmem:[%s0 + $0x190] sm:$0xff]
  %v65 = vld [vmem:[%s0 + $0x198] sm:$0xff]
  %v66 = vld [vmem:[%s0 + $0x1a0] sm:$0xff]
  %v67 = vld [vmem:[%s0 + $0x1a8] sm:$0xff]
  %v68 = vld [vmem:[%s0 + $0x1b0] sm:$0xff]
  %v69 = vld [vmem:[%s0 + $0x1b8] sm:$0xff]
  %v70 = vld [vmem:[%s0 + $0x1c0] sm:$0xff]
  %v71 = vld [vmem:[%s0 + $0x1c8] sm:$0xff]
  %v72 = vld [vmem:[%s0 + $0x1d0] sm:$0xff]
  %v73 = vld [vmem:[%s0 + $0x1d8] sm:$0xff]
  %v74 = vld [vmem:[%s0 + $0x1e0] sm:$0xff]
  %v75 = vld [vmem:[%s0 + $0x1e8] sm:$0xff]
  %v76 = vld [vmem:[%s0 + $0x1f0] sm:$0xff]
  %v77 = vld [vmem:[%s0 + $0x1f8] sm:$0xff]
  %v78 = vld [vmem:[%s0 + $0x200] sm:$0xff]
  %v79 = vld [vmem:[%s0 + $0x208] sm:$0xff]
  %v80 = vld [vmem:[%s0 + $0x210] sm:$0xff]
  %v81 = vld [vmem:[%s0 + $0x218] sm:$0xff]
  %v82 = vld [vmem:[%s0 + $0x220] sm:$0xff]
  %v83 = vld [vmem:[%s0 + $0x228] sm:$0xff]
  %v84 = vld [vmem:[%s0 + $0x230] sm:$0xff]
  %v85 = vld [vmem:[%s0 + $0x238] sm:$0xff]
  %v86 = vld [vmem:[%s0 + $0x240] sm:$0xff]
  %v87 = vld [vmem:[%s0 + $0x248] sm:$0xff]
  %v88 = vld [vmem:[%s0 + $0x250] sm:$0xff]
  %v89 = vld [vmem:[%s0 + $0x258] sm:$0xff]
  %v90 = vld [vmem:[%s0 + $0x260] sm:$0xff]
  %v91 = vld [vmem:[%s0 + $0x268] sm:$0xff]
  %v92 = vld [vmem:[%s0 + $0x270] sm:$0xff]
  %v93 = vld [vmem:[%s0 + $0x278] sm:$0xff]
  %v94 = vld [vmem:[%s0 + $0x280] sm:$0xff]
  %v95 = vld [vmem:[%s0 + $0x288] sm:$0xff]
  %v96 = vld [vmem:[%s0 + $0x290] sm:$0xff]
  %v97 = vld [vmem:[%s0 + $0x298] sm:$0xff]
  %v98 = vld [vmem:[%s0 + $0x2a0] sm:$0xff]
  %v99 = vld [vmem:[%s0 + $0x2a8] sm:$0xff]
  %v100 = vld [vmem:[%s0 + $0x2b0] sm:$0xff]
  %v101 = vld [vmem:[%s0 + $0x2b8] sm:$0xff]
  %v102 = vld [vmem:[%s0 + $0x2c0] sm:$0xff]
  %v103 = vld [vmem:[%s0 + $0x2c8] sm:$0xff]
  %v104 = vld [vmem:[%s0 + $0x2d0] sm:$0xff]
  %v105 = vld [vmem:[%s0 + $0x2d8] sm:$0xff]
  %v106 = vld [vmem:[%s0 + $0x2e0] sm:$0xff]
  %v107 = vld [vmem:[%s0 + $0x2e8] sm:$0xff]
  %v108 = vld [vmem:[%s0 + $0x2f0] sm:$0xff]
  %v109 = vld [vmem:[%s0 + $0x2f8] sm:$0xff]
  %v110 = vld [vmem:[%s0 + $0x300] sm:$0xff]
  %v111 = vld [vmem:[%s0 + $0x308] sm:$0xff]
  %v112 = vld [vmem:[%s0 + $0x310] sm:$0xff]
  %v113 = vld [vmem:[%s0 + $0x318] sm:$0xff]
  %v114 = vld [vmem:[%s0 + $0x320] sm:$0xff]
  %v115 = vld [vmem:[%s0 + $0x328] sm:$0xff]
  %v116 = vld [vmem:[%s0 + $0x330] sm:$0xff]
  %v117 = vld [vmem:[%s0 + $0x338] sm:$0xff]
  %v118 = vld [vmem:[%s0 + $0x340] sm:$0xff]
  %v119 = vld [vmem:[%s0 + $0x348] sm:$0xff]
  %v120 = vld [vmem:[%s0 + $0x350] sm:$0xff]
  %v121 = vld [vmem:[%s0 + $0x358] sm:$0xff]
  %v122 = vld [vmem:[%s0 + $0x360] sm:$0xff]
  %v123 = vld [vmem:[%s0 + $0x368] sm:$0xff]
  %v124 = vld [vmem:[%s0 + $0x370] sm:$0xff]
  %v125 = vld [vmem:[%s0 + $0x378] sm:$0xff]
  %v126 = vld [vmem:[%s0 + $0x380] sm:$0xff]
  %v127 = vld [vmem:[%s0 + $0x388] sm:$0xff]
  %v128 = vld [vmem:[%s0 + $0x390] sm:$0xff]
  %v129 = vld [vmem:[%s0 + $0x398] sm:$0xff]
  %v130 = vld [vmem:[%s0 + $0x3a0] sm:$0xff]
  %v131 = vld [vmem:[%s0 + $0x3a8] sm:$0xff]
  %v132 = vld [vmem:[%s0 + $0x3b0] sm:$0xff]
  %v133 = vld [vmem:[%s0 + $0x3b8] sm:$0xff]
  %v134 = vld [vmem:[%s0 + $0x3c0] sm:$0xff]
  %v135 = vld [vmem:[%s0 + $0x3c8] sm:$0xff]
  %v136 = vld [vmem:[%s0 + $0x3d0] sm:$0xff]
  %v137 = vld [vmem:[%s0 + $0x3d8] sm:$0xff]
  %v138 = vld [vmem:[%s0 + $0x3e0] sm:$0xff]
  %v139 = vld [vmem:[%s0 + $0x3e8] sm:$0xff]
  %v140 = vld [vmem:[%s0 + $0x3f0] sm:$0xff]
  %v141 = vld [vmem:[%s0 + $0x3f8] sm:$0xff]
  %v142 = vld [vmem:[%s1] sm:$0xf]
  %v143 = vld [vmem:[%s1 + $0x4] sm:$0xf]
  %v144 = vld [vmem:[%s1 + $0x8] sm:$0xf]
  %v145 = vld [vmem:[%s1 + $0xc] sm:$0xf]
  %v146 = vld [vmem:[%s1 + $0x10] sm:$0xf]
  %v147 = vld [vmem:[%s1 + $0x14] sm:$0xf]
  %v148 = vld [vmem:[%s1 + $0x18] sm:$0xf]
  %v149 = vld [vmem:[%s1 + $0x1c] sm:$0xf]
  %v150 = vld [vmem:[%s1 + $0x20] sm:$0xf]
  %v151 = vld [vmem:[%s1 + $0x24] sm:$0xf]
  %v152 = vld [vmem:[%s1 + $0x28] sm:$0xf]
  %v153 = vld [vmem:[%s1 + $0x2c] sm:$0xf]
  %v154 = vld [vmem:[%s1 + $0x30] sm:$0xf]
  %v155 = vld [vmem:[%s1 + $0x34] sm:$0xf]
  %v156 = vld [vmem:[%s1 + $0x38] sm:$0xf]
  %v157 = vld [vmem:[%s1 + $0x3c] sm:$0xf]
  %v158 = vld [vmem:[%s1 + $0x40] sm:$0xf]
  %v159 = vld [vmem:[%s1 + $0x44] sm:$0xf]
  %v160 = vld [vmem:[%s1 + $0x48] sm:$0xf]
  %v161 = vld [vmem:[%s1 + $0x4c] sm:$0xf]
  %v162 = vld [vmem:[%s1 + $0x50] sm:$0xf]
  %v163 = vld [vmem:[%s1 + $0x54] sm:$0xf]
  %v164 = vld [vmem:[%s1 + $0x58] sm:$0xf]
  %v165 = vld [vmem:[%s1 + $0x5c] sm:$0xf]
  %v166 = vld [vmem:[%s1 + $0x60] sm:$0xf]
  %v167 = vld [vmem:[%s1 + $0x64] sm:$0xf]
  %v168 = vld [vmem:[%s1 + $0x68] sm:$0xf]
  %v169 = vld [vmem:[%s1 + $0x6c] sm:$0xf]
  %v170 = vld [vmem:[%s1 + $0x70] sm:$0xf]
  %v171 = vld [vmem:[%s1 + $0x74] sm:$0xf]
  %v172 = vld [vmem:[%s1 + $0x78] sm:$0xf]
  %v173 = vld [vmem:[%s1 + $0x7c] sm:$0xf]
  %v174 = vld [vmem:[%s1 + $0x80] sm:$0xf]
  %v175 = vld [vmem:[%s1 + $0x84] sm:$0xf]
  %v176 = vld [vmem:[%s1 + $0x88] sm:$0xf]
  %v177 = vld [vmem:[%s1 + $0x8c] sm:$0xf]
  %v178 = vld [vmem:[%s1 + $0x90] sm:$0xf]
  %v179 = vld [vmem:[%s1 + $0x94] sm:$0xf]
  %v180 = vld [vmem:[%s1 + $0x98] sm:$0xf]
  %v181 = vld [vmem:[%s1 + $0x9c] sm:$0xf]
  %v182 = vld [vmem:[%s1 + $0xa0] sm:$0xf]
  %v183 = vld [vmem:[%s1 + $0xa4] sm:$0xf]
  %v184 = vld [vmem:[%s1 + $0xa8] sm:$0xf]
  %v185 = vld [vmem:[%s1 + $0xac] sm:$0xf]
  %v186 = vld [vmem:[%s1 + $0xb0] sm:$0xf]
  %v187 = vld [vmem:[%s1 + $0xb4] sm:$0xf]
  %v188 = vld [vmem:[%s1 + $0xb8] sm:$0xf]
  %v189 = vld [vmem:[%s1 + $0xbc] sm:$0xf]
  %v190 = vld [vmem:[%s1 + $0xc0] sm:$0xf]
  %v191 = vld [vmem:[%s1 + $0xc4] sm:$0xf]
  %v192 = vld [vmem:[%s1 + $0xc8] sm:$0xf]
  %v193 = vld [vmem:[%s1 + $0xcc] sm:$0xf]
  %v194 = vld [vmem:[%s1 + $0xd0] sm:$0xf]
  %v195 = vld [vmem:[%s1 + $0xd4] sm:$0xf]
  %v196 = vld [vmem:[%s1 + $0xd8] sm:$0xf]
  %v197 = vld [vmem:[%s1 + $0xdc] sm:$0xf]
  %v198 = vld [vmem:[%s1 + $0xe0] sm:$0xf]
  %v199 = vld [vmem:[%s1 + $0xe4] sm:$0xf]
  %v200 = vld [vmem:[%s1 + $0xe8] sm:$0xf]
  %v201 = vld [vmem:[%s1 + $0xec] sm:$0xf]
  %v202 = vld [vmem:[%s1 + $0xf0] sm:$0xf]
  %v203 = vld [vmem:[%s1 + $0xf4] sm:$0xf]
  %v204 = vld [vmem:[%s1 + $0xf8] sm:$0xf]
  %v205 = vld [vmem:[%s1 + $0xfc] sm:$0xf]
  %v206 = vld [vmem:[%s2] sm:$0x1]
  %v208 = vperm.slane %v206, 0
  %v338 = vunpack.c.l.b16 %v14
  %v339 = vunpack.c.h.b16 %v14
  %v340 = vunpack.c.l.b16 %v15
  %v341 = vunpack.c.h.b16 %v15
  %v342 = vunpack.c.l.b16 %v16
  %v343 = vunpack.c.h.b16 %v16
  %v344 = vunpack.c.l.b16 %v17
  %v345 = vunpack.c.h.b16 %v17
  %v346 = vunpack.c.l.b16 %v18
  %v347 = vunpack.c.h.b16 %v18
  %v348 = vunpack.c.l.b16 %v19
  %v349 = vunpack.c.h.b16 %v19
  %v350 = vunpack.c.l.b16 %v20
  %v351 = vunpack.c.h.b16 %v20
  %v352 = vunpack.c.l.b16 %v21
  %v353 = vunpack.c.h.b16 %v21
  %v354 = vunpack.c.l.b16 %v22
  %v355 = vunpack.c.h.b16 %v22
  %v356 = vunpack.c.l.b16 %v23
  %v357 = vunpack.c.h.b16 %v23
  %v358 = vunpack.c.l.b16 %v24
  %v359 = vunpack.c.h.b16 %v24
  %v360 = vunpack.c.l.b16 %v25
  %v361 = vunpack.c.h.b16 %v25
  %v362 = vunpack.c.l.b16 %v26
  %v363 = vunpack.c.h.b16 %v26
  %v364 = vunpack.c.l.b16 %v27
  %v365 = vunpack.c.h.b16 %v27
  %v366 = vunpack.c.l.b16 %v28
  %v367 = vunpack.c.h.b16 %v28
  %v368 = vunpack.c.l.b16 %v29
  %v369 = vunpack.c.h.b16 %v29
  %v370 = vunpack.c.l.b16 %v30
  %v371 = vunpack.c.h.b16 %v30
  %v372 = vunpack.c.l.b16 %v31
  %v373 = vunpack.c.h.b16 %v31
  %v374 = vunpack.c.l.b16 %v32
  %v375 = vunpack.c.h.b16 %v32
  %v376 = vunpack.c.l.b16 %v33
  %v377 = vunpack.c.h.b16 %v33
  %v378 = vunpack.c.l.b16 %v34
  %v379 = vunpack.c.h.b16 %v34
  %v380 = vunpack.c.l.b16 %v35
  %v381 = vunpack.c.h.b16 %v35
  %v382 = vunpack.c.l.b16 %v36
  %v383 = vunpack.c.h.b16 %v36
  %v384 = vunpack.c.l.b16 %v37
  %v385 = vunpack.c.h.b16 %v37
  %v386 = vunpack.c.l.b16 %v38
  %v387 = vunpack.c.h.b16 %v38
  %v388 = vunpack.c.l.b16 %v39
  %v389 = vunpack.c.h.b16 %v39
  %v390 = vunpack.c.l.b16 %v40
  %v391 = vunpack.c.h.b16 %v40
  %v392 = vunpack.c.l.b16 %v41
  %v393 = vunpack.c.h.b16 %v41
  %v394 = vunpack.c.l.b16 %v42
  %v395 = vunpack.c.h.b16 %v42
  %v396 = vunpack.c.l.b16 %v43
  %v397 = vunpack.c.h.b16 %v43
  %v398 = vunpack.c.l.b16 %v44
  %v399 = vunpack.c.h.b16 %v44
  %v400 = vunpack.c.l.b16 %v45
  %v401 = vunpack.c.h.b16 %v45
  %v402 = vunpack.c.l.b16 %v46
  %v403 = vunpack.c.h.b16 %v46
  %v404 = vunpack.c.l.b16 %v47
  %v405 = vunpack.c.h.b16 %v47
  %v406 = vunpack.c.l.b16 %v48
  %v407 = vunpack.c.h.b16 %v48
  %v408 = vunpack.c.l.b16 %v49
  %v409 = vunpack.c.h.b16 %v49
  %v410 = vunpack.c.l.b16 %v50
  %v411 = vunpack.c.h.b16 %v50
  %v412 = vunpack.c.l.b16 %v51
  %v413 = vunpack.c.h.b16 %v51
  %v414 = vunpack.c.l.b16 %v52
  %v415 = vunpack.c.h.b16 %v52
  %v416 = vunpack.c.l.b16 %v53
  %v417 = vunpack.c.h.b16 %v53
  %v418 = vunpack.c.l.b16 %v54
  %v419 = vunpack.c.h.b16 %v54
  %v420 = vunpack.c.l.b16 %v55
  %v421 = vunpack.c.h.b16 %v55
  %v422 = vunpack.c.l.b16 %v56
  %v423 = vunpack.c.h.b16 %v56
  %v424 = vunpack.c.l.b16 %v57
  %v425 = vunpack.c.h.b16 %v57
  %v426 = vunpack.c.l.b16 %v58
  %v427 = vunpack.c.h.b16 %v58
  %v428 = vunpack.c.l.b16 %v59
  %v429 = vunpack.c.h.b16 %v59
  %v430 = vunpack.c.l.b16 %v60
  %v431 = vunpack.c.h.b16 %v60
  %v432 = vunpack.c.l.b16 %v61
  %v433 = vunpack.c.h.b16 %v61
  %v434 = vunpack.c.l.b16 %v62
  %v435 = vunpack.c.h.b16 %v62
  %v436 = vunpack.c.l.b16 %v63
  %v437 = vunpack.c.h.b16 %v63
  %v438 = vunpack.c.l.b16 %v64
  %v439 = vunpack.c.h.b16 %v64
  %v440 = vunpack.c.l.b16 %v65
  %v441 = vunpack.c.h.b16 %v65
  %v442 = vunpack.c.l.b16 %v66
  %v443 = vunpack.c.h.b16 %v66
  %v444 = vunpack.c.l.b16 %v67
  %v445 = vunpack.c.h.b16 %v67
  %v446 = vunpack.c.l.b16 %v68
  %v447 = vunpack.c.h.b16 %v68
  %v448 = vunpack.c.l.b16 %v69
  %v449 = vunpack.c.h.b16 %v69
  %v450 = vunpack.c.l.b16 %v70
  %v451 = vunpack.c.h.b16 %v70
  %v452 = vunpack.c.l.b16 %v71
  %v453 = vunpack.c.h.b16 %v71
  %v454 = vunpack.c.l.b16 %v72
  %v455 = vunpack.c.h.b16 %v72
  %v456 = vunpack.c.l.b16 %v73
  %v457 = vunpack.c.h.b16 %v73
  %v458 = vunpack.c.l.b16 %v74
  %v459 = vunpack.c.h.b16 %v74
  %v460 = vunpack.c.l.b16 %v75
  %v461 = vunpack.c.h.b16 %v75
  %v462 = vunpack.c.l.b16 %v76
  %v463 = vunpack.c.h.b16 %v76
  %v464 = vunpack.c.l.b16 %v77
  %v465 = vunpack.c.h.b16 %v77
  %v466 = vunpack.c.l.b16 %v78
  %v467 = vunpack.c.h.b16 %v78
  %v468 = vunpack.c.l.b16 %v79
  %v469 = vunpack.c.h.b16 %v79
  %v470 = vunpack.c.l.b16 %v80
  %v471 = vunpack.c.h.b16 %v80
  %v472 = vunpack.c.l.b16 %v81
  %v473 = vunpack.c.h.b16 %v81
  %v474 = vunpack.c.l.b16 %v82
  %v475 = vunpack.c.h.b16 %v82
  %v476 = vunpack.c.l.b16 %v83
  %v477 = vunpack.c.h.b16 %v83
  %v478 = vunpack.c.l.b16 %v84
  %v479 = vunpack.c.h.b16 %v84
  %v480 = vunpack.c.l.b16 %v85
  %v481 = vunpack.c.h.b16 %v85
  %v482 = vunpack.c.l.b16 %v86
  %v483 = vunpack.c.h.b16 %v86
  %v484 = vunpack.c.l.b16 %v87
  %v485 = vunpack.c.h.b16 %v87
  %v486 = vunpack.c.l.b16 %v88
  %v487 = vunpack.c.h.b16 %v88
  %v488 = vunpack.c.l.b16 %v89
  %v489 = vunpack.c.h.b16 %v89
  %v490 = vunpack.c.l.b16 %v90
  %v491 = vunpack.c.h.b16 %v90
  %v492 = vunpack.c.l.b16 %v91
  %v493 = vunpack.c.h.b16 %v91
  %v494 = vunpack.c.l.b16 %v92
  %v495 = vunpack.c.h.b16 %v92
  %v496 = vunpack.c.l.b16 %v93
  %v497 = vunpack.c.h.b16 %v93
  %v498 = vunpack.c.l.b16 %v94
  %v499 = vunpack.c.h.b16 %v94
  %v500 = vunpack.c.l.b16 %v95
  %v501 = vunpack.c.h.b16 %v95
  %v502 = vunpack.c.l.b16 %v96
  %v503 = vunpack.c.h.b16 %v96
  %v504 = vunpack.c.l.b16 %v97
  %v505 = vunpack.c.h.b16 %v97
  %v506 = vunpack.c.l.b16 %v98
  %v507 = vunpack.c.h.b16 %v98
  %v508 = vunpack.c.l.b16 %v99
  %v509 = vunpack.c.h.b16 %v99
  %v510 = vunpack.c.l.b16 %v100
  %v511 = vunpack.c.h.b16 %v100
  %v512 = vunpack.c.l.b16 %v101
  %v513 = vunpack.c.h.b16 %v101
  %v514 = vunpack.c.l.b16 %v102
  %v515 = vunpack.c.h.b16 %v102
  %v516 = vunpack.c.l.b16 %v103
  %v517 = vunpack.c.h.b16 %v103
  %v518 = vunpack.c.l.b16 %v104
  %v519 = vunpack.c.h.b16 %v104
  %v520 = vunpack.c.l.b16 %v105
  %v521 = vunpack.c.h.b16 %v105
  %v522 = vunpack.c.l.b16 %v106
  %v523 = vunpack.c.h.b16 %v106
  %v524 = vunpack.c.l.b16 %v107
  %v525 = vunpack.c.h.b16 %v107
  %v526 = vunpack.c.l.b16 %v108
  %v527 = vunpack.c.h.b16 %v108
  %v528 = vunpack.c.l.b16 %v109
  %v529 = vunpack.c.h.b16 %v109
  %v530 = vunpack.c.l.b16 %v110
  %v531 = vunpack.c.h.b16 %v110
  %v532 = vunpack.c.l.b16 %v111
  %v533 = vunpack.c.h.b16 %v111
  %v534 = vunpack.c.l.b16 %v112
  %v535 = vunpack.c.h.b16 %v112
  %v536 = vunpack.c.l.b16 %v113
  %v537 = vunpack.c.h.b16 %v113
  %v538 = vunpack.c.l.b16 %v114
  %v539 = vunpack.c.h.b16 %v114
  %v540 = vunpack.c.l.b16 %v115
  %v541 = vunpack.c.h.b16 %v115
  %v542 = vunpack.c.l.b16 %v116
  %v543 = vunpack.c.h.b16 %v116
  %v544 = vunpack.c.l.b16 %v117
  %v545 = vunpack.c.h.b16 %v117
  %v546 = vunpack.c.l.b16 %v118
  %v547 = vunpack.c.h.b16 %v118
  %v548 = vunpack.c.l.b16 %v119
  %v549 = vunpack.c.h.b16 %v119
  %v550 = vunpack.c.l.b16 %v120
  %v551 = vunpack.c.h.b16 %v120
  %v552 = vunpack.c.l.b16 %v121
  %v553 = vunpack.c.h.b16 %v121
  %v554 = vunpack.c.l.b16 %v122
  %v555 = vunpack.c.h.b16 %v122
  %v556 = vunpack.c.l.b16 %v123
  %v557 = vunpack.c.h.b16 %v123
  %v558 = vunpack.c.l.b16 %v124
  %v559 = vunpack.c.h.b16 %v124
  %v560 = vunpack.c.l.b16 %v125
  %v561 = vunpack.c.h.b16 %v125
  %v562 = vunpack.c.l.b16 %v126
  %v563 = vunpack.c.h.b16 %v126
  %v564 = vunpack.c.l.b16 %v127
  %v565 = vunpack.c.h.b16 %v127
  %v566 = vunpack.c.l.b16 %v128
  %v567 = vunpack.c.h.b16 %v128
  %v568 = vunpack.c.l.b16 %v129
  %v569 = vunpack.c.h.b16 %v129
  %v570 = vunpack.c.l.b16 %v130
  %v571 = vunpack.c.h.b16 %v130
  %v572 = vunpack.c.l.b16 %v131
  %v573 = vunpack.c.h.b16 %v131
  %v574 = vunpack.c.l.b16 %v132
  %v575 = vunpack.c.h.b16 %v132
  %v576 = vunpack.c.l.b16 %v133
  %v577 = vunpack.c.h.b16 %v133
  %v578 = vunpack.c.l.b16 %v134
  %v579 = vunpack.c.h.b16 %v134
  %v580 = vunpack.c.l.b16 %v135
  %v581 = vunpack.c.h.b16 %v135
  %v582 = vunpack.c.l.b16 %v136
  %v583 = vunpack.c.h.b16 %v136
  %v584 = vunpack.c.l.b16 %v137
  %v585 = vunpack.c.h.b16 %v137
  %v586 = vunpack.c.l.b16 %v138
  %v587 = vunpack.c.h.b16 %v138
  %v588 = vunpack.c.l.b16 %v139
  %v589 = vunpack.c.h.b16 %v139
  %v590 = vunpack.c.l.b16 %v140
  %v591 = vunpack.c.h.b16 %v140
  %v592 = vunpack.c.l.b16 %v141
  %v593 = vunpack.c.h.b16 %v141
  %v594 = vpack.c.b16 %v342, %v338
  %v595 = vpack.c.b16 %v343, %v339
  %v596 = vpack.c.b16 %v344, %v340
  %v597 = vpack.c.b16 %v345, %v341
  %v598 = vpack.c.b16 %v350, %v346
  %v599 = vpack.c.b16 %v351, %v347
  %v600 = vpack.c.b16 %v352, %v348
  %v601 = vpack.c.b16 %v353, %v349
  %v602 = vpack.c.b16 %v358, %v354
  %v603 = vpack.c.b16 %v359, %v355
  %v604 = vpack.c.b16 %v360, %v356
  %v605 = vpack.c.b16 %v361, %v357
  %v606 = vpack.c.b16 %v366, %v362
  %v607 = vpack.c.b16 %v367, %v363
  %v608 = vpack.c.b16 %v368, %v364
  %v609 = vpack.c.b16 %v369, %v365
  %v610 = vpack.c.b16 %v374, %v370
  %v611 = vpack.c.b16 %v375, %v371
  %v612 = vpack.c.b16 %v376, %v372
  %v613 = vpack.c.b16 %v377, %v373
  %v614 = vpack.c.b16 %v382, %v378
  %v615 = vpack.c.b16 %v383, %v379
  %v616 = vpack.c.b16 %v384, %v380
  %v617 = vpack.c.b16 %v385, %v381
  %v618 = vpack.c.b16 %v390, %v386
  %v619 = vpack.c.b16 %v391, %v387
  %v620 = vpack.c.b16 %v392, %v388
  %v621 = vpack.c.b16 %v393, %v389
  %v622 = vpack.c.b16 %v398, %v394
  %v623 = vpack.c.b16 %v399, %v395
  %v624 = vpack.c.b16 %v400, %v396
  %v625 = vpack.c.b16 %v401, %v397
  %v626 = vpack.c.b16 %v406, %v402
  %v627 = vpack.c.b16 %v407, %v403
  %v628 = vpack.c.b16 %v408, %v404
  %v629 = vpack.c.b16 %v409, %v405
  %v630 = vpack.c.b16 %v414, %v410
  %v631 = vpack.c.b16 %v415, %v411
  %v632 = vpack.c.b16 %v416, %v412
  %v633 = vpack.c.b16 %v417, %v413
  %v634 = vpack.c.b16 %v422, %v418
  %v635 = vpack.c.b16 %v423, %v419
  %v636 = vpack.c.b16 %v424, %v420
  %v637 = vpack.c.b16 %v425, %v421
  %v638 = vpack.c.b16 %v430, %v426
  %v639 = vpack.c.b16 %v431, %v427
  %v640 = vpack.c.b16 %v432, %v428
  %v641 = vpack.c.b16 %v433, %v429
  %v642 = vpack.c.b16 %v438, %v434
  %v643 = vpack.c.b16 %v439, %v435
  %v644 = vpack.c.b16 %v440, %v436
  %v645 = vpack.c.b16 %v441, %v437
  %v646 = vpack.c.b16 %v446, %v442
  %v647 = vpack.c.b16 %v447, %v443
  %v648 = vpack.c.b16 %v448, %v444
  %v649 = vpack.c.b16 %v449, %v445
  %v650 = vpack.c.b16 %v454, %v450
  %v651 = vpack.c.b16 %v455, %v451
  %v652 = vpack.c.b16 %v456, %v452
  %v653 = vpack.c.b16 %v457, %v453
  %v654 = vpack.c.b16 %v462, %v458
  %v655 = vpack.c.b16 %v463, %v459
  %v656 = vpack.c.b16 %v464, %v460
  %v657 = vpack.c.b16 %v465, %v461
  %v658 = vpack.c.b16 %v470, %v466
  %v659 = vpack.c.b16 %v471, %v467
  %v660 = vpack.c.b16 %v472, %v468
  %v661 = vpack.c.b16 %v473, %v469
  %v662 = vpack.c.b16 %v478, %v474
  %v663 = vpack.c.b16 %v479, %v475
  %v664 = vpack.c.b16 %v480, %v476
  %v665 = vpack.c.b16 %v481, %v477
  %v666 = vpack.c.b16 %v486, %v482
  %v667 = vpack.c.b16 %v487, %v483
  %v668 = vpack.c.b16 %v488, %v484
  %v669 = vpack.c.b16 %v489, %v485
  %v670 = vpack.c.b16 %v494, %v490
  %v671 = vpack.c.b16 %v495, %v491
  %v672 = vpack.c.b16 %v496, %v492
  %v673 = vpack.c.b16 %v497, %v493
  %v674 = vpack.c.b16 %v502, %v498
  %v675 = vpack.c.b16 %v503, %v499
  %v676 = vpack.c.b16 %v504, %v500
  %v677 = vpack.c.b16 %v505, %v501
  %v678 = vpack.c.b16 %v510, %v506
  %v679 = vpack.c.b16 %v511, %v507
  %v680 = vpack.c.b16 %v512, %v508
  %v681 = vpack.c.b16 %v513, %v509
  %v682 = vpack.c.b16 %v518, %v514
  %v683 = vpack.c.b16 %v519, %v515
  %v684 = vpack.c.b16 %v520, %v516
  %v685 = vpack.c.b16 %v521, %v517
  %v686 = vpack.c.b16 %v526, %v522
  %v687 = vpack.c.b16 %v527, %v523
  %v688 = vpack.c.b16 %v528, %v524
  %v689 = vpack.c.b16 %v529, %v525
  %v690 = vpack.c.b16 %v534, %v530
  %v691 = vpack.c.b16 %v535, %v531
  %v692 = vpack.c.b16 %v536, %v532
  %v693 = vpack.c.b16 %v537, %v533
  %v694 = vpack.c.b16 %v542, %v538
  %v695 = vpack.c.b16 %v543, %v539
  %v696 = vpack.c.b16 %v544, %v540
  %v697 = vpack.c.b16 %v545, %v541
  %v698 = vpack.c.b16 %v550, %v546
  %v699 = vpack.c.b16 %v551, %v547
  %v700 = vpack.c.b16 %v552, %v548
  %v701 = vpack.c.b16 %v553, %v549
  %v702 = vpack.c.b16 %v558, %v554
  %v703 = vpack.c.b16 %v559, %v555
  %v704 = vpack.c.b16 %v560, %v556
  %v705 = vpack.c.b16 %v561, %v557
  %v706 = vpack.c.b16 %v566, %v562
  %v707 = vpack.c.b16 %v567, %v563
  %v708 = vpack.c.b16 %v568, %v564
  %v709 = vpack.c.b16 %v569, %v565
  %v710 = vpack.c.b16 %v574, %v570
  %v711 = vpack.c.b16 %v575, %v571
  %v712 = vpack.c.b16 %v576, %v572
  %v713 = vpack.c.b16 %v577, %v573
  %v714 = vpack.c.b16 %v582, %v578
  %v715 = vpack.c.b16 %v583, %v579
  %v716 = vpack.c.b16 %v584, %v580
  %v717 = vpack.c.b16 %v585, %v581
  %v718 = vpack.c.b16 %v590, %v586
  %v719 = vpack.c.b16 %v591, %v587
  %v720 = vpack.c.b16 %v592, %v588
  %v721 = vpack.c.b16 %v593, %v589
  %v914 = vunpack.c.l.b16 %v142
  %v915 = vunpack.c.l.b16 %v143
  %v916 = vunpack.c.l.b16 %v144
  %v917 = vunpack.c.l.b16 %v145
  %v918 = vunpack.c.l.b16 %v146
  %v919 = vunpack.c.l.b16 %v147
  %v920 = vunpack.c.l.b16 %v148
  %v921 = vunpack.c.l.b16 %v149
  %v922 = vunpack.c.l.b16 %v150
  %v923 = vunpack.c.l.b16 %v151
  %v924 = vunpack.c.l.b16 %v152
  %v925 = vunpack.c.l.b16 %v153
  %v926 = vunpack.c.l.b16 %v154
  %v927 = vunpack.c.l.b16 %v155
  %v928 = vunpack.c.l.b16 %v156
  %v929 = vunpack.c.l.b16 %v157
  %v930 = vunpack.c.l.b16 %v158
  %v931 = vunpack.c.l.b16 %v159
  %v932 = vunpack.c.l.b16 %v160
  %v933 = vunpack.c.l.b16 %v161
  %v934 = vunpack.c.l.b16 %v162
  %v935 = vunpack.c.l.b16 %v163
  %v936 = vunpack.c.l.b16 %v164
  %v937 = vunpack.c.l.b16 %v165
  %v938 = vunpack.c.l.b16 %v166
  %v939 = vunpack.c.l.b16 %v167
  %v940 = vunpack.c.l.b16 %v168
  %v941 = vunpack.c.l.b16 %v169
  %v942 = vunpack.c.l.b16 %v170
  %v943 = vunpack.c.l.b16 %v171
  %v944 = vunpack.c.l.b16 %v172
  %v945 = vunpack.c.l.b16 %v173
  %v946 = vunpack.c.l.b16 %v174
  %v947 = vunpack.c.l.b16 %v175
  %v948 = vunpack.c.l.b16 %v176
  %v949 = vunpack.c.l.b16 %v177
  %v950 = vunpack.c.l.b16 %v178
  %v951 = vunpack.c.l.b16 %v179
  %v952 = vunpack.c.l.b16 %v180
  %v953 = vunpack.c.l.b16 %v181
  %v954 = vunpack.c.l.b16 %v182
  %v955 = vunpack.c.l.b16 %v183
  %v956 = vunpack.c.l.b16 %v184
  %v957 = vunpack.c.l.b16 %v185
  %v958 = vunpack.c.l.b16 %v186
  %v959 = vunpack.c.l.b16 %v187
  %v960 = vunpack.c.l.b16 %v188
  %v961 = vunpack.c.l.b16 %v189
  %v962 = vunpack.c.l.b16 %v190
  %v963 = vunpack.c.l.b16 %v191
  %v964 = vunpack.c.l.b16 %v192
  %v965 = vunpack.c.l.b16 %v193
  %v966 = vunpack.c.l.b16 %v194
  %v967 = vunpack.c.l.b16 %v195
  %v968 = vunpack.c.l.b16 %v196
  %v969 = vunpack.c.l.b16 %v197
  %v970 = vunpack.c.l.b16 %v198
  %v971 = vunpack.c.l.b16 %v199
  %v972 = vunpack.c.l.b16 %v200
  %v973 = vunpack.c.l.b16 %v201
  %v974 = vunpack.c.l.b16 %v202
  %v975 = vunpack.c.l.b16 %v203
  %v976 = vunpack.c.l.b16 %v204
  %v977 = vunpack.c.l.b16 %v205
  %v978 = vpack.c.b16 %v915, %v914
  %v979 = vpack.c.b16 %v917, %v916
  %v980 = vpack.c.b16 %v919, %v918
  %v981 = vpack.c.b16 %v921, %v920
  %v982 = vpack.c.b16 %v923, %v922
  %v983 = vpack.c.b16 %v925, %v924
  %v984 = vpack.c.b16 %v927, %v926
  %v985 = vpack.c.b16 %v929, %v928
  %v986 = vpack.c.b16 %v931, %v930
  %v987 = vpack.c.b16 %v933, %v932
  %v988 = vpack.c.b16 %v935, %v934
  %v989 = vpack.c.b16 %v937, %v936
  %v990 = vpack.c.b16 %v939, %v938
  %v991 = vpack.c.b16 %v941, %v940
  %v992 = vpack.c.b16 %v943, %v942
  %v993 = vpack.c.b16 %v945, %v944
  %v994 = vpack.c.b16 %v947, %v946
  %v995 = vpack.c.b16 %v949, %v948
  %v996 = vpack.c.b16 %v951, %v950
  %v997 = vpack.c.b16 %v953, %v952
  %v998 = vpack.c.b16 %v955, %v954
  %v999 = vpack.c.b16 %v957, %v956
  %v1000 = vpack.c.b16 %v959, %v958
  %v1001 = vpack.c.b16 %v961, %v960
  %v1002 = vpack.c.b16 %v963, %v962
  %v1003 = vpack.c.b16 %v965, %v964
  %v1004 = vpack.c.b16 %v967, %v966
  %v1005 = vpack.c.b16 %v969, %v968
  %v1006 = vpack.c.b16 %v971, %v970
  %v1007 = vpack.c.b16 %v973, %v972
  %v1008 = vpack.c.b16 %v975, %v974
  %v1009 = vpack.c.b16 %v977, %v976
  %1042 = vmatpush.bf16.msra.mxu0 %v985
  %1043 = vmatpush.bf16.msra.mxu0 %v984
  %1044 = vmatpush.bf16.msra.mxu0 %v983
  %1045 = vmatpush.bf16.msra.mxu0 %v982
  %1046 = vmatpush.bf16.msra.mxu0 %v981
  %1047 = vmatpush.bf16.msra.mxu0 %v980
  %1048 = vmatpush.bf16.msra.mxu0 %v979
  %1049 = vmatpush.bf16.msra.mxu0 %v978
  %1050 = vmatmul.bf16.gmra.mxu0 %v594
  %v1051 = vpop.f32.mrf.mxu0
  %v1052 = vadd.f32 %v208, %v1051
  %v1053 = vpop.f32.mrf.mxu0
  %v1054 = vadd.f32 %v208, %v1053
  %1055 = vmatmul.bf16.gmra.mxu0 %v598
  %v1056 = vpop.f32.mrf.mxu0
  %v1057 = vadd.f32 %v208, %v1056
  %v1058 = vpop.f32.mrf.mxu0
  %v1059 = vadd.f32 %v208, %v1058
  %1060 = vmatmul.bf16.gmra.mxu0 %v602
  %v1061 = vpop.f32.mrf.mxu0
  %v1062 = vadd.f32 %v208, %v1061
  %v1063 = vpop.f32.mrf.mxu0
  %v1064 = vadd.f32 %v208, %v1063
  %1065 = vmatmul.bf16.gmra.mxu0 %v606
  %v1066 = vpop.f32.mrf.mxu0
  %v1067 = vadd.f32 %v208, %v1066
  %v1068 = vpop.f32.mrf.mxu0
  %v1069 = vadd.f32 %v208, %v1068
  %1070 = vmatmul.bf16.gmra.mxu0 %v610
  %v1071 = vpop.f32.mrf.mxu0
  %v1072 = vadd.f32 %v208, %v1071
  %v1073 = vpop.f32.mrf.mxu0
  %v1074 = vadd.f32 %v208, %v1073
  %1075 = vmatmul.bf16.gmra.mxu0 %v614
  %v1076 = vpop.f32.mrf.mxu0
  %v1077 = vadd.f32 %v208, %v1076
  %v1078 = vpop.f32.mrf.mxu0
  %v1079 = vadd.f32 %v208, %v1078
  %1080 = vmatmul.bf16.gmra.mxu0 %v618
  %v1081 = vpop.f32.mrf.mxu0
  %v1082 = vadd.f32 %v208, %v1081
  %v1083 = vpop.f32.mrf.mxu0
  %v1084 = vadd.f32 %v208, %v1083
  %1085 = vmatmul.bf16.gmra.mxu0 %v622
  %v1086 = vpop.f32.mrf.mxu0
  %v1087 = vadd.f32 %v208, %v1086
  %v1088 = vpop.f32.mrf.mxu0
  %v1089 = vadd.f32 %v208, %v1088
  %1090 = vmatmul.bf16.gmra.mxu0 %v626
  %v1091 = vpop.f32.mrf.mxu0
  %v1092 = vadd.f32 %v208, %v1091
  %v1093 = vpop.f32.mrf.mxu0
  %v1094 = vadd.f32 %v208, %v1093
  %1095 = vmatmul.bf16.gmra.mxu0 %v630
  %v1096 = vpop.f32.mrf.mxu0
  %v1097 = vadd.f32 %v208, %v1096
  %v1098 = vpop.f32.mrf.mxu0
  %v1099 = vadd.f32 %v208, %v1098
  %1100 = vmatmul.bf16.gmra.mxu0 %v634
  %v1101 = vpop.f32.mrf.mxu0
  %v1102 = vadd.f32 %v208, %v1101
  %v1103 = vpop.f32.mrf.mxu0
  %v1104 = vadd.f32 %v208, %v1103
  %1105 = vmatmul.bf16.gmra.mxu0 %v638
  %v1106 = vpop.f32.mrf.mxu0
  %v1107 = vadd.f32 %v208, %v1106
  %v1108 = vpop.f32.mrf.mxu0
  %v1109 = vadd.f32 %v208, %v1108
  %1110 = vmatmul.bf16.gmra.mxu0 %v642
  %v1111 = vpop.f32.mrf.mxu0
  %v1112 = vadd.f32 %v208, %v1111
  %v1113 = vpop.f32.mrf.mxu0
  %v1114 = vadd.f32 %v208, %v1113
  %1115 = vmatmul.bf16.gmra.mxu0 %v646
  %v1116 = vpop.f32.mrf.mxu0
  %v1117 = vadd.f32 %v208, %v1116
  %v1118 = vpop.f32.mrf.mxu0
  %v1119 = vadd.f32 %v208, %v1118
  %1120 = vmatmul.bf16.gmra.mxu0 %v650
  %v1121 = vpop.f32.mrf.mxu0
  %v1122 = vadd.f32 %v208, %v1121
  %v1123 = vpop.f32.mrf.mxu0
  %v1124 = vadd.f32 %v208, %v1123
  %1125 = vmatmul.bf16.gmra.mxu0 %v654
  %v1126 = vpop.f32.mrf.mxu0
  %v1127 = vadd.f32 %v208, %v1126
  %v1128 = vpop.f32.mrf.mxu0
  %v1129 = vadd.f32 %v208, %v1128
  %1130 = vmatmul.bf16.gmra.mxu0 %v658
  %v1131 = vpop.f32.mrf.mxu0
  %v1132 = vadd.f32 %v208, %v1131
  %v1133 = vpop.f32.mrf.mxu0
  %v1134 = vadd.f32 %v208, %v1133
  %1135 = vmatmul.bf16.gmra.mxu0 %v662
  %v1136 = vpop.f32.mrf.mxu0
  %v1137 = vadd.f32 %v208, %v1136
  %v1138 = vpop.f32.mrf.mxu0
  %v1139 = vadd.f32 %v208, %v1138
  %1140 = vmatmul.bf16.gmra.mxu0 %v666
  %v1141 = vpop.f32.mrf.mxu0
  %v1142 = vadd.f32 %v208, %v1141
  %v1143 = vpop.f32.mrf.mxu0
  %v1144 = vadd.f32 %v208, %v1143
  %1145 = vmatmul.bf16.gmra.mxu0 %v670
  %v1146 = vpop.f32.mrf.mxu0
  %v1147 = vadd.f32 %v208, %v1146
  %v1148 = vpop.f32.mrf.mxu0
  %v1149 = vadd.f32 %v208, %v1148
  %1150 = vmatmul.bf16.gmra.mxu0 %v674
  %v1151 = vpop.f32.mrf.mxu0
  %v1152 = vadd.f32 %v208, %v1151
  %v1153 = vpop.f32.mrf.mxu0
  %v1154 = vadd.f32 %v208, %v1153
  %1155 = vmatmul.bf16.gmra.mxu0 %v678
  %v1156 = vpop.f32.mrf.mxu0
  %v1157 = vadd.f32 %v208, %v1156
  %v1158 = vpop.f32.mrf.mxu0
  %v1159 = vadd.f32 %v208, %v1158
  %1160 = vmatmul.bf16.gmra.mxu0 %v682
  %v1161 = vpop.f32.mrf.mxu0
  %v1162 = vadd.f32 %v208, %v1161
  %v1163 = vpop.f32.mrf.mxu0
  %v1164 = vadd.f32 %v208, %v1163
  %1165 = vmatmul.bf16.gmra.mxu0 %v686
  %v1166 = vpop.f32.mrf.mxu0
  %v1167 = vadd.f32 %v208, %v1166
  %v1168 = vpop.f32.mrf.mxu0
  %v1169 = vadd.f32 %v208, %v1168
  %1170 = vmatmul.bf16.gmra.mxu0 %v690
  %v1171 = vpop.f32.mrf.mxu0
  %v1172 = vadd.f32 %v208, %v1171
  %v1173 = vpop.f32.mrf.mxu0
  %v1174 = vadd.f32 %v208, %v1173
  %1175 = vmatmul.bf16.gmra.mxu0 %v694
  %v1176 = vpop.f32.mrf.mxu0
  %v1177 = vadd.f32 %v208, %v1176
  %v1178 = vpop.f32.mrf.mxu0
  %v1179 = vadd.f32 %v208, %v1178
  %1180 = vmatmul.bf16.gmra.mxu0 %v698
  %v1181 = vpop.f32.mrf.mxu0
  %v1182 = vadd.f32 %v208, %v1181
  %v1183 = vpop.f32.mrf.mxu0
  %v1184 = vadd.f32 %v208, %v1183
  %1185 = vmatmul.bf16.gmra.mxu0 %v702
  %v1186 = vpop.f32.mrf.mxu0
  %v1187 = vadd.f32 %v208, %v1186
  %v1188 = vpop.f32.mrf.mxu0
  %v1189 = vadd.f32 %v208, %v1188
  %1190 = vmatmul.bf16.gmra.mxu0 %v706
  %v1191 = vpop.f32.mrf.mxu0
  %v1192 = vadd.f32 %v208, %v1191
  %v1193 = vpop.f32.mrf.mxu0
  %v1194 = vadd.f32 %v208, %v1193
  %1195 = vmatmul.bf16.gmra.mxu0 %v710
  %v1196 = vpop.f32.mrf.mxu0
  %v1197 = vadd.f32 %v208, %v1196
  %v1198 = vpop.f32.mrf.mxu0
  %v1199 = vadd.f32 %v208, %v1198
  %1200 = vmatmul.bf16.gmra.mxu0 %v714
  %v1201 = vpop.f32.mrf.mxu0
  %v1202 = vadd.f32 %v208, %v1201
  %v1203 = vpop.f32.mrf.mxu0
  %v1204 = vadd.f32 %v208, %v1203
  %1205 = vmatmul.bf16.gmra.mxu0 %v718
  %v1206 = vpop.f32.mrf.mxu0
  %v1207 = vadd.f32 %v208, %v1206
  %v1208 = vpop.f32.mrf.mxu0
  %v1209 = vadd.f32 %v208, %v1208
  %1210 = vdwg.mxu0
  %1211 = vmatpush.bf16.msra.mxu0 %v993
  %1212 = vmatpush.bf16.msra.mxu0 %v992
  %1213 = vmatpush.bf16.msra.mxu0 %v991
  %1214 = vmatpush.bf16.msra.mxu0 %v990
  %1215 = vmatpush.bf16.msra.mxu0 %v989
  %1216 = vmatpush.bf16.msra.mxu0 %v988
  %1217 = vmatpush.bf16.msra.mxu0 %v987
  %1218 = vmatpush.bf16.msra.mxu0 %v986
  %1219 = vmatmul.bf16.gmra.mxu0 %v595
  %v1220 = vpop.f32.mrf.mxu0
  %v1221 = vadd.f32 %v1052, %v1220
  %v1222 = vpop.f32.mrf.mxu0
  %v1223 = vadd.f32 %v1054, %v1222
  %1224 = vmatmul.bf16.gmra.mxu0 %v599
  %v1225 = vpop.f32.mrf.mxu0
  %v1226 = vadd.f32 %v1057, %v1225
  %v1227 = vpop.f32.mrf.mxu0
  %v1228 = vadd.f32 %v1059, %v1227
  %1229 = vmatmul.bf16.gmra.mxu0 %v603
  %v1230 = vpop.f32.mrf.mxu0
  %v1231 = vadd.f32 %v1062, %v1230
  %v1232 = vpop.f32.mrf.mxu0
  %v1233 = vadd.f32 %v1064, %v1232
  %1234 = vmatmul.bf16.gmra.mxu0 %v607
  %v1235 = vpop.f32.mrf.mxu0
  %v1236 = vadd.f32 %v1067, %v1235
  %v1237 = vpop.f32.mrf.mxu0
  %v1238 = vadd.f32 %v1069, %v1237
  %1239 = vmatmul.bf16.gmra.mxu0 %v611
  %v1240 = vpop.f32.mrf.mxu0
  %v1241 = vadd.f32 %v1072, %v1240
  %v1242 = vpop.f32.mrf.mxu0
  %v1243 = vadd.f32 %v1074, %v1242
  %1244 = vmatmul.bf16.gmra.mxu0 %v615
  %v1245 = vpop.f32.mrf.mxu0
  %v1246 = vadd.f32 %v1077, %v1245
  %v1247 = vpop.f32.mrf.mxu0
  %v1248 = vadd.f32 %v1079, %v1247
  %1249 = vmatmul.bf16.gmra.mxu0 %v619
  %v1250 = vpop.f32.mrf.mxu0
  %v1251 = vadd.f32 %v1082, %v1250
  %v1252 = vpop.f32.mrf.mxu0
  %v1253 = vadd.f32 %v1084, %v1252
  %1254 = vmatmul.bf16.gmra.mxu0 %v623
  %v1255 = vpop.f32.mrf.mxu0
  %v1256 = vadd.f32 %v1087, %v1255
  %v1257 = vpop.f32.mrf.mxu0
  %v1258 = vadd.f32 %v1089, %v1257
  %1259 = vmatmul.bf16.gmra.mxu0 %v627
  %v1260 = vpop.f32.mrf.mxu0
  %v1261 = vadd.f32 %v1092, %v1260
  %v1262 = vpop.f32.mrf.mxu0
  %v1263 = vadd.f32 %v1094, %v1262
  %1264 = vmatmul.bf16.gmra.mxu0 %v631
  %v1265 = vpop.f32.mrf.mxu0
  %v1266 = vadd.f32 %v1097, %v1265
  %v1267 = vpop.f32.mrf.mxu0
  %v1268 = vadd.f32 %v1099, %v1267
  %1269 = vmatmul.bf16.gmra.mxu0 %v635
  %v1270 = vpop.f32.mrf.mxu0
  %v1271 = vadd.f32 %v1102, %v1270
  %v1272 = vpop.f32.mrf.mxu0
  %v1273 = vadd.f32 %v1104, %v1272
  %1274 = vmatmul.bf16.gmra.mxu0 %v639
  %v1275 = vpop.f32.mrf.mxu0
  %v1276 = vadd.f32 %v1107, %v1275
  %v1277 = vpop.f32.mrf.mxu0
  %v1278 = vadd.f32 %v1109, %v1277
  %1279 = vmatmul.bf16.gmra.mxu0 %v643
  %v1280 = vpop.f32.mrf.mxu0
  %v1281 = vadd.f32 %v1112, %v1280
  %v1282 = vpop.f32.mrf.mxu0
  %v1283 = vadd.f32 %v1114, %v1282
  %1284 = vmatmul.bf16.gmra.mxu0 %v647
  %v1285 = vpop.f32.mrf.mxu0
  %v1286 = vadd.f32 %v1117, %v1285
  %v1287 = vpop.f32.mrf.mxu0
  %v1288 = vadd.f32 %v1119, %v1287
  %1289 = vmatmul.bf16.gmra.mxu0 %v651
  %v1290 = vpop.f32.mrf.mxu0
  %v1291 = vadd.f32 %v1122, %v1290
  %v1292 = vpop.f32.mrf.mxu0
  %v1293 = vadd.f32 %v1124, %v1292
  %1294 = vmatmul.bf16.gmra.mxu0 %v655
  %v1295 = vpop.f32.mrf.mxu0
  %v1296 = vadd.f32 %v1127, %v1295
  %v1297 = vpop.f32.mrf.mxu0
  %v1298 = vadd.f32 %v1129, %v1297
  %1299 = vmatmul.bf16.gmra.mxu0 %v659
  %v1300 = vpop.f32.mrf.mxu0
  %v1301 = vadd.f32 %v1132, %v1300
  %v1302 = vpop.f32.mrf.mxu0
  %v1303 = vadd.f32 %v1134, %v1302
  %1304 = vmatmul.bf16.gmra.mxu0 %v663
  %v1305 = vpop.f32.mrf.mxu0
  %v1306 = vadd.f32 %v1137, %v1305
  %v1307 = vpop.f32.mrf.mxu0
  %v1308 = vadd.f32 %v1139, %v1307
  %1309 = vmatmul.bf16.gmra.mxu0 %v667
  %v1310 = vpop.f32.mrf.mxu0
  %v1311 = vadd.f32 %v1142, %v1310
  %v1312 = vpop.f32.mrf.mxu0
  %v1313 = vadd.f32 %v1144, %v1312
  %1314 = vmatmul.bf16.gmra.mxu0 %v671
  %v1315 = vpop.f32.mrf.mxu0
  %v1316 = vadd.f32 %v1147, %v1315
  %v1317 = vpop.f32.mrf.mxu0
  %v1318 = vadd.f32 %v1149, %v1317
  %1319 = vmatmul.bf16.gmra.mxu0 %v675
  %v1320 = vpop.f32.mrf.mxu0
  %v1321 = vadd.f32 %v1152, %v1320
  %v1322 = vpop.f32.mrf.mxu0
  %v1323 = vadd.f32 %v1154, %v1322
  %1324 = vmatmul.bf16.gmra.mxu0 %v679
  %v1325 = vpop.f32.mrf.mxu0
  %v1326 = vadd.f32 %v1157, %v1325
  %v1327 = vpop.f32.mrf.mxu0
  %v1328 = vadd.f32 %v1159, %v1327
  %1329 = vmatmul.bf16.gmra.mxu0 %v683
  %v1330 = vpop.f32.mrf.mxu0
  %v1331 = vadd.f32 %v1162, %v1330
  %v1332 = vpop.f32.mrf.mxu0
  %v1333 = vadd.f32 %v1164, %v1332
  %1334 = vmatmul.bf16.gmra.mxu0 %v687
  %v1335 = vpop.f32.mrf.mxu0
  %v1336 = vadd.f32 %v1167, %v1335
  %v1337 = vpop.f32.mrf.mxu0
  %v1338 = vadd.f32 %v1169, %v1337
  %1339 = vmatmul.bf16.gmra.mxu0 %v691
  %v1340 = vpop.f32.mrf.mxu0
  %v1341 = vadd.f32 %v1172, %v1340
  %v1342 = vpop.f32.mrf.mxu0
  %v1343 = vadd.f32 %v1174, %v1342
  %1344 = vmatmul.bf16.gmra.mxu0 %v695
  %v1345 = vpop.f32.mrf.mxu0
  %v1346 = vadd.f32 %v1177, %v1345
  %v1347 = vpop.f32.mrf.mxu0
  %v1348 = vadd.f32 %v1179, %v1347
  %1349 = vmatmul.bf16.gmra.mxu0 %v699
  %v1350 = vpop.f32.mrf.mxu0
  %v1351 = vadd.f32 %v1182, %v1350
  %v1352 = vpop.f32.mrf.mxu0
  %v1353 = vadd.f32 %v1184, %v1352
  %1354 = vmatmul.bf16.gmra.mxu0 %v703
  %v1355 = vpop.f32.mrf.mxu0
  %v1356 = vadd.f32 %v1187, %v1355
  %v1357 = vpop.f32.mrf.mxu0
  %v1358 = vadd.f32 %v1189, %v1357
  %1359 = vmatmul.bf16.gmra.mxu0 %v707
  %v1360 = vpop.f32.mrf.mxu0
  %v1361 = vadd.f32 %v1192, %v1360
  %v1362 = vpop.f32.mrf.mxu0
  %v1363 = vadd.f32 %v1194, %v1362
  %1364 = vmatmul.bf16.gmra.mxu0 %v711
  %v1365 = vpop.f32.mrf.mxu0
  %v1366 = vadd.f32 %v1197, %v1365
  %v1367 = vpop.f32.mrf.mxu0
  %v1368 = vadd.f32 %v1199, %v1367
  %1369 = vmatmul.bf16.gmra.mxu0 %v715
  %v1370 = vpop.f32.mrf.mxu0
  %v1371 = vadd.f32 %v1202, %v1370
  %v1372 = vpop.f32.mrf.mxu0
  %v1373 = vadd.f32 %v1204, %v1372
  %1374 = vmatmul.bf16.gmra.mxu0 %v719
  %v1375 = vpop.f32.mrf.mxu0
  %v1376 = vadd.f32 %v1207, %v1375
  %v1377 = vpop.f32.mrf.mxu0
  %v1378 = vadd.f32 %v1209, %v1377
  %1379 = vdwg.mxu0
  %1380 = vmatpush.bf16.msra.mxu0 %v1001
  %1381 = vmatpush.bf16.msra.mxu0 %v1000
  %1382 = vmatpush.bf16.msra.mxu0 %v999
  %1383 = vmatpush.bf16.msra.mxu0 %v998
  %1384 = vmatpush.bf16.msra.mxu0 %v997
  %1385 = vmatpush.bf16.msra.mxu0 %v996
  %1386 = vmatpush.bf16.msra.mxu0 %v995
  %1387 = vmatpush.bf16.msra.mxu0 %v994
  %1388 = vmatmul.bf16.gmra.mxu0 %v596
  %v1389 = vpop.f32.mrf.mxu0
  %v1390 = vadd.f32 %v1221, %v1389
  %v1391 = vpop.f32.mrf.mxu0
  %v1392 = vadd.f32 %v1223, %v1391
  %1393 = vmatmul.bf16.gmra.mxu0 %v600
  %v1394 = vpop.f32.mrf.mxu0
  %v1395 = vadd.f32 %v1226, %v1394
  %v1396 = vpop.f32.mrf.mxu0
  %v1397 = vadd.f32 %v1228, %v1396
  %1398 = vmatmul.bf16.gmra.mxu0 %v604
  %v1399 = vpop.f32.mrf.mxu0
  %v1400 = vadd.f32 %v1231, %v1399
  %v1401 = vpop.f32.mrf.mxu0
  %v1402 = vadd.f32 %v1233, %v1401
  %1403 = vmatmul.bf16.gmra.mxu0 %v608
  %v1404 = vpop.f32.mrf.mxu0
  %v1405 = vadd.f32 %v1236, %v1404
  %v1406 = vpop.f32.mrf.mxu0
  %v1407 = vadd.f32 %v1238, %v1406
  %1408 = vmatmul.bf16.gmra.mxu0 %v612
  %v1409 = vpop.f32.mrf.mxu0
  %v1410 = vadd.f32 %v1241, %v1409
  %v1411 = vpop.f32.mrf.mxu0
  %v1412 = vadd.f32 %v1243, %v1411
  %1413 = vmatmul.bf16.gmra.mxu0 %v616
  %v1414 = vpop.f32.mrf.mxu0
  %v1415 = vadd.f32 %v1246, %v1414
  %v1416 = vpop.f32.mrf.mxu0
  %v1417 = vadd.f32 %v1248, %v1416
  %1418 = vmatmul.bf16.gmra.mxu0 %v620
  %v1419 = vpop.f32.mrf.mxu0
  %v1420 = vadd.f32 %v1251, %v1419
  %v1421 = vpop.f32.mrf.mxu0
  %v1422 = vadd.f32 %v1253, %v1421
  %1423 = vmatmul.bf16.gmra.mxu0 %v624
  %v1424 = vpop.f32.mrf.mxu0
  %v1425 = vadd.f32 %v1256, %v1424
  %v1426 = vpop.f32.mrf.mxu0
  %v1427 = vadd.f32 %v1258, %v1426
  %1428 = vmatmul.bf16.gmra.mxu0 %v628
  %v1429 = vpop.f32.mrf.mxu0
  %v1430 = vadd.f32 %v1261, %v1429
  %v1431 = vpop.f32.mrf.mxu0
  %v1432 = vadd.f32 %v1263, %v1431
  %1433 = vmatmul.bf16.gmra.mxu0 %v632
  %v1434 = vpop.f32.mrf.mxu0
  %v1435 = vadd.f32 %v1266, %v1434
  %v1436 = vpop.f32.mrf.mxu0
  %v1437 = vadd.f32 %v1268, %v1436
  %1438 = vmatmul.bf16.gmra.mxu0 %v636
  %v1439 = vpop.f32.mrf.mxu0
  %v1440 = vadd.f32 %v1271, %v1439
  %v1441 = vpop.f32.mrf.mxu0
  %v1442 = vadd.f32 %v1273, %v1441
  %1443 = vmatmul.bf16.gmra.mxu0 %v640
  %v1444 = vpop.f32.mrf.mxu0
  %v1445 = vadd.f32 %v1276, %v1444
  %v1446 = vpop.f32.mrf.mxu0
  %v1447 = vadd.f32 %v1278, %v1446
  %1448 = vmatmul.bf16.gmra.mxu0 %v644
  %v1449 = vpop.f32.mrf.mxu0
  %v1450 = vadd.f32 %v1281, %v1449
  %v1451 = vpop.f32.mrf.mxu0
  %v1452 = vadd.f32 %v1283, %v1451
  %1453 = vmatmul.bf16.gmra.mxu0 %v648
  %v1454 = vpop.f32.mrf.mxu0
  %v1455 = vadd.f32 %v1286, %v1454
  %v1456 = vpop.f32.mrf.mxu0
  %v1457 = vadd.f32 %v1288, %v1456
  %1458 = vmatmul.bf16.gmra.mxu0 %v652
  %v1459 = vpop.f32.mrf.mxu0
  %v1460 = vadd.f32 %v1291, %v1459
  %v1461 = vpop.f32.mrf.mxu0
  %v1462 = vadd.f32 %v1293, %v1461
  %1463 = vmatmul.bf16.gmra.mxu0 %v656
  %v1464 = vpop.f32.mrf.mxu0
  %v1465 = vadd.f32 %v1296, %v1464
  %v1466 = vpop.f32.mrf.mxu0
  %v1467 = vadd.f32 %v1298, %v1466
  %1468 = vmatmul.bf16.gmra.mxu0 %v660
  %v1469 = vpop.f32.mrf.mxu0
  %v1470 = vadd.f32 %v1301, %v1469
  %v1471 = vpop.f32.mrf.mxu0
  %v1472 = vadd.f32 %v1303, %v1471
  %1473 = vmatmul.bf16.gmra.mxu0 %v664
  %v1474 = vpop.f32.mrf.mxu0
  %v1475 = vadd.f32 %v1306, %v1474
  %v1476 = vpop.f32.mrf.mxu0
  %v1477 = vadd.f32 %v1308, %v1476
  %1478 = vmatmul.bf16.gmra.mxu0 %v668
  %v1479 = vpop.f32.mrf.mxu0
  %v1480 = vadd.f32 %v1311, %v1479
  %v1481 = vpop.f32.mrf.mxu0
  %v1482 = vadd.f32 %v1313, %v1481
  %1483 = vmatmul.bf16.gmra.mxu0 %v672
  %v1484 = vpop.f32.mrf.mxu0
  %v1485 = vadd.f32 %v1316, %v1484
  %v1486 = vpop.f32.mrf.mxu0
  %v1487 = vadd.f32 %v1318, %v1486
  %1488 = vmatmul.bf16.gmra.mxu0 %v676
  %v1489 = vpop.f32.mrf.mxu0
  %v1490 = vadd.f32 %v1321, %v1489
  %v1491 = vpop.f32.mrf.mxu0
  %v1492 = vadd.f32 %v1323, %v1491
  %1493 = vmatmul.bf16.gmra.mxu0 %v680
  %v1494 = vpop.f32.mrf.mxu0
  %v1495 = vadd.f32 %v1326, %v1494
  %v1496 = vpop.f32.mrf.mxu0
  %v1497 = vadd.f32 %v1328, %v1496
  %1498 = vmatmul.bf16.gmra.mxu0 %v684
  %v1499 = vpop.f32.mrf.mxu0
  %v1500 = vadd.f32 %v1331, %v1499
  %v1501 = vpop.f32.mrf.mxu0
  %v1502 = vadd.f32 %v1333, %v1501
  %1503 = vmatmul.bf16.gmra.mxu0 %v688
  %v1504 = vpop.f32.mrf.mxu0
  %v1505 = vadd.f32 %v1336, %v1504
  %v1506 = vpop.f32.mrf.mxu0
  %v1507 = vadd.f32 %v1338, %v1506
  %1508 = vmatmul.bf16.gmra.mxu0 %v692
  %v1509 = vpop.f32.mrf.mxu0
  %v1510 = vadd.f32 %v1341, %v1509
  %v1511 = vpop.f32.mrf.mxu0
  %v1512 = vadd.f32 %v1343, %v1511
  %1513 = vmatmul.bf16.gmra.mxu0 %v696
  %v1514 = vpop.f32.mrf.mxu0
  %v1515 = vadd.f32 %v1346, %v1514
  %v1516 = vpop.f32.mrf.mxu0
  %v1517 = vadd.f32 %v1348, %v1516
  %1518 = vmatmul.bf16.gmra.mxu0 %v700
  %v1519 = vpop.f32.mrf.mxu0
  %v1520 = vadd.f32 %v1351, %v1519
  %v1521 = vpop.f32.mrf.mxu0
  %v1522 = vadd.f32 %v1353, %v1521
  %1523 = vmatmul.bf16.gmra.mxu0 %v704
  %v1524 = vpop.f32.mrf.mxu0
  %v1525 = vadd.f32 %v1356, %v1524
  %v1526 = vpop.f32.mrf.mxu0
  %v1527 = vadd.f32 %v1358, %v1526
  %1528 = vmatmul.bf16.gmra.mxu0 %v708
  %v1529 = vpop.f32.mrf.mxu0
  %v1530 = vadd.f32 %v1361, %v1529
  %v1531 = vpop.f32.mrf.mxu0
  %v1532 = vadd.f32 %v1363, %v1531
  %1533 = vmatmul.bf16.gmra.mxu0 %v712
  %v1534 = vpop.f32.mrf.mxu0
  %v1535 = vadd.f32 %v1366, %v1534
  %v1536 = vpop.f32.mrf.mxu0
  %v1537 = vadd.f32 %v1368, %v1536
  %1538 = vmatmul.bf16.gmra.mxu0 %v716
  %v1539 = vpop.f32.mrf.mxu0
  %v1540 = vadd.f32 %v1371, %v1539
  %v1541 = vpop.f32.mrf.mxu0
  %v1542 = vadd.f32 %v1373, %v1541
  %1543 = vmatmul.bf16.gmra.mxu0 %v720
  %v1544 = vpop.f32.mrf.mxu0
  %v1545 = vadd.f32 %v1376, %v1544
  %v1546 = vpop.f32.mrf.mxu0
  %v1547 = vadd.f32 %v1378, %v1546
  %1548 = vdwg.mxu0
  %1549 = vmatpush.bf16.msra.mxu0 %v1009
  %1550 = vmatpush.bf16.msra.mxu0 %v1008
  %1551 = vmatpush.bf16.msra.mxu0 %v1007
  %1552 = vmatpush.bf16.msra.mxu0 %v1006
  %1553 = vmatpush.bf16.msra.mxu0 %v1005
  %1554 = vmatpush.bf16.msra.mxu0 %v1004
  %1555 = vmatpush.bf16.msra.mxu0 %v1003
  %1556 = vmatpush.bf16.msra.mxu0 %v1002
  %1557 = vmatmul.bf16.gmra.mxu0 %v597
  %v1558 = vpop.f32.mrf.mxu0
  %v1559 = vadd.f32 %v1390, %v1558
  %v1560 = vpop.f32.mrf.mxu0
  %v1561 = vadd.f32 %v1392, %v1560
  %1562 = vmatmul.bf16.gmra.mxu0 %v601
  %v1563 = vpop.f32.mrf.mxu0
  %v1564 = vadd.f32 %v1395, %v1563
  %v1565 = vpop.f32.mrf.mxu0
  %v1566 = vadd.f32 %v1397, %v1565
  %1567 = vmatmul.bf16.gmra.mxu0 %v605
  %v1568 = vpop.f32.mrf.mxu0
  %v1569 = vadd.f32 %v1400, %v1568
  %v1570 = vpop.f32.mrf.mxu0
  %v1571 = vadd.f32 %v1402, %v1570
  %1572 = vmatmul.bf16.gmra.mxu0 %v609
  %v1573 = vpop.f32.mrf.mxu0
  %v1574 = vadd.f32 %v1405, %v1573
  %v1575 = vpop.f32.mrf.mxu0
  %v1576 = vadd.f32 %v1407, %v1575
  %1577 = vmatmul.bf16.gmra.mxu0 %v613
  %v1578 = vpop.f32.mrf.mxu0
  %v1579 = vadd.f32 %v1410, %v1578
  %v1580 = vpop.f32.mrf.mxu0
  %v1581 = vadd.f32 %v1412, %v1580
  %1582 = vmatmul.bf16.gmra.mxu0 %v617
  %v1583 = vpop.f32.mrf.mxu0
  %v1584 = vadd.f32 %v1415, %v1583
  %v1585 = vpop.f32.mrf.mxu0
  %v1586 = vadd.f32 %v1417, %v1585
  %1587 = vmatmul.bf16.gmra.mxu0 %v621
  %v1588 = vpop.f32.mrf.mxu0
  %v1589 = vadd.f32 %v1420, %v1588
  %v1590 = vpop.f32.mrf.mxu0
  %v1591 = vadd.f32 %v1422, %v1590
  %1592 = vmatmul.bf16.gmra.mxu0 %v625
  %v1593 = vpop.f32.mrf.mxu0
  %v1594 = vadd.f32 %v1425, %v1593
  %v1595 = vpop.f32.mrf.mxu0
  %v1596 = vadd.f32 %v1427, %v1595
  %1597 = vmatmul.bf16.gmra.mxu0 %v629
  %v1598 = vpop.f32.mrf.mxu0
  %v1599 = vadd.f32 %v1430, %v1598
  %v1600 = vpop.f32.mrf.mxu0
  %v1601 = vadd.f32 %v1432, %v1600
  %1602 = vmatmul.bf16.gmra.mxu0 %v633
  %v1603 = vpop.f32.mrf.mxu0
  %v1604 = vadd.f32 %v1435, %v1603
  %v1605 = vpop.f32.mrf.mxu0
  %v1606 = vadd.f32 %v1437, %v1605
  %1607 = vmatmul.bf16.gmra.mxu0 %v637
  %v1608 = vpop.f32.mrf.mxu0
  %v1609 = vadd.f32 %v1440, %v1608
  %v1610 = vpop.f32.mrf.mxu0
  %v1611 = vadd.f32 %v1442, %v1610
  %1612 = vmatmul.bf16.gmra.mxu0 %v641
  %v1613 = vpop.f32.mrf.mxu0
  %v1614 = vadd.f32 %v1445, %v1613
  %v1615 = vpop.f32.mrf.mxu0
  %v1616 = vadd.f32 %v1447, %v1615
  %1617 = vmatmul.bf16.gmra.mxu0 %v645
  %v1618 = vpop.f32.mrf.mxu0
  %v1619 = vadd.f32 %v1450, %v1618
  %v1620 = vpop.f32.mrf.mxu0
  %v1621 = vadd.f32 %v1452, %v1620
  %1622 = vmatmul.bf16.gmra.mxu0 %v649
  %v1623 = vpop.f32.mrf.mxu0
  %v1624 = vadd.f32 %v1455, %v1623
  %v1625 = vpop.f32.mrf.mxu0
  %v1626 = vadd.f32 %v1457, %v1625
  %1627 = vmatmul.bf16.gmra.mxu0 %v653
  %v1628 = vpop.f32.mrf.mxu0
  %v1629 = vadd.f32 %v1460, %v1628
  %v1630 = vpop.f32.mrf.mxu0
  %v1631 = vadd.f32 %v1462, %v1630
  %1632 = vmatmul.bf16.gmra.mxu0 %v657
  %v1633 = vpop.f32.mrf.mxu0
  %v1634 = vadd.f32 %v1465, %v1633
  %v1635 = vpop.f32.mrf.mxu0
  %v1636 = vadd.f32 %v1467, %v1635
  %1637 = vmatmul.bf16.gmra.mxu0 %v661
  %v1638 = vpop.f32.mrf.mxu0
  %v1639 = vadd.f32 %v1470, %v1638
  %v1640 = vpop.f32.mrf.mxu0
  %v1641 = vadd.f32 %v1472, %v1640
  %1642 = vmatmul.bf16.gmra.mxu0 %v665
  %v1643 = vpop.f32.mrf.mxu0
  %v1644 = vadd.f32 %v1475, %v1643
  %v1645 = vpop.f32.mrf.mxu0
  %v1646 = vadd.f32 %v1477, %v1645
  %1647 = vmatmul.bf16.gmra.mxu0 %v669
  %v1648 = vpop.f32.mrf.mxu0
  %v1649 = vadd.f32 %v1480, %v1648
  %v1650 = vpop.f32.mrf.mxu0
  %v1651 = vadd.f32 %v1482, %v1650
  %1652 = vmatmul.bf16.gmra.mxu0 %v673
  %v1653 = vpop.f32.mrf.mxu0
  %v1654 = vadd.f32 %v1485, %v1653
  %v1655 = vpop.f32.mrf.mxu0
  %v1656 = vadd.f32 %v1487, %v1655
  %1657 = vmatmul.bf16.gmra.mxu0 %v677
  %v1658 = vpop.f32.mrf.mxu0
  %v1659 = vadd.f32 %v1490, %v1658
  %v1660 = vpop.f32.mrf.mxu0
  %v1661 = vadd.f32 %v1492, %v1660
  %1662 = vmatmul.bf16.gmra.mxu0 %v681
  %v1663 = vpop.f32.mrf.mxu0
  %v1664 = vadd.f32 %v1495, %v1663
  %v1665 = vpop.f32.mrf.mxu0
  %v1666 = vadd.f32 %v1497, %v1665
  %1667 = vmatmul.bf16.gmra.mxu0 %v685
  %v1668 = vpop.f32.mrf.mxu0
  %v1669 = vadd.f32 %v1500, %v1668
  %v1670 = vpop.f32.mrf.mxu0
  %v1671 = vadd.f32 %v1502, %v1670
  %1672 = vmatmul.bf16.gmra.mxu0 %v689
  %v1673 = vpop.f32.mrf.mxu0
  %v1674 = vadd.f32 %v1505, %v1673
  %v1675 = vpop.f32.mrf.mxu0
  %v1676 = vadd.f32 %v1507, %v1675
  %1677 = vmatmul.bf16.gmra.mxu0 %v693
  %v1678 = vpop.f32.mrf.mxu0
  %v1679 = vadd.f32 %v1510, %v1678
  %v1680 = vpop.f32.mrf.mxu0
  %v1681 = vadd.f32 %v1512, %v1680
  %1682 = vmatmul.bf16.gmra.mxu0 %v697
  %v1683 = vpop.f32.mrf.mxu0
  %v1684 = vadd.f32 %v1515, %v1683
  %v1685 = vpop.f32.mrf.mxu0
  %v1686 = vadd.f32 %v1517, %v1685
  %1687 = vmatmul.bf16.gmra.mxu0 %v701
  %v1688 = vpop.f32.mrf.mxu0
  %v1689 = vadd.f32 %v1520, %v1688
  %v1690 = vpop.f32.mrf.mxu0
  %v1691 = vadd.f32 %v1522, %v1690
  %1692 = vmatmul.bf16.gmra.mxu0 %v705
  %v1693 = vpop.f32.mrf.mxu0
  %v1694 = vadd.f32 %v1525, %v1693
  %v1695 = vpop.f32.mrf.mxu0
  %v1696 = vadd.f32 %v1527, %v1695
  %1697 = vmatmul.bf16.gmra.mxu0 %v709
  %v1698 = vpop.f32.mrf.mxu0
  %v1699 = vadd.f32 %v1530, %v1698
  %v1700 = vpop.f32.mrf.mxu0
  %v1701 = vadd.f32 %v1532, %v1700
  %1702 = vmatmul.bf16.gmra.mxu0 %v713
  %v1703 = vpop.f32.mrf.mxu0
  %v1704 = vadd.f32 %v1535, %v1703
  %v1705 = vpop.f32.mrf.mxu0
  %v1706 = vadd.f32 %v1537, %v1705
  %1707 = vmatmul.bf16.gmra.mxu0 %v717
  %v1708 = vpop.f32.mrf.mxu0
  %v1709 = vadd.f32 %v1540, %v1708
  %v1710 = vpop.f32.mrf.mxu0
  %v1711 = vadd.f32 %v1542, %v1710
  %1712 = vmatmul.bf16.gmra.mxu0 %v721
  %v1713 = vpop.f32.mrf.mxu0
  %v1714 = vadd.f32 %v1545, %v1713
  %v1715 = vpop.f32.mrf.mxu0
  %v1716 = vadd.f32 %v1547, %v1715
  %1717 = vdwg.mxu0
  %v1718 = vmax.f32 %v1559, 0.0
  %v1719 = vmax.f32 %v1561, 0.0
  %v1720 = vmax.f32 %v1564, 0.0
  %v1721 = vmax.f32 %v1566, 0.0
  %v1722 = vmax.f32 %v1569, 0.0
  %v1723 = vmax.f32 %v1571, 0.0
  %v1724 = vmax.f32 %v1574, 0.0
  %v1725 = vmax.f32 %v1576, 0.0
  %v1726 = vmax.f32 %v1579, 0.0
  %v1727 = vmax.f32 %v1581, 0.0
  %v1728 = vmax.f32 %v1584, 0.0
  %v1729 = vmax.f32 %v1586, 0.0
  %v1730 = vmax.f32 %v1589, 0.0
  %v1731 = vmax.f32 %v1591, 0.0
  %v1732 = vmax.f32 %v1594, 0.0
  %v1733 = vmax.f32 %v1596, 0.0
  %v1734 = vmax.f32 %v1599, 0.0
  %v1735 = vmax.f32 %v1601, 0.0
  %v1736 = vmax.f32 %v1604, 0.0
  %v1737 = vmax.f32 %v1606, 0.0
  %v1738 = vmax.f32 %v1609, 0.0
  %v1739 = vmax.f32 %v1611, 0.0
  %v1740 = vmax.f32 %v1614, 0.0
  %v1741 = vmax.f32 %v1616, 0.0
  %v1742 = vmax.f32 %v1619, 0.0
  %v1743 = vmax.f32 %v1621, 0.0
  %v1744 = vmax.f32 %v1624, 0.0
  %v1745 = vmax.f32 %v1626, 0.0
  %v1746 = vmax.f32 %v1629, 0.0
  %v1747 = vmax.f32 %v1631, 0.0
  %v1748 = vmax.f32 %v1634, 0.0
  %v1749 = vmax.f32 %v1636, 0.0
  %v1750 = vmax.f32 %v1639, 0.0
  %v1751 = vmax.f32 %v1641, 0.0
  %v1752 = vmax.f32 %v1644, 0.0
  %v1753 = vmax.f32 %v1646, 0.0
  %v1754 = vmax.f32 %v1649, 0.0
  %v1755 = vmax.f32 %v1651, 0.0
  %v1756 = vmax.f32 %v1654, 0.0
  %v1757 = vmax.f32 %v1656, 0.0
  %v1758 = vmax.f32 %v1659, 0.0
  %v1759 = vmax.f32 %v1661, 0.0
  %v1760 = vmax.f32 %v1664, 0.0
  %v1761 = vmax.f32 %v1666, 0.0
  %v1762 = vmax.f32 %v1669, 0.0
  %v1763 = vmax.f32 %v1671, 0.0
  %v1764 = vmax.f32 %v1674, 0.0
  %v1765 = vmax.f32 %v1676, 0.0
  %v1766 = vmax.f32 %v1679, 0.0
  %v1767 = vmax.f32 %v1681, 0.0
  %v1768 = vmax.f32 %v1684, 0.0
  %v1769 = vmax.f32 %v1686, 0.0
  %v1770 = vmax.f32 %v1689, 0.0
  %v1771 = vmax.f32 %v1691, 0.0
  %v1772 = vmax.f32 %v1694, 0.0
  %v1773 = vmax.f32 %v1696, 0.0
  %v1774 = vmax.f32 %v1699, 0.0
  %v1775 = vmax.f32 %v1701, 0.0
  %v1776 = vmax.f32 %v1704, 0.0
  %v1777 = vmax.f32 %v1706, 0.0
  %v1778 = vmax.f32 %v1709, 0.0
  %v1779 = vmax.f32 %v1711, 0.0
  %v1780 = vmax.f32 %v1714, 0.0
  %v1781 = vmax.f32 %v1716, 0.0
  %v1782 = vpack.c.bf16 %v1718, %v1718
  %v1783 = vpack.c.bf16 %v1719, %v1719
  %v1784 = vpack.c.bf16 %v1720, %v1720
  %v1785 = vpack.c.bf16 %v1721, %v1721
  %v1786 = vpack.c.bf16 %v1722, %v1722
  %v1787 = vpack.c.bf16 %v1723, %v1723
  %v1788 = vpack.c.bf16 %v1724, %v1724
  %v1789 = vpack.c.bf16 %v1725, %v1725
  %v1790 = vpack.c.bf16 %v1726, %v1726
  %v1791 = vpack.c.bf16 %v1727, %v1727
  %v1792 = vpack.c.bf16 %v1728, %v1728
  %v1793 = vpack.c.bf16 %v1729, %v1729
  %v1794 = vpack.c.bf16 %v1730, %v1730
  %v1795 = vpack.c.bf16 %v1731, %v1731
  %v1796 = vpack.c.bf16 %v1732, %v1732
  %v1797 = vpack.c.bf16 %v1733, %v1733
  %v1798 = vpack.c.bf16 %v1734, %v1734
  %v1799 = vpack.c.bf16 %v1735, %v1735
  %v1800 = vpack.c.bf16 %v1736, %v1736
  %v1801 = vpack.c.bf16 %v1737, %v1737
  %v1802 = vpack.c.bf16 %v1738, %v1738
  %v1803 = vpack.c.bf16 %v1739, %v1739
  %v1804 = vpack.c.bf16 %v1740, %v1740
  %v1805 = vpack.c.bf16 %v1741, %v1741
  %v1806 = vpack.c.bf16 %v1742, %v1742
  %v1807 = vpack.c.bf16 %v1743, %v1743
  %v1808 = vpack.c.bf16 %v1744, %v1744
  %v1809 = vpack.c.bf16 %v1745, %v1745
  %v1810 = vpack.c.bf16 %v1746, %v1746
  %v1811 = vpack.c.bf16 %v1747, %v1747
  %v1812 = vpack.c.bf16 %v1748, %v1748
  %v1813 = vpack.c.bf16 %v1749, %v1749
  %v1814 = vpack.c.bf16 %v1750, %v1750
  %v1815 = vpack.c.bf16 %v1751, %v1751
  %v1816 = vpack.c.bf16 %v1752, %v1752
  %v1817 = vpack.c.bf16 %v1753, %v1753
  %v1818 = vpack.c.bf16 %v1754, %v1754
  %v1819 = vpack.c.bf16 %v1755, %v1755
  %v1820 = vpack.c.bf16 %v1756, %v1756
  %v1821 = vpack.c.bf16 %v1757, %v1757
  %v1822 = vpack.c.bf16 %v1758, %v1758
  %v1823 = vpack.c.bf16 %v1759, %v1759
  %v1824 = vpack.c.bf16 %v1760, %v1760
  %v1825 = vpack.c.bf16 %v1761, %v1761
  %v1826 = vpack.c.bf16 %v1762, %v1762
  %v1827 = vpack.c.bf16 %v1763, %v1763
  %v1828 = vpack.c.bf16 %v1764, %v1764
  %v1829 = vpack.c.bf16 %v1765, %v1765
  %v1830 = vpack.c.bf16 %v1766, %v1766
  %v1831 = vpack.c.bf16 %v1767, %v1767
  %v1832 = vpack.c.bf16 %v1768, %v1768
  %v1833 = vpack.c.bf16 %v1769, %v1769
  %v1834 = vpack.c.bf16 %v1770, %v1770
  %v1835 = vpack.c.bf16 %v1771, %v1771
  %v1836 = vpack.c.bf16 %v1772, %v1772
  %v1837 = vpack.c.bf16 %v1773, %v1773
  %v1838 = vpack.c.bf16 %v1774, %v1774
  %v1839 = vpack.c.bf16 %v1775, %v1775
  %v1840 = vpack.c.bf16 %v1776, %v1776
  %v1841 = vpack.c.bf16 %v1777, %v1777
  %v1842 = vpack.c.bf16 %v1778, %v1778
  %v1843 = vpack.c.bf16 %v1779, %v1779
  %v1844 = vpack.c.bf16 %v1780, %v1780
  %v1845 = vpack.c.bf16 %v1781, %v1781
  %vm1846 = vcmask 257024
  %1847 = vst.msk [vmem:[%s3] sm:$0xf] %vm1846, %v1782
  %1848 = vst.msk [vmem:[%s3 + $0x4] sm:$0xf] %vm1846, %v1783
  %1849 = vst.msk [vmem:[%s3 + $0x8] sm:$0xf] %vm1846, %v1784
  %1850 = vst.msk [vmem:[%s3 + $0xc] sm:$0xf] %vm1846, %v1785
  %1851 = vst.msk [vmem:[%s3 + $0x10] sm:$0xf] %vm1846, %v1786
  %1852 = vst.msk [vmem:[%s3 + $0x14] sm:$0xf] %vm1846, %v1787
  %1853 = vst.msk [vmem:[%s3 + $0x18] sm:$0xf] %vm1846, %v1788
  %1854 = vst.msk [vmem:[%s3 + $0x1c] sm:$0xf] %vm1846, %v1789
  %1855 = vst.msk [vmem:[%s3 + $0x20] sm:$0xf] %vm1846, %v1790
  %1856 = vst.msk [vmem:[%s3 + $0x24] sm:$0xf] %vm1846, %v1791
  %1857 = vst.msk [vmem:[%s3 + $0x28] sm:$0xf] %vm1846, %v1792
  %1858 = vst.msk [vmem:[%s3 + $0x2c] sm:$0xf] %vm1846, %v1793
  %1859 = vst.msk [vmem:[%s3 + $0x30] sm:$0xf] %vm1846, %v1794
  %1860 = vst.msk [vmem:[%s3 + $0x34] sm:$0xf] %vm1846, %v1795
  %1861 = vst.msk [vmem:[%s3 + $0x38] sm:$0xf] %vm1846, %v1796
  %1862 = vst.msk [vmem:[%s3 + $0x3c] sm:$0xf] %vm1846, %v1797
  %1863 = vst.msk [vmem:[%s3 + $0x40] sm:$0xf] %vm1846, %v1798
  %1864 = vst.msk [vmem:[%s3 + $0x44] sm:$0xf] %vm1846, %v1799
  %1865 = vst.msk [vmem:[%s3 + $0x48] sm:$0xf] %vm1846, %v1800
  %1866 = vst.msk [vmem:[%s3 + $0x4c] sm:$0xf] %vm1846, %v1801
  %1867 = vst.msk [vmem:[%s3 + $0x50] sm:$0xf] %vm1846, %v1802
  %1868 = vst.msk [vmem:[%s3 + $0x54] sm:$0xf] %vm1846, %v1803
  %1869 = vst.msk [vmem:[%s3 + $0x58] sm:$0xf] %vm1846, %v1804
  %1870 = vst.msk [vmem:[%s3 + $0x5c] sm:$0xf] %vm1846, %v1805
  %1871 = vst.msk [vmem:[%s3 + $0x60] sm:$0xf] %vm1846, %v1806
  %1872 = vst.msk [vmem:[%s3 + $0x64] sm:$0xf] %vm1846, %v1807
  %1873 = vst.msk [vmem:[%s3 + $0x68] sm:$0xf] %vm1846, %v1808
  %1874 = vst.msk [vmem:[%s3 + $0x6c] sm:$0xf] %vm1846, %v1809
  %1875 = vst.msk [vmem:[%s3 + $0x70] sm:$0xf] %vm1846, %v1810
  %1876 = vst.msk [vmem:[%s3 + $0x74] sm:$0xf] %vm1846, %v1811
  %1877 = vst.msk [vmem:[%s3 + $0x78] sm:$0xf] %vm1846, %v1812
  %1878 = vst.msk [vmem:[%s3 + $0x7c] sm:$0xf] %vm1846, %v1813
  %1879 = vst.msk [vmem:[%s3 + $0x80] sm:$0xf] %vm1846, %v1814
  %1880 = vst.msk [vmem:[%s3 + $0x84] sm:$0xf] %vm1846, %v1815
  %1881 = vst.msk [vmem:[%s3 + $0x88] sm:$0xf] %vm1846, %v1816
  %1882 = vst.msk [vmem:[%s3 + $0x8c] sm:$0xf] %vm1846, %v1817
  %1883 = vst.msk [vmem:[%s3 + $0x90] sm:$0xf] %vm1846, %v1818
  %1884 = vst.msk [vmem:[%s3 + $0x94] sm:$0xf] %vm1846, %v1819
  %1885 = vst.msk [vmem:[%s3 + $0x98] sm:$0xf] %vm1846, %v1820
  %1886 = vst.msk [vmem:[%s3 + $0x9c] sm:$0xf] %vm1846, %v1821
  %1887 = vst.msk [vmem:[%s3 + $0xa0] sm:$0xf] %vm1846, %v1822
  %1888 = vst.msk [vmem:[%s3 + $0xa4] sm:$0xf] %vm1846, %v1823
  %1889 = vst.msk [vmem:[%s3 + $0xa8] sm:$0xf] %vm1846, %v1824
  %1890 = vst.msk [vmem:[%s3 + $0xac] sm:$0xf] %vm1846, %v1825
  %1891 = vst.msk [vmem:[%s3 + $0xb0] sm:$0xf] %vm1846, %v1826
  %1892 = vst.msk [vmem:[%s3 + $0xb4] sm:$0xf] %vm1846, %v1827
  %1893 = vst.msk [vmem:[%s3 + $0xb8] sm:$0xf] %vm1846, %v1828
  %1894 = vst.msk [vmem:[%s3 + $0xbc] sm:$0xf] %vm1846, %v1829
  %1895 = vst.msk [vmem:[%s3 + $0xc0] sm:$0xf] %vm1846, %v1830
  %1896 = vst.msk [vmem:[%s3 + $0xc4] sm:$0xf] %vm1846, %v1831
  %1897 = vst.msk [vmem:[%s3 + $0xc8] sm:$0xf] %vm1846, %v1832
  %1898 = vst.msk [vmem:[%s3 + $0xcc] sm:$0xf] %vm1846, %v1833
  %1899 = vst.msk [vmem:[%s3 + $0xd0] sm:$0xf] %vm1846, %v1834
  %1900 = vst.msk [vmem:[%s3 + $0xd4] sm:$0xf] %vm1846, %v1835
  %1901 = vst.msk [vmem:[%s3 + $0xd8] sm:$0xf] %vm1846, %v1836
  %1902 = vst.msk [vmem:[%s3 + $0xdc] sm:$0xf] %vm1846, %v1837
  %1903 = vst.msk [vmem:[%s3 + $0xe0] sm:$0xf] %vm1846, %v1838
  %1904 = vst.msk [vmem:[%s3 + $0xe4] sm:$0xf] %vm1846, %v1839
  %1905 = vst.msk [vmem:[%s3 + $0xe8] sm:$0xf] %vm1846, %v1840
  %1906 = vst.msk [vmem:[%s3 + $0xec] sm:$0xf] %vm1846, %v1841
  %1907 = vst.msk [vmem:[%s3 + $0xf0] sm:$0xf] %vm1846, %v1842
  %1908 = vst.msk [vmem:[%s3 + $0xf4] sm:$0xf] %vm1846, %v1843
  %1909 = vst.msk [vmem:[%s3 + $0xf8] sm:$0xf] %vm1846, %v1844
  %1910 = vst.msk [vmem:[%s3 + $0xfc] sm:$0xf] %vm1846, %v1845
  // Predicated region
  $region14: #{forward.10} parent=0 // pred_check
    _
  $region15: #{forward.10} parent=0 // pred_check_branch
    %1912 = sbr.rel (0) target = $region17
  $region16: #{forward.10} parent=0 // pred_region
    _
  $region17: #{forward.10} parent=0 // pred_fallthru
    _
  // Predicated region
  $region18: #{forward.10} parent=0 // pred_check
    _
  $region19: #{forward.10} parent=0 // pred_check_branch
    %1914 = sbr.rel (0) target = $region21
  $region20: #{forward.10} parent=0 // pred_region
    _
  $region21: #{forward.10} parent=0 // pred_fallthru
    _

// kernel: forward.11
$region0: #{forward.11}
  #allocation0 [shape = 'u32[]', space=smem, size = 0x4, offset = 0x4, fixed_abs, tag = 'smem constant byte address 0x4 - core index']
  #allocation1 [shape = 'u32[72,128]{1,0:T(1,128)}', space=vmem, size = 0x9000, scoped, tag = 'internal scratch']
  %s0 = inlined_call_operand.vmem [shape: bf16[128,512], index: 0, kind: input, shape index: {}]
  %s1 = inlined_call_operand.vmem [shape: bf16[512,64], index: 1, kind: input, shape index: {}]
  %s2 = inlined_call_operand.vmem [shape: f32[1,64], index: 2, kind: input, shape index: {}]
  %s3 = inlined_call_operand.vmem [shape: bf16[128,64], index: 3, kind: output, shape index: {}]
  %s4 = sld [smem:[#allocation0]]
  $region22: #{forward.11} parent=0
    _
  %s6 = ssub.s32 1, %s4
  %s7 = scalar_select 0, %s6, %s4
  // Predicated region
  $region2: #{forward.11} parent=0 // pred_check
    _
  $region3: #{forward.11} parent=0 // pred_check_branch
    %9 = sbr.rel (0) target = $region5
  $region4: #{forward.11} parent=0 // pred_region
    _
  $region5: #{forward.11} parent=0 // pred_fallthru
    _
  // Predicated region
  $region6: #{forward.11} parent=0 // pred_check
    _
  $region7: #{forward.11} parent=0 // pred_check_branch
    %11 = sbr.rel (0) target = $region9
  $region8: #{forward.11} parent=0 // pred_region
    _
  $region9: #{forward.11} parent=0 // pred_fallthru
    _
  // Predicated region
  $region10: #{forward.11} parent=0 // pred_check
    _
  $region11: #{forward.11} parent=0 // pred_check_branch
    %13 = sbr.rel (0) target = $region13
  $region12: #{forward.11} parent=0 // pred_region
    _
  $region13: #{forward.11} parent=0 // pred_fallthru
    _
  %v14 = vld [vmem:[%s0] sm:$0xff]
  %v15 = vld [vmem:[%s0 + $0x8] sm:$0xff]
  %v16 = vld [vmem:[%s0 + $0x10] sm:$0xff]
  %v17 = vld [vmem:[%s0 + $0x18] sm:$0xff]
  %v18 = vld [vmem:[%s0 + $0x20] sm:$0xff]
  %v19 = vld [vmem:[%s0 + $0x28] sm:$0xff]
  %v20 = vld [vmem:[%s0 + $0x30] sm:$0xff]
  %v21 = vld [vmem:[%s0 + $0x38] sm:$0xff]
  %v22 = vld [vmem:[%s0 + $0x40] sm:$0xff]
  %v23 = vld [vmem:[%s0 + $0x48] sm:$0xff]
  %v24 = vld [vmem:[%s0 + $0x50] sm:$0xff]
  %v25 = vld [vmem:[%s0 + $0x58] sm:$0xff]
  %v26 = vld [vmem:[%s0 + $0x60] sm:$0xff]
  %v27 = vld [vmem:[%s0 + $0x68] sm:$0xff]
  %v28 = vld [vmem:[%s0 + $0x70] sm:$0xff]
  %v29 = vld [vmem:[%s0 + $0x78] sm:$0xff]
  %v30 = vld [vmem:[%s0 + $0x80] sm:$0xff]
  %v31 = vld [vmem:[%s0 + $0x88] sm:$0xff]
  %v32 = vld [vmem:[%s0 + $0x90] sm:$0xff]
  %v33 = vld [vmem:[%s0 + $0x98] sm:$0xff]
  %v34 = vld [vmem:[%s0 + $0xa0] sm:$0xff]
  %v35 = vld [vmem:[%s0 + $0xa8] sm:$0xff]
  %v36 = vld [vmem:[%s0 + $0xb0] sm:$0xff]
  %v37 = vld [vmem:[%s0 + $0xb8] sm:$0xff]
  %v38 = vld [vmem:[%s0 + $0xc0] sm:$0xff]
  %v39 = vld [vmem:[%s0 + $0xc8] sm:$0xff]
  %v40 = vld [vmem:[%s0 + $0xd0] sm:$0xff]
  %v41 = vld [vmem:[%s0 + $0xd8] sm:$0xff]
  %v42 = vld [vmem:[%s0 + $0xe0] sm:$0xff]
  %v43 = vld [vmem:[%s0 + $0xe8] sm:$0xff]
  %v44 = vld [vmem:[%s0 + $0xf0] sm:$0xff]
  %v45 = vld [vmem:[%s0 + $0xf8] sm:$0xff]
  %v46 = vld [vmem:[%s1] sm:$0xf]
  %v47 = vld [vmem:[%s1 + $0x4] sm:$0xf]
  %v48 = vld [vmem:[%s1 + $0x8] sm:$0xf]
  %v49 = vld [vmem:[%s1 + $0xc] sm:$0xf]
  %v50 = vld [vmem:[%s1 + $0x10] sm:$0xf]
  %v51 = vld [vmem:[%s1 + $0x14] sm:$0xf]
  %v52 = vld [vmem:[%s1 + $0x18] sm:$0xf]
  %v53 = vld [vmem:[%s1 + $0x1c] sm:$0xf]
  %v54 = vld [vmem:[%s1 + $0x20] sm:$0xf]
  %v55 = vld [vmem:[%s1 + $0x24] sm:$0xf]
  %v56 = vld [vmem:[%s1 + $0x28] sm:$0xf]
  %v57 = vld [vmem:[%s1 + $0x2c] sm:$0xf]
  %v58 = vld [vmem:[%s1 + $0x30] sm:$0xf]
  %v59 = vld [vmem:[%s1 + $0x34] sm:$0xf]
  %v60 = vld [vmem:[%s1 + $0x38] sm:$0xf]
  %v61 = vld [vmem:[%s1 + $0x3c] sm:$0xf]
  %v62 = vld [vmem:[%s1 + $0x40] sm:$0xf]
  %v63 = vld [vmem:[%s1 + $0x44] sm:$0xf]
  %v64 = vld [vmem:[%s1 + $0x48] sm:$0xf]
  %v65 = vld [vmem:[%s1 + $0x4c] sm:$0xf]
  %v66 = vld [vmem:[%s1 + $0x50] sm:$0xf]
  %v67 = vld [vmem:[%s1 + $0x54] sm:$0xf]
  %v68 = vld [vmem:[%s1 + $0x58] sm:$0xf]
  %v69 = vld [vmem:[%s1 + $0x5c] sm:$0xf]
  %v70 = vld [vmem:[%s1 + $0x60] sm:$0xf]
  %v71 = vld [vmem:[%s1 + $0x64] sm:$0xf]
  %v72 = vld [vmem:[%s1 + $0x68] sm:$0xf]
  %v73 = vld [vmem:[%s1 + $0x6c] sm:$0xf]
  %v74 = vld [vmem:[%s1 + $0x70] sm:$0xf]
  %v75 = vld [vmem:[%s1 + $0x74] sm:$0xf]
  %v76 = vld [vmem:[%s1 + $0x78] sm:$0xf]
  %v77 = vld [vmem:[%s1 + $0x7c] sm:$0xf]
  %v78 = vld [vmem:[%s1 + $0x80] sm:$0xf]
  %v79 = vld [vmem:[%s1 + $0x84] sm:$0xf]
  %v80 = vld [vmem:[%s1 + $0x88] sm:$0xf]
  %v81 = vld [vmem:[%s1 + $0x8c] sm:$0xf]
  %v82 = vld [vmem:[%s1 + $0x90] sm:$0xf]
  %v83 = vld [vmem:[%s1 + $0x94] sm:$0xf]
  %v84 = vld [vmem:[%s1 + $0x98] sm:$0xf]
  %v85 = vld [vmem:[%s1 + $0x9c] sm:$0xf]
  %v86 = vld [vmem:[%s1 + $0xa0] sm:$0xf]
  %v87 = vld [vmem:[%s1 + $0xa4] sm:$0xf]
  %v88 = vld [vmem:[%s1 + $0xa8] sm:$0xf]
  %v89 = vld [vmem:[%s1 + $0xac] sm:$0xf]
  %v90 = vld [vmem:[%s1 + $0xb0] sm:$0xf]
  %v91 = vld [vmem:[%s1 + $0xb4] sm:$0xf]
  %v92 = vld [vmem:[%s1 + $0xb8] sm:$0xf]
  %v93 = vld [vmem:[%s1 + $0xbc] sm:$0xf]
  %v94 = vld [vmem:[%s1 + $0xc0] sm:$0xf]
  %v95 = vld [vmem:[%s1 + $0xc4] sm:$0xf]
  %v96 = vld [vmem:[%s1 + $0xc8] sm:$0xf]
  %v97 = vld [vmem:[%s1 + $0xcc] sm:$0xf]
  %v98 = vld [vmem:[%s1 + $0xd0] sm:$0xf]
  %v99 = vld [vmem:[%s1 + $0xd4] sm:$0xf]
  %v100 = vld [vmem:[%s1 + $0xd8] sm:$0xf]
  %v101 = vld [vmem:[%s1 + $0xdc] sm:$0xf]
  %v102 = vld [vmem:[%s1 + $0xe0] sm:$0xf]
  %v103 = vld [vmem:[%s1 + $0xe4] sm:$0xf]
  %v104 = vld [vmem:[%s1 + $0xe8] sm:$0xf]
  %v105 = vld [vmem:[%s1 + $0xec] sm:$0xf]
  %v106 = vld [vmem:[%s1 + $0xf0] sm:$0xf]
  %v107 = vld [vmem:[%s1 + $0xf4] sm:$0xf]
  %v108 = vld [vmem:[%s1 + $0xf8] sm:$0xf]
  %v109 = vld [vmem:[%s1 + $0xfc] sm:$0xf]
  %v110 = vld [vmem:[%s2] sm:$0x1]
  %v112 = vperm.slane %v110, 0
  %v146 = vunpack.c.l.b16 %v14
  %v147 = vunpack.c.h.b16 %v14
  %v148 = vunpack.c.l.b16 %v15
  %v149 = vunpack.c.h.b16 %v15
  %v150 = vunpack.c.l.b16 %v16
  %v151 = vunpack.c.h.b16 %v16
  %v152 = vunpack.c.l.b16 %v17
  %v153 = vunpack.c.h.b16 %v17
  %v154 = vunpack.c.l.b16 %v18
  %v155 = vunpack.c.h.b16 %v18
  %v156 = vunpack.c.l.b16 %v19
  %v157 = vunpack.c.h.b16 %v19
  %v158 = vunpack.c.l.b16 %v20
  %v159 = vunpack.c.h.b16 %v20
  %v160 = vunpack.c.l.b16 %v21
  %v161 = vunpack.c.h.b16 %v21
  %v162 = vunpack.c.l.b16 %v22
  %v163 = vunpack.c.h.b16 %v22
  %v164 = vunpack.c.l.b16 %v23
  %v165 = vunpack.c.h.b16 %v23
  %v166 = vunpack.c.l.b16 %v24
  %v167 = vunpack.c.h.b16 %v24
  %v168 = vunpack.c.l.b16 %v25
  %v169 = vunpack.c.h.b16 %v25
  %v170 = vunpack.c.l.b16 %v26
  %v171 = vunpack.c.h.b16 %v26
  %v172 = vunpack.c.l.b16 %v27
  %v173 = vunpack.c.h.b16 %v27
  %v174 = vunpack.c.l.b16 %v28
  %v175 = vunpack.c.h.b16 %v28
  %v176 = vunpack.c.l.b16 %v29
  %v177 = vunpack.c.h.b16 %v29
  %v178 = vunpack.c.l.b16 %v30
  %v179 = vunpack.c.h.b16 %v30
  %v180 = vunpack.c.l.b16 %v31
  %v181 = vunpack.c.h.b16 %v31
  %v182 = vunpack.c.l.b16 %v32
  %v183 = vunpack.c.h.b16 %v32
  %v184 = vunpack.c.l.b16 %v33
  %v185 = vunpack.c.h.b16 %v33
  %v186 = vunpack.c.l.b16 %v34
  %v187 = vunpack.c.h.b16 %v34
  %v188 = vunpack.c.l.b16 %v35
  %v189 = vunpack.c.h.b16 %v35
  %v190 = vunpack.c.l.b16 %v36
  %v191 = vunpack.c.h.b16 %v36
  %v192 = vunpack.c.l.b16 %v37
  %v193 = vunpack.c.h.b16 %v37
  %v194 = vunpack.c.l.b16 %v38
  %v195 = vunpack.c.h.b16 %v38
  %v196 = vunpack.c.l.b16 %v39
  %v197 = vunpack.c.h.b16 %v39
  %v198 = vunpack.c.l.b16 %v40
  %v199 = vunpack.c.h.b16 %v40
  %v200 = vunpack.c.l.b16 %v41
  %v201 = vunpack.c.h.b16 %v41
  %v202 = vunpack.c.l.b16 %v42
  %v203 = vunpack.c.h.b16 %v42
  %v204 = vunpack.c.l.b16 %v43
  %v205 = vunpack.c.h.b16 %v43
  %v206 = vunpack.c.l.b16 %v44
  %v207 = vunpack.c.h.b16 %v44
  %v208 = vunpack.c.l.b16 %v45
  %v209 = vunpack.c.h.b16 %v45
  %v210 = vpack.c.b16 %v150, %v146
  %v211 = vpack.c.b16 %v151, %v147
  %v212 = vpack.c.b16 %v152, %v148
  %v213 = vpack.c.b16 %v153, %v149
  %v214 = vpack.c.b16 %v158, %v154
  %v215 = vpack.c.b16 %v159, %v155
  %v216 = vpack.c.b16 %v160, %v156
  %v217 = vpack.c.b16 %v161, %v157
  %v218 = vpack.c.b16 %v166, %v162
  %v219 = vpack.c.b16 %v167, %v163
  %v220 = vpack.c.b16 %v168, %v164
  %v221 = vpack.c.b16 %v169, %v165
  %v222 = vpack.c.b16 %v174, %v170
  %v223 = vpack.c.b16 %v175, %v171
  %v224 = vpack.c.b16 %v176, %v172
  %v225 = vpack.c.b16 %v177, %v173
  %v226 = vpack.c.b16 %v182, %v178
  %v227 = vpack.c.b16 %v183, %v179
  %v228 = vpack.c.b16 %v184, %v180
  %v229 = vpack.c.b16 %v185, %v181
  %v230 = vpack.c.b16 %v190, %v186
  %v231 = vpack.c.b16 %v191, %v187
  %v232 = vpack.c.b16 %v192, %v188
  %v233 = vpack.c.b16 %v193, %v189
  %v234 = vpack.c.b16 %v198, %v194
  %v235 = vpack.c.b16 %v199, %v195
  %v236 = vpack.c.b16 %v200, %v196
  %v237 = vpack.c.b16 %v201, %v197
  %v238 = vpack.c.b16 %v206, %v202
  %v239 = vpack.c.b16 %v207, %v203
  %v240 = vpack.c.b16 %v208, %v204
  %v241 = vpack.c.b16 %v209, %v205
  %v338 = vunpack.c.l.b16 %v46
  %v339 = vunpack.c.l.b16 %v47
  %v340 = vunpack.c.l.b16 %v48
  %v341 = vunpack.c.l.b16 %v49
  %v342 = vunpack.c.l.b16 %v50
  %v343 = vunpack.c.l.b16 %v51
  %v344 = vunpack.c.l.b16 %v52
  %v345 = vunpack.c.l.b16 %v53
  %v346 = vunpack.c.l.b16 %v54
  %v347 = vunpack.c.l.b16 %v55
  %v348 = vunpack.c.l.b16 %v56
  %v349 = vunpack.c.l.b16 %v57
  %v350 = vunpack.c.l.b16 %v58
  %v351 = vunpack.c.l.b16 %v59
  %v352 = vunpack.c.l.b16 %v60
  %v353 = vunpack.c.l.b16 %v61
  %v354 = vunpack.c.l.b16 %v62
  %v355 = vunpack.c.l.b16 %v63
  %v356 = vunpack.c.l.b16 %v64
  %v357 = vunpack.c.l.b16 %v65
  %v358 = vunpack.c.l.b16 %v66
  %v359 = vunpack.c.l.b16 %v67
  %v360 = vunpack.c.l.b16 %v68
  %v361 = vunpack.c.l.b16 %v69
  %v362 = vunpack.c.l.b16 %v70
  %v363 = vunpack.c.l.b16 %v71
  %v364 = vunpack.c.l.b16 %v72
  %v365 = vunpack.c.l.b16 %v73
  %v366 = vunpack.c.l.b16 %v74
  %v367 = vunpack.c.l.b16 %v75
  %v368 = vunpack.c.l.b16 %v76
  %v369 = vunpack.c.l.b16 %v77
  %v370 = vunpack.c.l.b16 %v78
  %v371 = vunpack.c.l.b16 %v79
  %v372 = vunpack.c.l.b16 %v80
  %v373 = vunpack.c.l.b16 %v81
  %v374 = vunpack.c.l.b16 %v82
  %v375 = vunpack.c.l.b16 %v83
  %v376 = vunpack.c.l.b16 %v84
  %v377 = vunpack.c.l.b16 %v85
  %v378 = vunpack.c.l.b16 %v86
  %v379 = vunpack.c.l.b16 %v87
  %v380 = vunpack.c.l.b16 %v88
  %v381 = vunpack.c.l.b16 %v89
  %v382 = vunpack.c.l.b16 %v90
  %v383 = vunpack.c.l.b16 %v91
  %v384 = vunpack.c.l.b16 %v92
  %v385 = vunpack.c.l.b16 %v93
  %v386 = vunpack.c.l.b16 %v94
  %v387 = vunpack.c.l.b16 %v95
  %v388 = vunpack.c.l.b16 %v96
  %v389 = vunpack.c.l.b16 %v97
  %v390 = vunpack.c.l.b16 %v98
  %v391 = vunpack.c.l.b16 %v99
  %v392 = vunpack.c.l.b16 %v100
  %v393 = vunpack.c.l.b16 %v101
  %v394 = vunpack.c.l.b16 %v102
  %v395 = vunpack.c.l.b16 %v103
  %v396 = vunpack.c.l.b16 %v104
  %v397 = vunpack.c.l.b16 %v105
  %v398 = vunpack.c.l.b16 %v106
  %v399 = vunpack.c.l.b16 %v107
  %v400 = vunpack.c.l.b16 %v108
  %v401 = vunpack.c.l.b16 %v109
  %v402 = vpack.c.b16 %v339, %v338
  %v403 = vpack.c.b16 %v341, %v340
  %v404 = vpack.c.b16 %v343, %v342
  %v405 = vpack.c.b16 %v345, %v344
  %v406 = vpack.c.b16 %v347, %v346
  %v407 = vpack.c.b16 %v349, %v348
  %v408 = vpack.c.b16 %v351, %v350
  %v409 = vpack.c.b16 %v353, %v352
  %v410 = vpack.c.b16 %v355, %v354
  %v411 = vpack.c.b16 %v357, %v356
  %v412 = vpack.c.b16 %v359, %v358
  %v413 = vpack.c.b16 %v361, %v360
  %v414 = vpack.c.b16 %v363, %v362
  %v415 = vpack.c.b16 %v365, %v364
  %v416 = vpack.c.b16 %v367, %v366
  %v417 = vpack.c.b16 %v369, %v368
  %v418 = vpack.c.b16 %v371, %v370
  %v419 = vpack.c.b16 %v373, %v372
  %v420 = vpack.c.b16 %v375, %v374
  %v421 = vpack.c.b16 %v377, %v376
  %v422 = vpack.c.b16 %v379, %v378
  %v423 = vpack.c.b16 %v381, %v380
  %v424 = vpack.c.b16 %v383, %v382
  %v425 = vpack.c.b16 %v385, %v384
  %v426 = vpack.c.b16 %v387, %v386
  %v427 = vpack.c.b16 %v389, %v388
  %v428 = vpack.c.b16 %v391, %v390
  %v429 = vpack.c.b16 %v393, %v392
  %v430 = vpack.c.b16 %v395, %v394
  %v431 = vpack.c.b16 %v397, %v396
  %v432 = vpack.c.b16 %v399, %v398
  %v433 = vpack.c.b16 %v401, %v400
  %466 = vmatpush.bf16.msra.mxu0 %v409
  %467 = vmatpush.bf16.msra.mxu0 %v408
  %468 = vmatpush.bf16.msra.mxu0 %v407
  %469 = vmatpush.bf16.msra.mxu0 %v406
  %470 = vmatpush.bf16.msra.mxu0 %v405
  %471 = vmatpush.bf16.msra.mxu0 %v404
  %472 = vmatpush.bf16.msra.mxu0 %v403
  %473 = vmatpush.bf16.msra.mxu0 %v402
  %474 = vmatmul.bf16.gmra.mxu0 %v210
  %v475 = vpop.f32.mrf.mxu0
  %v476 = vadd.f32 %v112, %v475
  %v477 = vpop.f32.mrf.mxu0
  %v478 = vadd.f32 %v112, %v477
  %479 = vmatmul.bf16.gmra.mxu0 %v214
  %v480 = vpop.f32.mrf.mxu0
  %v481 = vadd.f32 %v112, %v480
  %v482 = vpop.f32.mrf.mxu0
  %v483 = vadd.f32 %v112, %v482
  %484 = vmatmul.bf16.gmra.mxu0 %v218
  %v485 = vpop.f32.mrf.mxu0
  %v486 = vadd.f32 %v112, %v485
  %v487 = vpop.f32.mrf.mxu0
  %v488 = vadd.f32 %v112, %v487
  %489 = vmatmul.bf16.gmra.mxu0 %v222
  %v490 = vpop.f32.mrf.mxu0
  %v491 = vadd.f32 %v112, %v490
  %v492 = vpop.f32.mrf.mxu0
  %v493 = vadd.f32 %v112, %v492
  %494 = vmatmul.bf16.gmra.mxu0 %v226
  %v495 = vpop.f32.mrf.mxu0
  %v496 = vadd.f32 %v112, %v495
  %v497 = vpop.f32.mrf.mxu0
  %v498 = vadd.f32 %v112, %v497
  %499 = vmatmul.bf16.gmra.mxu0 %v230
  %v500 = vpop.f32.mrf.mxu0
  %v501 = vadd.f32 %v112, %v500
  %v502 = vpop.f32.mrf.mxu0
  %v503 = vadd.f32 %v112, %v502
  %504 = vmatmul.bf16.gmra.mxu0 %v234
  %v505 = vpop.f32.mrf.mxu0
  %v506 = vadd.f32 %v112, %v505
  %v507 = vpop.f32.mrf.mxu0
  %v508 = vadd.f32 %v112, %v507
  %509 = vmatmul.bf16.gmra.mxu0 %v238
  %v510 = vpop.f32.mrf.mxu0
  %v511 = vadd.f32 %v112, %v510
  %v512 = vpop.f32.mrf.mxu0
  %v513 = vadd.f32 %v112, %v512
  %514 = vdwg.mxu0
  %515 = vmatpush.bf16.msra.mxu0 %v417
  %516 = vmatpush.bf16.msra.mxu0 %v416
  %517 = vmatpush.bf16.msra.mxu0 %v415
  %518 = vmatpush.bf16.msra.mxu0 %v414
  %519 = vmatpush.bf16.msra.mxu0 %v413
  %520 = vmatpush.bf16.msra.mxu0 %v412
  %521 = vmatpush.bf16.msra.mxu0 %v411
  %522 = vmatpush.bf16.msra.mxu0 %v410
  %523 = vmatmul.bf16.gmra.mxu0 %v211
  %v524 = vpop.f32.mrf.mxu0
  %v525 = vadd.f32 %v476, %v524
  %v526 = vpop.f32.mrf.mxu0
  %v527 = vadd.f32 %v478, %v526
  %528 = vmatmul.bf16.gmra.mxu0 %v215
  %v529 = vpop.f32.mrf.mxu0
  %v530 = vadd.f32 %v481, %v529
  %v531 = vpop.f32.mrf.mxu0
  %v532 = vadd.f32 %v483, %v531
  %533 = vmatmul.bf16.gmra.mxu0 %v219
  %v534 = vpop.f32.mrf.mxu0
  %v535 = vadd.f32 %v486, %v534
  %v536 = vpop.f32.mrf.mxu0
  %v537 = vadd.f32 %v488, %v536
  %538 = vmatmul.bf16.gmra.mxu0 %v223
  %v539 = vpop.f32.mrf.mxu0
  %v540 = vadd.f32 %v491, %v539
  %v541 = vpop.f32.mrf.mxu0
  %v542 = vadd.f32 %v493, %v541
  %543 = vmatmul.bf16.gmra.mxu0 %v227
  %v544 = vpop.f32.mrf.mxu0
  %v545 = vadd.f32 %v496, %v544
  %v546 = vpop.f32.mrf.mxu0
  %v547 = vadd.f32 %v498, %v546
  %548 = vmatmul.bf16.gmra.mxu0 %v231
  %v549 = vpop.f32.mrf.mxu0
  %v550 = vadd.f32 %v501, %v549
  %v551 = vpop.f32.mrf.mxu0
  %v552 = vadd.f32 %v503, %v551
  %553 = vmatmul.bf16.gmra.mxu0 %v235
  %v554 = vpop.f32.mrf.mxu0
  %v555 = vadd.f32 %v506, %v554
  %v556 = vpop.f32.mrf.mxu0
  %v557 = vadd.f32 %v508, %v556
  %558 = vmatmul.bf16.gmra.mxu0 %v239
  %v559 = vpop.f32.mrf.mxu0
  %v560 = vadd.f32 %v511, %v559
  %v561 = vpop.f32.mrf.mxu0
  %v562 = vadd.f32 %v513, %v561
  %563 = vdwg.mxu0
  %564 = vmatpush.bf16.msra.mxu0 %v425
  %565 = vmatpush.bf16.msra.mxu0 %v424
  %566 = vmatpush.bf16.msra.mxu0 %v423
  %567 = vmatpush.bf16.msra.mxu0 %v422
  %568 = vmatpush.bf16.msra.mxu0 %v421
  %569 = vmatpush.bf16.msra.mxu0 %v420
  %570 = vmatpush.bf16.msra.mxu0 %v419
  %571 = vmatpush.bf16.msra.mxu0 %v418
  %572 = vmatmul.bf16.gmra.mxu0 %v212
  %v573 = vpop.f32.mrf.mxu0
  %v574 = vadd.f32 %v525, %v573
  %v575 = vpop.f32.mrf.mxu0
  %v576 = vadd.f32 %v527, %v575
  %577 = vmatmul.bf16.gmra.mxu0 %v216
  %v578 = vpop.f32.mrf.mxu0
  %v579 = vadd.f32 %v530, %v578
  %v580 = vpop.f32.mrf.mxu0
  %v581 = vadd.f32 %v532, %v580
  %582 = vmatmul.bf16.gmra.mxu0 %v220
  %v583 = vpop.f32.mrf.mxu0
  %v584 = vadd.f32 %v535, %v583
  %v585 = vpop.f32.mrf.mxu0
  %v586 = vadd.f32 %v537, %v585
  %587 = vmatmul.bf16.gmra.mxu0 %v224
  %v588 = vpop.f32.mrf.mxu0
  %v589 = vadd.f32 %v540, %v588
  %v590 = vpop.f32.mrf.mxu0
  %v591 = vadd.f32 %v542, %v590
  %592 = vmatmul.bf16.gmra.mxu0 %v228
  %v593 = vpop.f32.mrf.mxu0
  %v594 = vadd.f32 %v545, %v593
  %v595 = vpop.f32.mrf.mxu0
  %v596 = vadd.f32 %v547, %v595
  %597 = vmatmul.bf16.gmra.mxu0 %v232
  %v598 = vpop.f32.mrf.mxu0
  %v599 = vadd.f32 %v550, %v598
  %v600 = vpop.f32.mrf.mxu0
  %v601 = vadd.f32 %v552, %v600
  %602 = vmatmul.bf16.gmra.mxu0 %v236
  %v603 = vpop.f32.mrf.mxu0
  %v604 = vadd.f32 %v555, %v603
  %v605 = vpop.f32.mrf.mxu0
  %v606 = vadd.f32 %v557, %v605
  %607 = vmatmul.bf16.gmra.mxu0 %v240
  %v608 = vpop.f32.mrf.mxu0
  %v609 = vadd.f32 %v560, %v608
  %v610 = vpop.f32.mrf.mxu0
  %v611 = vadd.f32 %v562, %v610
  %612 = vdwg.mxu0
  %613 = vmatpush.bf16.msra.mxu0 %v433
  %614 = vmatpush.bf16.msra.mxu0 %v432
  %615 = vmatpush.bf16.msra.mxu0 %v431
  %616 = vmatpush.bf16.msra.mxu0 %v430
  %617 = vmatpush.bf16.msra.mxu0 %v429
  %618 = vmatpush.bf16.msra.mxu0 %v428
  %619 = vmatpush.bf16.msra.mxu0 %v427
  %620 = vmatpush.bf16.msra.mxu0 %v426
  %621 = vmatmul.bf16.gmra.mxu0 %v213
  %v622 = vpop.f32.mrf.mxu0
  %v623 = vadd.f32 %v574, %v622
  %v624 = vpop.f32.mrf.mxu0
  %v625 = vadd.f32 %v576, %v624
  %626 = vmatmul.bf16.gmra.mxu0 %v217
  %v627 = vpop.f32.mrf.mxu0
  %v628 = vadd.f32 %v579, %v627
  %v629 = vpop.f32.mrf.mxu0
  %v630 = vadd.f32 %v581, %v629
  %631 = vmatmul.bf16.gmra.mxu0 %v221
  %v632 = vpop.f32.mrf.mxu0
  %v633 = vadd.f32 %v584, %v632
  %v634 = vpop.f32.mrf.mxu0
  %v635 = vadd.f32 %v586, %v634
  %636 = vmatmul.bf16.gmra.mxu0 %v225
  %v637 = vpop.f32.mrf.mxu0
  %v638 = vadd.f32 %v589, %v637
  %v639 = vpop.f32.mrf.mxu0
  %v640 = vadd.f32 %v591, %v639
  %641 = vmatmul.bf16.gmra.mxu0 %v229
  %v642 = vpop.f32.mrf.mxu0
  %v643 = vadd.f32 %v594, %v642
  %v644 = vpop.f32.mrf.mxu0
  %v645 = vadd.f32 %v596, %v644
  %646 = vmatmul.bf16.gmra.mxu0 %v233
  %v647 = vpop.f32.mrf.mxu0
  %v648 = vadd.f32 %v599, %v647
  %v649 = vpop.f32.mrf.mxu0
  %v650 = vadd.f32 %v601, %v649
  %651 = vmatmul.bf16.gmra.mxu0 %v237
  %v652 = vpop.f32.mrf.mxu0
  %v653 = vadd.f32 %v604, %v652
  %v654 = vpop.f32.mrf.mxu0
  %v655 = vadd.f32 %v606, %v654
  %656 = vmatmul.bf16.gmra.mxu0 %v241
  %v657 = vpop.f32.mrf.mxu0
  %v658 = vadd.f32 %v609, %v657
  %v659 = vpop.f32.mrf.mxu0
  %v660 = vadd.f32 %v611, %v659
  %661 = vdwg.mxu0
  %v662 = vmax.f32 %v623, 0.0
  %v663 = vmax.f32 %v625, 0.0
  %v664 = vmax.f32 %v628, 0.0
  %v665 = vmax.f32 %v630, 0.0
  %v666 = vmax.f32 %v633, 0.0
  %v667 = vmax.f32 %v635, 0.0
  %v668 = vmax.f32 %v638, 0.0
  %v669 = vmax.f32 %v640, 0.0
  %v670 = vmax.f32 %v643, 0.0
  %v671 = vmax.f32 %v645, 0.0
  %v672 = vmax.f32 %v648, 0.0
  %v673 = vmax.f32 %v650, 0.0
  %v674 = vmax.f32 %v653, 0.0
  %v675 = vmax.f32 %v655, 0.0
  %v676 = vmax.f32 %v658, 0.0
  %v677 = vmax.f32 %v660, 0.0
  %v678 = vpack.c.bf16 %v662, %v662
  %v679 = vpack.c.bf16 %v663, %v663
  %v680 = vpack.c.bf16 %v664, %v664
  %v681 = vpack.c.bf16 %v665, %v665
  %v682 = vpack.c.bf16 %v666, %v666
  %v683 = vpack.c.bf16 %v667, %v667
  %v684 = vpack.c.bf16 %v668, %v668
  %v685 = vpack.c.bf16 %v669, %v669
  %v686 = vpack.c.bf16 %v670, %v670
  %v687 = vpack.c.bf16 %v671, %v671
  %v688 = vpack.c.bf16 %v672, %v672
  %v689 = vpack.c.bf16 %v673, %v673
  %v690 = vpack.c.bf16 %v674, %v674
  %v691 = vpack.c.bf16 %v675, %v675
  %v692 = vpack.c.bf16 %v676, %v676
  %v693 = vpack.c.bf16 %v677, %v677
  %vm694 = vcmask 519168
  %695 = vst.msk [vmem:[%s3] sm:$0xf] %vm694, %v678
  %696 = vst.msk [vmem:[%s3 + $0x4] sm:$0xf] %vm694, %v679
  %697 = vst.msk [vmem:[%s3 + $0x8] sm:$0xf] %vm694, %v680
  %698 = vst.msk [vmem:[%s3 + $0xc] sm:$0xf] %vm694, %v681
  %699 = vst.msk [vmem:[%s3 + $0x10] sm:$0xf] %vm694, %v682
  %700 = vst.msk [vmem:[%s3 + $0x14] sm:$0xf] %vm694, %v683
  %701 = vst.msk [vmem:[%s3 + $0x18] sm:$0xf] %vm694, %v684
  %702 = vst.msk [vmem:[%s3 + $0x1c] sm:$0xf] %vm694, %v685
  %703 = vst.msk [vmem:[%s3 + $0x20] sm:$0xf] %vm694, %v686
  %704 = vst.msk [vmem:[%s3 + $0x24] sm:$0xf] %vm694, %v687
  %705 = vst.msk [vmem:[%s3 + $0x28] sm:$0xf] %vm694, %v688
  %706 = vst.msk [vmem:[%s3 + $0x2c] sm:$0xf] %vm694, %v689
  %707 = vst.msk [vmem:[%s3 + $0x30] sm:$0xf] %vm694, %v690
  %708 = vst.msk [vmem:[%s3 + $0x34] sm:$0xf] %vm694, %v691
  %709 = vst.msk [vmem:[%s3 + $0x38] sm:$0xf] %vm694, %v692
  %710 = vst.msk [vmem:[%s3 + $0x3c] sm:$0xf] %vm694, %v693
  // Predicated region
  $region14: #{forward.11} parent=0 // pred_check
    _
  $region15: #{forward.11} parent=0 // pred_check_branch
    %712 = sbr.rel (0) target = $region17
  $region16: #{forward.11} parent=0 // pred_region
    _
  $region17: #{forward.11} parent=0 // pred_fallthru
    _
  // Predicated region
  $region18: #{forward.11} parent=0 // pred_check
    _
  $region19: #{forward.11} parent=0 // pred_check_branch
    %714 = sbr.rel (0) target = $region21
  $region20: #{forward.11} parent=0 // pred_region
    _
  $region21: #{forward.11} parent=0 // pred_fallthru
    _

// kernel: forward.12
$region0: #{forward.12}
  #allocation0 [shape = 'u32[]', space=smem, size = 0x4, offset = 0x4, fixed_abs, tag = 'smem constant byte address 0x4 - core index']
  #allocation1 [shape = 'u32[72,128]{1,0:T(1,128)}', space=vmem, size = 0x9000, scoped, tag = 'internal scratch']
  %s0 = inlined_call_operand.vmem [shape: bf16[32,1024], index: 0, kind: input, shape index: {}]
  %s1 = inlined_call_operand.vmem [shape: bf16[1024,64], index: 1, kind: input, shape index: {}]
  %s2 = inlined_call_operand.vmem [shape: f32[1,64], index: 2, kind: input, shape index: {}]
  %s3 = inlined_call_operand.vmem [shape: f32[32,64], index: 3, kind: output, shape index: {}]
  %s4 = sld [smem:[#allocation0]]
  $region22: #{forward.12} parent=0
    _
  %s6 = ssub.s32 1, %s4
  %s7 = scalar_select 0, %s6, %s4
  // Predicated region
  $region2: #{forward.12} parent=0 // pred_check
    _
  $region3: #{forward.12} parent=0 // pred_check_branch
    %9 = sbr.rel (0) target = $region5
  $region4: #{forward.12} parent=0 // pred_region
    _
  $region5: #{forward.12} parent=0 // pred_fallthru
    _
  // Predicated region
  $region6: #{forward.12} parent=0 // pred_check
    _
  $region7: #{forward.12} parent=0 // pred_check_branch
    %11 = sbr.rel (0) target = $region9
  $region8: #{forward.12} parent=0 // pred_region
    _
  $region9: #{forward.12} parent=0 // pred_fallthru
    _
  // Predicated region
  $region10: #{forward.12} parent=0 // pred_check
    _
  $region11: #{forward.12} parent=0 // pred_check_branch
    %13 = sbr.rel (0) target = $region13
  $region12: #{forward.12} parent=0 // pred_region
    _
  $region13: #{forward.12} parent=0 // pred_fallthru
    _
  %v14 = vld [vmem:[%s0] sm:$0xff]
  %v15 = vld [vmem:[%s0 + $0x8] sm:$0xff]
  %v16 = vld [vmem:[%s0 + $0x10] sm:$0xff]
  %v17 = vld [vmem:[%s0 + $0x18] sm:$0xff]
  %v18 = vld [vmem:[%s0 + $0x20] sm:$0xff]
  %v19 = vld [vmem:[%s0 + $0x28] sm:$0xff]
  %v20 = vld [vmem:[%s0 + $0x30] sm:$0xff]
  %v21 = vld [vmem:[%s0 + $0x38] sm:$0xff]
  %v22 = vld [vmem:[%s0 + $0x40] sm:$0xff]
  %v23 = vld [vmem:[%s0 + $0x48] sm:$0xff]
  %v24 = vld [vmem:[%s0 + $0x50] sm:$0xff]
  %v25 = vld [vmem:[%s0 + $0x58] sm:$0xff]
  %v26 = vld [vmem:[%s0 + $0x60] sm:$0xff]
  %v27 = vld [vmem:[%s0 + $0x68] sm:$0xff]
  %v28 = vld [vmem:[%s0 + $0x70] sm:$0xff]
  %v29 = vld [vmem:[%s0 + $0x78] sm:$0xff]
  %v30 = vld [vmem:[%s1] sm:$0xf]
  %v31 = vld [vmem:[%s1 + $0x4] sm:$0xf]
  %v32 = vld [vmem:[%s1 + $0x8] sm:$0xf]
  %v33 = vld [vmem:[%s1 + $0xc] sm:$0xf]
  %v34 = vld [vmem:[%s1 + $0x10] sm:$0xf]
  %v35 = vld [vmem:[%s1 + $0x14] sm:$0xf]
  %v36 = vld [vmem:[%s1 + $0x18] sm:$0xf]
  %v37 = vld [vmem:[%s1 + $0x1c] sm:$0xf]
  %v38 = vld [vmem:[%s1 + $0x20] sm:$0xf]
  %v39 = vld [vmem:[%s1 + $0x24] sm:$0xf]
  %v40 = vld [vmem:[%s1 + $0x28] sm:$0xf]
  %v41 = vld [vmem:[%s1 + $0x2c] sm:$0xf]
  %v42 = vld [vmem:[%s1 + $0x30] sm:$0xf]
  %v43 = vld [vmem:[%s1 + $0x34] sm:$0xf]
  %v44 = vld [vmem:[%s1 + $0x38] sm:$0xf]
  %v45 = vld [vmem:[%s1 + $0x3c] sm:$0xf]
  %v46 = vld [vmem:[%s1 + $0x40] sm:$0xf]
  %v47 = vld [vmem:[%s1 + $0x44] sm:$0xf]
  %v48 = vld [vmem:[%s1 + $0x48] sm:$0xf]
  %v49 = vld [vmem:[%s1 + $0x4c] sm:$0xf]
  %v50 = vld [vmem:[%s1 + $0x50] sm:$0xf]
  %v51 = vld [vmem:[%s1 + $0x54] sm:$0xf]
  %v52 = vld [vmem:[%s1 + $0x58] sm:$0xf]
  %v53 = vld [vmem:[%s1 + $0x5c] sm:$0xf]
  %v54 = vld [vmem:[%s1 + $0x60] sm:$0xf]
  %v55 = vld [vmem:[%s1 + $0x64] sm:$0xf]
  %v56 = vld [vmem:[%s1 + $0x68] sm:$0xf]
  %v57 = vld [vmem:[%s1 + $0x6c] sm:$0xf]
  %v58 = vld [vmem:[%s1 + $0x70] sm:$0xf]
  %v59 = vld [vmem:[%s1 + $0x74] sm:$0xf]
  %v60 = vld [vmem:[%s1 + $0x78] sm:$0xf]
  %v61 = vld [vmem:[%s1 + $0x7c] sm:$0xf]
  %v62 = vld [vmem:[%s1 + $0x80] sm:$0xf]
  %v63 = vld [vmem:[%s1 + $0x84] sm:$0xf]
  %v64 = vld [vmem:[%s1 + $0x88] sm:$0xf]
  %v65 = vld [vmem:[%s1 + $0x8c] sm:$0xf]
  %v66 = vld [vmem:[%s1 + $0x90] sm:$0xf]
  %v67 = vld [vmem:[%s1 + $0x94] sm:$0xf]
  %v68 = vld [vmem:[%s1 + $0x98] sm:$0xf]
  %v69 = vld [vmem:[%s1 + $0x9c] sm:$0xf]
  %v70 = vld [vmem:[%s1 + $0xa0] sm:$0xf]
  %v71 = vld [vmem:[%s1 + $0xa4] sm:$0xf]
  %v72 = vld [vmem:[%s1 + $0xa8] sm:$0xf]
  %v73 = vld [vmem:[%s1 + $0xac] sm:$0xf]
  %v74 = vld [vmem:[%s1 + $0xb0] sm:$0xf]
  %v75 = vld [vmem:[%s1 + $0xb4] sm:$0xf]
  %v76 = vld [vmem:[%s1 + $0xb8] sm:$0xf]
  %v77 = vld [vmem:[%s1 + $0xbc] sm:$0xf]
  %v78 = vld [vmem:[%s1 + $0xc0] sm:$0xf]
  %v79 = vld [vmem:[%s1 + $0xc4] sm:$0xf]
  %v80 = vld [vmem:[%s1 + $0xc8] sm:$0xf]
  %v81 = vld [vmem:[%s1 + $0xcc] sm:$0xf]
  %v82 = vld [vmem:[%s1 + $0xd0] sm:$0xf]
  %v83 = vld [vmem:[%s1 + $0xd4] sm:$0xf]
  %v84 = vld [vmem:[%s1 + $0xd8] sm:$0xf]
  %v85 = vld [vmem:[%s1 + $0xdc] sm:$0xf]
  %v86 = vld [vmem:[%s1 + $0xe0] sm:$0xf]
  %v87 = vld [vmem:[%s1 + $0xe4] sm:$0xf]
  %v88 = vld [vmem:[%s1 + $0xe8] sm:$0xf]
  %v89 = vld [vmem:[%s1 + $0xec] sm:$0xf]
  %v90 = vld [vmem:[%s1 + $0xf0] sm:$0xf]
  %v91 = vld [vmem:[%s1 + $0xf4] sm:$0xf]
  %v92 = vld [vmem:[%s1 + $0xf8] sm:$0xf]
  %v93 = vld [vmem:[%s1 + $0xfc] sm:$0xf]
  %v94 = vld [vmem:[%s1 + $0x100] sm:$0xf]
  %v95 = vld [vmem:[%s1 + $0x104] sm:$0xf]
  %v96 = vld [vmem:[%s1 + $0x108] sm:$0xf]
  %v97 = vld [vmem:[%s1 + $0x10c] sm:$0xf]
  %v98 = vld [vmem:[%s1 + $0x110] sm:$0xf]
  %v99 = vld [vmem:[%s1 + $0x114] sm:$0xf]
  %v100 = vld [vmem:[%s1 + $0x118] sm:$0xf]
  %v101 = vld [vmem:[%s1 + $0x11c] sm:$0xf]
  %v102 = vld [vmem:[%s1 + $0x120] sm:$0xf]
  %v103 = vld [vmem:[%s1 + $0x124] sm:$0xf]
  %v104 = vld [vmem:[%s1 + $0x128] sm:$0xf]
  %v105 = vld [vmem:[%s1 + $0x12c] sm:$0xf]
  %v106 = vld [vmem:[%s1 + $0x130] sm:$0xf]
  %v107 = vld [vmem:[%s1 + $0x134] sm:$0xf]
  %v108 = vld [vmem:[%s1 + $0x138] sm:$0xf]
  %v109 = vld [vmem:[%s1 + $0x13c] sm:$0xf]
  %v110 = vld [vmem:[%s1 + $0x140] sm:$0xf]
  %v111 = vld [vmem:[%s1 + $0x144] sm:$0xf]
  %v112 = vld [vmem:[%s1 + $0x148] sm:$0xf]
  %v113 = vld [vmem:[%s1 + $0x14c] sm:$0xf]
  %v114 = vld [vmem:[%s1 + $0x150] sm:$0xf]
  %v115 = vld [vmem:[%s1 + $0x154] sm:$0xf]
  %v116 = vld [vmem:[%s1 + $0x158] sm:$0xf]
  %v117 = vld [vmem:[%s1 + $0x15c] sm:$0xf]
  %v118 = vld [vmem:[%s1 + $0x160] sm:$0xf]
  %v119 = vld [vmem:[%s1 + $0x164] sm:$0xf]
  %v120 = vld [vmem:[%s1 + $0x168] sm:$0xf]
  %v121 = vld [vmem:[%s1 + $0x16c] sm:$0xf]
  %v122 = vld [vmem:[%s1 + $0x170] sm:$0xf]
  %v123 = vld [vmem:[%s1 + $0x174] sm:$0xf]
  %v124 = vld [vmem:[%s1 + $0x178] sm:$0xf]
  %v125 = vld [vmem:[%s1 + $0x17c] sm:$0xf]
  %v126 = vld [vmem:[%s1 + $0x180] sm:$0xf]
  %v127 = vld [vmem:[%s1 + $0x184] sm:$0xf]
  %v128 = vld [vmem:[%s1 + $0x188] sm:$0xf]
  %v129 = vld [vmem:[%s1 + $0x18c] sm:$0xf]
  %v130 = vld [vmem:[%s1 + $0x190] sm:$0xf]
  %v131 = vld [vmem:[%s1 + $0x194] sm:$0xf]
  %v132 = vld [vmem:[%s1 + $0x198] sm:$0xf]
  %v133 = vld [vmem:[%s1 + $0x19c] sm:$0xf]
  %v134 = vld [vmem:[%s1 + $0x1a0] sm:$0xf]
  %v135 = vld [vmem:[%s1 + $0x1a4] sm:$0xf]
  %v136 = vld [vmem:[%s1 + $0x1a8] sm:$0xf]
  %v137 = vld [vmem:[%s1 + $0x1ac] sm:$0xf]
  %v138 = vld [vmem:[%s1 + $0x1b0] sm:$0xf]
  %v139 = vld [vmem:[%s1 + $0x1b4] sm:$0xf]
  %v140 = vld [vmem:[%s1 + $0x1b8] sm:$0xf]
  %v141 = vld [vmem:[%s1 + $0x1bc] sm:$0xf]
  %v142 = vld [vmem:[%s1 + $0x1c0] sm:$0xf]
  %v143 = vld [vmem:[%s1 + $0x1c4] sm:$0xf]
  %v144 = vld [vmem:[%s1 + $0x1c8] sm:$0xf]
  %v145 = vld [vmem:[%s1 + $0x1cc] sm:$0xf]
  %v146 = vld [vmem:[%s1 + $0x1d0] sm:$0xf]
  %v147 = vld [vmem:[%s1 + $0x1d4] sm:$0xf]
  %v148 = vld [vmem:[%s1 + $0x1d8] sm:$0xf]
  %v149 = vld [vmem:[%s1 + $0x1dc] sm:$0xf]
  %v150 = vld [vmem:[%s1 + $0x1e0] sm:$0xf]
  %v151 = vld [vmem:[%s1 + $0x1e4] sm:$0xf]
  %v152 = vld [vmem:[%s1 + $0x1e8] sm:$0xf]
  %v153 = vld [vmem:[%s1 + $0x1ec] sm:$0xf]
  %v154 = vld [vmem:[%s1 + $0x1f0] sm:$0xf]
  %v155 = vld [vmem:[%s1 + $0x1f4] sm:$0xf]
  %v156 = vld [vmem:[%s1 + $0x1f8] sm:$0xf]
  %v157 = vld [vmem:[%s1 + $0x1fc] sm:$0xf]
  %v158 = vld [vmem:[%s2] sm:$0x1]
  %v160 = vperm.slane %v158, 0
  %v178 = vunpack.c.l.b16 %v14
  %v179 = vunpack.c.h.b16 %v14
  %v180 = vunpack.c.l.b16 %v15
  %v181 = vunpack.c.h.b16 %v15
  %v182 = vunpack.c.l.b16 %v16
  %v183 = vunpack.c.h.b16 %v16
  %v184 = vunpack.c.l.b16 %v17
  %v185 = vunpack.c.h.b16 %v17
  %v186 = vunpack.c.l.b16 %v18
  %v187 = vunpack.c.h.b16 %v18
  %v188 = vunpack.c.l.b16 %v19
  %v189 = vunpack.c.h.b16 %v19
  %v190 = vunpack.c.l.b16 %v20
  %v191 = vunpack.c.h.b16 %v20
  %v192 = vunpack.c.l.b16 %v21
  %v193 = vunpack.c.h.b16 %v21
  %v194 = vunpack.c.l.b16 %v22
  %v195 = vunpack.c.h.b16 %v22
  %v196 = vunpack.c.l.b16 %v23
  %v197 = vunpack.c.h.b16 %v23
  %v198 = vunpack.c.l.b16 %v24
  %v199 = vunpack.c.h.b16 %v24
  %v200 = vunpack.c.l.b16 %v25
  %v201 = vunpack.c.h.b16 %v25
  %v202 = vunpack.c.l.b16 %v26
  %v203 = vunpack.c.h.b16 %v26
  %v204 = vunpack.c.l.b16 %v27
  %v205 = vunpack.c.h.b16 %v27
  %v206 = vunpack.c.l.b16 %v28
  %v207 = vunpack.c.h.b16 %v28
  %v208 = vunpack.c.l.b16 %v29
  %v209 = vunpack.c.h.b16 %v29
  %v210 = vpack.c.b16 %v186, %v178
  %v211 = vpack.c.b16 %v187, %v179
  %v212 = vpack.c.b16 %v188, %v180
  %v213 = vpack.c.b16 %v189, %v181
  %v214 = vpack.c.b16 %v190, %v182
  %v215 = vpack.c.b16 %v191, %v183
  %v216 = vpack.c.b16 %v192, %v184
  %v217 = vpack.c.b16 %v193, %v185
  %v218 = vpack.c.b16 %v202, %v194
  %v219 = vpack.c.b16 %v203, %v195
  %v220 = vpack.c.b16 %v204, %v196
  %v221 = vpack.c.b16 %v205, %v197
  %v222 = vpack.c.b16 %v206, %v198
  %v223 = vpack.c.b16 %v207, %v199
  %v224 = vpack.c.b16 %v208, %v200
  %v225 = vpack.c.b16 %v209, %v201
  %v370 = vunpack.c.l.b16 %v30
  %v371 = vunpack.c.l.b16 %v31
  %v372 = vunpack.c.l.b16 %v32
  %v373 = vunpack.c.l.b16 %v33
  %v374 = vunpack.c.l.b16 %v34
  %v375 = vunpack.c.l.b16 %v35
  %v376 = vunpack.c.l.b16 %v36
  %v377 = vunpack.c.l.b16 %v37
  %v378 = vunpack.c.l.b16 %v38
  %v379 = vunpack.c.l.b16 %v39
  %v380 = vunpack.c.l.b16 %v40
  %v381 = vunpack.c.l.b16 %v41
  %v382 = vunpack.c.l.b16 %v42
  %v383 = vunpack.c.l.b16 %v43
  %v384 = vunpack.c.l.b16 %v44
  %v385 = vunpack.c.l.b16 %v45
  %v386 = vunpack.c.l.b16 %v46
  %v387 = vunpack.c.l.b16 %v47
  %v388 = vunpack.c.l.b16 %v48
  %v389 = vunpack.c.l.b16 %v49
  %v390 = vunpack.c.l.b16 %v50
  %v391 = vunpack.c.l.b16 %v51
  %v392 = vunpack.c.l.b16 %v52
  %v393 = vunpack.c.l.b16 %v53
  %v394 = vunpack.c.l.b16 %v54
  %v395 = vunpack.c.l.b16 %v55
  %v396 = vunpack.c.l.b16 %v56
  %v397 = vunpack.c.l.b16 %v57
  %v398 = vunpack.c.l.b16 %v58
  %v399 = vunpack.c.l.b16 %v59
  %v400 = vunpack.c.l.b16 %v60
  %v401 = vunpack.c.l.b16 %v61
  %v402 = vunpack.c.l.b16 %v62
  %v403 = vunpack.c.l.b16 %v63
  %v404 = vunpack.c.l.b16 %v64
  %v405 = vunpack.c.l.b16 %v65
  %v406 = vunpack.c.l.b16 %v66
  %v407 = vunpack.c.l.b16 %v67
  %v408 = vunpack.c.l.b16 %v68
  %v409 = vunpack.c.l.b16 %v69
  %v410 = vunpack.c.l.b16 %v70
  %v411 = vunpack.c.l.b16 %v71
  %v412 = vunpack.c.l.b16 %v72
  %v413 = vunpack.c.l.b16 %v73
  %v414 = vunpack.c.l.b16 %v74
  %v415 = vunpack.c.l.b16 %v75
  %v416 = vunpack.c.l.b16 %v76
  %v417 = vunpack.c.l.b16 %v77
  %v418 = vunpack.c.l.b16 %v78
  %v419 = vunpack.c.l.b16 %v79
  %v420 = vunpack.c.l.b16 %v80
  %v421 = vunpack.c.l.b16 %v81
  %v422 = vunpack.c.l.b16 %v82
  %v423 = vunpack.c.l.b16 %v83
  %v424 = vunpack.c.l.b16 %v84
  %v425 = vunpack.c.l.b16 %v85
  %v426 = vunpack.c.l.b16 %v86
  %v427 = vunpack.c.l.b16 %v87
  %v428 = vunpack.c.l.b16 %v88
  %v429 = vunpack.c.l.b16 %v89
  %v430 = vunpack.c.l.b16 %v90
  %v431 = vunpack.c.l.b16 %v91
  %v432 = vunpack.c.l.b16 %v92
  %v433 = vunpack.c.l.b16 %v93
  %v434 = vunpack.c.l.b16 %v94
  %v435 = vunpack.c.l.b16 %v95
  %v436 = vunpack.c.l.b16 %v96
  %v437 = vunpack.c.l.b16 %v97
  %v438 = vunpack.c.l.b16 %v98
  %v439 = vunpack.c.l.b16 %v99
  %v440 = vunpack.c.l.b16 %v100
  %v441 = vunpack.c.l.b16 %v101
  %v442 = vunpack.c.l.b16 %v102
  %v443 = vunpack.c.l.b16 %v103
  %v444 = vunpack.c.l.b16 %v104
  %v445 = vunpack.c.l.b16 %v105
  %v446 = vunpack.c.l.b16 %v106
  %v447 = vunpack.c.l.b16 %v107
  %v448 = vunpack.c.l.b16 %v108
  %v449 = vunpack.c.l.b16 %v109
  %v450 = vunpack.c.l.b16 %v110
  %v451 = vunpack.c.l.b16 %v111
  %v452 = vunpack.c.l.b16 %v112
  %v453 = vunpack.c.l.b16 %v113
  %v454 = vunpack.c.l.b16 %v114
  %v455 = vunpack.c.l.b16 %v115
  %v456 = vunpack.c.l.b16 %v116
  %v457 = vunpack.c.l.b16 %v117
  %v458 = vunpack.c.l.b16 %v118
  %v459 = vunpack.c.l.b16 %v119
  %v460 = vunpack.c.l.b16 %v120
  %v461 = vunpack.c.l.b16 %v121
  %v462 = vunpack.c.l.b16 %v122
  %v463 = vunpack.c.l.b16 %v123
  %v464 = vunpack.c.l.b16 %v124
  %v465 = vunpack.c.l.b16 %v125
  %v466 = vunpack.c.l.b16 %v126
  %v467 = vunpack.c.l.b16 %v127
  %v468 = vunpack.c.l.b16 %v128
  %v469 = vunpack.c.l.b16 %v129
  %v470 = vunpack.c.l.b16 %v130
  %v471 = vunpack.c.l.b16 %v131
  %v472 = vunpack.c.l.b16 %v132
  %v473 = vunpack.c.l.b16 %v133
  %v474 = vunpack.c.l.b16 %v134
  %v475 = vunpack.c.l.b16 %v135
  %v476 = vunpack.c.l.b16 %v136
  %v477 = vunpack.c.l.b16 %v137
  %v478 = vunpack.c.l.b16 %v138
  %v479 = vunpack.c.l.b16 %v139
  %v480 = vunpack.c.l.b16 %v140
  %v481 = vunpack.c.l.b16 %v141
  %v482 = vunpack.c.l.b16 %v142
  %v483 = vunpack.c.l.b16 %v143
  %v484 = vunpack.c.l.b16 %v144
  %v485 = vunpack.c.l.b16 %v145
  %v486 = vunpack.c.l.b16 %v146
  %v487 = vunpack.c.l.b16 %v147
  %v488 = vunpack.c.l.b16 %v148
  %v489 = vunpack.c.l.b16 %v149
  %v490 = vunpack.c.l.b16 %v150
  %v491 = vunpack.c.l.b16 %v151
  %v492 = vunpack.c.l.b16 %v152
  %v493 = vunpack.c.l.b16 %v153
  %v494 = vunpack.c.l.b16 %v154
  %v495 = vunpack.c.l.b16 %v155
  %v496 = vunpack.c.l.b16 %v156
  %v497 = vunpack.c.l.b16 %v157
  %v498 = vpack.c.b16 %v371, %v370
  %v499 = vpack.c.b16 %v373, %v372
  %v500 = vpack.c.b16 %v375, %v374
  %v501 = vpack.c.b16 %v377, %v376
  %v502 = vpack.c.b16 %v379, %v378
  %v503 = vpack.c.b16 %v381, %v380
  %v504 = vpack.c.b16 %v383, %v382
  %v505 = vpack.c.b16 %v385, %v384
  %v506 = vpack.c.b16 %v387, %v386
  %v507 = vpack.c.b16 %v389, %v388
  %v508 = vpack.c.b16 %v391, %v390
  %v509 = vpack.c.b16 %v393, %v392
  %v510 = vpack.c.b16 %v395, %v394
  %v511 = vpack.c.b16 %v397, %v396
  %v512 = vpack.c.b16 %v399, %v398
  %v513 = vpack.c.b16 %v401, %v400
  %v514 = vpack.c.b16 %v403, %v402
  %v515 = vpack.c.b16 %v405, %v404
  %v516 = vpack.c.b16 %v407, %v406
  %v517 = vpack.c.b16 %v409, %v408
  %v518 = vpack.c.b16 %v411, %v410
  %v519 = vpack.c.b16 %v413, %v412
  %v520 = vpack.c.b16 %v415, %v414
  %v521 = vpack.c.b16 %v417, %v416
  %v522 = vpack.c.b16 %v419, %v418
  %v523 = vpack.c.b16 %v421, %v420
  %v524 = vpack.c.b16 %v423, %v422
  %v525 = vpack.c.b16 %v425, %v424
  %v526 = vpack.c.b16 %v427, %v426
  %v527 = vpack.c.b16 %v429, %v428
  %v528 = vpack.c.b16 %v431, %v430
  %v529 = vpack.c.b16 %v433, %v432
  %v530 = vpack.c.b16 %v435, %v434
  %v531 = vpack.c.b16 %v437, %v436
  %v532 = vpack.c.b16 %v439, %v438
  %v533 = vpack.c.b16 %v441, %v440
  %v534 = vpack.c.b16 %v443, %v442
  %v535 = vpack.c.b16 %v445, %v444
  %v536 = vpack.c.b16 %v447, %v446
  %v537 = vpack.c.b16 %v449, %v448
  %v538 = vpack.c.b16 %v451, %v450
  %v539 = vpack.c.b16 %v453, %v452
  %v540 = vpack.c.b16 %v455, %v454
  %v541 = vpack.c.b16 %v457, %v456
  %v542 = vpack.c.b16 %v459, %v458
  %v543 = vpack.c.b16 %v461, %v460
  %v544 = vpack.c.b16 %v463, %v462
  %v545 = vpack.c.b16 %v465, %v464
  %v546 = vpack.c.b16 %v467, %v466
  %v547 = vpack.c.b16 %v469, %v468
  %v548 = vpack.c.b16 %v471, %v470
  %v549 = vpack.c.b16 %v473, %v472
  %v550 = vpack.c.b16 %v475, %v474
  %v551 = vpack.c.b16 %v477, %v476
  %v552 = vpack.c.b16 %v479, %v478
  %v553 = vpack.c.b16 %v481, %v480
  %v554 = vpack.c.b16 %v483, %v482
  %v555 = vpack.c.b16 %v485, %v484
  %v556 = vpack.c.b16 %v487, %v486
  %v557 = vpack.c.b16 %v489, %v488
  %v558 = vpack.c.b16 %v491, %v490
  %v559 = vpack.c.b16 %v493, %v492
  %v560 = vpack.c.b16 %v495, %v494
  %v561 = vpack.c.b16 %v497, %v496
  %626 = vmatpush.bf16.msra.mxu0 %v505
  %627 = vmatpush.bf16.msra.mxu0 %v504
  %628 = vmatpush.bf16.msra.mxu0 %v503
  %629 = vmatpush.bf16.msra.mxu0 %v502
  %630 = vmatpush.bf16.msra.mxu0 %v501
  %631 = vmatpush.bf16.msra.mxu0 %v500
  %632 = vmatpush.bf16.msra.mxu0 %v499
  %633 = vmatpush.bf16.msra.mxu0 %v498
  %634 = vmatmul.bf16.gmra.mxu0 %v210
  %v635 = vpop.f32.mrf.mxu0
  %v636 = vadd.f32 %v160, %v635
  %v637 = vpop.f32.mrf.mxu0
  %v638 = vadd.f32 %v160, %v637
  %639 = vmatmul.bf16.gmra.mxu0 %v218
  %v640 = vpop.f32.mrf.mxu0
  %v641 = vadd.f32 %v160, %v640
  %v642 = vpop.f32.mrf.mxu0
  %v643 = vadd.f32 %v160, %v642
  %644 = vdwg.mxu0
  %645 = vmatpush.bf16.msra.mxu0 %v513
  %646 = vmatpush.bf16.msra.mxu0 %v512
  %647 = vmatpush.bf16.msra.mxu0 %v511
  %648 = vmatpush.bf16.msra.mxu0 %v510
  %649 = vmatpush.bf16.msra.mxu0 %v509
  %650 = vmatpush.bf16.msra.mxu0 %v508
  %651 = vmatpush.bf16.msra.mxu0 %v507
  %652 = vmatpush.bf16.msra.mxu0 %v506
  %653 = vmatmul.bf16.gmra.mxu0 %v211
  %v654 = vpop.f32.mrf.mxu0
  %v655 = vadd.f32 %v636, %v654
  %v656 = vpop.f32.mrf.mxu0
  %v657 = vadd.f32 %v638, %v656
  %658 = vmatmul.bf16.gmra.mxu0 %v219
  %v659 = vpop.f32.mrf.mxu0
  %v660 = vadd.f32 %v641, %v659
  %v661 = vpop.f32.mrf.mxu0
  %v662 = vadd.f32 %v643, %v661
  %663 = vdwg.mxu0
  %664 = vmatpush.bf16.msra.mxu0 %v521
  %665 = vmatpush.bf16.msra.mxu0 %v520
  %666 = vmatpush.bf16.msra.mxu0 %v519
  %667 = vmatpush.bf16.msra.mxu0 %v518
  %668 = vmatpush.bf16.msra.mxu0 %v517
  %669 = vmatpush.bf16.msra.mxu0 %v516
  %670 = vmatpush.bf16.msra.mxu0 %v515
  %671 = vmatpush.bf16.msra.mxu0 %v514
  %672 = vmatmul.bf16.gmra.mxu0 %v212
  %v673 = vpop.f32.mrf.mxu0
  %v674 = vadd.f32 %v655, %v673
  %v675 = vpop.f32.mrf.mxu0
  %v676 = vadd.f32 %v657, %v675
  %677 = vmatmul.bf16.gmra.mxu0 %v220
  %v678 = vpop.f32.mrf.mxu0
  %v679 = vadd.f32 %v660, %v678
  %v680 = vpop.f32.mrf.mxu0
  %v681 = vadd.f32 %v662, %v680
  %682 = vdwg.mxu0
  %683 = vmatpush.bf16.msra.mxu0 %v529
  %684 = vmatpush.bf16.msra.mxu0 %v528
  %685 = vmatpush.bf16.msra.mxu0 %v527
  %686 = vmatpush.bf16.msra.mxu0 %v526
  %687 = vmatpush.bf16.msra.mxu0 %v525
  %688 = vmatpush.bf16.msra.mxu0 %v524
  %689 = vmatpush.bf16.msra.mxu0 %v523
  %690 = vmatpush.bf16.msra.mxu0 %v522
  %691 = vmatmul.bf16.gmra.mxu0 %v213
  %v692 = vpop.f32.mrf.mxu0
  %v693 = vadd.f32 %v674, %v692
  %v694 = vpop.f32.mrf.mxu0
  %v695 = vadd.f32 %v676, %v694
  %696 = vmatmul.bf16.gmra.mxu0 %v221
  %v697 = vpop.f32.mrf.mxu0
  %v698 = vadd.f32 %v679, %v697
  %v699 = vpop.f32.mrf.mxu0
  %v700 = vadd.f32 %v681, %v699
  %701 = vdwg.mxu0
  %702 = vmatpush.bf16.msra.mxu0 %v537
  %703 = vmatpush.bf16.msra.mxu0 %v536
  %704 = vmatpush.bf16.msra.mxu0 %v535
  %705 = vmatpush.bf16.msra.mxu0 %v534
  %706 = vmatpush.bf16.msra.mxu0 %v533
  %707 = vmatpush.bf16.msra.mxu0 %v532
  %708 = vmatpush.bf16.msra.mxu0 %v531
  %709 = vmatpush.bf16.msra.mxu0 %v530
  %710 = vmatmul.bf16.gmra.mxu0 %v214
  %v711 = vpop.f32.mrf.mxu0
  %v712 = vadd.f32 %v693, %v711
  %v713 = vpop.f32.mrf.mxu0
  %v714 = vadd.f32 %v695, %v713
  %715 = vmatmul.bf16.gmra.mxu0 %v222
  %v716 = vpop.f32.mrf.mxu0
  %v717 = vadd.f32 %v698, %v716
  %v718 = vpop.f32.mrf.mxu0
  %v719 = vadd.f32 %v700, %v718
  %720 = vdwg.mxu0
  %721 = vmatpush.bf16.msra.mxu0 %v545
  %722 = vmatpush.bf16.msra.mxu0 %v544
  %723 = vmatpush.bf16.msra.mxu0 %v543
  %724 = vmatpush.bf16.msra.mxu0 %v542
  %725 = vmatpush.bf16.msra.mxu0 %v541
  %726 = vmatpush.bf16.msra.mxu0 %v540
  %727 = vmatpush.bf16.msra.mxu0 %v539
  %728 = vmatpush.bf16.msra.mxu0 %v538
  %729 = vmatmul.bf16.gmra.mxu0 %v215
  %v730 = vpop.f32.mrf.mxu0
  %v731 = vadd.f32 %v712, %v730
  %v732 = vpop.f32.mrf.mxu0
  %v733 = vadd.f32 %v714, %v732
  %734 = vmatmul.bf16.gmra.mxu0 %v223
  %v735 = vpop.f32.mrf.mxu0
  %v736 = vadd.f32 %v717, %v735
  %v737 = vpop.f32.mrf.mxu0
  %v738 = vadd.f32 %v719, %v737
  %739 = vdwg.mxu0
  %740 = vmatpush.bf16.msra.mxu0 %v553
  %741 = vmatpush.bf16.msra.mxu0 %v552
  %742 = vmatpush.bf16.msra.mxu0 %v551
  %743 = vmatpush.bf16.msra.mxu0 %v550
  %744 = vmatpush.bf16.msra.mxu0 %v549
  %745 = vmatpush.bf16.msra.mxu0 %v548
  %746 = vmatpush.bf16.msra.mxu0 %v547
  %747 = vmatpush.bf16.msra.mxu0 %v546
  %748 = vmatmul.bf16.gmra.mxu0 %v216
  %v749 = vpop.f32.mrf.mxu0
  %v750 = vadd.f32 %v731, %v749
  %v751 = vpop.f32.mrf.mxu0
  %v752 = vadd.f32 %v733, %v751
  %753 = vmatmul.bf16.gmra.mxu0 %v224
  %v754 = vpop.f32.mrf.mxu0
  %v755 = vadd.f32 %v736, %v754
  %v756 = vpop.f32.mrf.mxu0
  %v757 = vadd.f32 %v738, %v756
  %758 = vdwg.mxu0
  %759 = vmatpush.bf16.msra.mxu0 %v561
  %760 = vmatpush.bf16.msra.mxu0 %v560
  %761 = vmatpush.bf16.msra.mxu0 %v559
  %762 = vmatpush.bf16.msra.mxu0 %v558
  %763 = vmatpush.bf16.msra.mxu0 %v557
  %764 = vmatpush.bf16.msra.mxu0 %v556
  %765 = vmatpush.bf16.msra.mxu0 %v555
  %766 = vmatpush.bf16.msra.mxu0 %v554
  %767 = vmatmul.bf16.gmra.mxu0 %v217
  %v768 = vpop.f32.mrf.mxu0
  %v769 = vadd.f32 %v750, %v768
  %v770 = vpop.f32.mrf.mxu0
  %v771 = vadd.f32 %v752, %v770
  %772 = vmatmul.bf16.gmra.mxu0 %v225
  %v773 = vpop.f32.mrf.mxu0
  %v774 = vadd.f32 %v755, %v773
  %v775 = vpop.f32.mrf.mxu0
  %v776 = vadd.f32 %v757, %v775
  %777 = vdwg.mxu0
  %v778 = vmax.f32 %v769, 0.0
  %v779 = vmax.f32 %v771, 0.0
  %v780 = vmax.f32 %v774, 0.0
  %v781 = vmax.f32 %v776, 0.0
  %vm782 = vcmask 523264
  %783 = vst.msk [vmem:[%s3] sm:$0xff] %vm782, %v778
  %784 = vst.msk [vmem:[%s3 + $0x8] sm:$0xff] %vm782, %v779
  %785 = vst.msk [vmem:[%s3 + $0x10] sm:$0xff] %vm782, %v780
  %786 = vst.msk [vmem:[%s3 + $0x18] sm:$0xff] %vm782, %v781
  // Predicated region
  $region14: #{forward.12} parent=0 // pred_check
    _
  $region15: #{forward.12} parent=0 // pred_check_branch
    %788 = sbr.rel (0) target = $region17
  $region16: #{forward.12} parent=0 // pred_region
    _
  $region17: #{forward.12} parent=0 // pred_fallthru
    _
  // Predicated region
  $region18: #{forward.12} parent=0 // pred_check
    _
  $region19: #{forward.12} parent=0 // pred_check_branch
    %790 = sbr.rel (0) target = $region21
  $region20: #{forward.12} parent=0 // pred_region
    _
  $region21: #{forward.12} parent=0 // pred_fallthru
    _

// kernel: forward.13
$region0: #{forward.13}
  #allocation0 [shape = 'u32[]', space=smem, size = 0x4, offset = 0x4, fixed_abs, tag = 'smem constant byte address 0x4 - core index']
  #allocation1 [shape = 'u32[72,128]{1,0:T(1,128)}', space=vmem, size = 0x9000, scoped, tag = 'internal scratch']
  #allocation2 [shape = 'f32[1,1]{1,0:T(1,128)S(1)}', space=vmem, size = 0x200, scoped, tag = 'scoped memory for forward.13']
  %s0 = inlined_call_operand.vmem [shape: f32[2,1024], index: 0, kind: input, shape index: {}]
  %s1 = inlined_call_operand.vmem [shape: f32[2,16], index: 1, kind: input, shape index: {}]
  %s2 = inlined_call_operand.vmem [shape: f32[1024,256], index: 2, kind: input, shape index: {}]
  %s3 = inlined_call_operand.vmem [shape: f32[1,256], index: 3, kind: input, shape index: {}]
  %s4 = inlined_call_operand.vmem [shape: f32[256,16], index: 4, kind: input, shape index: {}]
  %s5 = inlined_call_operand.vmem [shape: f32[1,16], index: 5, kind: input, shape index: {}]
  %s6 = inlined_call_operand.vmem [shape: f32[256,16], index: 6, kind: input, shape index: {}]
  %s7 = inlined_call_operand.vmem [shape: f32[1,16], index: 7, kind: input, shape index: {}]
  %s8 = inlined_call_operand.vmem [shape: f32[16,256], index: 8, kind: input, shape index: {}]
  %s9 = inlined_call_operand.vmem [shape: f32[1,256], index: 9, kind: input, shape index: {}]
  %s10 = inlined_call_operand.vmem [shape: f32[256,1024], index: 10, kind: input, shape index: {}]
  %s11 = inlined_call_operand.vmem [shape: f32[1,1024], index: 11, kind: input, shape index: {}]
  %s12 = inlined_call_operand.vmem [shape: f32[16,32], index: 12, kind: input, shape index: {}]
  %s13 = inlined_call_operand.vmem [shape: f32[1,32], index: 13, kind: input, shape index: {}]
  %s14 = inlined_call_operand.vmem [shape: f32[1,32], index: 14, kind: input, shape index: {}]
  %s15 = inlined_call_operand.vmem [shape: f32[1,32], index: 15, kind: input, shape index: {}]
  %s16 = inlined_call_operand.vmem [shape: f32[32,32], index: 16, kind: input, shape index: {}]
  %s17 = inlined_call_operand.vmem [shape: f32[1,32], index: 17, kind: input, shape index: {}]
  %s18 = inlined_call_operand.vmem [shape: f32[1,32], index: 18, kind: input, shape index: {}]
  %s19 = inlined_call_operand.vmem [shape: f32[1,32], index: 19, kind: input, shape index: {}]
  %s20 = inlined_call_operand.vmem [shape: f32[32,1], index: 20, kind: input, shape index: {}]
  %s21 = inlined_call_operand.<no memory space> [shape: f32[1,1], index: 21, kind: input, shape index: {}]
  %s22 = inlined_call_operand.hbm [shape: f32[2,16], index: 22, kind: output, shape index: {0}]
  %s23 = inlined_call_operand.hbm [shape: f32[2,16], index: 23, kind: output, shape index: {1}]
  %s24 = inlined_call_operand.vmem [shape: f32[2,1024], index: 24, kind: output, shape index: {2}]
  %s25 = inlined_call_operand.vmem [shape: f32[2,1], index: 25, kind: output, shape index: {3}]
  %26 = xla_tuple %s22, %s23, %s24, %s25
  %s27 = sld [smem:[#allocation0]]
  $region122: #{forward.13} parent=0
    _
  %s29 = ssub.s32 1, %s27
  %s30 = scalar_select 0, %s29, %s27
  %v31 = vstv %s21
  %32 = vst [vmem:[#allocation2] sm:$0x1] %v31
  $region1: #{forward.13} parent=0
    #allocation3 [shape = 'u8[1024]{0}', space=vmem, size = 0x400, scoped, tag = 'output window, operand 0, single buffered']
    #allocation4 [shape = 's32[1]{0}', space=sflag, size = 0x4, scoped, tag = 'scoped memory for forward.13']
    #allocation5 [shape = 'u8[1024]{0}', space=vmem, size = 0x400, scoped, tag = 'output window, operand 1, single buffered']
    #allocation6 [shape = 's32[1]{0}', space=sflag, size = 0x4, scoped, tag = 'scoped memory for forward.13']
    %33 = vsyncpa [#allocation4], 0
    %34 = vsyncpa [#allocation6], 0
    // Predicated region
    $region2: #{forward.13} parent=1 // pred_check
      _
    $region3: #{forward.13} parent=1 // pred_check_branch
      %36 = sbr.rel (0) target = $region5
    $region4: #{forward.13} parent=1 // pred_region
      _
    $region5: #{forward.13} parent=1 // pred_fallthru
      _
    // Predicated region
    $region6: #{forward.13} parent=1 // pred_check
      _
    $region7: #{forward.13} parent=1 // pred_check_branch
      %38 = sbr.rel (0) target = $region9
    $region8: #{forward.13} parent=1 // pred_region
      _
    $region9: #{forward.13} parent=1 // pred_fallthru
      _
    // Predicated region
    $region10: #{forward.13} parent=1 // pred_check
      _
    $region11: #{forward.13} parent=1 // pred_check_branch
      %40 = sbr.rel (0) target = $region13
    $region12: #{forward.13} parent=1 // pred_region
      _
    $region13: #{forward.13} parent=1 // pred_fallthru
      _
    // Predicated region
    $region14: #{forward.13} parent=1 // pred_check
      _
    $region15: #{forward.13} parent=1 // pred_check_branch
      %42 = sbr.rel (0) target = $region17
    $region16: #{forward.13} parent=1 // pred_region
      _
    $region17: #{forward.13} parent=1 // pred_fallthru
      _
    // Predicated region
    $region18: #{forward.13} parent=1 // pred_check
      _
    $region19: #{forward.13} parent=1 // pred_check_branch
      %44 = sbr.rel (0) target = $region21
    $region20: #{forward.13} parent=1 // pred_region
      _
    $region21: #{forward.13} parent=1 // pred_fallthru
      _
    // Predicated region
    $region22: #{forward.13} parent=1 // pred_check
      _
    $region23: #{forward.13} parent=1 // pred_check_branch
      %46 = sbr.rel (0) target = $region25
    $region24: #{forward.13} parent=1 // pred_region
      _
    $region25: #{forward.13} parent=1 // pred_fallthru
      _
    // Predicated region
    $region26: #{forward.13} parent=1 // pred_check
      _
    $region27: #{forward.13} parent=1 // pred_check_branch
      %48 = sbr.rel (0) target = $region29
    $region28: #{forward.13} parent=1 // pred_region
      _
    $region29: #{forward.13} parent=1 // pred_fallthru
      _
    // Predicated region
    $region30: #{forward.13} parent=1 // pred_check
      _
    $region31: #{forward.13} parent=1 // pred_check_branch
      %50 = sbr.rel (0) target = $region33
    $region32: #{forward.13} parent=1 // pred_region
      _
    $region33: #{forward.13} parent=1 // pred_fallthru
      _
    // Predicated region
    $region34: #{forward.13} parent=1 // pred_check
      _
    $region35: #{forward.13} parent=1 // pred_check_branch
      %52 = sbr.rel (0) target = $region37
    $region36: #{forward.13} parent=1 // pred_region
      _
    $region37: #{forward.13} parent=1 // pred_fallthru
      _
    // Predicated region
    $region38: #{forward.13} parent=1 // pred_check
      _
    $region39: #{forward.13} parent=1 // pred_check_branch
      %54 = sbr.rel (0) target = $region41
    $region40: #{forward.13} parent=1 // pred_region
      _
    $region41: #{forward.13} parent=1 // pred_fallthru
      _
    // Predicated region
    $region42: #{forward.13} parent=1 // pred_check
      _
    $region43: #{forward.13} parent=1 // pred_check_branch
      %56 = sbr.rel (0) target = $region45
    $region44: #{forward.13} parent=1 // pred_region
      _
    $region45: #{forward.13} parent=1 // pred_fallthru
      _
    // Predicated region
    $region46: #{forward.13} parent=1 // pred_check
      _
    $region47: #{forward.13} parent=1 // pred_check_branch
      %58 = sbr.rel (0) target = $region49
    $region48: #{forward.13} parent=1 // pred_region
      _
    $region49: #{forward.13} parent=1 // pred_fallthru
      _
    // Predicated region
    $region50: #{forward.13} parent=1 // pred_check
      _
    $region51: #{forward.13} parent=1 // pred_check_branch
      %60 = sbr.rel (0) target = $region53
    $region52: #{forward.13} parent=1 // pred_region
      _
    $region53: #{forward.13} parent=1 // pred_fallthru
      _
    // Predicated region
    $region54: #{forward.13} parent=1 // pred_check
      _
    $region55: #{forward.13} parent=1 // pred_check_branch
      %62 = sbr.rel (0) target = $region57
    $region56: #{forward.13} parent=1 // pred_region
      _
    $region57: #{forward.13} parent=1 // pred_fallthru
      _
    // Predicated region
    $region58: #{forward.13} parent=1 // pred_check
      _
    $region59: #{forward.13} parent=1 // pred_check_branch
      %64 = sbr.rel (0) target = $region61
    $region60: #{forward.13} parent=1 // pred_region
      _
    $region61: #{forward.13} parent=1 // pred_fallthru
      _
    // Predicated region
    $region62: #{forward.13} parent=1 // pred_check
      _
    $region63: #{forward.13} parent=1 // pred_check_branch
      %66 = sbr.rel (0) target = $region65
    $region64: #{forward.13} parent=1 // pred_region
      _
    $region65: #{forward.13} parent=1 // pred_fallthru
      _
    // Predicated region
    $region66: #{forward.13} parent=1 // pred_check
      _
    $region67: #{forward.13} parent=1 // pred_check_branch
      %68 = sbr.rel (0) target = $region69
    $region68: #{forward.13} parent=1 // pred_region
      _
    $region69: #{forward.13} parent=1 // pred_fallthru
      _
    // Predicated region
    $region70: #{forward.13} parent=1 // pred_check
      _
    $region71: #{forward.13} parent=1 // pred_check_branch
      %70 = sbr.rel (0) target = $region73
    $region72: #{forward.13} parent=1 // pred_region
      _
    $region73: #{forward.13} parent=1 // pred_fallthru
      _
    // Predicated region
    $region74: #{forward.13} parent=1 // pred_check
      _
    $region75: #{forward.13} parent=1 // pred_check_branch
      %72 = sbr.rel (0) target = $region77
    $region76: #{forward.13} parent=1 // pred_region
      _
    $region77: #{forward.13} parent=1 // pred_fallthru
      _
    // Predicated region
    $region78: #{forward.13} parent=1 // pred_check
      _
    $region79: #{forward.13} parent=1 // pred_check_branch
      %74 = sbr.rel (0) target = $region81
    $region80: #{forward.13} parent=1 // pred_region
      _
    $region81: #{forward.13} parent=1 // pred_fallthru
      _
    // Predicated region
    $region82: #{forward.13} parent=1 // pred_check
      _
    $region83: #{forward.13} parent=1 // pred_check_branch
      %76 = sbr.rel (0) target = $region85
    $region84: #{forward.13} parent=1 // pred_region
      _
    $region85: #{forward.13} parent=1 // pred_fallthru
      _
    // Predicated region
    $region86: #{forward.13} parent=1 // pred_check
      _
    $region87: #{forward.13} parent=1 // pred_check_branch
      %78 = sbr.rel (0) target = $region89
    $region88: #{forward.13} parent=1 // pred_region
      _
    $region89: #{forward.13} parent=1 // pred_fallthru
      _
    %v79 = vld [vmem:[%s0] sm:$0xff]
    %v80 = vld [vmem:[%s0 + $0x8] sm:$0xff]
    %v81 = vld [vmem:[%s2] sm:$0xff]
    %v82 = vld [vmem:[%s2 + $0x8] sm:$0xff]
    %v83 = vld [vmem:[%s2 + $0x10] sm:$0xff]
    %v84 = vld [vmem:[%s2 + $0x18] sm:$0xff]
    %v85 = vld [vmem:[%s2 + $0x20] sm:$0xff]
    %v86 = vld [vmem:[%s2 + $0x28] sm:$0xff]
    %v87 = vld [vmem:[%s2 + $0x30] sm:$0xff]
    %v88 = vld [vmem:[%s2 + $0x38] sm:$0xff]
    %v89 = vld [vmem:[%s2 + $0x40] sm:$0xff]
    %v90 = vld [vmem:[%s2 + $0x48] sm:$0xff]
    %v91 = vld [vmem:[%s2 + $0x50] sm:$0xff]
    %v92 = vld [vmem:[%s2 + $0x58] sm:$0xff]
    %v93 = vld [vmem:[%s2 + $0x60] sm:$0xff]
    %v94 = vld [vmem:[%s2 + $0x68] sm:$0xff]
    %v95 = vld [vmem:[%s2 + $0x70] sm:$0xff]
    %v96 = vld [vmem:[%s2 + $0x78] sm:$0xff]
    %v97 = vld [vmem:[%s2 + $0x80] sm:$0xff]
    %v98 = vld [vmem:[%s2 + $0x88] sm:$0xff]
    %v99 = vld [vmem:[%s2 + $0x90] sm:$0xff]
    %v100 = vld [vmem:[%s2 + $0x98] sm:$0xff]
    %v101 = vld [vmem:[%s2 + $0xa0] sm:$0xff]
    %v102 = vld [vmem:[%s2 + $0xa8] sm:$0xff]
    %v103 = vld [vmem:[%s2 + $0xb0] sm:$0xff]
    %v104 = vld [vmem:[%s2 + $0xb8] sm:$0xff]
    %v105 = vld [vmem:[%s2 + $0xc0] sm:$0xff]
    %v106 = vld [vmem:[%s2 + $0xc8] sm:$0xff]
    %v107 = vld [vmem:[%s2 + $0xd0] sm:$0xff]
    %v108 = vld [vmem:[%s2 + $0xd8] sm:$0xff]
    %v109 = vld [vmem:[%s2 + $0xe0] sm:$0xff]
    %v110 = vld [vmem:[%s2 + $0xe8] sm:$0xff]
    %v111 = vld [vmem:[%s2 + $0xf0] sm:$0xff]
    %v112 = vld [vmem:[%s2 + $0xf8] sm:$0xff]
    %v113 = vld [vmem:[%s2 + $0x100] sm:$0xff]
    %v114 = vld [vmem:[%s2 + $0x108] sm:$0xff]
    %v115 = vld [vmem:[%s2 + $0x110] sm:$0xff]
    %v116 = vld [vmem:[%s2 + $0x118] sm:$0xff]
    %v117 = vld [vmem:[%s2 + $0x120] sm:$0xff]
    %v118 = vld [vmem:[%s2 + $0x128] sm:$0xff]
    %v119 = vld [vmem:[%s2 + $0x130] sm:$0xff]
    %v120 = vld [vmem:[%s2 + $0x138] sm:$0xff]
    %v121 = vld [vmem:[%s2 + $0x140] sm:$0xff]
    %v122 = vld [vmem:[%s2 + $0x148] sm:$0xff]
    %v123 = vld [vmem:[%s2 + $0x150] sm:$0xff]
    %v124 = vld [vmem:[%s2 + $0x158] sm:$0xff]
    %v125 = vld [vmem:[%s2 + $0x160] sm:$0xff]
    %v126 = vld [vmem:[%s2 + $0x168] sm:$0xff]
    %v127 = vld [vmem:[%s2 + $0x170] sm:$0xff]
    %v128 = vld [vmem:[%s2 + $0x178] sm:$0xff]
    %v129 = vld [vmem:[%s2 + $0x180] sm:$0xff]
    %v130 = vld [vmem:[%s2 + $0x188] sm:$0xff]
    %v131 = vld [vmem:[%s2 + $0x190] sm:$0xff]
    %v132 = vld [vmem:[%s2 + $0x198] sm:$0xff]
    %v133 = vld [vmem:[%s2 + $0x1a0] sm:$0xff]
    %v134 = vld [vmem:[%s2 + $0x1a8] sm:$0xff]
    %v135 = vld [vmem:[%s2 + $0x1b0] sm:$0xff]
    %v136 = vld [vmem:[%s2 + $0x1b8] sm:$0xff]
    %v137 = vld [vmem:[%s2 + $0x1c0] sm:$0xff]
    %v138 = vld [vmem:[%s2 + $0x1c8] sm:$0xff]
    %v139 = vld [vmem:[%s2 + $0x1d0] sm:$0xff]
    %v140 = vld [vmem:[%s2 + $0x1d8] sm:$0xff]
    %v141 = vld [vmem:[%s2 + $0x1e0] sm:$0xff]
    %v142 = vld [vmem:[%s2 + $0x1e8] sm:$0xff]
    %v143 = vld [vmem:[%s2 + $0x1f0] sm:$0xff]
    %v144 = vld [vmem:[%s2 + $0x1f8] sm:$0xff]
    %v145 = vld [vmem:[%s2 + $0x200] sm:$0xff]
    %v146 = vld [vmem:[%s2 + $0x208] sm:$0xff]
    %v147 = vld [vmem:[%s2 + $0x210] sm:$0xff]
    %v148 = vld [vmem:[%s2 + $0x218] sm:$0xff]
    %v149 = vld [vmem:[%s2 + $0x220] sm:$0xff]
    %v150 = vld [vmem:[%s2 + $0x228] sm:$0xff]
    %v151 = vld [vmem:[%s2 + $0x230] sm:$0xff]
    %v152 = vld [vmem:[%s2 + $0x238] sm:$0xff]
    %v153 = vld [vmem:[%s2 + $0x240] sm:$0xff]
    %v154 = vld [vmem:[%s2 + $0x248] sm:$0xff]
    %v155 = vld [vmem:[%s2 + $0x250] sm:$0xff]
    %v156 = vld [vmem:[%s2 + $0x258] sm:$0xff]
    %v157 = vld [vmem:[%s2 + $0x260] sm:$0xff]
    %v158 = vld [vmem:[%s2 + $0x268] sm:$0xff]
    %v159 = vld [vmem:[%s2 + $0x270] sm:$0xff]
    %v160 = vld [vmem:[%s2 + $0x278] sm:$0xff]
    %v161 = vld [vmem:[%s2 + $0x280] sm:$0xff]
    %v162 = vld [vmem:[%s2 + $0x288] sm:$0xff]
    %v163 = vld [vmem:[%s2 + $0x290] sm:$0xff]
    %v164 = vld [vmem:[%s2 + $0x298] sm:$0xff]
    %v165 = vld [vmem:[%s2 + $0x2a0] sm:$0xff]
    %v166 = vld [vmem:[%s2 + $0x2a8] sm:$0xff]
    %v167 = vld [vmem:[%s2 + $0x2b0] sm:$0xff]
    %v168 = vld [vmem:[%s2 + $0x2b8] sm:$0xff]
    %v169 = vld [vmem:[%s2 + $0x2c0] sm:$0xff]
    %v170 = vld [vmem:[%s2 + $0x2c8] sm:$0xff]
    %v171 = vld [vmem:[%s2 + $0x2d0] sm:$0xff]
    %v172 = vld [vmem:[%s2 + $0x2d8] sm:$0xff]
    %v173 = vld [vmem:[%s2 + $0x2e0] sm:$0xff]
    %v174 = vld [vmem:[%s2 + $0x2e8] sm:$0xff]
    %v175 = vld [vmem:[%s2 + $0x2f0] sm:$0xff]
    %v176 = vld [vmem:[%s2 + $0x2f8] sm:$0xff]
    %v177 = vld [vmem:[%s2 + $0x300] sm:$0xff]
    %v178 = vld [vmem:[%s2 + $0x308] sm:$0xff]
    %v179 = vld [vmem:[%s2 + $0x310] sm:$0xff]
    %v180 = vld [vmem:[%s2 + $0x318] sm:$0xff]
    %v181 = vld [vmem:[%s2 + $0x320] sm:$0xff]
    %v182 = vld [vmem:[%s2 + $0x328] sm:$0xff]
    %v183 = vld [vmem:[%s2 + $0x330] sm:$0xff]
    %v184 = vld [vmem:[%s2 + $0x338] sm:$0xff]
    %v185 = vld [vmem:[%s2 + $0x340] sm:$0xff]
    %v186 = vld [vmem:[%s2 + $0x348] sm:$0xff]
    %v187 = vld [vmem:[%s2 + $0x350] sm:$0xff]
    %v188 = vld [vmem:[%s2 + $0x358] sm:$0xff]
    %v189 = vld [vmem:[%s2 + $0x360] sm:$0xff]
    %v190 = vld [vmem:[%s2 + $0x368] sm:$0xff]
    %v191 = vld [vmem:[%s2 + $0x370] sm:$0xff]
    %v192 = vld [vmem:[%s2 + $0x378] sm:$0xff]
    %v193 = vld [vmem:[%s2 + $0x380] sm:$0xff]
    %v194 = vld [vmem:[%s2 + $0x388] sm:$0xff]
    %v195 = vld [vmem:[%s2 + $0x390] sm:$0xff]
    %v196 = vld [vmem:[%s2 + $0x398] sm:$0xff]
    %v197 = vld [vmem:[%s2 + $0x3a0] sm:$0xff]
    %v198 = vld [vmem:[%s2 + $0x3a8] sm:$0xff]
    %v199 = vld [vmem:[%s2 + $0x3b0] sm:$0xff]
    %v200 = vld [vmem:[%s2 + $0x3b8] sm:$0xff]
    %v201 = vld [vmem:[%s2 + $0x3c0] sm:$0xff]
    %v202 = vld [vmem:[%s2 + $0x3c8] sm:$0xff]
    %v203 = vld [vmem:[%s2 + $0x3d0] sm:$0xff]
    %v204 = vld [vmem:[%s2 + $0x3d8] sm:$0xff]
    %v205 = vld [vmem:[%s2 + $0x3e0] sm:$0xff]
    %v206 = vld [vmem:[%s2 + $0x3e8] sm:$0xff]
    %v207 = vld [vmem:[%s2 + $0x3f0] sm:$0xff]
    %v208 = vld [vmem:[%s2 + $0x3f8] sm:$0xff]
    %v209 = vld [vmem:[%s2 + $0x400] sm:$0xff]
    %v210 = vld [vmem:[%s2 + $0x408] sm:$0xff]
    %v211 = vld [vmem:[%s2 + $0x410] sm:$0xff]
    %v212 = vld [vmem:[%s2 + $0x418] sm:$0xff]
    %v213 = vld [vmem:[%s2 + $0x420] sm:$0xff]
    %v214 = vld [vmem:[%s2 + $0x428] sm:$0xff]
    %v215 = vld [vmem:[%s2 + $0x430] sm:$0xff]
    %v216 = vld [vmem:[%s2 + $0x438] sm:$0xff]
    %v217 = vld [vmem:[%s2 + $0x440] sm:$0xff]
    %v218 = vld [vmem:[%s2 + $0x448] sm:$0xff]
    %v219 = vld [vmem:[%s2 + $0x450] sm:$0xff]
    %v220 = vld [vmem:[%s2 + $0x458] sm:$0xff]
    %v221 = vld [vmem:[%s2 + $0x460] sm:$0xff]
    %v222 = vld [vmem:[%s2 + $0x468] sm:$0xff]
    %v223 = vld [vmem:[%s2 + $0x470] sm:$0xff]
    %v224 = vld [vmem:[%s2 + $0x478] sm:$0xff]
    %v225 = vld [vmem:[%s2 + $0x480] sm:$0xff]
    %v226 = vld [vmem:[%s2 + $0x488] sm:$0xff]
    %v227 = vld [vmem:[%s2 + $0x490] sm:$0xff]
    %v228 = vld [vmem:[%s2 + $0x498] sm:$0xff]
    %v229 = vld [vmem:[%s2 + $0x4a0] sm:$0xff]
    %v230 = vld [vmem:[%s2 + $0x4a8] sm:$0xff]
    %v231 = vld [vmem:[%s2 + $0x4b0] sm:$0xff]
    %v232 = vld [vmem:[%s2 + $0x4b8] sm:$0xff]
    %v233 = vld [vmem:[%s2 + $0x4c0] sm:$0xff]
    %v234 = vld [vmem:[%s2 + $0x4c8] sm:$0xff]
    %v235 = vld [vmem:[%s2 + $0x4d0] sm:$0xff]
    %v236 = vld [vmem:[%s2 + $0x4d8] sm:$0xff]
    %v237 = vld [vmem:[%s2 + $0x4e0] sm:$0xff]
    %v238 = vld [vmem:[%s2 + $0x4e8] sm:$0xff]
    %v239 = vld [vmem:[%s2 + $0x4f0] sm:$0xff]
    %v240 = vld [vmem:[%s2 + $0x4f8] sm:$0xff]
    %v241 = vld [vmem:[%s2 + $0x500] sm:$0xff]
    %v242 = vld [vmem:[%s2 + $0x508] sm:$0xff]
    %v243 = vld [vmem:[%s2 + $0x510] sm:$0xff]
    %v244 = vld [vmem:[%s2 + $0x518] sm:$0xff]
    %v245 = vld [vmem:[%s2 + $0x520] sm:$0xff]
    %v246 = vld [vmem:[%s2 + $0x528] sm:$0xff]
    %v247 = vld [vmem:[%s2 + $0x530] sm:$0xff]
    %v248 = vld [vmem:[%s2 + $0x538] sm:$0xff]
    %v249 = vld [vmem:[%s2 + $0x540] sm:$0xff]
    %v250 = vld [vmem:[%s2 + $0x548] sm:$0xff]
    %v251 = vld [vmem:[%s2 + $0x550] sm:$0xff]
    %v252 = vld [vmem:[%s2 + $0x558] sm:$0xff]
    %v253 = vld [vmem:[%s2 + $0x560] sm:$0xff]
    %v254 = vld [vmem:[%s2 + $0x568] sm:$0xff]
    %v255 = vld [vmem:[%s2 + $0x570] sm:$0xff]
    %v256 = vld [vmem:[%s2 + $0x578] sm:$0xff]
    %v257 = vld [vmem:[%s2 + $0x580] sm:$0xff]
    %v258 = vld [vmem:[%s2 + $0x588] sm:$0xff]
    %v259 = vld [vmem:[%s2 + $0x590] sm:$0xff]
    %v260 = vld [vmem:[%s2 + $0x598] sm:$0xff]
    %v261 = vld [vmem:[%s2 + $0x5a0] sm:$0xff]
    %v262 = vld [vmem:[%s2 + $0x5a8] sm:$0xff]
    %v263 = vld [vmem:[%s2 + $0x5b0] sm:$0xff]
    %v264 = vld [vmem:[%s2 + $0x5b8] sm:$0xff]
    %v265 = vld [vmem:[%s2 + $0x5c0] sm:$0xff]
    %v266 = vld [vmem:[%s2 + $0x5c8] sm:$0xff]
    %v267 = vld [vmem:[%s2 + $0x5d0] sm:$0xff]
    %v268 = vld [vmem:[%s2 + $0x5d8] sm:$0xff]
    %v269 = vld [vmem:[%s2 + $0x5e0] sm:$0xff]
    %v270 = vld [vmem:[%s2 + $0x5e8] sm:$0xff]
    %v271 = vld [vmem:[%s2 + $0x5f0] sm:$0xff]
    %v272 = vld [vmem:[%s2 + $0x5f8] sm:$0xff]
    %v273 = vld [vmem:[%s2 + $0x600] sm:$0xff]
    %v274 = vld [vmem:[%s2 + $0x608] sm:$0xff]
    %v275 = vld [vmem:[%s2 + $0x610] sm:$0xff]
    %v276 = vld [vmem:[%s2 + $0x618] sm:$0xff]
    %v277 = vld [vmem:[%s2 + $0x620] sm:$0xff]
    %v278 = vld [vmem:[%s2 + $0x628] sm:$0xff]
    %v279 = vld [vmem:[%s2 + $0x630] sm:$0xff]
    %v280 = vld [vmem:[%s2 + $0x638] sm:$0xff]
    %v281 = vld [vmem:[%s2 + $0x640] sm:$0xff]
    %v282 = vld [vmem:[%s2 + $0x648] sm:$0xff]
    %v283 = vld [vmem:[%s2 + $0x650] sm:$0xff]
    %v284 = vld [vmem:[%s2 + $0x658] sm:$0xff]
    %v285 = vld [vmem:[%s2 + $0x660] sm:$0xff]
    %v286 = vld [vmem:[%s2 + $0x668] sm:$0xff]
    %v287 = vld [vmem:[%s2 + $0x670] sm:$0xff]
    %v288 = vld [vmem:[%s2 + $0x678] sm:$0xff]
    %v289 = vld [vmem:[%s2 + $0x680] sm:$0xff]
    %v290 = vld [vmem:[%s2 + $0x688] sm:$0xff]
    %v291 = vld [vmem:[%s2 + $0x690] sm:$0xff]
    %v292 = vld [vmem:[%s2 + $0x698] sm:$0xff]
    %v293 = vld [vmem:[%s2 + $0x6a0] sm:$0xff]
    %v294 = vld [vmem:[%s2 + $0x6a8] sm:$0xff]
    %v295 = vld [vmem:[%s2 + $0x6b0] sm:$0xff]
    %v296 = vld [vmem:[%s2 + $0x6b8] sm:$0xff]
    %v297 = vld [vmem:[%s2 + $0x6c0] sm:$0xff]
    %v298 = vld [vmem:[%s2 + $0x6c8] sm:$0xff]
    %v299 = vld [vmem:[%s2 + $0x6d0] sm:$0xff]
    %v300 = vld [vmem:[%s2 + $0x6d8] sm:$0xff]
    %v301 = vld [vmem:[%s2 + $0x6e0] sm:$0xff]
    %v302 = vld [vmem:[%s2 + $0x6e8] sm:$0xff]
    %v303 = vld [vmem:[%s2 + $0x6f0] sm:$0xff]
    %v304 = vld [vmem:[%s2 + $0x6f8] sm:$0xff]
    %v305 = vld [vmem:[%s2 + $0x700] sm:$0xff]
    %v306 = vld [vmem:[%s2 + $0x708] sm:$0xff]
    %v307 = vld [vmem:[%s2 + $0x710] sm:$0xff]
    %v308 = vld [vmem:[%s2 + $0x718] sm:$0xff]
    %v309 = vld [vmem:[%s2 + $0x720] sm:$0xff]
    %v310 = vld [vmem:[%s2 + $0x728] sm:$0xff]
    %v311 = vld [vmem:[%s2 + $0x730] sm:$0xff]
    %v312 = vld [vmem:[%s2 + $0x738] sm:$0xff]
    %v313 = vld [vmem:[%s2 + $0x740] sm:$0xff]
    %v314 = vld [vmem:[%s2 + $0x748] sm:$0xff]
    %v315 = vld [vmem:[%s2 + $0x750] sm:$0xff]
    %v316 = vld [vmem:[%s2 + $0x758] sm:$0xff]
    %v317 = vld [vmem:[%s2 + $0x760] sm:$0xff]
    %v318 = vld [vmem:[%s2 + $0x768] sm:$0xff]
    %v319 = vld [vmem:[%s2 + $0x770] sm:$0xff]
    %v320 = vld [vmem:[%s2 + $0x778] sm:$0xff]
    %v321 = vld [vmem:[%s2 + $0x780] sm:$0xff]
    %v322 = vld [vmem:[%s2 + $0x788] sm:$0xff]
    %v323 = vld [vmem:[%s2 + $0x790] sm:$0xff]
    %v324 = vld [vmem:[%s2 + $0x798] sm:$0xff]
    %v325 = vld [vmem:[%s2 + $0x7a0] sm:$0xff]
    %v326 = vld [vmem:[%s2 + $0x7a8] sm:$0xff]
    %v327 = vld [vmem:[%s2 + $0x7b0] sm:$0xff]
    %v328 = vld [vmem:[%s2 + $0x7b8] sm:$0xff]
    %v329 = vld [vmem:[%s2 + $0x7c0] sm:$0xff]
    %v330 = vld [vmem:[%s2 + $0x7c8] sm:$0xff]
    %v331 = vld [vmem:[%s2 + $0x7d0] sm:$0xff]
    %v332 = vld [vmem:[%s2 + $0x7d8] sm:$0xff]
    %v333 = vld [vmem:[%s2 + $0x7e0] sm:$0xff]
    %v334 = vld [vmem:[%s2 + $0x7e8] sm:$0xff]
    %v335 = vld [vmem:[%s2 + $0x7f0] sm:$0xff]
    %v336 = vld [vmem:[%s2 + $0x7f8] sm:$0xff]
    %v337 = vld [vmem:[%s3] sm:$0x3]
    %v339 = vperm.slane %v337, 0
    %v340 = vperm.slane %v337, 1
    %345 = vst [vmem:[#allocation1] ss:$4 sm:$0xff] %v79
    %s346 = scalar_lea.vmem [#allocation1], 32
    %347 = vst [vmem:[%s346] ss:$4 sm:$0xff] %v80
    %v348 = vld.sshfl [vmem:[#allocation1] sm:$0xff pattern:$0x73625140]
    %v349 = vld.sshfl [vmem:[#allocation1 + $0x8] sm:$0xff pattern:$0x73625140]
    %v350 = vld.sshfl [vmem:[#allocation1 + $0x10] sm:$0xff pattern:$0x73625140]
    %v351 = vld.sshfl [vmem:[#allocation1 + $0x18] sm:$0xff pattern:$0x73625140]
    %v352 = vld.sshfl [vmem:[#allocation1 + $0x20] sm:$0xff pattern:$0x73625140]
    %v353 = vld.sshfl [vmem:[#allocation1 + $0x28] sm:$0xff pattern:$0x73625140]
    %v354 = vld.sshfl [vmem:[#allocation1 + $0x30] sm:$0xff pattern:$0x73625140]
    %v355 = vld.sshfl [vmem:[#allocation1 + $0x38] sm:$0xff pattern:$0x73625140]
    %364 = vmatpush.msra.mxu0 %v111
    %365 = vmatpush.msra.mxu0 %v109
    %366 = vmatpush.msra.mxu0 %v107
    %367 = vmatpush.msra.mxu0 %v105
    %368 = vmatpush.msra.mxu0 %v103
    %369 = vmatpush.msra.mxu0 %v101
    %370 = vmatpush.msra.mxu0 %v99
    %371 = vmatpush.msra.mxu0 %v97
    %372 = vmatpush.msra.mxu0 %v95
    %373 = vmatpush.msra.mxu0 %v93
    %374 = vmatpush.msra.mxu0 %v91
    %375 = vmatpush.msra.mxu0 %v89
    %376 = vmatpush.msra.mxu0 %v87
    %377 = vmatpush.msra.mxu0 %v85
    %378 = vmatpush.msra.mxu0 %v83
    %379 = vmatpush.msra.mxu0 %v81
    %380 = vmatmul.f32.gmra.mxu0 %v348
    %v381 = vpop.f32.mrf.mxu0
    %v382 = vadd.f32 %v339, %v381
    %383 = vdwg.mxu0
    %384 = vmatpush.msra.mxu0 %v143
    %385 = vmatpush.msra.mxu0 %v141
    %386 = vmatpush.msra.mxu0 %v139
    %387 = vmatpush.msra.mxu0 %v137
    %388 = vmatpush.msra.mxu0 %v135
    %389 = vmatpush.msra.mxu0 %v133
    %390 = vmatpush.msra.mxu0 %v131
    %391 = vmatpush.msra.mxu0 %v129
    %392 = vmatpush.msra.mxu0 %v127
    %393 = vmatpush.msra.mxu0 %v125
    %394 = vmatpush.msra.mxu0 %v123
    %395 = vmatpush.msra.mxu0 %v121
    %396 = vmatpush.msra.mxu0 %v119
    %397 = vmatpush.msra.mxu0 %v117
    %398 = vmatpush.msra.mxu0 %v115
    %399 = vmatpush.msra.mxu0 %v113
    %400 = vmatmul.f32.gmra.mxu0 %v349
    %v401 = vpop.f32.mrf.mxu0
    %v402 = vadd.f32 %v382, %v401
    %403 = vdwg.mxu0
    %404 = vmatpush.msra.mxu0 %v175
    %405 = vmatpush.msra.mxu0 %v173
    %406 = vmatpush.msra.mxu0 %v171
    %407 = vmatpush.msra.mxu0 %v169
    %408 = vmatpush.msra.mxu0 %v167
    %409 = vmatpush.msra.mxu0 %v165
    %410 = vmatpush.msra.mxu0 %v163
    %411 = vmatpush.msra.mxu0 %v161
    %412 = vmatpush.msra.mxu0 %v159
    %413 = vmatpush.msra.mxu0 %v157
    %414 = vmatpush.msra.mxu0 %v155
    %415 = vmatpush.msra.mxu0 %v153
    %416 = vmatpush.msra.mxu0 %v151
    %417 = vmatpush.msra.mxu0 %v149
    %418 = vmatpush.msra.mxu0 %v147
    %419 = vmatpush.msra.mxu0 %v145
    %420 = vmatmul.f32.gmra.mxu0 %v350
    %v421 = vpop.f32.mrf.mxu0
    %v422 = vadd.f32 %v402, %v421
    %423 = vdwg.mxu0
    %424 = vmatpush.msra.mxu0 %v207
    %425 = vmatpush.msra.mxu0 %v205
    %426 = vmatpush.msra.mxu0 %v203
    %427 = vmatpush.msra.mxu0 %v201
    %428 = vmatpush.msra.mxu0 %v199
    %429 = vmatpush.msra.mxu0 %v197
    %430 = vmatpush.msra.mxu0 %v195
    %431 = vmatpush.msra.mxu0 %v193
    %432 = vmatpush.msra.mxu0 %v191
    %433 = vmatpush.msra.mxu0 %v189
    %434 = vmatpush.msra.mxu0 %v187
    %435 = vmatpush.msra.mxu0 %v185
    %436 = vmatpush.msra.mxu0 %v183
    %437 = vmatpush.msra.mxu0 %v181
    %438 = vmatpush.msra.mxu0 %v179
    %439 = vmatpush.msra.mxu0 %v177
    %440 = vmatmul.f32.gmra.mxu0 %v351
    %v441 = vpop.f32.mrf.mxu0
    %v442 = vadd.f32 %v422, %v441
    %443 = vdwg.mxu0
    %444 = vmatpush.msra.mxu0 %v239
    %445 = vmatpush.msra.mxu0 %v237
    %446 = vmatpush.msra.mxu0 %v235
    %447 = vmatpush.msra.mxu0 %v233
    %448 = vmatpush.msra.mxu0 %v231
    %449 = vmatpush.msra.mxu0 %v229
    %450 = vmatpush.msra.mxu0 %v227
    %451 = vmatpush.msra.mxu0 %v225
    %452 = vmatpush.msra.mxu0 %v223
    %453 = vmatpush.msra.mxu0 %v221
    %454 = vmatpush.msra.mxu0 %v219
    %455 = vmatpush.msra.mxu0 %v217
    %456 = vmatpush.msra.mxu0 %v215
    %457 = vmatpush.msra.mxu0 %v213
    %458 = vmatpush.msra.mxu0 %v211
    %459 = vmatpush.msra.mxu0 %v209
    %460 = vmatmul.f32.gmra.mxu0 %v352
    %v461 = vpop.f32.mrf.mxu0
    %v462 = vadd.f32 %v442, %v461
    %463 = vdwg.mxu0
    %464 = vmatpush.msra.mxu0 %v271
    %465 = vmatpush.msra.mxu0 %v269
    %466 = vmatpush.msra.mxu0 %v267
    %467 = vmatpush.msra.mxu0 %v265
    %468 = vmatpush.msra.mxu0 %v263
    %469 = vmatpush.msra.mxu0 %v261
    %470 = vmatpush.msra.mxu0 %v259
    %471 = vmatpush.msra.mxu0 %v257
    %472 = vmatpush.msra.mxu0 %v255
    %473 = vmatpush.msra.mxu0 %v253
    %474 = vmatpush.msra.mxu0 %v251
    %475 = vmatpush.msra.mxu0 %v249
    %476 = vmatpush.msra.mxu0 %v247
    %477 = vmatpush.msra.mxu0 %v245
    %478 = vmatpush.msra.mxu0 %v243
    %479 = vmatpush.msra.mxu0 %v241
    %480 = vmatmul.f32.gmra.mxu0 %v353
    %v481 = vpop.f32.mrf.mxu0
    %v482 = vadd.f32 %v462, %v481
    %483 = vdwg.mxu0
    %484 = vmatpush.msra.mxu0 %v303
    %485 = vmatpush.msra.mxu0 %v301
    %486 = vmatpush.msra.mxu0 %v299
    %487 = vmatpush.msra.mxu0 %v297
    %488 = vmatpush.msra.mxu0 %v295
    %489 = vmatpush.msra.mxu0 %v293
    %490 = vmatpush.msra.mxu0 %v291
    %491 = vmatpush.msra.mxu0 %v289
    %492 = vmatpush.msra.mxu0 %v287
    %493 = vmatpush.msra.mxu0 %v285
    %494 = vmatpush.msra.mxu0 %v283
    %495 = vmatpush.msra.mxu0 %v281
    %496 = vmatpush.msra.mxu0 %v279
    %497 = vmatpush.msra.mxu0 %v277
    %498 = vmatpush.msra.mxu0 %v275
    %499 = vmatpush.msra.mxu0 %v273
    %500 = vmatmul.f32.gmra.mxu0 %v354
    %v501 = vpop.f32.mrf.mxu0
    %v502 = vadd.f32 %v482, %v501
    %503 = vdwg.mxu0
    %504 = vmatpush.msra.mxu0 %v335
    %505 = vmatpush.msra.mxu0 %v333
    %506 = vmatpush.msra.mxu0 %v331
    %507 = vmatpush.msra.mxu0 %v329
    %508 = vmatpush.msra.mxu0 %v327
    %509 = vmatpush.msra.mxu0 %v325
    %510 = vmatpush.msra.mxu0 %v323
    %511 = vmatpush.msra.mxu0 %v321
    %512 = vmatpush.msra.mxu0 %v319
    %513 = vmatpush.msra.mxu0 %v317
    %514 = vmatpush.msra.mxu0 %v315
    %515 = vmatpush.msra.mxu0 %v313
    %516 = vmatpush.msra.mxu0 %v311
    %517 = vmatpush.msra.mxu0 %v309
    %518 = vmatpush.msra.mxu0 %v307
    %519 = vmatpush.msra.mxu0 %v305
    %520 = vmatmul.f32.gmra.mxu0 %v355
    %v521 = vpop.f32.mrf.mxu0
    %v522 = vadd.f32 %v502, %v521
    %523 = vdwg.mxu0
    %524 = vmatpush.msra.mxu0 %v112
    %525 = vmatpush.msra.mxu0 %v110
    %526 = vmatpush.msra.mxu0 %v108
    %527 = vmatpush.msra.mxu0 %v106
    %528 = vmatpush.msra.mxu0 %v104
    %529 = vmatpush.msra.mxu0 %v102
    %530 = vmatpush.msra.mxu0 %v100
    %531 = vmatpush.msra.mxu0 %v98
    %532 = vmatpush.msra.mxu0 %v96
    %533 = vmatpush.msra.mxu0 %v94
    %534 = vmatpush.msra.mxu0 %v92
    %535 = vmatpush.msra.mxu0 %v90
    %536 = vmatpush.msra.mxu0 %v88
    %537 = vmatpush.msra.mxu0 %v86
    %538 = vmatpush.msra.mxu0 %v84
    %539 = vmatpush.msra.mxu0 %v82
    %540 = vmatmul.f32.gmra.mxu0 %v348
    %v541 = vpop.f32.mrf.mxu0
    %v542 = vadd.f32 %v340, %v541
    %543 = vdwg.mxu0
    %544 = vmatpush.msra.mxu0 %v144
    %545 = vmatpush.msra.mxu0 %v142
    %546 = vmatpush.msra.mxu0 %v140
    %547 = vmatpush.msra.mxu0 %v138
    %548 = vmatpush.msra.mxu0 %v136
    %549 = vmatpush.msra.mxu0 %v134
    %550 = vmatpush.msra.mxu0 %v132
    %551 = vmatpush.msra.mxu0 %v130
    %552 = vmatpush.msra.mxu0 %v128
    %553 = vmatpush.msra.mxu0 %v126
    %554 = vmatpush.msra.mxu0 %v124
    %555 = vmatpush.msra.mxu0 %v122
    %556 = vmatpush.msra.mxu0 %v120
    %557 = vmatpush.msra.mxu0 %v118
    %558 = vmatpush.msra.mxu0 %v116
    %559 = vmatpush.msra.mxu0 %v114
    %560 = vmatmul.f32.gmra.mxu0 %v349
    %v561 = vpop.f32.mrf.mxu0
    %v562 = vadd.f32 %v542, %v561
    %563 = vdwg.mxu0
    %564 = vmatpush.msra.mxu0 %v176
    %565 = vmatpush.msra.mxu0 %v174
    %566 = vmatpush.msra.mxu0 %v172
    %567 = vmatpush.msra.mxu0 %v170
    %568 = vmatpush.msra.mxu0 %v168
    %569 = vmatpush.msra.mxu0 %v166
    %570 = vmatpush.msra.mxu0 %v164
    %571 = vmatpush.msra.mxu0 %v162
    %572 = vmatpush.msra.mxu0 %v160
    %573 = vmatpush.msra.mxu0 %v158
    %574 = vmatpush.msra.mxu0 %v156
    %575 = vmatpush.msra.mxu0 %v154
    %576 = vmatpush.msra.mxu0 %v152
    %577 = vmatpush.msra.mxu0 %v150
    %578 = vmatpush.msra.mxu0 %v148
    %579 = vmatpush.msra.mxu0 %v146
    %580 = vmatmul.f32.gmra.mxu0 %v350
    %v581 = vpop.f32.mrf.mxu0
    %v582 = vadd.f32 %v562, %v581
    %583 = vdwg.mxu0
    %584 = vmatpush.msra.mxu0 %v208
    %585 = vmatpush.msra.mxu0 %v206
    %586 = vmatpush.msra.mxu0 %v204
    %587 = vmatpush.msra.mxu0 %v202
    %588 = vmatpush.msra.mxu0 %v200
    %589 = vmatpush.msra.mxu0 %v198
    %590 = vmatpush.msra.mxu0 %v196
    %591 = vmatpush.msra.mxu0 %v194
    %592 = vmatpush.msra.mxu0 %v192
    %593 = vmatpush.msra.mxu0 %v190
    %594 = vmatpush.msra.mxu0 %v188
    %595 = vmatpush.msra.mxu0 %v186
    %596 = vmatpush.msra.mxu0 %v184
    %597 = vmatpush.msra.mxu0 %v182
    %598 = vmatpush.msra.mxu0 %v180
    %599 = vmatpush.msra.mxu0 %v178
    %600 = vmatmul.f32.gmra.mxu0 %v351
    %v601 = vpop.f32.mrf.mxu0
    %v602 = vadd.f32 %v582, %v601
    %603 = vdwg.mxu0
    %604 = vmatpush.msra.mxu0 %v240
    %605 = vmatpush.msra.mxu0 %v238
    %606 = vmatpush.msra.mxu0 %v236
    %607 = vmatpush.msra.mxu0 %v234
    %608 = vmatpush.msra.mxu0 %v232
    %609 = vmatpush.msra.mxu0 %v230
    %610 = vmatpush.msra.mxu0 %v228
    %611 = vmatpush.msra.mxu0 %v226
    %612 = vmatpush.msra.mxu0 %v224
    %613 = vmatpush.msra.mxu0 %v222
    %614 = vmatpush.msra.mxu0 %v220
    %615 = vmatpush.msra.mxu0 %v218
    %616 = vmatpush.msra.mxu0 %v216
    %617 = vmatpush.msra.mxu0 %v214
    %618 = vmatpush.msra.mxu0 %v212
    %619 = vmatpush.msra.mxu0 %v210
    %620 = vmatmul.f32.gmra.mxu0 %v352
    %v621 = vpop.f32.mrf.mxu0
    %v622 = vadd.f32 %v602, %v621
    %623 = vdwg.mxu0
    %624 = vmatpush.msra.mxu0 %v272
    %625 = vmatpush.msra.mxu0 %v270
    %626 = vmatpush.msra.mxu0 %v268
    %627 = vmatpush.msra.mxu0 %v266
    %628 = vmatpush.msra.mxu0 %v264
    %629 = vmatpush.msra.mxu0 %v262
    %630 = vmatpush.msra.mxu0 %v260
    %631 = vmatpush.msra.mxu0 %v258
    %632 = vmatpush.msra.mxu0 %v256
    %633 = vmatpush.msra.mxu0 %v254
    %634 = vmatpush.msra.mxu0 %v252
    %635 = vmatpush.msra.mxu0 %v250
    %636 = vmatpush.msra.mxu0 %v248
    %637 = vmatpush.msra.mxu0 %v246
    %638 = vmatpush.msra.mxu0 %v244
    %639 = vmatpush.msra.mxu0 %v242
    %640 = vmatmul.f32.gmra.mxu0 %v353
    %v641 = vpop.f32.mrf.mxu0
    %v642 = vadd.f32 %v622, %v641
    %643 = vdwg.mxu0
    %644 = vmatpush.msra.mxu0 %v304
    %645 = vmatpush.msra.mxu0 %v302
    %646 = vmatpush.msra.mxu0 %v300
    %647 = vmatpush.msra.mxu0 %v298
    %648 = vmatpush.msra.mxu0 %v296
    %649 = vmatpush.msra.mxu0 %v294
    %650 = vmatpush.msra.mxu0 %v292
    %651 = vmatpush.msra.mxu0 %v290
    %652 = vmatpush.msra.mxu0 %v288
    %653 = vmatpush.msra.mxu0 %v286
    %654 = vmatpush.msra.mxu0 %v284
    %655 = vmatpush.msra.mxu0 %v282
    %656 = vmatpush.msra.mxu0 %v280
    %657 = vmatpush.msra.mxu0 %v278
    %658 = vmatpush.msra.mxu0 %v276
    %659 = vmatpush.msra.mxu0 %v274
    %660 = vmatmul.f32.gmra.mxu0 %v354
    %v661 = vpop.f32.mrf.mxu0
    %v662 = vadd.f32 %v642, %v661
    %663 = vdwg.mxu0
    %664 = vmatpush.msra.mxu0 %v336
    %665 = vmatpush.msra.mxu0 %v334
    %666 = vmatpush.msra.mxu0 %v332
    %667 = vmatpush.msra.mxu0 %v330
    %668 = vmatpush.msra.mxu0 %v328
    %669 = vmatpush.msra.mxu0 %v326
    %670 = vmatpush.msra.mxu0 %v324
    %671 = vmatpush.msra.mxu0 %v322
    %672 = vmatpush.msra.mxu0 %v320
    %673 = vmatpush.msra.mxu0 %v318
    %674 = vmatpush.msra.mxu0 %v316
    %675 = vmatpush.msra.mxu0 %v314
    %676 = vmatpush.msra.mxu0 %v312
    %677 = vmatpush.msra.mxu0 %v310
    %678 = vmatpush.msra.mxu0 %v308
    %679 = vmatpush.msra.mxu0 %v306
    %680 = vmatmul.f32.gmra.mxu0 %v355
    %v681 = vpop.f32.mrf.mxu0
    %v682 = vadd.f32 %v662, %v681
    %683 = vdwg.mxu0
    %v684 = vmax.f32 %v522, 0.0
    %v685 = vmax.f32 %v682, 0.0
    %v686 = vld [vmem:[%s4] sm:$0xff]
    %v687 = vld [vmem:[%s4 + $0x8] sm:$0xff]
    %v688 = vld [vmem:[%s4 + $0x10] sm:$0xff]
    %v689 = vld [vmem:[%s4 + $0x18] sm:$0xff]
    %v690 = vld [vmem:[%s4 + $0x20] sm:$0xff]
    %v691 = vld [vmem:[%s4 + $0x28] sm:$0xff]
    %v692 = vld [vmem:[%s4 + $0x30] sm:$0xff]
    %v693 = vld [vmem:[%s4 + $0x38] sm:$0xff]
    %v694 = vld [vmem:[%s4 + $0x40] sm:$0xff]
    %v695 = vld [vmem:[%s4 + $0x48] sm:$0xff]
    %v696 = vld [vmem:[%s4 + $0x50] sm:$0xff]
    %v697 = vld [vmem:[%s4 + $0x58] sm:$0xff]
    %v698 = vld [vmem:[%s4 + $0x60] sm:$0xff]
    %v699 = vld [vmem:[%s4 + $0x68] sm:$0xff]
    %v700 = vld [vmem:[%s4 + $0x70] sm:$0xff]
    %v701 = vld [vmem:[%s4 + $0x78] sm:$0xff]
    %v702 = vld [vmem:[%s4 + $0x80] sm:$0xff]
    %v703 = vld [vmem:[%s4 + $0x88] sm:$0xff]
    %v704 = vld [vmem:[%s4 + $0x90] sm:$0xff]
    %v705 = vld [vmem:[%s4 + $0x98] sm:$0xff]
    %v706 = vld [vmem:[%s4 + $0xa0] sm:$0xff]
    %v707 = vld [vmem:[%s4 + $0xa8] sm:$0xff]
    %v708 = vld [vmem:[%s4 + $0xb0] sm:$0xff]
    %v709 = vld [vmem:[%s4 + $0xb8] sm:$0xff]
    %v710 = vld [vmem:[%s4 + $0xc0] sm:$0xff]
    %v711 = vld [vmem:[%s4 + $0xc8] sm:$0xff]
    %v712 = vld [vmem:[%s4 + $0xd0] sm:$0xff]
    %v713 = vld [vmem:[%s4 + $0xd8] sm:$0xff]
    %v714 = vld [vmem:[%s4 + $0xe0] sm:$0xff]
    %v715 = vld [vmem:[%s4 + $0xe8] sm:$0xff]
    %v716 = vld [vmem:[%s4 + $0xf0] sm:$0xff]
    %v717 = vld [vmem:[%s4 + $0xf8] sm:$0xff]
    %v718 = vld [vmem:[%s5] sm:$0x1]
    %v720 = vperm.slane %v718, 0
    %722 = vmatpush.msra.mxu0 %v701
    %723 = vmatpush.msra.mxu0 %v700
    %724 = vmatpush.msra.mxu0 %v699
    %725 = vmatpush.msra.mxu0 %v698
    %726 = vmatpush.msra.mxu0 %v697
    %727 = vmatpush.msra.mxu0 %v696
    %728 = vmatpush.msra.mxu0 %v695
    %729 = vmatpush.msra.mxu0 %v694
    %730 = vmatpush.msra.mxu0 %v693
    %731 = vmatpush.msra.mxu0 %v692
    %732 = vmatpush.msra.mxu0 %v691
    %733 = vmatpush.msra.mxu0 %v690
    %734 = vmatpush.msra.mxu0 %v689
    %735 = vmatpush.msra.mxu0 %v688
    %736 = vmatpush.msra.mxu0 %v687
    %737 = vmatpush.msra.mxu0 %v686
    %738 = vmatmul.f32.gmra.mxu0 %v684
    %v739 = vpop.f32.mrf.mxu0
    %v740 = vadd.f32 %v720, %v739
    %741 = vdwg.mxu0
    %742 = vmatpush.msra.mxu0 %v717
    %743 = vmatpush.msra.mxu0 %v716
    %744 = vmatpush.msra.mxu0 %v715
    %745 = vmatpush.msra.mxu0 %v714
    %746 = vmatpush.msra.mxu0 %v713
    %747 = vmatpush.msra.mxu0 %v712
    %748 = vmatpush.msra.mxu0 %v711
    %749 = vmatpush.msra.mxu0 %v710
    %750 = vmatpush.msra.mxu0 %v709
    %751 = vmatpush.msra.mxu0 %v708
    %752 = vmatpush.msra.mxu0 %v707
    %753 = vmatpush.msra.mxu0 %v706
    %754 = vmatpush.msra.mxu0 %v705
    %755 = vmatpush.msra.mxu0 %v704
    %756 = vmatpush.msra.mxu0 %v703
    %757 = vmatpush.msra.mxu0 %v702
    %758 = vmatmul.f32.gmra.mxu0 %v685
    %v759 = vpop.f32.mrf.mxu0
    %v760 = vadd.f32 %v740, %v759
    %761 = vdwg.mxu0
    %v762 = vld [vmem:[%s6] sm:$0xff]
    %v763 = vld [vmem:[%s6 + $0x8] sm:$0xff]
    %v764 = vld [vmem:[%s6 + $0x10] sm:$0xff]
    %v765 = vld [vmem:[%s6 + $0x18] sm:$0xff]
    %v766 = vld [vmem:[%s6 + $0x20] sm:$0xff]
    %v767 = vld [vmem:[%s6 + $0x28] sm:$0xff]
    %v768 = vld [vmem:[%s6 + $0x30] sm:$0xff]
    %v769 = vld [vmem:[%s6 + $0x38] sm:$0xff]
    %v770 = vld [vmem:[%s6 + $0x40] sm:$0xff]
    %v771 = vld [vmem:[%s6 + $0x48] sm:$0xff]
    %v772 = vld [vmem:[%s6 + $0x50] sm:$0xff]
    %v773 = vld [vmem:[%s6 + $0x58] sm:$0xff]
    %v774 = vld [vmem:[%s6 + $0x60] sm:$0xff]
    %v775 = vld [vmem:[%s6 + $0x68] sm:$0xff]
    %v776 = vld [vmem:[%s6 + $0x70] sm:$0xff]
    %v777 = vld [vmem:[%s6 + $0x78] sm:$0xff]
    %v778 = vld [vmem:[%s6 + $0x80] sm:$0xff]
    %v779 = vld [vmem:[%s6 + $0x88] sm:$0xff]
    %v780 = vld [vmem:[%s6 + $0x90] sm:$0xff]
    %v781 = vld [vmem:[%s6 + $0x98] sm:$0xff]
    %v782 = vld [vmem:[%s6 + $0xa0] sm:$0xff]
    %v783 = vld [vmem:[%s6 + $0xa8] sm:$0xff]
    %v784 = vld [vmem:[%s6 + $0xb0] sm:$0xff]
    %v785 = vld [vmem:[%s6 + $0xb8] sm:$0xff]
    %v786 = vld [vmem:[%s6 + $0xc0] sm:$0xff]
    %v787 = vld [vmem:[%s6 + $0xc8] sm:$0xff]
    %v788 = vld [vmem:[%s6 + $0xd0] sm:$0xff]
    %v789 = vld [vmem:[%s6 + $0xd8] sm:$0xff]
    %v790 = vld [vmem:[%s6 + $0xe0] sm:$0xff]
    %v791 = vld [vmem:[%s6 + $0xe8] sm:$0xff]
    %v792 = vld [vmem:[%s6 + $0xf0] sm:$0xff]
    %v793 = vld [vmem:[%s6 + $0xf8] sm:$0xff]
    %v794 = vld [vmem:[%s7] sm:$0x1]
    %v796 = vperm.slane %v794, 0
    %798 = vmatpush.msra.mxu0 %v777
    %799 = vmatpush.msra.mxu0 %v776
    %800 = vmatpush.msra.mxu0 %v775
    %801 = vmatpush.msra.mxu0 %v774
    %802 = vmatpush.msra.mxu0 %v773
    %803 = vmatpush.msra.mxu0 %v772
    %804 = vmatpush.msra.mxu0 %v771
    %805 = vmatpush.msra.mxu0 %v770
    %806 = vmatpush.msra.mxu0 %v769
    %807 = vmatpush.msra.mxu0 %v768
    %808 = vmatpush.msra.mxu0 %v767
    %809 = vmatpush.msra.mxu0 %v766
    %810 = vmatpush.msra.mxu0 %v765
    %811 = vmatpush.msra.mxu0 %v764
    %812 = vmatpush.msra.mxu0 %v763
    %813 = vmatpush.msra.mxu0 %v762
    %814 = vmatmul.f32.gmra.mxu0 %v684
    %v815 = vpop.f32.mrf.mxu0
    %v816 = vadd.f32 %v796, %v815
    %817 = vdwg.mxu0
    %818 = vmatpush.msra.mxu0 %v793
    %819 = vmatpush.msra.mxu0 %v792
    %820 = vmatpush.msra.mxu0 %v791
    %821 = vmatpush.msra.mxu0 %v790
    %822 = vmatpush.msra.mxu0 %v789
    %823 = vmatpush.msra.mxu0 %v788
    %824 = vmatpush.msra.mxu0 %v787
    %825 = vmatpush.msra.mxu0 %v786
    %826 = vmatpush.msra.mxu0 %v785
    %827 = vmatpush.msra.mxu0 %v784
    %828 = vmatpush.msra.mxu0 %v783
    %829 = vmatpush.msra.mxu0 %v782
    %830 = vmatpush.msra.mxu0 %v781
    %831 = vmatpush.msra.mxu0 %v780
    %832 = vmatpush.msra.mxu0 %v779
    %833 = vmatpush.msra.mxu0 %v778
    %834 = vmatmul.f32.gmra.mxu0 %v685
    %v835 = vpop.f32.mrf.mxu0
    %v836 = vadd.f32 %v816, %v835
    %837 = vdwg.mxu0
    %vm838 = vcmask 123904
    %839 = vst.msk [vmem:[#allocation3] sm:$0x3] %vm838, %v760
    %840 = vst.msk [vmem:[#allocation5] sm:$0x3] %vm838, %v836
    %v841 = vld [vmem:[%s1] sm:$0x3]
    %v842 = vmul.f32 %v836, 0.5
    %v843 = vmul.f32 %v842, 1.442695
    %v844 = vpow.pop %v843
    %v845 = vmul.f32 %v841, %v844
    %v846 = vadd.f32 %v760, %v845
    %v847 = vld [vmem:[%s8] sm:$0xff]
    %v848 = vld [vmem:[%s8 + $0x8] sm:$0xff]
    %v849 = vld [vmem:[%s8 + $0x10] sm:$0xff]
    %v850 = vld [vmem:[%s8 + $0x18] sm:$0xff]
    %v851 = vld [vmem:[%s9] sm:$0x3]
    %v853 = vperm.slane %v851, 0
    %v854 = vperm.slane %v851, 1
    %vm857 = vcmask 130048
    %v859 = vsel %vm857, %v846, 0
    %861 = vmatpush.msra.mxu0 0.0
    %862 = vmatpush.msra.mxu0 0.0
    %863 = vmatpush.msra.mxu0 0.0
    %864 = vmatpush.msra.mxu0 0.0
    %865 = vmatpush.msra.mxu0 0.0
    %866 = vmatpush.msra.mxu0 0.0
    %867 = vmatpush.msra.mxu0 0.0
    %868 = vmatpush.msra.mxu0 0.0
    %869 = vmatpush.msra.mxu0 0.0
    %870 = vmatpush.msra.mxu0 0.0
    %871 = vmatpush.msra.mxu0 0.0
    %872 = vmatpush.msra.mxu0 0.0
    %873 = vmatpush.msra.mxu0 0.0
    %874 = vmatpush.msra.mxu0 0.0
    %875 = vmatpush.msra.mxu0 %v849
    %876 = vmatpush.msra.mxu0 %v847
    %877 = vmatmul.f32.gmra.mxu0 %v859
    %v878 = vpop.f32.mrf.mxu0
    %v879 = vadd.f32 %v853, %v878
    %880 = vdwg.mxu0
    %881 = vmatpush.msra.mxu0 0.0
    %882 = vmatpush.msra.mxu0 0.0
    %883 = vmatpush.msra.mxu0 0.0
    %884 = vmatpush.msra.mxu0 0.0
    %885 = vmatpush.msra.mxu0 0.0
    %886 = vmatpush.msra.mxu0 0.0
    %887 = vmatpush.msra.mxu0 0.0
    %888 = vmatpush.msra.mxu0 0.0
    %889 = vmatpush.msra.mxu0 0.0
    %890 = vmatpush.msra.mxu0 0.0
    %891 = vmatpush.msra.mxu0 0.0
    %892 = vmatpush.msra.mxu0 0.0
    %893 = vmatpush.msra.mxu0 0.0
    %894 = vmatpush.msra.mxu0 0.0
    %895 = vmatpush.msra.mxu0 %v850
    %896 = vmatpush.msra.mxu0 %v848
    %897 = vmatmul.f32.gmra.mxu0 %v859
    %v898 = vpop.f32.mrf.mxu0
    %v899 = vadd.f32 %v854, %v898
    %900 = vdwg.mxu0
    %v901 = vmax.f32 %v879, 0.0
    %v902 = vmax.f32 %v899, 0.0
    %v903 = vld [vmem:[%s10] sm:$0xff]
    %v904 = vld [vmem:[%s10 + $0x8] sm:$0xff]
    %v905 = vld [vmem:[%s10 + $0x10] sm:$0xff]
    %v906 = vld [vmem:[%s10 + $0x18] sm:$0xff]
    %v907 = vld [vmem:[%s10 + $0x20] sm:$0xff]
    %v908 = vld [vmem:[%s10 + $0x28] sm:$0xff]
    %v909 = vld [vmem:[%s10 + $0x30] sm:$0xff]
    %v910 = vld [vmem:[%s10 + $0x38] sm:$0xff]
    %v911 = vld [vmem:[%s10 + $0x40] sm:$0xff]
    %v912 = vld [vmem:[%s10 + $0x48] sm:$0xff]
    %v913 = vld [vmem:[%s10 + $0x50] sm:$0xff]
    %v914 = vld [vmem:[%s10 + $0x58] sm:$0xff]
    %v915 = vld [vmem:[%s10 + $0x60] sm:$0xff]
    %v916 = vld [vmem:[%s10 + $0x68] sm:$0xff]
    %v917 = vld [vmem:[%s10 + $0x70] sm:$0xff]
    %v918 = vld [vmem:[%s10 + $0x78] sm:$0xff]
    %v919 = vld [vmem:[%s10 + $0x80] sm:$0xff]
    %v920 = vld [vmem:[%s10 + $0x88] sm:$0xff]
    %v921 = vld [vmem:[%s10 + $0x90] sm:$0xff]
    %v922 = vld [vmem:[%s10 + $0x98] sm:$0xff]
    %v923 = vld [vmem:[%s10 + $0xa0] sm:$0xff]
    %v924 = vld [vmem:[%s10 + $0xa8] sm:$0xff]
    %v925 = vld [vmem:[%s10 + $0xb0] sm:$0xff]
    %v926 = vld [vmem:[%s10 + $0xb8] sm:$0xff]
    %v927 = vld [vmem:[%s10 + $0xc0] sm:$0xff]
    %v928 = vld [vmem:[%s10 + $0xc8] sm:$0xff]
    %v929 = vld [vmem:[%s10 + $0xd0] sm:$0xff]
    %v930 = vld [vmem:[%s10 + $0xd8] sm:$0xff]
    %v931 = vld [vmem:[%s10 + $0xe0] sm:$0xff]
    %v932 = vld [vmem:[%s10 + $0xe8] sm:$0xff]
    %v933 = vld [vmem:[%s10 + $0xf0] sm:$0xff]
    %v934 = vld [vmem:[%s10 + $0xf8] sm:$0xff]
    %v935 = vld [vmem:[%s10 + $0x100] sm:$0xff]
    %v936 = vld [vmem:[%s10 + $0x108] sm:$0xff]
    %v937 = vld [vmem:[%s10 + $0x110] sm:$0xff]
    %v938 = vld [vmem:[%s10 + $0x118] sm:$0xff]
    %v939 = vld [vmem:[%s10 + $0x120] sm:$0xff]
    %v940 = vld [vmem:[%s10 + $0x128] sm:$0xff]
    %v941 = vld [vmem:[%s10 + $0x130] sm:$0xff]
    %v942 = vld [vmem:[%s10 + $0x138] sm:$0xff]
    %v943 = vld [vmem:[%s10 + $0x140] sm:$0xff]
    %v944 = vld [vmem:[%s10 + $0x148] sm:$0xff]
    %v945 = vld [vmem:[%s10 + $0x150] sm:$0xff]
    %v946 = vld [vmem:[%s10 + $0x158] sm:$0xff]
    %v947 = vld [vmem:[%s10 + $0x160] sm:$0xff]
    %v948 = vld [vmem:[%s10 + $0x168] sm:$0xff]
    %v949 = vld [vmem:[%s10 + $0x170] sm:$0xff]
    %v950 = vld [vmem:[%s10 + $0x178] sm:$0xff]
    %v951 = vld [vmem:[%s10 + $0x180] sm:$0xff]
    %v952 = vld [vmem:[%s10 + $0x188] sm:$0xff]
    %v953 = vld [vmem:[%s10 + $0x190] sm:$0xff]
    %v954 = vld [vmem:[%s10 + $0x198] sm:$0xff]
    %v955 = vld [vmem:[%s10 + $0x1a0] sm:$0xff]
    %v956 = vld [vmem:[%s10 + $0x1a8] sm:$0xff]
    %v957 = vld [vmem:[%s10 + $0x1b0] sm:$0xff]
    %v958 = vld [vmem:[%s10 + $0x1b8] sm:$0xff]
    %v959 = vld [vmem:[%s10 + $0x1c0] sm:$0xff]
    %v960 = vld [vmem:[%s10 + $0x1c8] sm:$0xff]
    %v961 = vld [vmem:[%s10 + $0x1d0] sm:$0xff]
    %v962 = vld [vmem:[%s10 + $0x1d8] sm:$0xff]
    %v963 = vld [vmem:[%s10 + $0x1e0] sm:$0xff]
    %v964 = vld [vmem:[%s10 + $0x1e8] sm:$0xff]
    %v965 = vld [vmem:[%s10 + $0x1f0] sm:$0xff]
    %v966 = vld [vmem:[%s10 + $0x1f8] sm:$0xff]
    %v967 = vld [vmem:[%s10 + $0x200] sm:$0xff]
    %v968 = vld [vmem:[%s10 + $0x208] sm:$0xff]
    %v969 = vld [vmem:[%s10 + $0x210] sm:$0xff]
    %v970 = vld [vmem:[%s10 + $0x218] sm:$0xff]
    %v971 = vld [vmem:[%s10 + $0x220] sm:$0xff]
    %v972 = vld [vmem:[%s10 + $0x228] sm:$0xff]
    %v973 = vld [vmem:[%s10 + $0x230] sm:$0xff]
    %v974 = vld [vmem:[%s10 + $0x238] sm:$0xff]
    %v975 = vld [vmem:[%s10 + $0x240] sm:$0xff]
    %v976 = vld [vmem:[%s10 + $0x248] sm:$0xff]
    %v977 = vld [vmem:[%s10 + $0x250] sm:$0xff]
    %v978 = vld [vmem:[%s10 + $0x258] sm:$0xff]
    %v979 = vld [vmem:[%s10 + $0x260] sm:$0xff]
    %v980 = vld [vmem:[%s10 + $0x268] sm:$0xff]
    %v981 = vld [vmem:[%s10 + $0x270] sm:$0xff]
    %v982 = vld [vmem:[%s10 + $0x278] sm:$0xff]
    %v983 = vld [vmem:[%s10 + $0x280] sm:$0xff]
    %v984 = vld [vmem:[%s10 + $0x288] sm:$0xff]
    %v985 = vld [vmem:[%s10 + $0x290] sm:$0xff]
    %v986 = vld [vmem:[%s10 + $0x298] sm:$0xff]
    %v987 = vld [vmem:[%s10 + $0x2a0] sm:$0xff]
    %v988 = vld [vmem:[%s10 + $0x2a8] sm:$0xff]
    %v989 = vld [vmem:[%s10 + $0x2b0] sm:$0xff]
    %v990 = vld [vmem:[%s10 + $0x2b8] sm:$0xff]
    %v991 = vld [vmem:[%s10 + $0x2c0] sm:$0xff]
    %v992 = vld [vmem:[%s10 + $0x2c8] sm:$0xff]
    %v993 = vld [vmem:[%s10 + $0x2d0] sm:$0xff]
    %v994 = vld [vmem:[%s10 + $0x2d8] sm:$0xff]
    %v995 = vld [vmem:[%s10 + $0x2e0] sm:$0xff]
    %v996 = vld [vmem:[%s10 + $0x2e8] sm:$0xff]
    %v997 = vld [vmem:[%s10 + $0x2f0] sm:$0xff]
    %v998 = vld [vmem:[%s10 + $0x2f8] sm:$0xff]
    %v999 = vld [vmem:[%s10 + $0x300] sm:$0xff]
    %v1000 = vld [vmem:[%s10 + $0x308] sm:$0xff]
    %v1001 = vld [vmem:[%s10 + $0x310] sm:$0xff]
    %v1002 = vld [vmem:[%s10 + $0x318] sm:$0xff]
    %v1003 = vld [vmem:[%s10 + $0x320] sm:$0xff]
    %v1004 = vld [vmem:[%s10 + $0x328] sm:$0xff]
    %v1005 = vld [vmem:[%s10 + $0x330] sm:$0xff]
    %v1006 = vld [vmem:[%s10 + $0x338] sm:$0xff]
    %v1007 = vld [vmem:[%s10 + $0x340] sm:$0xff]
    %v1008 = vld [vmem:[%s10 + $0x348] sm:$0xff]
    %v1009 = vld [vmem:[%s10 + $0x350] sm:$0xff]
    %v1010 = vld [vmem:[%s10 + $0x358] sm:$0xff]
    %v1011 = vld [vmem:[%s10 + $0x360] sm:$0xff]
    %v1012 = vld [vmem:[%s10 + $0x368] sm:$0xff]
    %v1013 = vld [vmem:[%s10 + $0x370] sm:$0xff]
    %v1014 = vld [vmem:[%s10 + $0x378] sm:$0xff]
    %v1015 = vld [vmem:[%s10 + $0x380] sm:$0xff]
    %v1016 = vld [vmem:[%s10 + $0x388] sm:$0xff]
    %v1017 = vld [vmem:[%s10 + $0x390] sm:$0xff]
    %v1018 = vld [vmem:[%s10 + $0x398] sm:$0xff]
    %v1019 = vld [vmem:[%s10 + $0x3a0] sm:$0xff]
    %v1020 = vld [vmem:[%s10 + $0x3a8] sm:$0xff]
    %v1021 = vld [vmem:[%s10 + $0x3b0] sm:$0xff]
    %v1022 = vld [vmem:[%s10 + $0x3b8] sm:$0xff]
    %v1023 = vld [vmem:[%s10 + $0x3c0] sm:$0xff]
    %v1024 = vld [vmem:[%s10 + $0x3c8] sm:$0xff]
    %v1025 = vld [vmem:[%s10 + $0x3d0] sm:$0xff]
    %v1026 = vld [vmem:[%s10 + $0x3d8] sm:$0xff]
    %v1027 = vld [vmem:[%s10 + $0x3e0] sm:$0xff]
    %v1028 = vld [vmem:[%s10 + $0x3e8] sm:$0xff]
    %v1029 = vld [vmem:[%s10 + $0x3f0] sm:$0xff]
    %v1030 = vld [vmem:[%s10 + $0x3f8] sm:$0xff]
    %v1031 = vld [vmem:[%s10 + $0x400] sm:$0xff]
    %v1032 = vld [vmem:[%s10 + $0x408] sm:$0xff]
    %v1033 = vld [vmem:[%s10 + $0x410] sm:$0xff]
    %v1034 = vld [vmem:[%s10 + $0x418] sm:$0xff]
    %v1035 = vld [vmem:[%s10 + $0x420] sm:$0xff]
    %v1036 = vld [vmem:[%s10 + $0x428] sm:$0xff]
    %v1037 = vld [vmem:[%s10 + $0x430] sm:$0xff]
    %v1038 = vld [vmem:[%s10 + $0x438] sm:$0xff]
    %v1039 = vld [vmem:[%s10 + $0x440] sm:$0xff]
    %v1040 = vld [vmem:[%s10 + $0x448] sm:$0xff]
    %v1041 = vld [vmem:[%s10 + $0x450] sm:$0xff]
    %v1042 = vld [vmem:[%s10 + $0x458] sm:$0xff]
    %v1043 = vld [vmem:[%s10 + $0x460] sm:$0xff]
    %v1044 = vld [vmem:[%s10 + $0x468] sm:$0xff]
    %v1045 = vld [vmem:[%s10 + $0x470] sm:$0xff]
    %v1046 = vld [vmem:[%s10 + $0x478] sm:$0xff]
    %v1047 = vld [vmem:[%s10 + $0x480] sm:$0xff]
    %v1048 = vld [vmem:[%s10 + $0x488] sm:$0xff]
    %v1049 = vld [vmem:[%s10 + $0x490] sm:$0xff]
    %v1050 = vld [vmem:[%s10 + $0x498] sm:$0xff]
    %v1051 = vld [vmem:[%s10 + $0x4a0] sm:$0xff]
    %v1052 = vld [vmem:[%s10 + $0x4a8] sm:$0xff]
    %v1053 = vld [vmem:[%s10 + $0x4b0] sm:$0xff]
    %v1054 = vld [vmem:[%s10 + $0x4b8] sm:$0xff]
    %v1055 = vld [vmem:[%s10 + $0x4c0] sm:$0xff]
    %v1056 = vld [vmem:[%s10 + $0x4c8] sm:$0xff]
    %v1057 = vld [vmem:[%s10 + $0x4d0] sm:$0xff]
    %v1058 = vld [vmem:[%s10 + $0x4d8] sm:$0xff]
    %v1059 = vld [vmem:[%s10 + $0x4e0] sm:$0xff]
    %v1060 = vld [vmem:[%s10 + $0x4e8] sm:$0xff]
    %v1061 = vld [vmem:[%s10 + $0x4f0] sm:$0xff]
    %v1062 = vld [vmem:[%s10 + $0x4f8] sm:$0xff]
    %v1063 = vld [vmem:[%s10 + $0x500] sm:$0xff]
    %v1064 = vld [vmem:[%s10 + $0x508] sm:$0xff]
    %v1065 = vld [vmem:[%s10 + $0x510] sm:$0xff]
    %v1066 = vld [vmem:[%s10 + $0x518] sm:$0xff]
    %v1067 = vld [vmem:[%s10 + $0x520] sm:$0xff]
    %v1068 = vld [vmem:[%s10 + $0x528] sm:$0xff]
    %v1069 = vld [vmem:[%s10 + $0x530] sm:$0xff]
    %v1070 = vld [vmem:[%s10 + $0x538] sm:$0xff]
    %v1071 = vld [vmem:[%s10 + $0x540] sm:$0xff]
    %v1072 = vld [vmem:[%s10 + $0x548] sm:$0xff]
    %v1073 = vld [vmem:[%s10 + $0x550] sm:$0xff]
    %v1074 = vld [vmem:[%s10 + $0x558] sm:$0xff]
    %v1075 = vld [vmem:[%s10 + $0x560] sm:$0xff]
    %v1076 = vld [vmem:[%s10 + $0x568] sm:$0xff]
    %v1077 = vld [vmem:[%s10 + $0x570] sm:$0xff]
    %v1078 = vld [vmem:[%s10 + $0x578] sm:$0xff]
    %v1079 = vld [vmem:[%s10 + $0x580] sm:$0xff]
    %v1080 = vld [vmem:[%s10 + $0x588] sm:$0xff]
    %v1081 = vld [vmem:[%s10 + $0x590] sm:$0xff]
    %v1082 = vld [vmem:[%s10 + $0x598] sm:$0xff]
    %v1083 = vld [vmem:[%s10 + $0x5a0] sm:$0xff]
    %v1084 = vld [vmem:[%s10 + $0x5a8] sm:$0xff]
    %v1085 = vld [vmem:[%s10 + $0x5b0] sm:$0xff]
    %v1086 = vld [vmem:[%s10 + $0x5b8] sm:$0xff]
    %v1087 = vld [vmem:[%s10 + $0x5c0] sm:$0xff]
    %v1088 = vld [vmem:[%s10 + $0x5c8] sm:$0xff]
    %v1089 = vld [vmem:[%s10 + $0x5d0] sm:$0xff]
    %v1090 = vld [vmem:[%s10 + $0x5d8] sm:$0xff]
    %v1091 = vld [vmem:[%s10 + $0x5e0] sm:$0xff]
    %v1092 = vld [vmem:[%s10 + $0x5e8] sm:$0xff]
    %v1093 = vld [vmem:[%s10 + $0x5f0] sm:$0xff]
    %v1094 = vld [vmem:[%s10 + $0x5f8] sm:$0xff]
    %v1095 = vld [vmem:[%s10 + $0x600] sm:$0xff]
    %v1096 = vld [vmem:[%s10 + $0x608] sm:$0xff]
    %v1097 = vld [vmem:[%s10 + $0x610] sm:$0xff]
    %v1098 = vld [vmem:[%s10 + $0x618] sm:$0xff]
    %v1099 = vld [vmem:[%s10 + $0x620] sm:$0xff]
    %v1100 = vld [vmem:[%s10 + $0x628] sm:$0xff]
    %v1101 = vld [vmem:[%s10 + $0x630] sm:$0xff]
    %v1102 = vld [vmem:[%s10 + $0x638] sm:$0xff]
    %v1103 = vld [vmem:[%s10 + $0x640] sm:$0xff]
    %v1104 = vld [vmem:[%s10 + $0x648] sm:$0xff]
    %v1105 = vld [vmem:[%s10 + $0x650] sm:$0xff]
    %v1106 = vld [vmem:[%s10 + $0x658] sm:$0xff]
    %v1107 = vld [vmem:[%s10 + $0x660] sm:$0xff]
    %v1108 = vld [vmem:[%s10 + $0x668] sm:$0xff]
    %v1109 = vld [vmem:[%s10 + $0x670] sm:$0xff]
    %v1110 = vld [vmem:[%s10 + $0x678] sm:$0xff]
    %v1111 = vld [vmem:[%s10 + $0x680] sm:$0xff]
    %v1112 = vld [vmem:[%s10 + $0x688] sm:$0xff]
    %v1113 = vld [vmem:[%s10 + $0x690] sm:$0xff]
    %v1114 = vld [vmem:[%s10 + $0x698] sm:$0xff]
    %v1115 = vld [vmem:[%s10 + $0x6a0] sm:$0xff]
    %v1116 = vld [vmem:[%s10 + $0x6a8] sm:$0xff]
    %v1117 = vld [vmem:[%s10 + $0x6b0] sm:$0xff]
    %v1118 = vld [vmem:[%s10 + $0x6b8] sm:$0xff]
    %v1119 = vld [vmem:[%s10 + $0x6c0] sm:$0xff]
    %v1120 = vld [vmem:[%s10 + $0x6c8] sm:$0xff]
    %v1121 = vld [vmem:[%s10 + $0x6d0] sm:$0xff]
    %v1122 = vld [vmem:[%s10 + $0x6d8] sm:$0xff]
    %v1123 = vld [vmem:[%s10 + $0x6e0] sm:$0xff]
    %v1124 = vld [vmem:[%s10 + $0x6e8] sm:$0xff]
    %v1125 = vld [vmem:[%s10 + $0x6f0] sm:$0xff]
    %v1126 = vld [vmem:[%s10 + $0x6f8] sm:$0xff]
    %v1127 = vld [vmem:[%s10 + $0x700] sm:$0xff]
    %v1128 = vld [vmem:[%s10 + $0x708] sm:$0xff]
    %v1129 = vld [vmem:[%s10 + $0x710] sm:$0xff]
    %v1130 = vld [vmem:[%s10 + $0x718] sm:$0xff]
    %v1131 = vld [vmem:[%s10 + $0x720] sm:$0xff]
    %v1132 = vld [vmem:[%s10 + $0x728] sm:$0xff]
    %v1133 = vld [vmem:[%s10 + $0x730] sm:$0xff]
    %v1134 = vld [vmem:[%s10 + $0x738] sm:$0xff]
    %v1135 = vld [vmem:[%s10 + $0x740] sm:$0xff]
    %v1136 = vld [vmem:[%s10 + $0x748] sm:$0xff]
    %v1137 = vld [vmem:[%s10 + $0x750] sm:$0xff]
    %v1138 = vld [vmem:[%s10 + $0x758] sm:$0xff]
    %v1139 = vld [vmem:[%s10 + $0x760] sm:$0xff]
    %v1140 = vld [vmem:[%s10 + $0x768] sm:$0xff]
    %v1141 = vld [vmem:[%s10 + $0x770] sm:$0xff]
    %v1142 = vld [vmem:[%s10 + $0x778] sm:$0xff]
    %v1143 = vld [vmem:[%s10 + $0x780] sm:$0xff]
    %v1144 = vld [vmem:[%s10 + $0x788] sm:$0xff]
    %v1145 = vld [vmem:[%s10 + $0x790] sm:$0xff]
    %v1146 = vld [vmem:[%s10 + $0x798] sm:$0xff]
    %v1147 = vld [vmem:[%s10 + $0x7a0] sm:$0xff]
    %v1148 = vld [vmem:[%s10 + $0x7a8] sm:$0xff]
    %v1149 = vld [vmem:[%s10 + $0x7b0] sm:$0xff]
    %v1150 = vld [vmem:[%s10 + $0x7b8] sm:$0xff]
    %v1151 = vld [vmem:[%s10 + $0x7c0] sm:$0xff]
    %v1152 = vld [vmem:[%s10 + $0x7c8] sm:$0xff]
    %v1153 = vld [vmem:[%s10 + $0x7d0] sm:$0xff]
    %v1154 = vld [vmem:[%s10 + $0x7d8] sm:$0xff]
    %v1155 = vld [vmem:[%s10 + $0x7e0] sm:$0xff]
    %v1156 = vld [vmem:[%s10 + $0x7e8] sm:$0xff]
    %v1157 = vld [vmem:[%s10 + $0x7f0] sm:$0xff]
    %v1158 = vld [vmem:[%s10 + $0x7f8] sm:$0xff]
    %v1159 = vld [vmem:[%s11] sm:$0xff]
    %v1161 = vperm.slane %v1159, 0
    %v1162 = vperm.slane %v1159, 1
    %v1163 = vperm.slane %v1159, 2
    %v1164 = vperm.slane %v1159, 3
    %v1165 = vperm.slane %v1159, 4
    %v1166 = vperm.slane %v1159, 5
    %v1167 = vperm.slane %v1159, 6
    %v1168 = vperm.slane %v1159, 7
    %1177 = vmatpush.msra.mxu0 %v1023
    %1178 = vmatpush.msra.mxu0 %v1015
    %1179 = vmatpush.msra.mxu0 %v1007
    %1180 = vmatpush.msra.mxu0 %v999
    %1181 = vmatpush.msra.mxu0 %v991
    %1182 = vmatpush.msra.mxu0 %v983
    %1183 = vmatpush.msra.mxu0 %v975
    %1184 = vmatpush.msra.mxu0 %v967
    %1185 = vmatpush.msra.mxu0 %v959
    %1186 = vmatpush.msra.mxu0 %v951
    %1187 = vmatpush.msra.mxu0 %v943
    %1188 = vmatpush.msra.mxu0 %v935
    %1189 = vmatpush.msra.mxu0 %v927
    %1190 = vmatpush.msra.mxu0 %v919
    %1191 = vmatpush.msra.mxu0 %v911
    %1192 = vmatpush.msra.mxu0 %v903
    %1193 = vmatmul.f32.gmra.mxu0 %v901
    %v1194 = vpop.f32.mrf.mxu0
    %v1195 = vadd.f32 %v1161, %v1194
    %1196 = vdwg.mxu0
    %1197 = vmatpush.msra.mxu0 %v1151
    %1198 = vmatpush.msra.mxu0 %v1143
    %1199 = vmatpush.msra.mxu0 %v1135
    %1200 = vmatpush.msra.mxu0 %v1127
    %1201 = vmatpush.msra.mxu0 %v1119
    %1202 = vmatpush.msra.mxu0 %v1111
    %1203 = vmatpush.msra.mxu0 %v1103
    %1204 = vmatpush.msra.mxu0 %v1095
    %1205 = vmatpush.msra.mxu0 %v1087
    %1206 = vmatpush.msra.mxu0 %v1079
    %1207 = vmatpush.msra.mxu0 %v1071
    %1208 = vmatpush.msra.mxu0 %v1063
    %1209 = vmatpush.msra.mxu0 %v1055
    %1210 = vmatpush.msra.mxu0 %v1047
    %1211 = vmatpush.msra.mxu0 %v1039
    %1212 = vmatpush.msra.mxu0 %v1031
    %1213 = vmatmul.f32.gmra.mxu0 %v902
    %v1214 = vpop.f32.mrf.mxu0
    %v1215 = vadd.f32 %v1195, %v1214
    %1216 = vdwg.mxu0
    %1217 = vmatpush.msra.mxu0 %v1024
    %1218 = vmatpush.msra.mxu0 %v1016
    %1219 = vmatpush.msra.mxu0 %v1008
    %1220 = vmatpush.msra.mxu0 %v1000
    %1221 = vmatpush.msra.mxu0 %v992
    %1222 = vmatpush.msra.mxu0 %v984
    %1223 = vmatpush.msra.mxu0 %v976
    %1224 = vmatpush.msra.mxu0 %v968
    %1225 = vmatpush.msra.mxu0 %v960
    %1226 = vmatpush.msra.mxu0 %v952
    %1227 = vmatpush.msra.mxu0 %v944
    %1228 = vmatpush.msra.mxu0 %v936
    %1229 = vmatpush.msra.mxu0 %v928
    %1230 = vmatpush.msra.mxu0 %v920
    %1231 = vmatpush.msra.mxu0 %v912
    %1232 = vmatpush.msra.mxu0 %v904
    %1233 = vmatmul.f32.gmra.mxu0 %v901
    %v1234 = vpop.f32.mrf.mxu0
    %v1235 = vadd.f32 %v1162, %v1234
    %1236 = vdwg.mxu0
    %1237 = vmatpush.msra.mxu0 %v1152
    %1238 = vmatpush.msra.mxu0 %v1144
    %1239 = vmatpush.msra.mxu0 %v1136
    %1240 = vmatpush.msra.mxu0 %v1128
    %1241 = vmatpush.msra.mxu0 %v1120
    %1242 = vmatpush.msra.mxu0 %v1112
    %1243 = vmatpush.msra.mxu0 %v1104
    %1244 = vmatpush.msra.mxu0 %v1096
    %1245 = vmatpush.msra.mxu0 %v1088
    %1246 = vmatpush.msra.mxu0 %v1080
    %1247 = vmatpush.msra.mxu0 %v1072
    %1248 = vmatpush.msra.mxu0 %v1064
    %1249 = vmatpush.msra.mxu0 %v1056
    %1250 = vmatpush.msra.mxu0 %v1048
    %1251 = vmatpush.msra.mxu0 %v1040
    %1252 = vmatpush.msra.mxu0 %v1032
    %1253 = vmatmul.f32.gmra.mxu0 %v902
    %v1254 = vpop.f32.mrf.mxu0
    %v1255 = vadd.f32 %v1235, %v1254
    %1256 = vdwg.mxu0
    %1257 = vmatpush.msra.mxu0 %v1025
    %1258 = vmatpush.msra.mxu0 %v1017
    %1259 = vmatpush.msra.mxu0 %v1009
    %1260 = vmatpush.msra.mxu0 %v1001
    %1261 = vmatpush.msra.mxu0 %v993
    %1262 = vmatpush.msra.mxu0 %v985
    %1263 = vmatpush.msra.mxu0 %v977
    %1264 = vmatpush.msra.mxu0 %v969
    %1265 = vmatpush.msra.mxu0 %v961
    %1266 = vmatpush.msra.mxu0 %v953
    %1267 = vmatpush.msra.mxu0 %v945
    %1268 = vmatpush.msra.mxu0 %v937
    %1269 = vmatpush.msra.mxu0 %v929
    %1270 = vmatpush.msra.mxu0 %v921
    %1271 = vmatpush.msra.mxu0 %v913
    %1272 = vmatpush.msra.mxu0 %v905
    %1273 = vmatmul.f32.gmra.mxu0 %v901
    %v1274 = vpop.f32.mrf.mxu0
    %v1275 = vadd.f32 %v1163, %v1274
    %1276 = vdwg.mxu0
    %1277 = vmatpush.msra.mxu0 %v1153
    %1278 = vmatpush.msra.mxu0 %v1145
    %1279 = vmatpush.msra.mxu0 %v1137
    %1280 = vmatpush.msra.mxu0 %v1129
    %1281 = vmatpush.msra.mxu0 %v1121
    %1282 = vmatpush.msra.mxu0 %v1113
    %1283 = vmatpush.msra.mxu0 %v1105
    %1284 = vmatpush.msra.mxu0 %v1097
    %1285 = vmatpush.msra.mxu0 %v1089
    %1286 = vmatpush.msra.mxu0 %v1081
    %1287 = vmatpush.msra.mxu0 %v1073
    %1288 = vmatpush.msra.mxu0 %v1065
    %1289 = vmatpush.msra.mxu0 %v1057
    %1290 = vmatpush.msra.mxu0 %v1049
    %1291 = vmatpush.msra.mxu0 %v1041
    %1292 = vmatpush.msra.mxu0 %v1033
    %1293 = vmatmul.f32.gmra.mxu0 %v902
    %v1294 = vpop.f32.mrf.mxu0
    %v1295 = vadd.f32 %v1275, %v1294
    %1296 = vdwg.mxu0
    %1297 = vmatpush.msra.mxu0 %v1026
    %1298 = vmatpush.msra.mxu0 %v1018
    %1299 = vmatpush.msra.mxu0 %v1010
    %1300 = vmatpush.msra.mxu0 %v1002
    %1301 = vmatpush.msra.mxu0 %v994
    %1302 = vmatpush.msra.mxu0 %v986
    %1303 = vmatpush.msra.mxu0 %v978
    %1304 = vmatpush.msra.mxu0 %v970
    %1305 = vmatpush.msra.mxu0 %v962
    %1306 = vmatpush.msra.mxu0 %v954
    %1307 = vmatpush.msra.mxu0 %v946
    %1308 = vmatpush.msra.mxu0 %v938
    %1309 = vmatpush.msra.mxu0 %v930
    %1310 = vmatpush.msra.mxu0 %v922
    %1311 = vmatpush.msra.mxu0 %v914
    %1312 = vmatpush.msra.mxu0 %v906
    %1313 = vmatmul.f32.gmra.mxu0 %v901
    %v1314 = vpop.f32.mrf.mxu0
    %v1315 = vadd.f32 %v1164, %v1314
    %1316 = vdwg.mxu0
    %1317 = vmatpush.msra.mxu0 %v1154
    %1318 = vmatpush.msra.mxu0 %v1146
    %1319 = vmatpush.msra.mxu0 %v1138
    %1320 = vmatpush.msra.mxu0 %v1130
    %1321 = vmatpush.msra.mxu0 %v1122
    %1322 = vmatpush.msra.mxu0 %v1114
    %1323 = vmatpush.msra.mxu0 %v1106
    %1324 = vmatpush.msra.mxu0 %v1098
    %1325 = vmatpush.msra.mxu0 %v1090
    %1326 = vmatpush.msra.mxu0 %v1082
    %1327 = vmatpush.msra.mxu0 %v1074
    %1328 = vmatpush.msra.mxu0 %v1066
    %1329 = vmatpush.msra.mxu0 %v1058
    %1330 = vmatpush.msra.mxu0 %v1050
    %1331 = vmatpush.msra.mxu0 %v1042
    %1332 = vmatpush.msra.mxu0 %v1034
    %1333 = vmatmul.f32.gmra.mxu0 %v902
    %v1334 = vpop.f32.mrf.mxu0
    %v1335 = vadd.f32 %v1315, %v1334
    %1336 = vdwg.mxu0
    %1337 = vmatpush.msra.mxu0 %v1027
    %1338 = vmatpush.msra.mxu0 %v1019
    %1339 = vmatpush.msra.mxu0 %v1011
    %1340 = vmatpush.msra.mxu0 %v1003
    %1341 = vmatpush.msra.mxu0 %v995
    %1342 = vmatpush.msra.mxu0 %v987
    %1343 = vmatpush.msra.mxu0 %v979
    %1344 = vmatpush.msra.mxu0 %v971
    %1345 = vmatpush.msra.mxu0 %v963
    %1346 = vmatpush.msra.mxu0 %v955
    %1347 = vmatpush.msra.mxu0 %v947
    %1348 = vmatpush.msra.mxu0 %v939
    %1349 = vmatpush.msra.mxu0 %v931
    %1350 = vmatpush.msra.mxu0 %v923
    %1351 = vmatpush.msra.mxu0 %v915
    %1352 = vmatpush.msra.mxu0 %v907
    %1353 = vmatmul.f32.gmra.mxu0 %v901
    %v1354 = vpop.f32.mrf.mxu0
    %v1355 = vadd.f32 %v1165, %v1354
    %1356 = vdwg.mxu0
    %1357 = vmatpush.msra.mxu0 %v1155
    %1358 = vmatpush.msra.mxu0 %v1147
    %1359 = vmatpush.msra.mxu0 %v1139
    %1360 = vmatpush.msra.mxu0 %v1131
    %1361 = vmatpush.msra.mxu0 %v1123
    %1362 = vmatpush.msra.mxu0 %v1115
    %1363 = vmatpush.msra.mxu0 %v1107
    %1364 = vmatpush.msra.mxu0 %v1099
    %1365 = vmatpush.msra.mxu0 %v1091
    %1366 = vmatpush.msra.mxu0 %v1083
    %1367 = vmatpush.msra.mxu0 %v1075
    %1368 = vmatpush.msra.mxu0 %v1067
    %1369 = vmatpush.msra.mxu0 %v1059
    %1370 = vmatpush.msra.mxu0 %v1051
    %1371 = vmatpush.msra.mxu0 %v1043
    %1372 = vmatpush.msra.mxu0 %v1035
    %1373 = vmatmul.f32.gmra.mxu0 %v902
    %v1374 = vpop.f32.mrf.mxu0
    %v1375 = vadd.f32 %v1355, %v1374
    %1376 = vdwg.mxu0
    %1377 = vmatpush.msra.mxu0 %v1028
    %1378 = vmatpush.msra.mxu0 %v1020
    %1379 = vmatpush.msra.mxu0 %v1012
    %1380 = vmatpush.msra.mxu0 %v1004
    %1381 = vmatpush.msra.mxu0 %v996
    %1382 = vmatpush.msra.mxu0 %v988
    %1383 = vmatpush.msra.mxu0 %v980
    %1384 = vmatpush.msra.mxu0 %v972
    %1385 = vmatpush.msra.mxu0 %v964
    %1386 = vmatpush.msra.mxu0 %v956
    %1387 = vmatpush.msra.mxu0 %v948
    %1388 = vmatpush.msra.mxu0 %v940
    %1389 = vmatpush.msra.mxu0 %v932
    %1390 = vmatpush.msra.mxu0 %v924
    %1391 = vmatpush.msra.mxu0 %v916
    %1392 = vmatpush.msra.mxu0 %v908
    %1393 = vmatmul.f32.gmra.mxu0 %v901
    %v1394 = vpop.f32.mrf.mxu0
    %v1395 = vadd.f32 %v1166, %v1394
    %1396 = vdwg.mxu0
    %1397 = vmatpush.msra.mxu0 %v1156
    %1398 = vmatpush.msra.mxu0 %v1148
    %1399 = vmatpush.msra.mxu0 %v1140
    %1400 = vmatpush.msra.mxu0 %v1132
    %1401 = vmatpush.msra.mxu0 %v1124
    %1402 = vmatpush.msra.mxu0 %v1116
    %1403 = vmatpush.msra.mxu0 %v1108
    %1404 = vmatpush.msra.mxu0 %v1100
    %1405 = vmatpush.msra.mxu0 %v1092
    %1406 = vmatpush.msra.mxu0 %v1084
    %1407 = vmatpush.msra.mxu0 %v1076
    %1408 = vmatpush.msra.mxu0 %v1068
    %1409 = vmatpush.msra.mxu0 %v1060
    %1410 = vmatpush.msra.mxu0 %v1052
    %1411 = vmatpush.msra.mxu0 %v1044
    %1412 = vmatpush.msra.mxu0 %v1036
    %1413 = vmatmul.f32.gmra.mxu0 %v902
    %v1414 = vpop.f32.mrf.mxu0
    %v1415 = vadd.f32 %v1395, %v1414
    %1416 = vdwg.mxu0
    %1417 = vmatpush.msra.mxu0 %v1029
    %1418 = vmatpush.msra.mxu0 %v1021
    %1419 = vmatpush.msra.mxu0 %v1013
    %1420 = vmatpush.msra.mxu0 %v1005
    %1421 = vmatpush.msra.mxu0 %v997
    %1422 = vmatpush.msra.mxu0 %v989
    %1423 = vmatpush.msra.mxu0 %v981
    %1424 = vmatpush.msra.mxu0 %v973
    %1425 = vmatpush.msra.mxu0 %v965
    %1426 = vmatpush.msra.mxu0 %v957
    %1427 = vmatpush.msra.mxu0 %v949
    %1428 = vmatpush.msra.mxu0 %v941
    %1429 = vmatpush.msra.mxu0 %v933
    %1430 = vmatpush.msra.mxu0 %v925
    %1431 = vmatpush.msra.mxu0 %v917
    %1432 = vmatpush.msra.mxu0 %v909
    %1433 = vmatmul.f32.gmra.mxu0 %v901
    %v1434 = vpop.f32.mrf.mxu0
    %v1435 = vadd.f32 %v1167, %v1434
    %1436 = vdwg.mxu0
    %1437 = vmatpush.msra.mxu0 %v1157
    %1438 = vmatpush.msra.mxu0 %v1149
    %1439 = vmatpush.msra.mxu0 %v1141
    %1440 = vmatpush.msra.mxu0 %v1133
    %1441 = vmatpush.msra.mxu0 %v1125
    %1442 = vmatpush.msra.mxu0 %v1117
    %1443 = vmatpush.msra.mxu0 %v1109
    %1444 = vmatpush.msra.mxu0 %v1101
    %1445 = vmatpush.msra.mxu0 %v1093
    %1446 = vmatpush.msra.mxu0 %v1085
    %1447 = vmatpush.msra.mxu0 %v1077
    %1448 = vmatpush.msra.mxu0 %v1069
    %1449 = vmatpush.msra.mxu0 %v1061
    %1450 = vmatpush.msra.mxu0 %v1053
    %1451 = vmatpush.msra.mxu0 %v1045
    %1452 = vmatpush.msra.mxu0 %v1037
    %1453 = vmatmul.f32.gmra.mxu0 %v902
    %v1454 = vpop.f32.mrf.mxu0
    %v1455 = vadd.f32 %v1435, %v1454
    %1456 = vdwg.mxu0
    %1457 = vmatpush.msra.mxu0 %v1030
    %1458 = vmatpush.msra.mxu0 %v1022
    %1459 = vmatpush.msra.mxu0 %v1014
    %1460 = vmatpush.msra.mxu0 %v1006
    %1461 = vmatpush.msra.mxu0 %v998
    %1462 = vmatpush.msra.mxu0 %v990
    %1463 = vmatpush.msra.mxu0 %v982
    %1464 = vmatpush.msra.mxu0 %v974
    %1465 = vmatpush.msra.mxu0 %v966
    %1466 = vmatpush.msra.mxu0 %v958
    %1467 = vmatpush.msra.mxu0 %v950
    %1468 = vmatpush.msra.mxu0 %v942
    %1469 = vmatpush.msra.mxu0 %v934
    %1470 = vmatpush.msra.mxu0 %v926
    %1471 = vmatpush.msra.mxu0 %v918
    %1472 = vmatpush.msra.mxu0 %v910
    %1473 = vmatmul.f32.gmra.mxu0 %v901
    %v1474 = vpop.f32.mrf.mxu0
    %v1475 = vadd.f32 %v1168, %v1474
    %1476 = vdwg.mxu0
    %1477 = vmatpush.msra.mxu0 %v1158
    %1478 = vmatpush.msra.mxu0 %v1150
    %1479 = vmatpush.msra.mxu0 %v1142
    %1480 = vmatpush.msra.mxu0 %v1134
    %1481 = vmatpush.msra.mxu0 %v1126
    %1482 = vmatpush.msra.mxu0 %v1118
    %1483 = vmatpush.msra.mxu0 %v1110
    %1484 = vmatpush.msra.mxu0 %v1102
    %1485 = vmatpush.msra.mxu0 %v1094
    %1486 = vmatpush.msra.mxu0 %v1086
    %1487 = vmatpush.msra.mxu0 %v1078
    %1488 = vmatpush.msra.mxu0 %v1070
    %1489 = vmatpush.msra.mxu0 %v1062
    %1490 = vmatpush.msra.mxu0 %v1054
    %1491 = vmatpush.msra.mxu0 %v1046
    %1492 = vmatpush.msra.mxu0 %v1038
    %1493 = vmatmul.f32.gmra.mxu0 %v902
    %v1494 = vpop.f32.mrf.mxu0
    %v1495 = vadd.f32 %v1475, %v1494
    %1496 = vdwg.mxu0
    %v1497 = vmax.f32 %v1215, 0.0
    %v1498 = vmax.f32 %v1255, 0.0
    %v1499 = vmax.f32 %v1295, 0.0
    %v1500 = vmax.f32 %v1335, 0.0
    %v1501 = vmax.f32 %v1375, 0.0
    %v1502 = vmax.f32 %v1415, 0.0
    %v1503 = vmax.f32 %v1455, 0.0
    %v1504 = vmax.f32 %v1495, 0.0
    %v1513 = vrot.slane %v1498, 6
    %v1514 = vrot.slane %v1499, 4
    %v1515 = vrot.slane %v1500, 2
    %v1516 = vrot.slane %v1502, 6
    %v1517 = vrot.slane %v1503, 4
    %v1518 = vrot.slane %v1504, 2
    %vm1519 = vcmask 1041408
    %v1520 = vsel %vm1519, %v1497, %v1513
    %vm1521 = vcmask 1045508
    %v1522 = vsel %vm1521, %v1514, %v1515
    %vm1523 = vcmask 1043456
    %v1524 = vsel %vm1523, %v1520, %v1522
    %v1525 = vsel %vm1519, %v1501, %v1516
    %v1526 = vsel %vm1521, %v1517, %v1518
    %v1527 = vsel %vm1523, %v1525, %v1526
    %1530 = vst [vmem:[%s24] sm:$0xff] %v1524
    %1531 = vst [vmem:[%s24 + $0x8] sm:$0xff] %v1527
    %v1532 = vld [vmem:[%s12] sm:$0xff]
    %v1533 = vld [vmem:[%s12 + $0x8] sm:$0xff]
    %v1534 = vld [vmem:[%s13] sm:$0x1]
    %v1536 = vperm.slane %v1534, 0
    %1538 = vmatpush.msra.mxu0 0.0
    %1539 = vmatpush.msra.mxu0 0.0
    %1540 = vmatpush.msra.mxu0 0.0
    %1541 = vmatpush.msra.mxu0 0.0
    %1542 = vmatpush.msra.mxu0 0.0
    %1543 = vmatpush.msra.mxu0 0.0
    %1544 = vmatpush.msra.mxu0 0.0
    %1545 = vmatpush.msra.mxu0 0.0
    %1546 = vmatpush.msra.mxu0 0.0
    %1547 = vmatpush.msra.mxu0 0.0
    %1548 = vmatpush.msra.mxu0 0.0
    %1549 = vmatpush.msra.mxu0 0.0
    %1550 = vmatpush.msra.mxu0 0.0
    %1551 = vmatpush.msra.mxu0 0.0
    %1552 = vmatpush.msra.mxu0 %v1533
    %1553 = vmatpush.msra.mxu0 %v1532
    %1554 = vmatmul.f32.gmra.mxu0 %v859
    %v1555 = vpop.f32.mrf.mxu0
    %v1556 = vadd.f32 %v1536, %v1555
    %1557 = vdwg.mxu0
    %vm1558 = vcmask 254976
    %v1559 = vsel %vm1558, %v1556, 0.0
    %v1560 = vrot.slane %v1559, 4
    %v1561 = vadd.f32 %v1559, %v1560
    %v1562 = vrot.slane %v1561, 2
    %v1563 = vadd.f32 %v1561, %v1562
    %v1564 = vrot.slane %v1563, 1
    %v1565 = vadd.f32 %v1563, %v1564
    %v1566 = vrcp.pop 2.0
    %v1567 = vmul.f32 2.0, %v1566
    %v1568 = vsub.f32 1.0, %v1567
    %v1569 = vmul.f32 %v1566, %v1568
    %v1570 = vadd.f32 %v1566, %v1569
    %vm1571 = vweird.f32 %v1566
    %v1572 = vsel %vm1571, %v1566, %v1570
    %v1573 = vmul.f32 %v1565, %v1572
    %v1574 = vsub.f32 %v1556, %v1573
    %v1575 = vmul.f32 %v1574, %v1574
    %v1576 = vsel %vm1558, %v1575, 0.0
    %v1577 = vrot.slane %v1576, 4
    %v1578 = vadd.f32 %v1576, %v1577
    %v1579 = vrot.slane %v1578, 2
    %v1580 = vadd.f32 %v1578, %v1579
    %v1581 = vrot.slane %v1580, 1
    %v1582 = vadd.f32 %v1580, %v1581
    %v1583 = vmul.f32 %v1582, %v1572
    %v1584 = vadd.f32 %v1583, 1e-05
    %v1585 = vrsqrt.pop %v1584
    %v1586 = vmul.f32 %v1585, %v1584
    %v1587 = vmul.f32 %v1586, %v1585
    %v1588 = vmul.f32 0.5, %v1587
    %v1589 = vsub.f32 1.5, %v1588
    %v1590 = vmul.f32 %v1585, %v1589
    %vm1591 = vweird.f32 %v1584
    %vm1592 = vweird.f32 %v1585
    %vm1593 = vmor %vm1591, %vm1592
    %v1594 = vsel %vm1593, %v1585, %v1590
    %v1595 = vmul.f32 %v1574, %v1594
    %v1596 = vld [vmem:[%s14] sm:$0x1]
    %v1598 = vperm.slane %v1596, 0
    %v1600 = vmul.f32 %v1595, %v1598
    %v1601 = vld [vmem:[%s15] sm:$0x1]
    %v1603 = vperm.slane %v1601, 0
    %v1605 = vadd.f32 %v1600, %v1603
    %vm1606 = vcmp.ge.f32.partialorder %v1605, 0.0
    %v1607 = vmul.f32 %v1605, 0.2
    %v1608 = vsel %vm1606, %v1605, %v1607
    %v1609 = vld [vmem:[%s16] sm:$0xff]
    %v1610 = vld [vmem:[%s16 + $0x8] sm:$0xff]
    %v1611 = vld [vmem:[%s16 + $0x10] sm:$0xff]
    %v1612 = vld [vmem:[%s16 + $0x18] sm:$0xff]
    %v1613 = vld [vmem:[%s17] sm:$0x1]
    %v1615 = vperm.slane %v1613, 0
    %vm1617 = vcmask 261120
    %v1619 = vsel %vm1617, %v1608, 0
    %1621 = vmatpush.msra.mxu0 0.0
    %1622 = vmatpush.msra.mxu0 0.0
    %1623 = vmatpush.msra.mxu0 0.0
    %1624 = vmatpush.msra.mxu0 0.0
    %1625 = vmatpush.msra.mxu0 0.0
    %1626 = vmatpush.msra.mxu0 0.0
    %1627 = vmatpush.msra.mxu0 0.0
    %1628 = vmatpush.msra.mxu0 0.0
    %1629 = vmatpush.msra.mxu0 0.0
    %1630 = vmatpush.msra.mxu0 0.0
    %1631 = vmatpush.msra.mxu0 0.0
    %1632 = vmatpush.msra.mxu0 0.0
    %1633 = vmatpush.msra.mxu0 %v1612
    %1634 = vmatpush.msra.mxu0 %v1611
    %1635 = vmatpush.msra.mxu0 %v1610
    %1636 = vmatpush.msra.mxu0 %v1609
    %1637 = vmatmul.f32.gmra.mxu0 %v1619
    %v1638 = vpop.f32.mrf.mxu0
    %v1639 = vadd.f32 %v1615, %v1638
    %1640 = vdwg.mxu0
    %v1641 = vsel %vm1558, %v1639, 0.0
    %v1642 = vrot.slane %v1641, 4
    %v1643 = vadd.f32 %v1641, %v1642
    %v1644 = vrot.slane %v1643, 2
    %v1645 = vadd.f32 %v1643, %v1644
    %v1646 = vrot.slane %v1645, 1
    %v1647 = vadd.f32 %v1645, %v1646
    %v1648 = vmul.f32 %v1647, %v1572
    %v1649 = vsub.f32 %v1639, %v1648
    %v1650 = vmul.f32 %v1649, %v1649
    %v1651 = vsel %vm1558, %v1650, 0.0
    %v1652 = vrot.slane %v1651, 4
    %v1653 = vadd.f32 %v1651, %v1652
    %v1654 = vrot.slane %v1653, 2
    %v1655 = vadd.f32 %v1653, %v1654
    %v1656 = vrot.slane %v1655, 1
    %v1657 = vadd.f32 %v1655, %v1656
    %v1658 = vmul.f32 %v1657, %v1572
    %v1659 = vadd.f32 %v1658, 1e-05
    %v1660 = vrsqrt.pop %v1659
    %v1661 = vmul.f32 %v1660, %v1659
    %v1662 = vmul.f32 %v1661, %v1660
    %v1663 = vmul.f32 0.5, %v1662
    %v1664 = vsub.f32 1.5, %v1663
    %v1665 = vmul.f32 %v1660, %v1664
    %vm1666 = vweird.f32 %v1659
    %vm1667 = vweird.f32 %v1660
    %vm1668 = vmor %vm1666, %vm1667
    %v1669 = vsel %vm1668, %v1660, %v1665
    %v1670 = vmul.f32 %v1649, %v1669
    %v1671 = vld [vmem:[%s18] sm:$0x1]
    %v1673 = vperm.slane %v1671, 0
    %v1675 = vmul.f32 %v1670, %v1673
    %v1676 = vld [vmem:[%s19] sm:$0x1]
    %v1678 = vperm.slane %v1676, 0
    %v1680 = vadd.f32 %v1675, %v1678
    %vm1681 = vcmp.ge.f32.partialorder %v1680, 0.0
    %v1682 = vmul.f32 %v1680, 0.2
    %v1683 = vsel %vm1681, %v1680, %v1682
    %v1684 = vld [vmem:[%s20] sm:$0xff]
    %v1685 = vld [vmem:[%s20 + $0x8] sm:$0xff]
    %v1686 = vld [vmem:[%s20 + $0x10] sm:$0xff]
    %v1687 = vld [vmem:[%s20 + $0x18] sm:$0xff]
    %v1688 = vld [vmem:[#allocation2] sm:$0x1]
    %v1690 = vperm.slane %v1688, 0
    %v1693 = vsel %vm1617, %v1683, 0
    %1695 = vmatpush.msra.mxu0 0.0
    %1696 = vmatpush.msra.mxu0 0.0
    %1697 = vmatpush.msra.mxu0 0.0
    %1698 = vmatpush.msra.mxu0 0.0
    %1699 = vmatpush.msra.mxu0 0.0
    %1700 = vmatpush.msra.mxu0 0.0
    %1701 = vmatpush.msra.mxu0 0.0
    %1702 = vmatpush.msra.mxu0 0.0
    %1703 = vmatpush.msra.mxu0 0.0
    %1704 = vmatpush.msra.mxu0 0.0
    %1705 = vmatpush.msra.mxu0 0.0
    %1706 = vmatpush.msra.mxu0 0.0
    %1707 = vmatpush.msra.mxu0 %v1687
    %1708 = vmatpush.msra.mxu0 %v1686
    %1709 = vmatpush.msra.mxu0 %v1685
    %1710 = vmatpush.msra.mxu0 %v1684
    %1711 = vmatmul.f32.gmra.mxu0 %v1693
    %v1712 = vpop.f32.mrf.mxu0
    %v1713 = vadd.f32 %v1690, %v1712
    %1714 = vdwg.mxu0
    %v1715 = vxor.u32 %v1713, 2147483648
    %v1716 = vmul.f32 %v1715, 1.442695
    %v1717 = vpow.pop %v1716
    %v1718 = vadd.f32 %v1717, 1.0
    %v1719 = vrcp.pop %v1718
    %v1720 = vmul.f32 %v1718, %v1719
    %v1721 = vsub.f32 1.0, %v1720
    %v1722 = vmul.f32 %v1719, %v1721
    %v1723 = vadd.f32 %v1719, %v1722
    %vm1724 = vweird.f32 %v1718
    %vm1725 = vweird.f32 %v1719
    %vm1726 = vmor %vm1724, %vm1725
    %v1727 = vsel %vm1726, %v1719, %v1723
    %v1728 = vand.u32 2147483647, %v1718
    %vm1729 = vcmp.eq.f32.partialorder %v1728, 8.507059e+37
    %v1730 = vand.u32 %v1718, 2147483648
    %v1731 = vor.u32 1.1754944e-38, %v1730
    %v1732 = vsel %vm1729, %v1731, %v1727
    %v1733 = vmul.f32 1.0, %v1732
    %vm1734 = vcmask 1024
    %1735 = vst.msk [vmem:[%s25] sm:$0x3] %vm1734, %v1733
    // Predicated region
    $region90: #{forward.13} parent=1 // pred_check
      _
    $region91: #{forward.13} parent=1 // pred_check_branch
      %1737 = sbr.rel (0) target = $region93
    $region92: #{forward.13} parent=1 // pred_region
      %1739 = vsyncadd [#allocation4], 0
      %s1741 = sshll.u32 [#allocation3], 4
      %s1742 = int_to_ptr.vmem [resolvable:$true] %s1741
      %s1743 = sshll.u32 %s22, 4
      %s1744 = int_to_ptr.hbm [resolvable:$true] %s1743
      %1746 = dma.vmem_to_hbm [thread:$0]  %s1742, 32, %s1744, [#allocation4]
    $region93: #{forward.13} parent=1 // pred_fallthru
      _
    // Predicated region
    $region94: #{forward.13} parent=1 // pred_check
      _
    $region95: #{forward.13} parent=1 // pred_check_branch
      %1748 = sbr.rel (0) target = $region97
    $region96: #{forward.13} parent=1 // pred_region
      %1750 = vsyncadd [#allocation6], 0
      %s1752 = sshll.u32 [#allocation5], 4
      %s1753 = int_to_ptr.vmem [resolvable:$true] %s1752
      %s1754 = sshll.u32 %s23, 4
      %s1755 = int_to_ptr.hbm [resolvable:$true] %s1754
      %1757 = dma.vmem_to_hbm [thread:$0]  %s1753, 32, %s1755, [#allocation6]
    $region97: #{forward.13} parent=1 // pred_fallthru
      _
    // Predicated region
    $region98: #{forward.13} parent=1 // pred_check
      _
    $region99: #{forward.13} parent=1 // pred_check_branch
      %1759 = sbr.rel (0) target = $region101
    $region100: #{forward.13} parent=1 // pred_region
      _
    $region101: #{forward.13} parent=1 // pred_fallthru
      _
    // Predicated region
    $region102: #{forward.13} parent=1 // pred_check
      _
    $region103: #{forward.13} parent=1 // pred_check_branch
      %1761 = sbr.rel (0) target = $region105
    $region104: #{forward.13} parent=1 // pred_region
      _
    $region105: #{forward.13} parent=1 // pred_fallthru
      _
    // Predicated region
    $region106: #{forward.13} parent=1 // pred_check
      _
    $region107: #{forward.13} parent=1 // pred_check_branch
      %1763 = sbr.rel (0) target = $region109
    $region108: #{forward.13} parent=1 // pred_region
      %1765 = dma.done [#allocation4], 32
    $region109: #{forward.13} parent=1 // pred_fallthru
      _
    // Predicated region
    $region110: #{forward.13} parent=1 // pred_check
      _
    $region111: #{forward.13} parent=1 // pred_check_branch
      %1767 = sbr.rel (0) target = $region113
    $region112: #{forward.13} parent=1 // pred_region
      %1769 = dma.done [#allocation6], 32
    $region113: #{forward.13} parent=1 // pred_fallthru
      _
    // Predicated region
    $region114: #{forward.13} parent=1 // pred_check
      _
    $region115: #{forward.13} parent=1 // pred_check_branch
      %1771 = sbr.rel (0) target = $region117
    $region116: #{forward.13} parent=1 // pred_region
      _
    $region117: #{forward.13} parent=1 // pred_fallthru
      _
    // Predicated region
    $region118: #{forward.13} parent=1 // pred_check
      _
    $region119: #{forward.13} parent=1 // pred_check_branch
      %1773 = sbr.rel (0) target = $region121
    $region120: #{forward.13} parent=1 // pred_region
      _
    $region121: #{forward.13} parent=1 // pred_fallthru
      _
    %1774 = vsyncpa [#allocation4], 1
    %1775 = vsyncpa [#allocation6], 1

// kernel: forward.14
$region0: #{forward.14}
  #allocation0 [shape = 'u32[]', space=smem, size = 0x4, offset = 0x4, fixed_abs, tag = 'smem constant byte address 0x4 - core index']
  #allocation1 [shape = 'u32[72,128]{1,0:T(1,128)}', space=vmem, size = 0x9000, scoped, tag = 'internal scratch']
  %s0 = inlined_call_operand.vmem [shape: bf16[32,576], index: 0, kind: input, shape index: {}]
  %s1 = inlined_call_operand.vmem [shape: bf16[576,256], index: 1, kind: input, shape index: {}]
  %s2 = inlined_call_operand.vmem [shape: f32[1,256], index: 2, kind: input, shape index: {}]
  %s3 = inlined_call_operand.vmem [shape: bf16[32,256], index: 3, kind: output, shape index: {}]
  %s4 = sld [smem:[#allocation0]]
  $region22: #{forward.14} parent=0
    _
  %s6 = ssub.s32 1, %s4
  %s7 = scalar_select 0, %s6, %s4
  // Predicated region
  $region2: #{forward.14} parent=0 // pred_check
    _
  $region3: #{forward.14} parent=0 // pred_check_branch
    %9 = sbr.rel (0) target = $region5
  $region4: #{forward.14} parent=0 // pred_region
    _
  $region5: #{forward.14} parent=0 // pred_fallthru
    _
  // Predicated region
  $region6: #{forward.14} parent=0 // pred_check
    _
  $region7: #{forward.14} parent=0 // pred_check_branch
    %11 = sbr.rel (0) target = $region9
  $region8: #{forward.14} parent=0 // pred_region
    _
  $region9: #{forward.14} parent=0 // pred_fallthru
    _
  // Predicated region
  $region10: #{forward.14} parent=0 // pred_check
    _
  $region11: #{forward.14} parent=0 // pred_check_branch
    %13 = sbr.rel (0) target = $region13
  $region12: #{forward.14} parent=0 // pred_region
    _
  $region13: #{forward.14} parent=0 // pred_fallthru
    _
  %v15 = vld [vmem:[%s0] sm:$0xff]
  %v16 = vld [vmem:[%s0 + $0x8] sm:$0xff]
  %v17 = vld [vmem:[%s0 + $0x10] sm:$0xf]
  %v18 = vld [vmem:[%s0 + $0x14] sm:$0xff]
  %v19 = vld [vmem:[%s0 + $0x1c] sm:$0xff]
  %v20 = vld [vmem:[%s0 + $0x24] sm:$0xf]
  %v21 = vld [vmem:[%s0 + $0x28] sm:$0xff]
  %v22 = vld [vmem:[%s0 + $0x30] sm:$0xff]
  %v23 = vld [vmem:[%s0 + $0x38] sm:$0xf]
  %v24 = vld [vmem:[%s0 + $0x3c] sm:$0xff]
  %v25 = vld [vmem:[%s0 + $0x44] sm:$0xff]
  %v26 = vld [vmem:[%s0 + $0x4c] sm:$0xf]
  %v27 = vld [vmem:[%s1] sm:$0xff]
  %v28 = vld [vmem:[%s1 + $0x8] sm:$0xff]
  %v29 = vld [vmem:[%s1 + $0x10] sm:$0xff]
  %v30 = vld [vmem:[%s1 + $0x18] sm:$0xff]
  %v31 = vld [vmem:[%s1 + $0x20] sm:$0xff]
  %v32 = vld [vmem:[%s1 + $0x28] sm:$0xff]
  %v33 = vld [vmem:[%s1 + $0x30] sm:$0xff]
  %v34 = vld [vmem:[%s1 + $0x38] sm:$0xff]
  %v35 = vld [vmem:[%s1 + $0x40] sm:$0xff]
  %v36 = vld [vmem:[%s1 + $0x48] sm:$0xff]
  %v37 = vld [vmem:[%s1 + $0x50] sm:$0xff]
  %v38 = vld [vmem:[%s1 + $0x58] sm:$0xff]
  %v39 = vld [vmem:[%s1 + $0x60] sm:$0xff]
  %v40 = vld [vmem:[%s1 + $0x68] sm:$0xff]
  %v41 = vld [vmem:[%s1 + $0x70] sm:$0xff]
  %v42 = vld [vmem:[%s1 + $0x78] sm:$0xff]
  %v43 = vld [vmem:[%s1 + $0x80] sm:$0xff]
  %v44 = vld [vmem:[%s1 + $0x88] sm:$0xff]
  %v45 = vld [vmem:[%s1 + $0x90] sm:$0xff]
  %v46 = vld [vmem:[%s1 + $0x98] sm:$0xff]
  %v47 = vld [vmem:[%s1 + $0xa0] sm:$0xff]
  %v48 = vld [vmem:[%s1 + $0xa8] sm:$0xff]
  %v49 = vld [vmem:[%s1 + $0xb0] sm:$0xff]
  %v50 = vld [vmem:[%s1 + $0xb8] sm:$0xff]
  %v51 = vld [vmem:[%s1 + $0xc0] sm:$0xff]
  %v52 = vld [vmem:[%s1 + $0xc8] sm:$0xff]
  %v53 = vld [vmem:[%s1 + $0xd0] sm:$0xff]
  %v54 = vld [vmem:[%s1 + $0xd8] sm:$0xff]
  %v55 = vld [vmem:[%s1 + $0xe0] sm:$0xff]
  %v56 = vld [vmem:[%s1 + $0xe8] sm:$0xff]
  %v57 = vld [vmem:[%s1 + $0xf0] sm:$0xff]
  %v58 = vld [vmem:[%s1 + $0xf8] sm:$0xff]
  %v59 = vld [vmem:[%s1 + $0x100] sm:$0xff]
  %v60 = vld [vmem:[%s1 + $0x108] sm:$0xff]
  %v61 = vld [vmem:[%s1 + $0x110] sm:$0xff]
  %v62 = vld [vmem:[%s1 + $0x118] sm:$0xff]
  %v63 = vld [vmem:[%s1 + $0x120] sm:$0xff]
  %v64 = vld [vmem:[%s1 + $0x128] sm:$0xff]
  %v65 = vld [vmem:[%s1 + $0x130] sm:$0xff]
  %v66 = vld [vmem:[%s1 + $0x138] sm:$0xff]
  %v67 = vld [vmem:[%s1 + $0x140] sm:$0xff]
  %v68 = vld [vmem:[%s1 + $0x148] sm:$0xff]
  %v69 = vld [vmem:[%s1 + $0x150] sm:$0xff]
  %v70 = vld [vmem:[%s1 + $0x158] sm:$0xff]
  %v71 = vld [vmem:[%s1 + $0x160] sm:$0xff]
  %v72 = vld [vmem:[%s1 + $0x168] sm:$0xff]
  %v73 = vld [vmem:[%s1 + $0x170] sm:$0xff]
  %v74 = vld [vmem:[%s1 + $0x178] sm:$0xff]
  %v75 = vld [vmem:[%s1 + $0x180] sm:$0xff]
  %v76 = vld [vmem:[%s1 + $0x188] sm:$0xff]
  %v77 = vld [vmem:[%s1 + $0x190] sm:$0xff]
  %v78 = vld [vmem:[%s1 + $0x198] sm:$0xff]
  %v79 = vld [vmem:[%s1 + $0x1a0] sm:$0xff]
  %v80 = vld [vmem:[%s1 + $0x1a8] sm:$0xff]
  %v81 = vld [vmem:[%s1 + $0x1b0] sm:$0xff]
  %v82 = vld [vmem:[%s1 + $0x1b8] sm:$0xff]
  %v83 = vld [vmem:[%s1 + $0x1c0] sm:$0xff]
  %v84 = vld [vmem:[%s1 + $0x1c8] sm:$0xff]
  %v85 = vld [vmem:[%s1 + $0x1d0] sm:$0xff]
  %v86 = vld [vmem:[%s1 + $0x1d8] sm:$0xff]
  %v87 = vld [vmem:[%s1 + $0x1e0] sm:$0xff]
  %v88 = vld [vmem:[%s1 + $0x1e8] sm:$0xff]
  %v89 = vld [vmem:[%s1 + $0x1f0] sm:$0xff]
  %v90 = vld [vmem:[%s1 + $0x1f8] sm:$0xff]
  %v91 = vld [vmem:[%s1 + $0x200] sm:$0xff]
  %v92 = vld [vmem:[%s1 + $0x208] sm:$0xff]
  %v93 = vld [vmem:[%s1 + $0x210] sm:$0xff]
  %v94 = vld [vmem:[%s1 + $0x218] sm:$0xff]
  %v95 = vld [vmem:[%s1 + $0x220] sm:$0xff]
  %v96 = vld [vmem:[%s1 + $0x228] sm:$0xff]
  %v97 = vld [vmem:[%s1 + $0x230] sm:$0xff]
  %v98 = vld [vmem:[%s1 + $0x238] sm:$0xff]
  %v99 = vld [vmem:[%s2] sm:$0x3]
  %v101 = vperm.slane %v99, 0
  %v102 = vperm.slane %v99, 1
  %v117 = vunpack.c.l.b16 %v15
  %v118 = vunpack.c.h.b16 %v15
  %v119 = vunpack.c.l.b16 %v16
  %v120 = vunpack.c.h.b16 %v16
  %v121 = vunpack.c.l.b16 %v17
  %v122 = vunpack.c.l.b16 %v18
  %v123 = vunpack.c.h.b16 %v18
  %v124 = vunpack.c.l.b16 %v19
  %v125 = vunpack.c.h.b16 %v19
  %v126 = vunpack.c.l.b16 %v20
  %v127 = vunpack.c.l.b16 %v21
  %v128 = vunpack.c.h.b16 %v21
  %v129 = vunpack.c.l.b16 %v22
  %v130 = vunpack.c.h.b16 %v22
  %v131 = vunpack.c.l.b16 %v23
  %v132 = vunpack.c.l.b16 %v24
  %v133 = vunpack.c.h.b16 %v24
  %v134 = vunpack.c.l.b16 %v25
  %v135 = vunpack.c.h.b16 %v25
  %v136 = vunpack.c.l.b16 %v26
  %v137 = vpack.c.b16 %v122, %v117
  %v138 = vpack.c.b16 %v123, %v118
  %v139 = vpack.c.b16 %v124, %v119
  %v140 = vpack.c.b16 %v125, %v120
  %v141 = vpack.c.b16 %v126, %v121
  %v142 = vpack.c.b16 %v132, %v127
  %v143 = vpack.c.b16 %v133, %v128
  %v144 = vpack.c.b16 %v134, %v129
  %v145 = vpack.c.b16 %v135, %v130
  %v146 = vpack.c.b16 %v136, %v131
  %v227 = vunpack.c.l.b16 %v27
  %v228 = vunpack.c.h.b16 %v27
  %v229 = vunpack.c.l.b16 %v28
  %v230 = vunpack.c.h.b16 %v28
  %v231 = vunpack.c.l.b16 %v29
  %v232 = vunpack.c.h.b16 %v29
  %v233 = vunpack.c.l.b16 %v30
  %v234 = vunpack.c.h.b16 %v30
  %v235 = vunpack.c.l.b16 %v31
  %v236 = vunpack.c.h.b16 %v31
  %v237 = vunpack.c.l.b16 %v32
  %v238 = vunpack.c.h.b16 %v32
  %v239 = vunpack.c.l.b16 %v33
  %v240 = vunpack.c.h.b16 %v33
  %v241 = vunpack.c.l.b16 %v34
  %v242 = vunpack.c.h.b16 %v34
  %v243 = vunpack.c.l.b16 %v35
  %v244 = vunpack.c.h.b16 %v35
  %v245 = vunpack.c.l.b16 %v36
  %v246 = vunpack.c.h.b16 %v36
  %v247 = vunpack.c.l.b16 %v37
  %v248 = vunpack.c.h.b16 %v37
  %v249 = vunpack.c.l.b16 %v38
  %v250 = vunpack.c.h.b16 %v38
  %v251 = vunpack.c.l.b16 %v39
  %v252 = vunpack.c.h.b16 %v39
  %v253 = vunpack.c.l.b16 %v40
  %v254 = vunpack.c.h.b16 %v40
  %v255 = vunpack.c.l.b16 %v41
  %v256 = vunpack.c.h.b16 %v41
  %v257 = vunpack.c.l.b16 %v42
  %v258 = vunpack.c.h.b16 %v42
  %v259 = vunpack.c.l.b16 %v43
  %v260 = vunpack.c.h.b16 %v43
  %v261 = vunpack.c.l.b16 %v44
  %v262 = vunpack.c.h.b16 %v44
  %v263 = vunpack.c.l.b16 %v45
  %v264 = vunpack.c.h.b16 %v45
  %v265 = vunpack.c.l.b16 %v46
  %v266 = vunpack.c.h.b16 %v46
  %v267 = vunpack.c.l.b16 %v47
  %v268 = vunpack.c.h.b16 %v47
  %v269 = vunpack.c.l.b16 %v48
  %v270 = vunpack.c.h.b16 %v48
  %v271 = vunpack.c.l.b16 %v49
  %v272 = vunpack.c.h.b16 %v49
  %v273 = vunpack.c.l.b16 %v50
  %v274 = vunpack.c.h.b16 %v50
  %v275 = vunpack.c.l.b16 %v51
  %v276 = vunpack.c.h.b16 %v51
  %v277 = vunpack.c.l.b16 %v52
  %v278 = vunpack.c.h.b16 %v52
  %v279 = vunpack.c.l.b16 %v53
  %v280 = vunpack.c.h.b16 %v53
  %v281 = vunpack.c.l.b16 %v54
  %v282 = vunpack.c.h.b16 %v54
  %v283 = vunpack.c.l.b16 %v55
  %v284 = vunpack.c.h.b16 %v55
  %v285 = vunpack.c.l.b16 %v56
  %v286 = vunpack.c.h.b16 %v56
  %v287 = vunpack.c.l.b16 %v57
  %v288 = vunpack.c.h.b16 %v57
  %v289 = vunpack.c.l.b16 %v58
  %v290 = vunpack.c.h.b16 %v58
  %v291 = vunpack.c.l.b16 %v59
  %v292 = vunpack.c.h.b16 %v59
  %v293 = vunpack.c.l.b16 %v60
  %v294 = vunpack.c.h.b16 %v60
  %v295 = vunpack.c.l.b16 %v61
  %v296 = vunpack.c.h.b16 %v61
  %v297 = vunpack.c.l.b16 %v62
  %v298 = vunpack.c.h.b16 %v62
  %v299 = vunpack.c.l.b16 %v63
  %v300 = vunpack.c.h.b16 %v63
  %v301 = vunpack.c.l.b16 %v64
  %v302 = vunpack.c.h.b16 %v64
  %v303 = vunpack.c.l.b16 %v65
  %v304 = vunpack.c.h.b16 %v65
  %v305 = vunpack.c.l.b16 %v66
  %v306 = vunpack.c.h.b16 %v66
  %v307 = vunpack.c.l.b16 %v67
  %v308 = vunpack.c.h.b16 %v67
  %v309 = vunpack.c.l.b16 %v68
  %v310 = vunpack.c.h.b16 %v68
  %v311 = vunpack.c.l.b16 %v69
  %v312 = vunpack.c.h.b16 %v69
  %v313 = vunpack.c.l.b16 %v70
  %v314 = vunpack.c.h.b16 %v70
  %v315 = vunpack.c.l.b16 %v71
  %v316 = vunpack.c.h.b16 %v71
  %v317 = vunpack.c.l.b16 %v72
  %v318 = vunpack.c.h.b16 %v72
  %v319 = vunpack.c.l.b16 %v73
  %v320 = vunpack.c.h.b16 %v73
  %v321 = vunpack.c.l.b16 %v74
  %v322 = vunpack.c.h.b16 %v74
  %v323 = vunpack.c.l.b16 %v75
  %v324 = vunpack.c.h.b16 %v75
  %v325 = vunpack.c.l.b16 %v76
  %v326 = vunpack.c.h.b16 %v76
  %v327 = vunpack.c.l.b16 %v77
  %v328 = vunpack.c.h.b16 %v77
  %v329 = vunpack.c.l.b16 %v78
  %v330 = vunpack.c.h.b16 %v78
  %v331 = vunpack.c.l.b16 %v79
  %v332 = vunpack.c.h.b16 %v79
  %v333 = vunpack.c.l.b16 %v80
  %v334 = vunpack.c.h.b16 %v80
  %v335 = vunpack.c.l.b16 %v81
  %v336 = vunpack.c.h.b16 %v81
  %v337 = vunpack.c.l.b16 %v82
  %v338 = vunpack.c.h.b16 %v82
  %v339 = vunpack.c.l.b16 %v83
  %v340 = vunpack.c.h.b16 %v83
  %v341 = vunpack.c.l.b16 %v84
  %v342 = vunpack.c.h.b16 %v84
  %v343 = vunpack.c.l.b16 %v85
  %v344 = vunpack.c.h.b16 %v85
  %v345 = vunpack.c.l.b16 %v86
  %v346 = vunpack.c.h.b16 %v86
  %v347 = vunpack.c.l.b16 %v87
  %v348 = vunpack.c.h.b16 %v87
  %v349 = vunpack.c.l.b16 %v88
  %v350 = vunpack.c.h.b16 %v88
  %v351 = vunpack.c.l.b16 %v89
  %v352 = vunpack.c.h.b16 %v89
  %v353 = vunpack.c.l.b16 %v90
  %v354 = vunpack.c.h.b16 %v90
  %v355 = vunpack.c.l.b16 %v91
  %v356 = vunpack.c.h.b16 %v91
  %v357 = vunpack.c.l.b16 %v92
  %v358 = vunpack.c.h.b16 %v92
  %v359 = vunpack.c.l.b16 %v93
  %v360 = vunpack.c.h.b16 %v93
  %v361 = vunpack.c.l.b16 %v94
  %v362 = vunpack.c.h.b16 %v94
  %v363 = vunpack.c.l.b16 %v95
  %v364 = vunpack.c.h.b16 %v95
  %v365 = vunpack.c.l.b16 %v96
  %v366 = vunpack.c.h.b16 %v96
  %v367 = vunpack.c.l.b16 %v97
  %v368 = vunpack.c.h.b16 %v97
  %v369 = vunpack.c.l.b16 %v98
  %v370 = vunpack.c.h.b16 %v98
  %v371 = vpack.c.b16 %v229, %v227
  %v372 = vpack.c.b16 %v230, %v228
  %v373 = vpack.c.b16 %v233, %v231
  %v374 = vpack.c.b16 %v234, %v232
  %v375 = vpack.c.b16 %v237, %v235
  %v376 = vpack.c.b16 %v238, %v236
  %v377 = vpack.c.b16 %v241, %v239
  %v378 = vpack.c.b16 %v242, %v240
  %v379 = vpack.c.b16 %v245, %v243
  %v380 = vpack.c.b16 %v246, %v244
  %v381 = vpack.c.b16 %v249, %v247
  %v382 = vpack.c.b16 %v250, %v248
  %v383 = vpack.c.b16 %v253, %v251
  %v384 = vpack.c.b16 %v254, %v252
  %v385 = vpack.c.b16 %v257, %v255
  %v386 = vpack.c.b16 %v258, %v256
  %v387 = vpack.c.b16 %v261, %v259
  %v388 = vpack.c.b16 %v262, %v260
  %v389 = vpack.c.b16 %v265, %v263
  %v390 = vpack.c.b16 %v266, %v264
  %v391 = vpack.c.b16 %v269, %v267
  %v392 = vpack.c.b16 %v270, %v268
  %v393 = vpack.c.b16 %v273, %v271
  %v394 = vpack.c.b16 %v274, %v272
  %v395 = vpack.c.b16 %v277, %v275
  %v396 = vpack.c.b16 %v278, %v276
  %v397 = vpack.c.b16 %v281, %v279
  %v398 = vpack.c.b16 %v282, %v280
  %v399 = vpack.c.b16 %v285, %v283
  %v400 = vpack.c.b16 %v286, %v284
  %v401 = vpack.c.b16 %v289, %v287
  %v402 = vpack.c.b16 %v290, %v288
  %v403 = vpack.c.b16 %v293, %v291
  %v404 = vpack.c.b16 %v294, %v292
  %v405 = vpack.c.b16 %v297, %v295
  %v406 = vpack.c.b16 %v298, %v296
  %v407 = vpack.c.b16 %v301, %v299
  %v408 = vpack.c.b16 %v302, %v300
  %v409 = vpack.c.b16 %v305, %v303
  %v410 = vpack.c.b16 %v306, %v304
  %v411 = vpack.c.b16 %v309, %v307
  %v412 = vpack.c.b16 %v310, %v308
  %v413 = vpack.c.b16 %v313, %v311
  %v414 = vpack.c.b16 %v314, %v312
  %v415 = vpack.c.b16 %v317, %v315
  %v416 = vpack.c.b16 %v318, %v316
  %v417 = vpack.c.b16 %v321, %v319
  %v418 = vpack.c.b16 %v322, %v320
  %v419 = vpack.c.b16 %v325, %v323
  %v420 = vpack.c.b16 %v326, %v324
  %v421 = vpack.c.b16 %v329, %v327
  %v422 = vpack.c.b16 %v330, %v328
  %v423 = vpack.c.b16 %v333, %v331
  %v424 = vpack.c.b16 %v334, %v332
  %v425 = vpack.c.b16 %v337, %v335
  %v426 = vpack.c.b16 %v338, %v336
  %v427 = vpack.c.b16 %v341, %v339
  %v428 = vpack.c.b16 %v342, %v340
  %v429 = vpack.c.b16 %v345, %v343
  %v430 = vpack.c.b16 %v346, %v344
  %v431 = vpack.c.b16 %v349, %v347
  %v432 = vpack.c.b16 %v350, %v348
  %v433 = vpack.c.b16 %v353, %v351
  %v434 = vpack.c.b16 %v354, %v352
  %v435 = vpack.c.b16 %v357, %v355
  %v436 = vpack.c.b16 %v358, %v356
  %v437 = vpack.c.b16 %v361, %v359
  %v438 = vpack.c.b16 %v362, %v360
  %v439 = vpack.c.b16 %v365, %v363
  %v440 = vpack.c.b16 %v366, %v364
  %v441 = vpack.c.b16 %v369, %v367
  %v442 = vpack.c.b16 %v370, %v368
  %vm515 = vcmask 523264
  %v517 = vsel %vm515, %v141, 0
  %v520 = vsel %vm515, %v146, 0
  %522 = vmatpush.bf16.msra.mxu0 %v385
  %523 = vmatpush.bf16.msra.mxu0 %v383
  %524 = vmatpush.bf16.msra.mxu0 %v381
  %525 = vmatpush.bf16.msra.mxu0 %v379
  %526 = vmatpush.bf16.msra.mxu0 %v377
  %527 = vmatpush.bf16.msra.mxu0 %v375
  %528 = vmatpush.bf16.msra.mxu0 %v373
  %529 = vmatpush.bf16.msra.mxu0 %v371
  %530 = vmatmul.bf16.gmra.mxu0 %v137
  %v531 = vpop.f32.mrf.mxu0
  %v532 = vadd.f32 %v101, %v531
  %v533 = vpop.f32.mrf.mxu0
  %v534 = vadd.f32 %v101, %v533
  %535 = vmatmul.bf16.gmra.mxu0 %v142
  %v536 = vpop.f32.mrf.mxu0
  %v537 = vadd.f32 %v101, %v536
  %v538 = vpop.f32.mrf.mxu0
  %v539 = vadd.f32 %v101, %v538
  %540 = vdwg.mxu0
  %541 = vmatpush.bf16.msra.mxu0 %v401
  %542 = vmatpush.bf16.msra.mxu0 %v399
  %543 = vmatpush.bf16.msra.mxu0 %v397
  %544 = vmatpush.bf16.msra.mxu0 %v395
  %545 = vmatpush.bf16.msra.mxu0 %v393
  %546 = vmatpush.bf16.msra.mxu0 %v391
  %547 = vmatpush.bf16.msra.mxu0 %v389
  %548 = vmatpush.bf16.msra.mxu0 %v387
  %549 = vmatmul.bf16.gmra.mxu0 %v138
  %v550 = vpop.f32.mrf.mxu0
  %v551 = vadd.f32 %v532, %v550
  %v552 = vpop.f32.mrf.mxu0
  %v553 = vadd.f32 %v534, %v552
  %554 = vmatmul.bf16.gmra.mxu0 %v143
  %v555 = vpop.f32.mrf.mxu0
  %v556 = vadd.f32 %v537, %v555
  %v557 = vpop.f32.mrf.mxu0
  %v558 = vadd.f32 %v539, %v557
  %559 = vdwg.mxu0
  %560 = vmatpush.bf16.msra.mxu0 %v417
  %561 = vmatpush.bf16.msra.mxu0 %v415
  %562 = vmatpush.bf16.msra.mxu0 %v413
  %563 = vmatpush.bf16.msra.mxu0 %v411
  %564 = vmatpush.bf16.msra.mxu0 %v409
  %565 = vmatpush.bf16.msra.mxu0 %v407
  %566 = vmatpush.bf16.msra.mxu0 %v405
  %567 = vmatpush.bf16.msra.mxu0 %v403
  %568 = vmatmul.bf16.gmra.mxu0 %v139
  %v569 = vpop.f32.mrf.mxu0
  %v570 = vadd.f32 %v551, %v569
  %v571 = vpop.f32.mrf.mxu0
  %v572 = vadd.f32 %v553, %v571
  %573 = vmatmul.bf16.gmra.mxu0 %v144
  %v574 = vpop.f32.mrf.mxu0
  %v575 = vadd.f32 %v556, %v574
  %v576 = vpop.f32.mrf.mxu0
  %v577 = vadd.f32 %v558, %v576
  %578 = vdwg.mxu0
  %579 = vmatpush.bf16.msra.mxu0 %v433
  %580 = vmatpush.bf16.msra.mxu0 %v431
  %581 = vmatpush.bf16.msra.mxu0 %v429
  %582 = vmatpush.bf16.msra.mxu0 %v427
  %583 = vmatpush.bf16.msra.mxu0 %v425
  %584 = vmatpush.bf16.msra.mxu0 %v423
  %585 = vmatpush.bf16.msra.mxu0 %v421
  %586 = vmatpush.bf16.msra.mxu0 %v419
  %587 = vmatmul.bf16.gmra.mxu0 %v140
  %v588 = vpop.f32.mrf.mxu0
  %v589 = vadd.f32 %v570, %v588
  %v590 = vpop.f32.mrf.mxu0
  %v591 = vadd.f32 %v572, %v590
  %592 = vmatmul.bf16.gmra.mxu0 %v145
  %v593 = vpop.f32.mrf.mxu0
  %v594 = vadd.f32 %v575, %v593
  %v595 = vpop.f32.mrf.mxu0
  %v596 = vadd.f32 %v577, %v595
  %597 = vdwg.mxu0
  %598 = vmatpush.bf16.msra.mxu0 0
  %599 = vmatpush.bf16.msra.mxu0 0
  %600 = vmatpush.bf16.msra.mxu0 0
  %601 = vmatpush.bf16.msra.mxu0 0
  %602 = vmatpush.bf16.msra.mxu0 %v441
  %603 = vmatpush.bf16.msra.mxu0 %v439
  %604 = vmatpush.bf16.msra.mxu0 %v437
  %605 = vmatpush.bf16.msra.mxu0 %v435
  %606 = vmatmul.bf16.gmra.mxu0 %v517
  %v607 = vpop.f32.mrf.mxu0
  %v608 = vadd.f32 %v589, %v607
  %v609 = vpop.f32.mrf.mxu0
  %v610 = vadd.f32 %v591, %v609
  %611 = vmatmul.bf16.gmra.mxu0 %v520
  %v612 = vpop.f32.mrf.mxu0
  %v613 = vadd.f32 %v594, %v612
  %v614 = vpop.f32.mrf.mxu0
  %v615 = vadd.f32 %v596, %v614
  %616 = vdwg.mxu0
  %617 = vmatpush.bf16.msra.mxu0 %v386
  %618 = vmatpush.bf16.msra.mxu0 %v384
  %619 = vmatpush.bf16.msra.mxu0 %v382
  %620 = vmatpush.bf16.msra.mxu0 %v380
  %621 = vmatpush.bf16.msra.mxu0 %v378
  %622 = vmatpush.bf16.msra.mxu0 %v376
  %623 = vmatpush.bf16.msra.mxu0 %v374
  %624 = vmatpush.bf16.msra.mxu0 %v372
  %625 = vmatmul.bf16.gmra.mxu0 %v137
  %v626 = vpop.f32.mrf.mxu0
  %v627 = vadd.f32 %v102, %v626
  %v628 = vpop.f32.mrf.mxu0
  %v629 = vadd.f32 %v102, %v628
  %630 = vmatmul.bf16.gmra.mxu0 %v142
  %v631 = vpop.f32.mrf.mxu0
  %v632 = vadd.f32 %v102, %v631
  %v633 = vpop.f32.mrf.mxu0
  %v634 = vadd.f32 %v102, %v633
  %635 = vdwg.mxu0
  %636 = vmatpush.bf16.msra.mxu0 %v402
  %637 = vmatpush.bf16.msra.mxu0 %v400
  %638 = vmatpush.bf16.msra.mxu0 %v398
  %639 = vmatpush.bf16.msra.mxu0 %v396
  %640 = vmatpush.bf16.msra.mxu0 %v394
  %641 = vmatpush.bf16.msra.mxu0 %v392
  %642 = vmatpush.bf16.msra.mxu0 %v390
  %643 = vmatpush.bf16.msra.mxu0 %v388
  %644 = vmatmul.bf16.gmra.mxu0 %v138
  %v645 = vpop.f32.mrf.mxu0
  %v646 = vadd.f32 %v627, %v645
  %v647 = vpop.f32.mrf.mxu0
  %v648 = vadd.f32 %v629, %v647
  %649 = vmatmul.bf16.gmra.mxu0 %v143
  %v650 = vpop.f32.mrf.mxu0
  %v651 = vadd.f32 %v632, %v650
  %v652 = vpop.f32.mrf.mxu0
  %v653 = vadd.f32 %v634, %v652
  %654 = vdwg.mxu0
  %655 = vmatpush.bf16.msra.mxu0 %v418
  %656 = vmatpush.bf16.msra.mxu0 %v416
  %657 = vmatpush.bf16.msra.mxu0 %v414
  %658 = vmatpush.bf16.msra.mxu0 %v412
  %659 = vmatpush.bf16.msra.mxu0 %v410
  %660 = vmatpush.bf16.msra.mxu0 %v408
  %661 = vmatpush.bf16.msra.mxu0 %v406
  %662 = vmatpush.bf16.msra.mxu0 %v404
  %663 = vmatmul.bf16.gmra.mxu0 %v139
  %v664 = vpop.f32.mrf.mxu0
  %v665 = vadd.f32 %v646, %v664
  %v666 = vpop.f32.mrf.mxu0
  %v667 = vadd.f32 %v648, %v666
  %668 = vmatmul.bf16.gmra.mxu0 %v144
  %v669 = vpop.f32.mrf.mxu0
  %v670 = vadd.f32 %v651, %v669
  %v671 = vpop.f32.mrf.mxu0
  %v672 = vadd.f32 %v653, %v671
  %673 = vdwg.mxu0
  %674 = vmatpush.bf16.msra.mxu0 %v434
  %675 = vmatpush.bf16.msra.mxu0 %v432
  %676 = vmatpush.bf16.msra.mxu0 %v430
  %677 = vmatpush.bf16.msra.mxu0 %v428
  %678 = vmatpush.bf16.msra.mxu0 %v426
  %679 = vmatpush.bf16.msra.mxu0 %v424
  %680 = vmatpush.bf16.msra.mxu0 %v422
  %681 = vmatpush.bf16.msra.mxu0 %v420
  %682 = vmatmul.bf16.gmra.mxu0 %v140
  %v683 = vpop.f32.mrf.mxu0
  %v684 = vadd.f32 %v665, %v683
  %v685 = vpop.f32.mrf.mxu0
  %v686 = vadd.f32 %v667, %v685
  %687 = vmatmul.bf16.gmra.mxu0 %v145
  %v688 = vpop.f32.mrf.mxu0
  %v689 = vadd.f32 %v670, %v688
  %v690 = vpop.f32.mrf.mxu0
  %v691 = vadd.f32 %v672, %v690
  %692 = vdwg.mxu0
  %693 = vmatpush.bf16.msra.mxu0 0
  %694 = vmatpush.bf16.msra.mxu0 0
  %695 = vmatpush.bf16.msra.mxu0 0
  %696 = vmatpush.bf16.msra.mxu0 0
  %697 = vmatpush.bf16.msra.mxu0 %v442
  %698 = vmatpush.bf16.msra.mxu0 %v440
  %699 = vmatpush.bf16.msra.mxu0 %v438
  %700 = vmatpush.bf16.msra.mxu0 %v436
  %701 = vmatmul.bf16.gmra.mxu0 %v517
  %v702 = vpop.f32.mrf.mxu0
  %v703 = vadd.f32 %v684, %v702
  %v704 = vpop.f32.mrf.mxu0
  %v705 = vadd.f32 %v686, %v704
  %706 = vmatmul.bf16.gmra.mxu0 %v520
  %v707 = vpop.f32.mrf.mxu0
  %v708 = vadd.f32 %v689, %v707
  %v709 = vpop.f32.mrf.mxu0
  %v710 = vadd.f32 %v691, %v709
  %711 = vdwg.mxu0
  %v712 = vmax.f32 %v608, 0.0
  %v713 = vmax.f32 %v703, 0.0
  %v714 = vmax.f32 %v610, 0.0
  %v715 = vmax.f32 %v705, 0.0
  %v716 = vmax.f32 %v613, 0.0
  %v717 = vmax.f32 %v708, 0.0
  %v718 = vmax.f32 %v615, 0.0
  %v719 = vmax.f32 %v710, 0.0
  %v720 = vpack.c.bf16 %v713, %v712
  %v721 = vpack.c.bf16 %v715, %v714
  %v722 = vpack.c.bf16 %v717, %v716
  %v723 = vpack.c.bf16 %v719, %v718
  %724 = vst [vmem:[%s3] sm:$0xff] %v720
  %725 = vst [vmem:[%s3 + $0x8] sm:$0xff] %v721
  %726 = vst [vmem:[%s3 + $0x10] sm:$0xff] %v722
  %727 = vst [vmem:[%s3 + $0x18] sm:$0xff] %v723
  // Predicated region
  $region14: #{forward.14} parent=0 // pred_check
    _
  $region15: #{forward.14} parent=0 // pred_check_branch
    %729 = sbr.rel (0) target = $region17
  $region16: #{forward.14} parent=0 // pred_region
    _
  $region17: #{forward.14} parent=0 // pred_fallthru
    _
  // Predicated region
  $region18: #{forward.14} parent=0 // pred_check
    _
  $region19: #{forward.14} parent=0 // pred_check_branch
    %731 = sbr.rel (0) target = $region21
  $region20: #{forward.14} parent=0 // pred_region
    _
  $region21: #{forward.14} parent=0 // pred_fallthru
    _

// kernel: forward.15
$region0: #{forward.15}
  #allocation0 [shape = 'u32[]', space=smem, size = 0x4, offset = 0x4, fixed_abs, tag = 'smem constant byte address 0x4 - core index']
  #allocation1 [shape = 'u32[72,128]{1,0:T(1,128)}', space=vmem, size = 0x9000, scoped, tag = 'internal scratch']
  %s0 = inlined_call_operand.vmem [shape: bf16[128,576], index: 0, kind: input, shape index: {}]
  %s1 = inlined_call_operand.vmem [shape: bf16[576,128], index: 1, kind: input, shape index: {}]
  %s2 = inlined_call_operand.vmem [shape: f32[1,128], index: 2, kind: input, shape index: {}]
  %s3 = inlined_call_operand.vmem [shape: bf16[128,128], index: 3, kind: output, shape index: {}]
  %s4 = sld [smem:[#allocation0]]
  $region22: #{forward.15} parent=0
    _
  %s6 = ssub.s32 1, %s4
  %s7 = scalar_select 0, %s6, %s4
  // Predicated region
  $region2: #{forward.15} parent=0 // pred_check
    _
  $region3: #{forward.15} parent=0 // pred_check_branch
    %9 = sbr.rel (0) target = $region5
  $region4: #{forward.15} parent=0 // pred_region
    _
  $region5: #{forward.15} parent=0 // pred_fallthru
    _
  // Predicated region
  $region6: #{forward.15} parent=0 // pred_check
    _
  $region7: #{forward.15} parent=0 // pred_check_branch
    %11 = sbr.rel (0) target = $region9
  $region8: #{forward.15} parent=0 // pred_region
    _
  $region9: #{forward.15} parent=0 // pred_fallthru
    _
  // Predicated region
  $region10: #{forward.15} parent=0 // pred_check
    _
  $region11: #{forward.15} parent=0 // pred_check_branch
    %13 = sbr.rel (0) target = $region13
  $region12: #{forward.15} parent=0 // pred_region
    _
  $region13: #{forward.15} parent=0 // pred_fallthru
    _
  %v15 = vld [vmem:[%s0] sm:$0xff]
  %v16 = vld [vmem:[%s0 + $0x8] sm:$0xff]
  %v17 = vld [vmem:[%s0 + $0x10] sm:$0xf]
  %v18 = vld [vmem:[%s0 + $0x14] sm:$0xff]
  %v19 = vld [vmem:[%s0 + $0x1c] sm:$0xff]
  %v20 = vld [vmem:[%s0 + $0x24] sm:$0xf]
  %v21 = vld [vmem:[%s0 + $0x28] sm:$0xff]
  %v22 = vld [vmem:[%s0 + $0x30] sm:$0xff]
  %v23 = vld [vmem:[%s0 + $0x38] sm:$0xf]
  %v24 = vld [vmem:[%s0 + $0x3c] sm:$0xff]
  %v25 = vld [vmem:[%s0 + $0x44] sm:$0xff]
  %v26 = vld [vmem:[%s0 + $0x4c] sm:$0xf]
  %v27 = vld [vmem:[%s0 + $0x50] sm:$0xff]
  %v28 = vld [vmem:[%s0 + $0x58] sm:$0xff]
  %v29 = vld [vmem:[%s0 + $0x60] sm:$0xf]
  %v30 = vld [vmem:[%s0 + $0x64] sm:$0xff]
  %v31 = vld [vmem:[%s0 + $0x6c] sm:$0xff]
  %v32 = vld [vmem:[%s0 + $0x74] sm:$0xf]
  %v33 = vld [vmem:[%s0 + $0x78] sm:$0xff]
  %v34 = vld [vmem:[%s0 + $0x80] sm:$0xff]
  %v35 = vld [vmem:[%s0 + $0x88] sm:$0xf]
  %v36 = vld [vmem:[%s0 + $0x8c] sm:$0xff]
  %v37 = vld [vmem:[%s0 + $0x94] sm:$0xff]
  %v38 = vld [vmem:[%s0 + $0x9c] sm:$0xf]
  %v39 = vld [vmem:[%s0 + $0xa0] sm:$0xff]
  %v40 = vld [vmem:[%s0 + $0xa8] sm:$0xff]
  %v41 = vld [vmem:[%s0 + $0xb0] sm:$0xf]
  %v42 = vld [vmem:[%s0 + $0xb4] sm:$0xff]
  %v43 = vld [vmem:[%s0 + $0xbc] sm:$0xff]
  %v44 = vld [vmem:[%s0 + $0xc4] sm:$0xf]
  %v45 = vld [vmem:[%s0 + $0xc8] sm:$0xff]
  %v46 = vld [vmem:[%s0 + $0xd0] sm:$0xff]
  %v47 = vld [vmem:[%s0 + $0xd8] sm:$0xf]
  %v48 = vld [vmem:[%s0 + $0xdc] sm:$0xff]
  %v49 = vld [vmem:[%s0 + $0xe4] sm:$0xff]
  %v50 = vld [vmem:[%s0 + $0xec] sm:$0xf]
  %v51 = vld [vmem:[%s0 + $0xf0] sm:$0xff]
  %v52 = vld [vmem:[%s0 + $0xf8] sm:$0xff]
  %v53 = vld [vmem:[%s0 + $0x100] sm:$0xf]
  %v54 = vld [vmem:[%s0 + $0x104] sm:$0xff]
  %v55 = vld [vmem:[%s0 + $0x10c] sm:$0xff]
  %v56 = vld [vmem:[%s0 + $0x114] sm:$0xf]
  %v57 = vld [vmem:[%s0 + $0x118] sm:$0xff]
  %v58 = vld [vmem:[%s0 + $0x120] sm:$0xff]
  %v59 = vld [vmem:[%s0 + $0x128] sm:$0xf]
  %v60 = vld [vmem:[%s0 + $0x12c] sm:$0xff]
  %v61 = vld [vmem:[%s0 + $0x134] sm:$0xff]
  %v62 = vld [vmem:[%s0 + $0x13c] sm:$0xf]
  %v63 = vld [vmem:[%s1] sm:$0xf]
  %v64 = vld [vmem:[%s1 + $0x4] sm:$0xf]
  %v65 = vld [vmem:[%s1 + $0x8] sm:$0xf]
  %v66 = vld [vmem:[%s1 + $0xc] sm:$0xf]
  %v67 = vld [vmem:[%s1 + $0x10] sm:$0xf]
  %v68 = vld [vmem:[%s1 + $0x14] sm:$0xf]
  %v69 = vld [vmem:[%s1 + $0x18] sm:$0xf]
  %v70 = vld [vmem:[%s1 + $0x1c] sm:$0xf]
  %v71 = vld [vmem:[%s1 + $0x20] sm:$0xf]
  %v72 = vld [vmem:[%s1 + $0x24] sm:$0xf]
  %v73 = vld [vmem:[%s1 + $0x28] sm:$0xf]
  %v74 = vld [vmem:[%s1 + $0x2c] sm:$0xf]
  %v75 = vld [vmem:[%s1 + $0x30] sm:$0xf]
  %v76 = vld [vmem:[%s1 + $0x34] sm:$0xf]
  %v77 = vld [vmem:[%s1 + $0x38] sm:$0xf]
  %v78 = vld [vmem:[%s1 + $0x3c] sm:$0xf]
  %v79 = vld [vmem:[%s1 + $0x40] sm:$0xf]
  %v80 = vld [vmem:[%s1 + $0x44] sm:$0xf]
  %v81 = vld [vmem:[%s1 + $0x48] sm:$0xf]
  %v82 = vld [vmem:[%s1 + $0x4c] sm:$0xf]
  %v83 = vld [vmem:[%s1 + $0x50] sm:$0xf]
  %v84 = vld [vmem:[%s1 + $0x54] sm:$0xf]
  %v85 = vld [vmem:[%s1 + $0x58] sm:$0xf]
  %v86 = vld [vmem:[%s1 + $0x5c] sm:$0xf]
  %v87 = vld [vmem:[%s1 + $0x60] sm:$0xf]
  %v88 = vld [vmem:[%s1 + $0x64] sm:$0xf]
  %v89 = vld [vmem:[%s1 + $0x68] sm:$0xf]
  %v90 = vld [vmem:[%s1 + $0x6c] sm:$0xf]
  %v91 = vld [vmem:[%s1 + $0x70] sm:$0xf]
  %v92 = vld [vmem:[%s1 + $0x74] sm:$0xf]
  %v93 = vld [vmem:[%s1 + $0x78] sm:$0xf]
  %v94 = vld [vmem:[%s1 + $0x7c] sm:$0xf]
  %v95 = vld [vmem:[%s1 + $0x80] sm:$0xf]
  %v96 = vld [vmem:[%s1 + $0x84] sm:$0xf]
  %v97 = vld [vmem:[%s1 + $0x88] sm:$0xf]
  %v98 = vld [vmem:[%s1 + $0x8c] sm:$0xf]
  %v99 = vld [vmem:[%s1 + $0x90] sm:$0xf]
  %v100 = vld [vmem:[%s1 + $0x94] sm:$0xf]
  %v101 = vld [vmem:[%s1 + $0x98] sm:$0xf]
  %v102 = vld [vmem:[%s1 + $0x9c] sm:$0xf]
  %v103 = vld [vmem:[%s1 + $0xa0] sm:$0xf]
  %v104 = vld [vmem:[%s1 + $0xa4] sm:$0xf]
  %v105 = vld [vmem:[%s1 + $0xa8] sm:$0xf]
  %v106 = vld [vmem:[%s1 + $0xac] sm:$0xf]
  %v107 = vld [vmem:[%s1 + $0xb0] sm:$0xf]
  %v108 = vld [vmem:[%s1 + $0xb4] sm:$0xf]
  %v109 = vld [vmem:[%s1 + $0xb8] sm:$0xf]
  %v110 = vld [vmem:[%s1 + $0xbc] sm:$0xf]
  %v111 = vld [vmem:[%s1 + $0xc0] sm:$0xf]
  %v112 = vld [vmem:[%s1 + $0xc4] sm:$0xf]
  %v113 = vld [vmem:[%s1 + $0xc8] sm:$0xf]
  %v114 = vld [vmem:[%s1 + $0xcc] sm:$0xf]
  %v115 = vld [vmem:[%s1 + $0xd0] sm:$0xf]
  %v116 = vld [vmem:[%s1 + $0xd4] sm:$0xf]
  %v117 = vld [vmem:[%s1 + $0xd8] sm:$0xf]
  %v118 = vld [vmem:[%s1 + $0xdc] sm:$0xf]
  %v119 = vld [vmem:[%s1 + $0xe0] sm:$0xf]
  %v120 = vld [vmem:[%s1 + $0xe4] sm:$0xf]
  %v121 = vld [vmem:[%s1 + $0xe8] sm:$0xf]
  %v122 = vld [vmem:[%s1 + $0xec] sm:$0xf]
  %v123 = vld [vmem:[%s1 + $0xf0] sm:$0xf]
  %v124 = vld [vmem:[%s1 + $0xf4] sm:$0xf]
  %v125 = vld [vmem:[%s1 + $0xf8] sm:$0xf]
  %v126 = vld [vmem:[%s1 + $0xfc] sm:$0xf]
  %v127 = vld [vmem:[%s1 + $0x100] sm:$0xf]
  %v128 = vld [vmem:[%s1 + $0x104] sm:$0xf]
  %v129 = vld [vmem:[%s1 + $0x108] sm:$0xf]
  %v130 = vld [vmem:[%s1 + $0x10c] sm:$0xf]
  %v131 = vld [vmem:[%s1 + $0x110] sm:$0xf]
  %v132 = vld [vmem:[%s1 + $0x114] sm:$0xf]
  %v133 = vld [vmem:[%s1 + $0x118] sm:$0xf]
  %v134 = vld [vmem:[%s1 + $0x11c] sm:$0xf]
  %v135 = vld [vmem:[%s2] sm:$0x1]
  %v137 = vperm.slane %v135, 0
  %v187 = vunpack.c.l.b16 %v15
  %v188 = vunpack.c.h.b16 %v15
  %v189 = vunpack.c.l.b16 %v16
  %v190 = vunpack.c.h.b16 %v16
  %v191 = vunpack.c.l.b16 %v17
  %v192 = vunpack.c.l.b16 %v18
  %v193 = vunpack.c.h.b16 %v18
  %v194 = vunpack.c.l.b16 %v19
  %v195 = vunpack.c.h.b16 %v19
  %v196 = vunpack.c.l.b16 %v20
  %v197 = vunpack.c.l.b16 %v21
  %v198 = vunpack.c.h.b16 %v21
  %v199 = vunpack.c.l.b16 %v22
  %v200 = vunpack.c.h.b16 %v22
  %v201 = vunpack.c.l.b16 %v23
  %v202 = vunpack.c.l.b16 %v24
  %v203 = vunpack.c.h.b16 %v24
  %v204 = vunpack.c.l.b16 %v25
  %v205 = vunpack.c.h.b16 %v25
  %v206 = vunpack.c.l.b16 %v26
  %v207 = vunpack.c.l.b16 %v27
  %v208 = vunpack.c.h.b16 %v27
  %v209 = vunpack.c.l.b16 %v28
  %v210 = vunpack.c.h.b16 %v28
  %v211 = vunpack.c.l.b16 %v29
  %v212 = vunpack.c.l.b16 %v30
  %v213 = vunpack.c.h.b16 %v30
  %v214 = vunpack.c.l.b16 %v31
  %v215 = vunpack.c.h.b16 %v31
  %v216 = vunpack.c.l.b16 %v32
  %v217 = vunpack.c.l.b16 %v33
  %v218 = vunpack.c.h.b16 %v33
  %v219 = vunpack.c.l.b16 %v34
  %v220 = vunpack.c.h.b16 %v34
  %v221 = vunpack.c.l.b16 %v35
  %v222 = vunpack.c.l.b16 %v36
  %v223 = vunpack.c.h.b16 %v36
  %v224 = vunpack.c.l.b16 %v37
  %v225 = vunpack.c.h.b16 %v37
  %v226 = vunpack.c.l.b16 %v38
  %v227 = vunpack.c.l.b16 %v39
  %v228 = vunpack.c.h.b16 %v39
  %v229 = vunpack.c.l.b16 %v40
  %v230 = vunpack.c.h.b16 %v40
  %v231 = vunpack.c.l.b16 %v41
  %v232 = vunpack.c.l.b16 %v42
  %v233 = vunpack.c.h.b16 %v42
  %v234 = vunpack.c.l.b16 %v43
  %v235 = vunpack.c.h.b16 %v43
  %v236 = vunpack.c.l.b16 %v44
  %v237 = vunpack.c.l.b16 %v45
  %v238 = vunpack.c.h.b16 %v45
  %v239 = vunpack.c.l.b16 %v46
  %v240 = vunpack.c.h.b16 %v46
  %v241 = vunpack.c.l.b16 %v47
  %v242 = vunpack.c.l.b16 %v48
  %v243 = vunpack.c.h.b16 %v48
  %v244 = vunpack.c.l.b16 %v49
  %v245 = vunpack.c.h.b16 %v49
  %v246 = vunpack.c.l.b16 %v50
  %v247 = vunpack.c.l.b16 %v51
  %v248 = vunpack.c.h.b16 %v51
  %v249 = vunpack.c.l.b16 %v52
  %v250 = vunpack.c.h.b16 %v52
  %v251 = vunpack.c.l.b16 %v53
  %v252 = vunpack.c.l.b16 %v54
  %v253 = vunpack.c.h.b16 %v54
  %v254 = vunpack.c.l.b16 %v55
  %v255 = vunpack.c.h.b16 %v55
  %v256 = vunpack.c.l.b16 %v56
  %v257 = vunpack.c.l.b16 %v57
  %v258 = vunpack.c.h.b16 %v57
  %v259 = vunpack.c.l.b16 %v58
  %v260 = vunpack.c.h.b16 %v58
  %v261 = vunpack.c.l.b16 %v59
  %v262 = vunpack.c.l.b16 %v60
  %v263 = vunpack.c.h.b16 %v60
  %v264 = vunpack.c.l.b16 %v61
  %v265 = vunpack.c.h.b16 %v61
  %v266 = vunpack.c.l.b16 %v62
  %v267 = vpack.c.b16 %v192, %v187
  %v268 = vpack.c.b16 %v193, %v188
  %v269 = vpack.c.b16 %v194, %v189
  %v270 = vpack.c.b16 %v195, %v190
  %v271 = vpack.c.b16 %v196, %v191
  %v272 = vpack.c.b16 %v202, %v197
  %v273 = vpack.c.b16 %v203, %v198
  %v274 = vpack.c.b16 %v204, %v199
  %v275 = vpack.c.b16 %v205, %v200
  %v276 = vpack.c.b16 %v206, %v201
  %v277 = vpack.c.b16 %v212, %v207
  %v278 = vpack.c.b16 %v213, %v208
  %v279 = vpack.c.b16 %v214, %v209
  %v280 = vpack.c.b16 %v215, %v210
  %v281 = vpack.c.b16 %v216, %v211
  %v282 = vpack.c.b16 %v222, %v217
  %v283 = vpack.c.b16 %v223, %v218
  %v284 = vpack.c.b16 %v224, %v219
  %v285 = vpack.c.b16 %v225, %v220
  %v286 = vpack.c.b16 %v226, %v221
  %v287 = vpack.c.b16 %v232, %v227
  %v288 = vpack.c.b16 %v233, %v228
  %v289 = vpack.c.b16 %v234, %v229
  %v290 = vpack.c.b16 %v235, %v230
  %v291 = vpack.c.b16 %v236, %v231
  %v292 = vpack.c.b16 %v242, %v237
  %v293 = vpack.c.b16 %v243, %v238
  %v294 = vpack.c.b16 %v244, %v239
  %v295 = vpack.c.b16 %v245, %v240
  %v296 = vpack.c.b16 %v246, %v241
  %v297 = vpack.c.b16 %v252, %v247
  %v298 = vpack.c.b16 %v253, %v248
  %v299 = vpack.c.b16 %v254, %v249
  %v300 = vpack.c.b16 %v255, %v250
  %v301 = vpack.c.b16 %v256, %v251
  %v302 = vpack.c.b16 %v262, %v257
  %v303 = vpack.c.b16 %v263, %v258
  %v304 = vpack.c.b16 %v264, %v259
  %v305 = vpack.c.b16 %v265, %v260
  %v306 = vpack.c.b16 %v266, %v261
  %v411 = vunpack.c.l.b16 %v63
  %v412 = vunpack.c.l.b16 %v64
  %v413 = vunpack.c.l.b16 %v65
  %v414 = vunpack.c.l.b16 %v66
  %v415 = vunpack.c.l.b16 %v67
  %v416 = vunpack.c.l.b16 %v68
  %v417 = vunpack.c.l.b16 %v69
  %v418 = vunpack.c.l.b16 %v70
  %v419 = vunpack.c.l.b16 %v71
  %v420 = vunpack.c.l.b16 %v72
  %v421 = vunpack.c.l.b16 %v73
  %v422 = vunpack.c.l.b16 %v74
  %v423 = vunpack.c.l.b16 %v75
  %v424 = vunpack.c.l.b16 %v76
  %v425 = vunpack.c.l.b16 %v77
  %v426 = vunpack.c.l.b16 %v78
  %v427 = vunpack.c.l.b16 %v79
  %v428 = vunpack.c.l.b16 %v80
  %v429 = vunpack.c.l.b16 %v81
  %v430 = vunpack.c.l.b16 %v82
  %v431 = vunpack.c.l.b16 %v83
  %v432 = vunpack.c.l.b16 %v84
  %v433 = vunpack.c.l.b16 %v85
  %v434 = vunpack.c.l.b16 %v86
  %v435 = vunpack.c.l.b16 %v87
  %v436 = vunpack.c.l.b16 %v88
  %v437 = vunpack.c.l.b16 %v89
  %v438 = vunpack.c.l.b16 %v90
  %v439 = vunpack.c.l.b16 %v91
  %v440 = vunpack.c.l.b16 %v92
  %v441 = vunpack.c.l.b16 %v93
  %v442 = vunpack.c.l.b16 %v94
  %v443 = vunpack.c.l.b16 %v95
  %v444 = vunpack.c.l.b16 %v96
  %v445 = vunpack.c.l.b16 %v97
  %v446 = vunpack.c.l.b16 %v98
  %v447 = vunpack.c.l.b16 %v99
  %v448 = vunpack.c.l.b16 %v100
  %v449 = vunpack.c.l.b16 %v101
  %v450 = vunpack.c.l.b16 %v102
  %v451 = vunpack.c.l.b16 %v103
  %v452 = vunpack.c.l.b16 %v104
  %v453 = vunpack.c.l.b16 %v105
  %v454 = vunpack.c.l.b16 %v106
  %v455 = vunpack.c.l.b16 %v107
  %v456 = vunpack.c.l.b16 %v108
  %v457 = vunpack.c.l.b16 %v109
  %v458 = vunpack.c.l.b16 %v110
  %v459 = vunpack.c.l.b16 %v111
  %v460 = vunpack.c.l.b16 %v112
  %v461 = vunpack.c.l.b16 %v113
  %v462 = vunpack.c.l.b16 %v114
  %v463 = vunpack.c.l.b16 %v115
  %v464 = vunpack.c.l.b16 %v116
  %v465 = vunpack.c.l.b16 %v117
  %v466 = vunpack.c.l.b16 %v118
  %v467 = vunpack.c.l.b16 %v119
  %v468 = vunpack.c.l.b16 %v120
  %v469 = vunpack.c.l.b16 %v121
  %v470 = vunpack.c.l.b16 %v122
  %v471 = vunpack.c.l.b16 %v123
  %v472 = vunpack.c.l.b16 %v124
  %v473 = vunpack.c.l.b16 %v125
  %v474 = vunpack.c.l.b16 %v126
  %v475 = vunpack.c.l.b16 %v127
  %v476 = vunpack.c.l.b16 %v128
  %v477 = vunpack.c.l.b16 %v129
  %v478 = vunpack.c.l.b16 %v130
  %v479 = vunpack.c.l.b16 %v131
  %v480 = vunpack.c.l.b16 %v132
  %v481 = vunpack.c.l.b16 %v133
  %v482 = vunpack.c.l.b16 %v134
  %v483 = vpack.c.b16 %v412, %v411
  %v484 = vpack.c.b16 %v414, %v413
  %v485 = vpack.c.b16 %v416, %v415
  %v486 = vpack.c.b16 %v418, %v417
  %v487 = vpack.c.b16 %v420, %v419
  %v488 = vpack.c.b16 %v422, %v421
  %v489 = vpack.c.b16 %v424, %v423
  %v490 = vpack.c.b16 %v426, %v425
  %v491 = vpack.c.b16 %v428, %v427
  %v492 = vpack.c.b16 %v430, %v429
  %v493 = vpack.c.b16 %v432, %v431
  %v494 = vpack.c.b16 %v434, %v433
  %v495 = vpack.c.b16 %v436, %v435
  %v496 = vpack.c.b16 %v438, %v437
  %v497 = vpack.c.b16 %v440, %v439
  %v498 = vpack.c.b16 %v442, %v441
  %v499 = vpack.c.b16 %v444, %v443
  %v500 = vpack.c.b16 %v446, %v445
  %v501 = vpack.c.b16 %v448, %v447
  %v502 = vpack.c.b16 %v450, %v449
  %v503 = vpack.c.b16 %v452, %v451
  %v504 = vpack.c.b16 %v454, %v453
  %v505 = vpack.c.b16 %v456, %v455
  %v506 = vpack.c.b16 %v458, %v457
  %v507 = vpack.c.b16 %v460, %v459
  %v508 = vpack.c.b16 %v462, %v461
  %v509 = vpack.c.b16 %v464, %v463
  %v510 = vpack.c.b16 %v466, %v465
  %v511 = vpack.c.b16 %v468, %v467
  %v512 = vpack.c.b16 %v470, %v469
  %v513 = vpack.c.b16 %v472, %v471
  %v514 = vpack.c.b16 %v474, %v473
  %v515 = vpack.c.b16 %v476, %v475
  %v516 = vpack.c.b16 %v478, %v477
  %v517 = vpack.c.b16 %v480, %v479
  %v518 = vpack.c.b16 %v482, %v481
  %vm555 = vcmask 523264
  %v557 = vsel %vm555, %v271, 0
  %v560 = vsel %vm555, %v276, 0
  %v563 = vsel %vm555, %v281, 0
  %v566 = vsel %vm555, %v286, 0
  %v569 = vsel %vm555, %v291, 0
  %v572 = vsel %vm555, %v296, 0
  %v575 = vsel %vm555, %v301, 0
  %v578 = vsel %vm555, %v306, 0
  %580 = vmatpush.bf16.msra.mxu0 %v490
  %581 = vmatpush.bf16.msra.mxu0 %v489
  %582 = vmatpush.bf16.msra.mxu0 %v488
  %583 = vmatpush.bf16.msra.mxu0 %v487
  %584 = vmatpush.bf16.msra.mxu0 %v486
  %585 = vmatpush.bf16.msra.mxu0 %v485
  %586 = vmatpush.bf16.msra.mxu0 %v484
  %587 = vmatpush.bf16.msra.mxu0 %v483
  %588 = vmatmul.bf16.gmra.mxu0 %v267
  %v589 = vpop.f32.mrf.mxu0
  %v590 = vadd.f32 %v137, %v589
  %v591 = vpop.f32.mrf.mxu0
  %v592 = vadd.f32 %v137, %v591
  %593 = vmatmul.bf16.gmra.mxu0 %v272
  %v594 = vpop.f32.mrf.mxu0
  %v595 = vadd.f32 %v137, %v594
  %v596 = vpop.f32.mrf.mxu0
  %v597 = vadd.f32 %v137, %v596
  %598 = vmatmul.bf16.gmra.mxu0 %v277
  %v599 = vpop.f32.mrf.mxu0
  %v600 = vadd.f32 %v137, %v599
  %v601 = vpop.f32.mrf.mxu0
  %v602 = vadd.f32 %v137, %v601
  %603 = vmatmul.bf16.gmra.mxu0 %v282
  %v604 = vpop.f32.mrf.mxu0
  %v605 = vadd.f32 %v137, %v604
  %v606 = vpop.f32.mrf.mxu0
  %v607 = vadd.f32 %v137, %v606
  %608 = vmatmul.bf16.gmra.mxu0 %v287
  %v609 = vpop.f32.mrf.mxu0
  %v610 = vadd.f32 %v137, %v609
  %v611 = vpop.f32.mrf.mxu0
  %v612 = vadd.f32 %v137, %v611
  %613 = vmatmul.bf16.gmra.mxu0 %v292
  %v614 = vpop.f32.mrf.mxu0
  %v615 = vadd.f32 %v137, %v614
  %v616 = vpop.f32.mrf.mxu0
  %v617 = vadd.f32 %v137, %v616
  %618 = vmatmul.bf16.gmra.mxu0 %v297
  %v619 = vpop.f32.mrf.mxu0
  %v620 = vadd.f32 %v137, %v619
  %v621 = vpop.f32.mrf.mxu0
  %v622 = vadd.f32 %v137, %v621
  %623 = vmatmul.bf16.gmra.mxu0 %v302
  %v624 = vpop.f32.mrf.mxu0
  %v625 = vadd.f32 %v137, %v624
  %v626 = vpop.f32.mrf.mxu0
  %v627 = vadd.f32 %v137, %v626
  %628 = vdwg.mxu0
  %629 = vmatpush.bf16.msra.mxu0 %v498
  %630 = vmatpush.bf16.msra.mxu0 %v497
  %631 = vmatpush.bf16.msra.mxu0 %v496
  %632 = vmatpush.bf16.msra.mxu0 %v495
  %633 = vmatpush.bf16.msra.mxu0 %v494
  %634 = vmatpush.bf16.msra.mxu0 %v493
  %635 = vmatpush.bf16.msra.mxu0 %v492
  %636 = vmatpush.bf16.msra.mxu0 %v491
  %637 = vmatmul.bf16.gmra.mxu0 %v268
  %v638 = vpop.f32.mrf.mxu0
  %v639 = vadd.f32 %v590, %v638
  %v640 = vpop.f32.mrf.mxu0
  %v641 = vadd.f32 %v592, %v640
  %642 = vmatmul.bf16.gmra.mxu0 %v273
  %v643 = vpop.f32.mrf.mxu0
  %v644 = vadd.f32 %v595, %v643
  %v645 = vpop.f32.mrf.mxu0
  %v646 = vadd.f32 %v597, %v645
  %647 = vmatmul.bf16.gmra.mxu0 %v278
  %v648 = vpop.f32.mrf.mxu0
  %v649 = vadd.f32 %v600, %v648
  %v650 = vpop.f32.mrf.mxu0
  %v651 = vadd.f32 %v602, %v650
  %652 = vmatmul.bf16.gmra.mxu0 %v283
  %v653 = vpop.f32.mrf.mxu0
  %v654 = vadd.f32 %v605, %v653
  %v655 = vpop.f32.mrf.mxu0
  %v656 = vadd.f32 %v607, %v655
  %657 = vmatmul.bf16.gmra.mxu0 %v288
  %v658 = vpop.f32.mrf.mxu0
  %v659 = vadd.f32 %v610, %v658
  %v660 = vpop.f32.mrf.mxu0
  %v661 = vadd.f32 %v612, %v660
  %662 = vmatmul.bf16.gmra.mxu0 %v293
  %v663 = vpop.f32.mrf.mxu0
  %v664 = vadd.f32 %v615, %v663
  %v665 = vpop.f32.mrf.mxu0
  %v666 = vadd.f32 %v617, %v665
  %667 = vmatmul.bf16.gmra.mxu0 %v298
  %v668 = vpop.f32.mrf.mxu0
  %v669 = vadd.f32 %v620, %v668
  %v670 = vpop.f32.mrf.mxu0
  %v671 = vadd.f32 %v622, %v670
  %672 = vmatmul.bf16.gmra.mxu0 %v303
  %v673 = vpop.f32.mrf.mxu0
  %v674 = vadd.f32 %v625, %v673
  %v675 = vpop.f32.mrf.mxu0
  %v676 = vadd.f32 %v627, %v675
  %677 = vdwg.mxu0
  %678 = vmatpush.bf16.msra.mxu0 %v506
  %679 = vmatpush.bf16.msra.mxu0 %v505
  %680 = vmatpush.bf16.msra.mxu0 %v504
  %681 = vmatpush.bf16.msra.mxu0 %v503
  %682 = vmatpush.bf16.msra.mxu0 %v502
  %683 = vmatpush.bf16.msra.mxu0 %v501
  %684 = vmatpush.bf16.msra.mxu0 %v500
  %685 = vmatpush.bf16.msra.mxu0 %v499
  %686 = vmatmul.bf16.gmra.mxu0 %v269
  %v687 = vpop.f32.mrf.mxu0
  %v688 = vadd.f32 %v639, %v687
  %v689 = vpop.f32.mrf.mxu0
  %v690 = vadd.f32 %v641, %v689
  %691 = vmatmul.bf16.gmra.mxu0 %v274
  %v692 = vpop.f32.mrf.mxu0
  %v693 = vadd.f32 %v644, %v692
  %v694 = vpop.f32.mrf.mxu0
  %v695 = vadd.f32 %v646, %v694
  %696 = vmatmul.bf16.gmra.mxu0 %v279
  %v697 = vpop.f32.mrf.mxu0
  %v698 = vadd.f32 %v649, %v697
  %v699 = vpop.f32.mrf.mxu0
  %v700 = vadd.f32 %v651, %v699
  %701 = vmatmul.bf16.gmra.mxu0 %v284
  %v702 = vpop.f32.mrf.mxu0
  %v703 = vadd.f32 %v654, %v702
  %v704 = vpop.f32.mrf.mxu0
  %v705 = vadd.f32 %v656, %v704
  %706 = vmatmul.bf16.gmra.mxu0 %v289
  %v707 = vpop.f32.mrf.mxu0
  %v708 = vadd.f32 %v659, %v707
  %v709 = vpop.f32.mrf.mxu0
  %v710 = vadd.f32 %v661, %v709
  %711 = vmatmul.bf16.gmra.mxu0 %v294
  %v712 = vpop.f32.mrf.mxu0
  %v713 = vadd.f32 %v664, %v712
  %v714 = vpop.f32.mrf.mxu0
  %v715 = vadd.f32 %v666, %v714
  %716 = vmatmul.bf16.gmra.mxu0 %v299
  %v717 = vpop.f32.mrf.mxu0
  %v718 = vadd.f32 %v669, %v717
  %v719 = vpop.f32.mrf.mxu0
  %v720 = vadd.f32 %v671, %v719
  %721 = vmatmul.bf16.gmra.mxu0 %v304
  %v722 = vpop.f32.mrf.mxu0
  %v723 = vadd.f32 %v674, %v722
  %v724 = vpop.f32.mrf.mxu0
  %v725 = vadd.f32 %v676, %v724
  %726 = vdwg.mxu0
  %727 = vmatpush.bf16.msra.mxu0 %v514
  %728 = vmatpush.bf16.msra.mxu0 %v513
  %729 = vmatpush.bf16.msra.mxu0 %v512
  %730 = vmatpush.bf16.msra.mxu0 %v511
  %731 = vmatpush.bf16.msra.mxu0 %v510
  %732 = vmatpush.bf16.msra.mxu0 %v509
  %733 = vmatpush.bf16.msra.mxu0 %v508
  %734 = vmatpush.bf16.msra.mxu0 %v507
  %735 = vmatmul.bf16.gmra.mxu0 %v270
  %v736 = vpop.f32.mrf.mxu0
  %v737 = vadd.f32 %v688, %v736
  %v738 = vpop.f32.mrf.mxu0
  %v739 = vadd.f32 %v690, %v738
  %740 = vmatmul.bf16.gmra.mxu0 %v275
  %v741 = vpop.f32.mrf.mxu0
  %v742 = vadd.f32 %v693, %v741
  %v743 = vpop.f32.mrf.mxu0
  %v744 = vadd.f32 %v695, %v743
  %745 = vmatmul.bf16.gmra.mxu0 %v280
  %v746 = vpop.f32.mrf.mxu0
  %v747 = vadd.f32 %v698, %v746
  %v748 = vpop.f32.mrf.mxu0
  %v749 = vadd.f32 %v700, %v748
  %750 = vmatmul.bf16.gmra.mxu0 %v285
  %v751 = vpop.f32.mrf.mxu0
  %v752 = vadd.f32 %v703, %v751
  %v753 = vpop.f32.mrf.mxu0
  %v754 = vadd.f32 %v705, %v753
  %755 = vmatmul.bf16.gmra.mxu0 %v290
  %v756 = vpop.f32.mrf.mxu0
  %v757 = vadd.f32 %v708, %v756
  %v758 = vpop.f32.mrf.mxu0
  %v759 = vadd.f32 %v710, %v758
  %760 = vmatmul.bf16.gmra.mxu0 %v295
  %v761 = vpop.f32.mrf.mxu0
  %v762 = vadd.f32 %v713, %v761
  %v763 = vpop.f32.mrf.mxu0
  %v764 = vadd.f32 %v715, %v763
  %765 = vmatmul.bf16.gmra.mxu0 %v300
  %v766 = vpop.f32.mrf.mxu0
  %v767 = vadd.f32 %v718, %v766
  %v768 = vpop.f32.mrf.mxu0
  %v769 = vadd.f32 %v720, %v768
  %770 = vmatmul.bf16.gmra.mxu0 %v305
  %v771 = vpop.f32.mrf.mxu0
  %v772 = vadd.f32 %v723, %v771
  %v773 = vpop.f32.mrf.mxu0
  %v774 = vadd.f32 %v725, %v773
  %775 = vdwg.mxu0
  %776 = vmatpush.bf16.msra.mxu0 0
  %777 = vmatpush.bf16.msra.mxu0 0
  %778 = vmatpush.bf16.msra.mxu0 0
  %779 = vmatpush.bf16.msra.mxu0 0
  %780 = vmatpush.bf16.msra.mxu0 %v518
  %781 = vmatpush.bf16.msra.mxu0 %v517
  %782 = vmatpush.bf16.msra.mxu0 %v516
  %783 = vmatpush.bf16.msra.mxu0 %v515
  %784 = vmatmul.bf16.gmra.mxu0 %v557
  %v785 = vpop.f32.mrf.mxu0
  %v786 = vadd.f32 %v737, %v785
  %v787 = vpop.f32.mrf.mxu0
  %v788 = vadd.f32 %v739, %v787
  %789 = vmatmul.bf16.gmra.mxu0 %v560
  %v790 = vpop.f32.mrf.mxu0
  %v791 = vadd.f32 %v742, %v790
  %v792 = vpop.f32.mrf.mxu0
  %v793 = vadd.f32 %v744, %v792
  %794 = vmatmul.bf16.gmra.mxu0 %v563
  %v795 = vpop.f32.mrf.mxu0
  %v796 = vadd.f32 %v747, %v795
  %v797 = vpop.f32.mrf.mxu0
  %v798 = vadd.f32 %v749, %v797
  %799 = vmatmul.bf16.gmra.mxu0 %v566
  %v800 = vpop.f32.mrf.mxu0
  %v801 = vadd.f32 %v752, %v800
  %v802 = vpop.f32.mrf.mxu0
  %v803 = vadd.f32 %v754, %v802
  %804 = vmatmul.bf16.gmra.mxu0 %v569
  %v805 = vpop.f32.mrf.mxu0
  %v806 = vadd.f32 %v757, %v805
  %v807 = vpop.f32.mrf.mxu0
  %v808 = vadd.f32 %v759, %v807
  %809 = vmatmul.bf16.gmra.mxu0 %v572
  %v810 = vpop.f32.mrf.mxu0
  %v811 = vadd.f32 %v762, %v810
  %v812 = vpop.f32.mrf.mxu0
  %v813 = vadd.f32 %v764, %v812
  %814 = vmatmul.bf16.gmra.mxu0 %v575
  %v815 = vpop.f32.mrf.mxu0
  %v816 = vadd.f32 %v767, %v815
  %v817 = vpop.f32.mrf.mxu0
  %v818 = vadd.f32 %v769, %v817
  %819 = vmatmul.bf16.gmra.mxu0 %v578
  %v820 = vpop.f32.mrf.mxu0
  %v821 = vadd.f32 %v772, %v820
  %v822 = vpop.f32.mrf.mxu0
  %v823 = vadd.f32 %v774, %v822
  %824 = vdwg.mxu0
  %v825 = vmax.f32 %v786, 0.0
  %v826 = vmax.f32 %v788, 0.0
  %v827 = vmax.f32 %v791, 0.0
  %v828 = vmax.f32 %v793, 0.0
  %v829 = vmax.f32 %v796, 0.0
  %v830 = vmax.f32 %v798, 0.0
  %v831 = vmax.f32 %v801, 0.0
  %v832 = vmax.f32 %v803, 0.0
  %v833 = vmax.f32 %v806, 0.0
  %v834 = vmax.f32 %v808, 0.0
  %v835 = vmax.f32 %v811, 0.0
  %v836 = vmax.f32 %v813, 0.0
  %v837 = vmax.f32 %v816, 0.0
  %v838 = vmax.f32 %v818, 0.0
  %v839 = vmax.f32 %v821, 0.0
  %v840 = vmax.f32 %v823, 0.0
  %v841 = vpack.c.bf16 %v825, %v825
  %v842 = vpack.c.bf16 %v826, %v826
  %v843 = vpack.c.bf16 %v827, %v827
  %v844 = vpack.c.bf16 %v828, %v828
  %v845 = vpack.c.bf16 %v829, %v829
  %v846 = vpack.c.bf16 %v830, %v830
  %v847 = vpack.c.bf16 %v831, %v831
  %v848 = vpack.c.bf16 %v832, %v832
  %v849 = vpack.c.bf16 %v833, %v833
  %v850 = vpack.c.bf16 %v834, %v834
  %v851 = vpack.c.bf16 %v835, %v835
  %v852 = vpack.c.bf16 %v836, %v836
  %v853 = vpack.c.bf16 %v837, %v837
  %v854 = vpack.c.bf16 %v838, %v838
  %v855 = vpack.c.bf16 %v839, %v839
  %v856 = vpack.c.bf16 %v840, %v840
  %857 = vst [vmem:[%s3] sm:$0xf] %v841
  %858 = vst [vmem:[%s3 + $0x4] sm:$0xf] %v842
  %859 = vst [vmem:[%s3 + $0x8] sm:$0xf] %v843
  %860 = vst [vmem:[%s3 + $0xc] sm:$0xf] %v844
  %861 = vst [vmem:[%s3 + $0x10] sm:$0xf] %v845
  %862 = vst [vmem:[%s3 + $0x14] sm:$0xf] %v846
  %863 = vst [vmem:[%s3 + $0x18] sm:$0xf] %v847
  %864 = vst [vmem:[%s3 + $0x1c] sm:$0xf] %v848
  %865 = vst [vmem:[%s3 + $0x20] sm:$0xf] %v849
  %866 = vst [vmem:[%s3 + $0x24] sm:$0xf] %v850
  %867 = vst [vmem:[%s3 + $0x28] sm:$0xf] %v851
  %868 = vst [vmem:[%s3 + $0x2c] sm:$0xf] %v852
  %869 = vst [vmem:[%s3 + $0x30] sm:$0xf] %v853
  %870 = vst [vmem:[%s3 + $0x34] sm:$0xf] %v854
  %871 = vst [vmem:[%s3 + $0x38] sm:$0xf] %v855
  %872 = vst [vmem:[%s3 + $0x3c] sm:$0xf] %v856
  // Predicated region
  $region14: #{forward.15} parent=0 // pred_check
    _
  $region15: #{forward.15} parent=0 // pred_check_branch
    %874 = sbr.rel (0) target = $region17
  $region16: #{forward.15} parent=0 // pred_region
    _
  $region17: #{forward.15} parent=0 // pred_fallthru
    _
  // Predicated region
  $region18: #{forward.15} parent=0 // pred_check
    _
  $region19: #{forward.15} parent=0 // pred_check_branch
    %876 = sbr.rel (0) target = $region21
  $region20: #{forward.15} parent=0 // pred_region
    _
  $region21: #{forward.15} parent=0 // pred_fallthru
    _

// kernel: forward.16
$region0: #{forward.16}
  #allocation0 [shape = 'u32[]', space=smem, size = 0x4, offset = 0x4, fixed_abs, tag = 'smem constant byte address 0x4 - core index']
  #allocation1 [shape = 'u32[72,128]{1,0:T(1,128)}', space=vmem, size = 0x9000, scoped, tag = 'internal scratch']
  %s0 = inlined_call_operand.vmem [shape: bf16[512,288], index: 0, kind: input, shape index: {}]
  %s1 = inlined_call_operand.vmem [shape: bf16[288,128], index: 1, kind: input, shape index: {}]
  %s2 = inlined_call_operand.vmem [shape: f32[1,128], index: 2, kind: input, shape index: {}]
  %s3 = inlined_call_operand.vmem [shape: bf16[512,128], index: 3, kind: output, shape index: {}]
  %s4 = sld [smem:[#allocation0]]
  $region22: #{forward.16} parent=0
    _
  %s6 = ssub.s32 1, %s4
  %s7 = scalar_select 0, %s6, %s4
  // Predicated region
  $region2: #{forward.16} parent=0 // pred_check
    _
  $region3: #{forward.16} parent=0 // pred_check_branch
    %9 = sbr.rel (0) target = $region5
  $region4: #{forward.16} parent=0 // pred_region
    _
  $region5: #{forward.16} parent=0 // pred_fallthru
    _
  // Predicated region
  $region6: #{forward.16} parent=0 // pred_check
    _
  $region7: #{forward.16} parent=0 // pred_check_branch
    %11 = sbr.rel (0) target = $region9
  $region8: #{forward.16} parent=0 // pred_region
    _
  $region9: #{forward.16} parent=0 // pred_fallthru
    _
  // Predicated region
  $region10: #{forward.16} parent=0 // pred_check
    _
  $region11: #{forward.16} parent=0 // pred_check_branch
    %13 = sbr.rel (0) target = $region13
  $region12: #{forward.16} parent=0 // pred_region
    _
  $region13: #{forward.16} parent=0 // pred_fallthru
    _
  %v15 = vld [vmem:[%s0] sm:$0xff]
  %v16 = vld [vmem:[%s0 + $0x8] sm:$0xf]
  %v17 = vld [vmem:[%s0 + $0xc] sm:$0xff]
  %v18 = vld [vmem:[%s0 + $0x14] sm:$0xf]
  %v19 = vld [vmem:[%s0 + $0x18] sm:$0xff]
  %v20 = vld [vmem:[%s0 + $0x20] sm:$0xf]
  %v21 = vld [vmem:[%s0 + $0x24] sm:$0xff]
  %v22 = vld [vmem:[%s0 + $0x2c] sm:$0xf]
  %v23 = vld [vmem:[%s0 + $0x30] sm:$0xff]
  %v24 = vld [vmem:[%s0 + $0x38] sm:$0xf]
  %v25 = vld [vmem:[%s0 + $0x3c] sm:$0xff]
  %v26 = vld [vmem:[%s0 + $0x44] sm:$0xf]
  %v27 = vld [vmem:[%s0 + $0x48] sm:$0xff]
  %v28 = vld [vmem:[%s0 + $0x50] sm:$0xf]
  %v29 = vld [vmem:[%s0 + $0x54] sm:$0xff]
  %v30 = vld [vmem:[%s0 + $0x5c] sm:$0xf]
  %v31 = vld [vmem:[%s0 + $0x60] sm:$0xff]
  %v32 = vld [vmem:[%s0 + $0x68] sm:$0xf]
  %v33 = vld [vmem:[%s0 + $0x6c] sm:$0xff]
  %v34 = vld [vmem:[%s0 + $0x74] sm:$0xf]
  %v35 = vld [vmem:[%s0 + $0x78] sm:$0xff]
  %v36 = vld [vmem:[%s0 + $0x80] sm:$0xf]
  %v37 = vld [vmem:[%s0 + $0x84] sm:$0xff]
  %v38 = vld [vmem:[%s0 + $0x8c] sm:$0xf]
  %v39 = vld [vmem:[%s0 + $0x90] sm:$0xff]
  %v40 = vld [vmem:[%s0 + $0x98] sm:$0xf]
  %v41 = vld [vmem:[%s0 + $0x9c] sm:$0xff]
  %v42 = vld [vmem:[%s0 + $0xa4] sm:$0xf]
  %v43 = vld [vmem:[%s0 + $0xa8] sm:$0xff]
  %v44 = vld [vmem:[%s0 + $0xb0] sm:$0xf]
  %v45 = vld [vmem:[%s0 + $0xb4] sm:$0xff]
  %v46 = vld [vmem:[%s0 + $0xbc] sm:$0xf]
  %v47 = vld [vmem:[%s0 + $0xc0] sm:$0xff]
  %v48 = vld [vmem:[%s0 + $0xc8] sm:$0xf]
  %v49 = vld [vmem:[%s0 + $0xcc] sm:$0xff]
  %v50 = vld [vmem:[%s0 + $0xd4] sm:$0xf]
  %v51 = vld [vmem:[%s0 + $0xd8] sm:$0xff]
  %v52 = vld [vmem:[%s0 + $0xe0] sm:$0xf]
  %v53 = vld [vmem:[%s0 + $0xe4] sm:$0xff]
  %v54 = vld [vmem:[%s0 + $0xec] sm:$0xf]
  %v55 = vld [vmem:[%s0 + $0xf0] sm:$0xff]
  %v56 = vld [vmem:[%s0 + $0xf8] sm:$0xf]
  %v57 = vld [vmem:[%s0 + $0xfc] sm:$0xff]
  %v58 = vld [vmem:[%s0 + $0x104] sm:$0xf]
  %v59 = vld [vmem:[%s0 + $0x108] sm:$0xff]
  %v60 = vld [vmem:[%s0 + $0x110] sm:$0xf]
  %v61 = vld [vmem:[%s0 + $0x114] sm:$0xff]
  %v62 = vld [vmem:[%s0 + $0x11c] sm:$0xf]
  %v63 = vld [vmem:[%s0 + $0x120] sm:$0xff]
  %v64 = vld [vmem:[%s0 + $0x128] sm:$0xf]
  %v65 = vld [vmem:[%s0 + $0x12c] sm:$0xff]
  %v66 = vld [vmem:[%s0 + $0x134] sm:$0xf]
  %v67 = vld [vmem:[%s0 + $0x138] sm:$0xff]
  %v68 = vld [vmem:[%s0 + $0x140] sm:$0xf]
  %v69 = vld [vmem:[%s0 + $0x144] sm:$0xff]
  %v70 = vld [vmem:[%s0 + $0x14c] sm:$0xf]
  %v71 = vld [vmem:[%s0 + $0x150] sm:$0xff]
  %v72 = vld [vmem:[%s0 + $0x158] sm:$0xf]
  %v73 = vld [vmem:[%s0 + $0x15c] sm:$0xff]
  %v74 = vld [vmem:[%s0 + $0x164] sm:$0xf]
  %v75 = vld [vmem:[%s0 + $0x168] sm:$0xff]
  %v76 = vld [vmem:[%s0 + $0x170] sm:$0xf]
  %v77 = vld [vmem:[%s0 + $0x174] sm:$0xff]
  %v78 = vld [vmem:[%s0 + $0x17c] sm:$0xf]
  %v79 = vld [vmem:[%s0 + $0x180] sm:$0xff]
  %v80 = vld [vmem:[%s0 + $0x188] sm:$0xf]
  %v81 = vld [vmem:[%s0 + $0x18c] sm:$0xff]
  %v82 = vld [vmem:[%s0 + $0x194] sm:$0xf]
  %v83 = vld [vmem:[%s0 + $0x198] sm:$0xff]
  %v84 = vld [vmem:[%s0 + $0x1a0] sm:$0xf]
  %v85 = vld [vmem:[%s0 + $0x1a4] sm:$0xff]
  %v86 = vld [vmem:[%s0 + $0x1ac] sm:$0xf]
  %v87 = vld [vmem:[%s0 + $0x1b0] sm:$0xff]
  %v88 = vld [vmem:[%s0 + $0x1b8] sm:$0xf]
  %v89 = vld [vmem:[%s0 + $0x1bc] sm:$0xff]
  %v90 = vld [vmem:[%s0 + $0x1c4] sm:$0xf]
  %v91 = vld [vmem:[%s0 + $0x1c8] sm:$0xff]
  %v92 = vld [vmem:[%s0 + $0x1d0] sm:$0xf]
  %v93 = vld [vmem:[%s0 + $0x1d4] sm:$0xff]
  %v94 = vld [vmem:[%s0 + $0x1dc] sm:$0xf]
  %v95 = vld [vmem:[%s0 + $0x1e0] sm:$0xff]
  %v96 = vld [vmem:[%s0 + $0x1e8] sm:$0xf]
  %v97 = vld [vmem:[%s0 + $0x1ec] sm:$0xff]
  %v98 = vld [vmem:[%s0 + $0x1f4] sm:$0xf]
  %v99 = vld [vmem:[%s0 + $0x1f8] sm:$0xff]
  %v100 = vld [vmem:[%s0 + $0x200] sm:$0xf]
  %v101 = vld [vmem:[%s0 + $0x204] sm:$0xff]
  %v102 = vld [vmem:[%s0 + $0x20c] sm:$0xf]
  %v103 = vld [vmem:[%s0 + $0x210] sm:$0xff]
  %v104 = vld [vmem:[%s0 + $0x218] sm:$0xf]
  %v105 = vld [vmem:[%s0 + $0x21c] sm:$0xff]
  %v106 = vld [vmem:[%s0 + $0x224] sm:$0xf]
  %v107 = vld [vmem:[%s0 + $0x228] sm:$0xff]
  %v108 = vld [vmem:[%s0 + $0x230] sm:$0xf]
  %v109 = vld [vmem:[%s0 + $0x234] sm:$0xff]
  %v110 = vld [vmem:[%s0 + $0x23c] sm:$0xf]
  %v111 = vld [vmem:[%s0 + $0x240] sm:$0xff]
  %v112 = vld [vmem:[%s0 + $0x248] sm:$0xf]
  %v113 = vld [vmem:[%s0 + $0x24c] sm:$0xff]
  %v114 = vld [vmem:[%s0 + $0x254] sm:$0xf]
  %v115 = vld [vmem:[%s0 + $0x258] sm:$0xff]
  %v116 = vld [vmem:[%s0 + $0x260] sm:$0xf]
  %v117 = vld [vmem:[%s0 + $0x264] sm:$0xff]
  %v118 = vld [vmem:[%s0 + $0x26c] sm:$0xf]
  %v119 = vld [vmem:[%s0 + $0x270] sm:$0xff]
  %v120 = vld [vmem:[%s0 + $0x278] sm:$0xf]
  %v121 = vld [vmem:[%s0 + $0x27c] sm:$0xff]
  %v122 = vld [vmem:[%s0 + $0x284] sm:$0xf]
  %v123 = vld [vmem:[%s0 + $0x288] sm:$0xff]
  %v124 = vld [vmem:[%s0 + $0x290] sm:$0xf]
  %v125 = vld [vmem:[%s0 + $0x294] sm:$0xff]
  %v126 = vld [vmem:[%s0 + $0x29c] sm:$0xf]
  %v127 = vld [vmem:[%s0 + $0x2a0] sm:$0xff]
  %v128 = vld [vmem:[%s0 + $0x2a8] sm:$0xf]
  %v129 = vld [vmem:[%s0 + $0x2ac] sm:$0xff]
  %v130 = vld [vmem:[%s0 + $0x2b4] sm:$0xf]
  %v131 = vld [vmem:[%s0 + $0x2b8] sm:$0xff]
  %v132 = vld [vmem:[%s0 + $0x2c0] sm:$0xf]
  %v133 = vld [vmem:[%s0 + $0x2c4] sm:$0xff]
  %v134 = vld [vmem:[%s0 + $0x2cc] sm:$0xf]
  %v135 = vld [vmem:[%s0 + $0x2d0] sm:$0xff]
  %v136 = vld [vmem:[%s0 + $0x2d8] sm:$0xf]
  %v137 = vld [vmem:[%s0 + $0x2dc] sm:$0xff]
  %v138 = vld [vmem:[%s0 + $0x2e4] sm:$0xf]
  %v139 = vld [vmem:[%s0 + $0x2e8] sm:$0xff]
  %v140 = vld [vmem:[%s0 + $0x2f0] sm:$0xf]
  %v141 = vld [vmem:[%s0 + $0x2f4] sm:$0xff]
  %v142 = vld [vmem:[%s0 + $0x2fc] sm:$0xf]
  %v143 = vld [vmem:[%s1] sm:$0xf]
  %v144 = vld [vmem:[%s1 + $0x4] sm:$0xf]
  %v145 = vld [vmem:[%s1 + $0x8] sm:$0xf]
  %v146 = vld [vmem:[%s1 + $0xc] sm:$0xf]
  %v147 = vld [vmem:[%s1 + $0x10] sm:$0xf]
  %v148 = vld [vmem:[%s1 + $0x14] sm:$0xf]
  %v149 = vld [vmem:[%s1 + $0x18] sm:$0xf]
  %v150 = vld [vmem:[%s1 + $0x1c] sm:$0xf]
  %v151 = vld [vmem:[%s1 + $0x20] sm:$0xf]
  %v152 = vld [vmem:[%s1 + $0x24] sm:$0xf]
  %v153 = vld [vmem:[%s1 + $0x28] sm:$0xf]
  %v154 = vld [vmem:[%s1 + $0x2c] sm:$0xf]
  %v155 = vld [vmem:[%s1 + $0x30] sm:$0xf]
  %v156 = vld [vmem:[%s1 + $0x34] sm:$0xf]
  %v157 = vld [vmem:[%s1 + $0x38] sm:$0xf]
  %v158 = vld [vmem:[%s1 + $0x3c] sm:$0xf]
  %v159 = vld [vmem:[%s1 + $0x40] sm:$0xf]
  %v160 = vld [vmem:[%s1 + $0x44] sm:$0xf]
  %v161 = vld [vmem:[%s1 + $0x48] sm:$0xf]
  %v162 = vld [vmem:[%s1 + $0x4c] sm:$0xf]
  %v163 = vld [vmem:[%s1 + $0x50] sm:$0xf]
  %v164 = vld [vmem:[%s1 + $0x54] sm:$0xf]
  %v165 = vld [vmem:[%s1 + $0x58] sm:$0xf]
  %v166 = vld [vmem:[%s1 + $0x5c] sm:$0xf]
  %v167 = vld [vmem:[%s1 + $0x60] sm:$0xf]
  %v168 = vld [vmem:[%s1 + $0x64] sm:$0xf]
  %v169 = vld [vmem:[%s1 + $0x68] sm:$0xf]
  %v170 = vld [vmem:[%s1 + $0x6c] sm:$0xf]
  %v171 = vld [vmem:[%s1 + $0x70] sm:$0xf]
  %v172 = vld [vmem:[%s1 + $0x74] sm:$0xf]
  %v173 = vld [vmem:[%s1 + $0x78] sm:$0xf]
  %v174 = vld [vmem:[%s1 + $0x7c] sm:$0xf]
  %v175 = vld [vmem:[%s1 + $0x80] sm:$0xf]
  %v176 = vld [vmem:[%s1 + $0x84] sm:$0xf]
  %v177 = vld [vmem:[%s1 + $0x88] sm:$0xf]
  %v178 = vld [vmem:[%s1 + $0x8c] sm:$0xf]
  %v179 = vld [vmem:[%s2] sm:$0x1]
  %v181 = vperm.slane %v179, 0
  %v311 = vunpack.c.l.b16 %v15
  %v312 = vunpack.c.h.b16 %v15
  %v313 = vunpack.c.l.b16 %v16
  %v314 = vunpack.c.l.b16 %v17
  %v315 = vunpack.c.h.b16 %v17
  %v316 = vunpack.c.l.b16 %v18
  %v317 = vunpack.c.l.b16 %v19
  %v318 = vunpack.c.h.b16 %v19
  %v319 = vunpack.c.l.b16 %v20
  %v320 = vunpack.c.l.b16 %v21
  %v321 = vunpack.c.h.b16 %v21
  %v322 = vunpack.c.l.b16 %v22
  %v323 = vunpack.c.l.b16 %v23
  %v324 = vunpack.c.h.b16 %v23
  %v325 = vunpack.c.l.b16 %v24
  %v326 = vunpack.c.l.b16 %v25
  %v327 = vunpack.c.h.b16 %v25
  %v328 = vunpack.c.l.b16 %v26
  %v329 = vunpack.c.l.b16 %v27
  %v330 = vunpack.c.h.b16 %v27
  %v331 = vunpack.c.l.b16 %v28
  %v332 = vunpack.c.l.b16 %v29
  %v333 = vunpack.c.h.b16 %v29
  %v334 = vunpack.c.l.b16 %v30
  %v335 = vunpack.c.l.b16 %v31
  %v336 = vunpack.c.h.b16 %v31
  %v337 = vunpack.c.l.b16 %v32
  %v338 = vunpack.c.l.b16 %v33
  %v339 = vunpack.c.h.b16 %v33
  %v340 = vunpack.c.l.b16 %v34
  %v341 = vunpack.c.l.b16 %v35
  %v342 = vunpack.c.h.b16 %v35
  %v343 = vunpack.c.l.b16 %v36
  %v344 = vunpack.c.l.b16 %v37
  %v345 = vunpack.c.h.b16 %v37
  %v346 = vunpack.c.l.b16 %v38
  %v347 = vunpack.c.l.b16 %v39
  %v348 = vunpack.c.h.b16 %v39
  %v349 = vunpack.c.l.b16 %v40
  %v350 = vunpack.c.l.b16 %v41
  %v351 = vunpack.c.h.b16 %v41
  %v352 = vunpack.c.l.b16 %v42
  %v353 = vunpack.c.l.b16 %v43
  %v354 = vunpack.c.h.b16 %v43
  %v355 = vunpack.c.l.b16 %v44
  %v356 = vunpack.c.l.b16 %v45
  %v357 = vunpack.c.h.b16 %v45
  %v358 = vunpack.c.l.b16 %v46
  %v359 = vunpack.c.l.b16 %v47
  %v360 = vunpack.c.h.b16 %v47
  %v361 = vunpack.c.l.b16 %v48
  %v362 = vunpack.c.l.b16 %v49
  %v363 = vunpack.c.h.b16 %v49
  %v364 = vunpack.c.l.b16 %v50
  %v365 = vunpack.c.l.b16 %v51
  %v366 = vunpack.c.h.b16 %v51
  %v367 = vunpack.c.l.b16 %v52
  %v368 = vunpack.c.l.b16 %v53
  %v369 = vunpack.c.h.b16 %v53
  %v370 = vunpack.c.l.b16 %v54
  %v371 = vunpack.c.l.b16 %v55
  %v372 = vunpack.c.h.b16 %v55
  %v373 = vunpack.c.l.b16 %v56
  %v374 = vunpack.c.l.b16 %v57
  %v375 = vunpack.c.h.b16 %v57
  %v376 = vunpack.c.l.b16 %v58
  %v377 = vunpack.c.l.b16 %v59
  %v378 = vunpack.c.h.b16 %v59
  %v379 = vunpack.c.l.b16 %v60
  %v380 = vunpack.c.l.b16 %v61
  %v381 = vunpack.c.h.b16 %v61
  %v382 = vunpack.c.l.b16 %v62
  %v383 = vunpack.c.l.b16 %v63
  %v384 = vunpack.c.h.b16 %v63
  %v385 = vunpack.c.l.b16 %v64
  %v386 = vunpack.c.l.b16 %v65
  %v387 = vunpack.c.h.b16 %v65
  %v388 = vunpack.c.l.b16 %v66
  %v389 = vunpack.c.l.b16 %v67
  %v390 = vunpack.c.h.b16 %v67
  %v391 = vunpack.c.l.b16 %v68
  %v392 = vunpack.c.l.b16 %v69
  %v393 = vunpack.c.h.b16 %v69
  %v394 = vunpack.c.l.b16 %v70
  %v395 = vunpack.c.l.b16 %v71
  %v396 = vunpack.c.h.b16 %v71
  %v397 = vunpack.c.l.b16 %v72
  %v398 = vunpack.c.l.b16 %v73
  %v399 = vunpack.c.h.b16 %v73
  %v400 = vunpack.c.l.b16 %v74
  %v401 = vunpack.c.l.b16 %v75
  %v402 = vunpack.c.h.b16 %v75
  %v403 = vunpack.c.l.b16 %v76
  %v404 = vunpack.c.l.b16 %v77
  %v405 = vunpack.c.h.b16 %v77
  %v406 = vunpack.c.l.b16 %v78
  %v407 = vunpack.c.l.b16 %v79
  %v408 = vunpack.c.h.b16 %v79
  %v409 = vunpack.c.l.b16 %v80
  %v410 = vunpack.c.l.b16 %v81
  %v411 = vunpack.c.h.b16 %v81
  %v412 = vunpack.c.l.b16 %v82
  %v413 = vunpack.c.l.b16 %v83
  %v414 = vunpack.c.h.b16 %v83
  %v415 = vunpack.c.l.b16 %v84
  %v416 = vunpack.c.l.b16 %v85
  %v417 = vunpack.c.h.b16 %v85
  %v418 = vunpack.c.l.b16 %v86
  %v419 = vunpack.c.l.b16 %v87
  %v420 = vunpack.c.h.b16 %v87
  %v421 = vunpack.c.l.b16 %v88
  %v422 = vunpack.c.l.b16 %v89
  %v423 = vunpack.c.h.b16 %v89
  %v424 = vunpack.c.l.b16 %v90
  %v425 = vunpack.c.l.b16 %v91
  %v426 = vunpack.c.h.b16 %v91
  %v427 = vunpack.c.l.b16 %v92
  %v428 = vunpack.c.l.b16 %v93
  %v429 = vunpack.c.h.b16 %v93
  %v430 = vunpack.c.l.b16 %v94
  %v431 = vunpack.c.l.b16 %v95
  %v432 = vunpack.c.h.b16 %v95
  %v433 = vunpack.c.l.b16 %v96
  %v434 = vunpack.c.l.b16 %v97
  %v435 = vunpack.c.h.b16 %v97
  %v436 = vunpack.c.l.b16 %v98
  %v437 = vunpack.c.l.b16 %v99
  %v438 = vunpack.c.h.b16 %v99
  %v439 = vunpack.c.l.b16 %v100
  %v440 = vunpack.c.l.b16 %v101
  %v441 = vunpack.c.h.b16 %v101
  %v442 = vunpack.c.l.b16 %v102
  %v443 = vunpack.c.l.b16 %v103
  %v444 = vunpack.c.h.b16 %v103
  %v445 = vunpack.c.l.b16 %v104
  %v446 = vunpack.c.l.b16 %v105
  %v447 = vunpack.c.h.b16 %v105
  %v448 = vunpack.c.l.b16 %v106
  %v449 = vunpack.c.l.b16 %v107
  %v450 = vunpack.c.h.b16 %v107
  %v451 = vunpack.c.l.b16 %v108
  %v452 = vunpack.c.l.b16 %v109
  %v453 = vunpack.c.h.b16 %v109
  %v454 = vunpack.c.l.b16 %v110
  %v455 = vunpack.c.l.b16 %v111
  %v456 = vunpack.c.h.b16 %v111
  %v457 = vunpack.c.l.b16 %v112
  %v458 = vunpack.c.l.b16 %v113
  %v459 = vunpack.c.h.b16 %v113
  %v460 = vunpack.c.l.b16 %v114
  %v461 = vunpack.c.l.b16 %v115
  %v462 = vunpack.c.h.b16 %v115
  %v463 = vunpack.c.l.b16 %v116
  %v464 = vunpack.c.l.b16 %v117
  %v465 = vunpack.c.h.b16 %v117
  %v466 = vunpack.c.l.b16 %v118
  %v467 = vunpack.c.l.b16 %v119
  %v468 = vunpack.c.h.b16 %v119
  %v469 = vunpack.c.l.b16 %v120
  %v470 = vunpack.c.l.b16 %v121
  %v471 = vunpack.c.h.b16 %v121
  %v472 = vunpack.c.l.b16 %v122
  %v473 = vunpack.c.l.b16 %v123
  %v474 = vunpack.c.h.b16 %v123
  %v475 = vunpack.c.l.b16 %v124
  %v476 = vunpack.c.l.b16 %v125
  %v477 = vunpack.c.h.b16 %v125
  %v478 = vunpack.c.l.b16 %v126
  %v479 = vunpack.c.l.b16 %v127
  %v480 = vunpack.c.h.b16 %v127
  %v481 = vunpack.c.l.b16 %v128
  %v482 = vunpack.c.l.b16 %v129
  %v483 = vunpack.c.h.b16 %v129
  %v484 = vunpack.c.l.b16 %v130
  %v485 = vunpack.c.l.b16 %v131
  %v486 = vunpack.c.h.b16 %v131
  %v487 = vunpack.c.l.b16 %v132
  %v488 = vunpack.c.l.b16 %v133
  %v489 = vunpack.c.h.b16 %v133
  %v490 = vunpack.c.l.b16 %v134
  %v491 = vunpack.c.l.b16 %v135
  %v492 = vunpack.c.h.b16 %v135
  %v493 = vunpack.c.l.b16 %v136
  %v494 = vunpack.c.l.b16 %v137
  %v495 = vunpack.c.h.b16 %v137
  %v496 = vunpack.c.l.b16 %v138
  %v497 = vunpack.c.l.b16 %v139
  %v498 = vunpack.c.h.b16 %v139
  %v499 = vunpack.c.l.b16 %v140
  %v500 = vunpack.c.l.b16 %v141
  %v501 = vunpack.c.h.b16 %v141
  %v502 = vunpack.c.l.b16 %v142
  %v503 = vpack.c.b16 %v314, %v311
  %v504 = vpack.c.b16 %v315, %v312
  %v505 = vpack.c.b16 %v316, %v313
  %v506 = vpack.c.b16 %v320, %v317
  %v507 = vpack.c.b16 %v321, %v318
  %v508 = vpack.c.b16 %v322, %v319
  %v509 = vpack.c.b16 %v326, %v323
  %v510 = vpack.c.b16 %v327, %v324
  %v511 = vpack.c.b16 %v328, %v325
  %v512 = vpack.c.b16 %v332, %v329
  %v513 = vpack.c.b16 %v333, %v330
  %v514 = vpack.c.b16 %v334, %v331
  %v515 = vpack.c.b16 %v338, %v335
  %v516 = vpack.c.b16 %v339, %v336
  %v517 = vpack.c.b16 %v340, %v337
  %v518 = vpack.c.b16 %v344, %v341
  %v519 = vpack.c.b16 %v345, %v342
  %v520 = vpack.c.b16 %v346, %v343
  %v521 = vpack.c.b16 %v350, %v347
  %v522 = vpack.c.b16 %v351, %v348
  %v523 = vpack.c.b16 %v352, %v349
  %v524 = vpack.c.b16 %v356, %v353
  %v525 = vpack.c.b16 %v357, %v354
  %v526 = vpack.c.b16 %v358, %v355
  %v527 = vpack.c.b16 %v362, %v359
  %v528 = vpack.c.b16 %v363, %v360
  %v529 = vpack.c.b16 %v364, %v361
  %v530 = vpack.c.b16 %v368, %v365
  %v531 = vpack.c.b16 %v369, %v366
  %v532 = vpack.c.b16 %v370, %v367
  %v533 = vpack.c.b16 %v374, %v371
  %v534 = vpack.c.b16 %v375, %v372
  %v535 = vpack.c.b16 %v376, %v373
  %v536 = vpack.c.b16 %v380, %v377
  %v537 = vpack.c.b16 %v381, %v378
  %v538 = vpack.c.b16 %v382, %v379
  %v539 = vpack.c.b16 %v386, %v383
  %v540 = vpack.c.b16 %v387, %v384
  %v541 = vpack.c.b16 %v388, %v385
  %v542 = vpack.c.b16 %v392, %v389
  %v543 = vpack.c.b16 %v393, %v390
  %v544 = vpack.c.b16 %v394, %v391
  %v545 = vpack.c.b16 %v398, %v395
  %v546 = vpack.c.b16 %v399, %v396
  %v547 = vpack.c.b16 %v400, %v397
  %v548 = vpack.c.b16 %v404, %v401
  %v549 = vpack.c.b16 %v405, %v402
  %v550 = vpack.c.b16 %v406, %v403
  %v551 = vpack.c.b16 %v410, %v407
  %v552 = vpack.c.b16 %v411, %v408
  %v553 = vpack.c.b16 %v412, %v409
  %v554 = vpack.c.b16 %v416, %v413
  %v555 = vpack.c.b16 %v417, %v414
  %v556 = vpack.c.b16 %v418, %v415
  %v557 = vpack.c.b16 %v422, %v419
  %v558 = vpack.c.b16 %v423, %v420
  %v559 = vpack.c.b16 %v424, %v421
  %v560 = vpack.c.b16 %v428, %v425
  %v561 = vpack.c.b16 %v429, %v426
  %v562 = vpack.c.b16 %v430, %v427
  %v563 = vpack.c.b16 %v434, %v431
  %v564 = vpack.c.b16 %v435, %v432
  %v565 = vpack.c.b16 %v436, %v433
  %v566 = vpack.c.b16 %v440, %v437
  %v567 = vpack.c.b16 %v441, %v438
  %v568 = vpack.c.b16 %v442, %v439
  %v569 = vpack.c.b16 %v446, %v443
  %v570 = vpack.c.b16 %v447, %v444
  %v571 = vpack.c.b16 %v448, %v445
  %v572 = vpack.c.b16 %v452, %v449
  %v573 = vpack.c.b16 %v453, %v450
  %v574 = vpack.c.b16 %v454, %v451
  %v575 = vpack.c.b16 %v458, %v455
  %v576 = vpack.c.b16 %v459, %v456
  %v577 = vpack.c.b16 %v460, %v457
  %v578 = vpack.c.b16 %v464, %v461
  %v579 = vpack.c.b16 %v465, %v462
  %v580 = vpack.c.b16 %v466, %v463
  %v581 = vpack.c.b16 %v470, %v467
  %v582 = vpack.c.b16 %v471, %v468
  %v583 = vpack.c.b16 %v472, %v469
  %v584 = vpack.c.b16 %v476, %v473
  %v585 = vpack.c.b16 %v477, %v474
  %v586 = vpack.c.b16 %v478, %v475
  %v587 = vpack.c.b16 %v482, %v479
  %v588 = vpack.c.b16 %v483, %v480
  %v589 = vpack.c.b16 %v484, %v481
  %v590 = vpack.c.b16 %v488, %v485
  %v591 = vpack.c.b16 %v489, %v486
  %v592 = vpack.c.b16 %v490, %v487
  %v593 = vpack.c.b16 %v494, %v491
  %v594 = vpack.c.b16 %v495, %v492
  %v595 = vpack.c.b16 %v496, %v493
  %v596 = vpack.c.b16 %v500, %v497
  %v597 = vpack.c.b16 %v501, %v498
  %v598 = vpack.c.b16 %v502, %v499
  %v699 = vunpack.c.l.b16 %v143
  %v700 = vunpack.c.l.b16 %v144
  %v701 = vunpack.c.l.b16 %v145
  %v702 = vunpack.c.l.b16 %v146
  %v703 = vunpack.c.l.b16 %v147
  %v704 = vunpack.c.l.b16 %v148
  %v705 = vunpack.c.l.b16 %v149
  %v706 = vunpack.c.l.b16 %v150
  %v707 = vunpack.c.l.b16 %v151
  %v708 = vunpack.c.l.b16 %v152
  %v709 = vunpack.c.l.b16 %v153
  %v710 = vunpack.c.l.b16 %v154
  %v711 = vunpack.c.l.b16 %v155
  %v712 = vunpack.c.l.b16 %v156
  %v713 = vunpack.c.l.b16 %v157
  %v714 = vunpack.c.l.b16 %v158
  %v715 = vunpack.c.l.b16 %v159
  %v716 = vunpack.c.l.b16 %v160
  %v717 = vunpack.c.l.b16 %v161
  %v718 = vunpack.c.l.b16 %v162
  %v719 = vunpack.c.l.b16 %v163
  %v720 = vunpack.c.l.b16 %v164
  %v721 = vunpack.c.l.b16 %v165
  %v722 = vunpack.c.l.b16 %v166
  %v723 = vunpack.c.l.b16 %v167
  %v724 = vunpack.c.l.b16 %v168
  %v725 = vunpack.c.l.b16 %v169
  %v726 = vunpack.c.l.b16 %v170
  %v727 = vunpack.c.l.b16 %v171
  %v728 = vunpack.c.l.b16 %v172
  %v729 = vunpack.c.l.b16 %v173
  %v730 = vunpack.c.l.b16 %v174
  %v731 = vunpack.c.l.b16 %v175
  %v732 = vunpack.c.l.b16 %v176
  %v733 = vunpack.c.l.b16 %v177
  %v734 = vunpack.c.l.b16 %v178
  %v735 = vpack.c.b16 %v700, %v699
  %v736 = vpack.c.b16 %v702, %v701
  %v737 = vpack.c.b16 %v704, %v703
  %v738 = vpack.c.b16 %v706, %v705
  %v739 = vpack.c.b16 %v708, %v707
  %v740 = vpack.c.b16 %v710, %v709
  %v741 = vpack.c.b16 %v712, %v711
  %v742 = vpack.c.b16 %v714, %v713
  %v743 = vpack.c.b16 %v716, %v715
  %v744 = vpack.c.b16 %v718, %v717
  %v745 = vpack.c.b16 %v720, %v719
  %v746 = vpack.c.b16 %v722, %v721
  %v747 = vpack.c.b16 %v724, %v723
  %v748 = vpack.c.b16 %v726, %v725
  %v749 = vpack.c.b16 %v728, %v727
  %v750 = vpack.c.b16 %v730, %v729
  %v751 = vpack.c.b16 %v732, %v731
  %v752 = vpack.c.b16 %v734, %v733
  %vm771 = vcmask 261120
  %v773 = vsel %vm771, %v505, 0
  %v776 = vsel %vm771, %v508, 0
  %v779 = vsel %vm771, %v511, 0
  %v782 = vsel %vm771, %v514, 0
  %v785 = vsel %vm771, %v517, 0
  %v788 = vsel %vm771, %v520, 0
  %v791 = vsel %vm771, %v523, 0
  %v794 = vsel %vm771, %v526, 0
  %v797 = vsel %vm771, %v529, 0
  %v800 = vsel %vm771, %v532, 0
  %v803 = vsel %vm771, %v535, 0
  %v806 = vsel %vm771, %v538, 0
  %v809 = vsel %vm771, %v541, 0
  %v812 = vsel %vm771, %v544, 0
  %v815 = vsel %vm771, %v547, 0
  %v818 = vsel %vm771, %v550, 0
  %v821 = vsel %vm771, %v553, 0
  %v824 = vsel %vm771, %v556, 0
  %v827 = vsel %vm771, %v559, 0
  %v830 = vsel %vm771, %v562, 0
  %v833 = vsel %vm771, %v565, 0
  %v836 = vsel %vm771, %v568, 0
  %v839 = vsel %vm771, %v571, 0
  %v842 = vsel %vm771, %v574, 0
  %v845 = vsel %vm771, %v577, 0
  %v848 = vsel %vm771, %v580, 0
  %v851 = vsel %vm771, %v583, 0
  %v854 = vsel %vm771, %v586, 0
  %v857 = vsel %vm771, %v589, 0
  %v860 = vsel %vm771, %v592, 0
  %v863 = vsel %vm771, %v595, 0
  %v866 = vsel %vm771, %v598, 0
  %868 = vmatpush.bf16.msra.mxu0 %v742
  %869 = vmatpush.bf16.msra.mxu0 %v741
  %870 = vmatpush.bf16.msra.mxu0 %v740
  %871 = vmatpush.bf16.msra.mxu0 %v739
  %872 = vmatpush.bf16.msra.mxu0 %v738
  %873 = vmatpush.bf16.msra.mxu0 %v737
  %874 = vmatpush.bf16.msra.mxu0 %v736
  %875 = vmatpush.bf16.msra.mxu0 %v735
  %876 = vmatmul.bf16.gmra.mxu0 %v503
  %v877 = vpop.f32.mrf.mxu0
  %v878 = vadd.f32 %v181, %v877
  %v879 = vpop.f32.mrf.mxu0
  %v880 = vadd.f32 %v181, %v879
  %881 = vmatmul.bf16.gmra.mxu0 %v506
  %v882 = vpop.f32.mrf.mxu0
  %v883 = vadd.f32 %v181, %v882
  %v884 = vpop.f32.mrf.mxu0
  %v885 = vadd.f32 %v181, %v884
  %886 = vmatmul.bf16.gmra.mxu0 %v509
  %v887 = vpop.f32.mrf.mxu0
  %v888 = vadd.f32 %v181, %v887
  %v889 = vpop.f32.mrf.mxu0
  %v890 = vadd.f32 %v181, %v889
  %891 = vmatmul.bf16.gmra.mxu0 %v512
  %v892 = vpop.f32.mrf.mxu0
  %v893 = vadd.f32 %v181, %v892
  %v894 = vpop.f32.mrf.mxu0
  %v895 = vadd.f32 %v181, %v894
  %896 = vmatmul.bf16.gmra.mxu0 %v515
  %v897 = vpop.f32.mrf.mxu0
  %v898 = vadd.f32 %v181, %v897
  %v899 = vpop.f32.mrf.mxu0
  %v900 = vadd.f32 %v181, %v899
  %901 = vmatmul.bf16.gmra.mxu0 %v518
  %v902 = vpop.f32.mrf.mxu0
  %v903 = vadd.f32 %v181, %v902
  %v904 = vpop.f32.mrf.mxu0
  %v905 = vadd.f32 %v181, %v904
  %906 = vmatmul.bf16.gmra.mxu0 %v521
  %v907 = vpop.f32.mrf.mxu0
  %v908 = vadd.f32 %v181, %v907
  %v909 = vpop.f32.mrf.mxu0
  %v910 = vadd.f32 %v181, %v909
  %911 = vmatmul.bf16.gmra.mxu0 %v524
  %v912 = vpop.f32.mrf.mxu0
  %v913 = vadd.f32 %v181, %v912
  %v914 = vpop.f32.mrf.mxu0
  %v915 = vadd.f32 %v181, %v914
  %916 = vmatmul.bf16.gmra.mxu0 %v527
  %v917 = vpop.f32.mrf.mxu0
  %v918 = vadd.f32 %v181, %v917
  %v919 = vpop.f32.mrf.mxu0
  %v920 = vadd.f32 %v181, %v919
  %921 = vmatmul.bf16.gmra.mxu0 %v530
  %v922 = vpop.f32.mrf.mxu0
  %v923 = vadd.f32 %v181, %v922
  %v924 = vpop.f32.mrf.mxu0
  %v925 = vadd.f32 %v181, %v924
  %926 = vmatmul.bf16.gmra.mxu0 %v533
  %v927 = vpop.f32.mrf.mxu0
  %v928 = vadd.f32 %v181, %v927
  %v929 = vpop.f32.mrf.mxu0
  %v930 = vadd.f32 %v181, %v929
  %931 = vmatmul.bf16.gmra.mxu0 %v536
  %v932 = vpop.f32.mrf.mxu0
  %v933 = vadd.f32 %v181, %v932
  %v934 = vpop.f32.mrf.mxu0
  %v935 = vadd.f32 %v181, %v934
  %936 = vmatmul.bf16.gmra.mxu0 %v539
  %v937 = vpop.f32.mrf.mxu0
  %v938 = vadd.f32 %v181, %v937
  %v939 = vpop.f32.mrf.mxu0
  %v940 = vadd.f32 %v181, %v939
  %941 = vmatmul.bf16.gmra.mxu0 %v542
  %v942 = vpop.f32.mrf.mxu0
  %v943 = vadd.f32 %v181, %v942
  %v944 = vpop.f32.mrf.mxu0
  %v945 = vadd.f32 %v181, %v944
  %946 = vmatmul.bf16.gmra.mxu0 %v545
  %v947 = vpop.f32.mrf.mxu0
  %v948 = vadd.f32 %v181, %v947
  %v949 = vpop.f32.mrf.mxu0
  %v950 = vadd.f32 %v181, %v949
  %951 = vmatmul.bf16.gmra.mxu0 %v548
  %v952 = vpop.f32.mrf.mxu0
  %v953 = vadd.f32 %v181, %v952
  %v954 = vpop.f32.mrf.mxu0
  %v955 = vadd.f32 %v181, %v954
  %956 = vmatmul.bf16.gmra.mxu0 %v551
  %v957 = vpop.f32.mrf.mxu0
  %v958 = vadd.f32 %v181, %v957
  %v959 = vpop.f32.mrf.mxu0
  %v960 = vadd.f32 %v181, %v959
  %961 = vmatmul.bf16.gmra.mxu0 %v554
  %v962 = vpop.f32.mrf.mxu0
  %v963 = vadd.f32 %v181, %v962
  %v964 = vpop.f32.mrf.mxu0
  %v965 = vadd.f32 %v181, %v964
  %966 = vmatmul.bf16.gmra.mxu0 %v557
  %v967 = vpop.f32.mrf.mxu0
  %v968 = vadd.f32 %v181, %v967
  %v969 = vpop.f32.mrf.mxu0
  %v970 = vadd.f32 %v181, %v969
  %971 = vmatmul.bf16.gmra.mxu0 %v560
  %v972 = vpop.f32.mrf.mxu0
  %v973 = vadd.f32 %v181, %v972
  %v974 = vpop.f32.mrf.mxu0
  %v975 = vadd.f32 %v181, %v974
  %976 = vmatmul.bf16.gmra.mxu0 %v563
  %v977 = vpop.f32.mrf.mxu0
  %v978 = vadd.f32 %v181, %v977
  %v979 = vpop.f32.mrf.mxu0
  %v980 = vadd.f32 %v181, %v979
  %981 = vmatmul.bf16.gmra.mxu0 %v566
  %v982 = vpop.f32.mrf.mxu0
  %v983 = vadd.f32 %v181, %v982
  %v984 = vpop.f32.mrf.mxu0
  %v985 = vadd.f32 %v181, %v984
  %986 = vmatmul.bf16.gmra.mxu0 %v569
  %v987 = vpop.f32.mrf.mxu0
  %v988 = vadd.f32 %v181, %v987
  %v989 = vpop.f32.mrf.mxu0
  %v990 = vadd.f32 %v181, %v989
  %991 = vmatmul.bf16.gmra.mxu0 %v572
  %v992 = vpop.f32.mrf.mxu0
  %v993 = vadd.f32 %v181, %v992
  %v994 = vpop.f32.mrf.mxu0
  %v995 = vadd.f32 %v181, %v994
  %996 = vmatmul.bf16.gmra.mxu0 %v575
  %v997 = vpop.f32.mrf.mxu0
  %v998 = vadd.f32 %v181, %v997
  %v999 = vpop.f32.mrf.mxu0
  %v1000 = vadd.f32 %v181, %v999
  %1001 = vmatmul.bf16.gmra.mxu0 %v578
  %v1002 = vpop.f32.mrf.mxu0
  %v1003 = vadd.f32 %v181, %v1002
  %v1004 = vpop.f32.mrf.mxu0
  %v1005 = vadd.f32 %v181, %v1004
  %1006 = vmatmul.bf16.gmra.mxu0 %v581
  %v1007 = vpop.f32.mrf.mxu0
  %v1008 = vadd.f32 %v181, %v1007
  %v1009 = vpop.f32.mrf.mxu0
  %v1010 = vadd.f32 %v181, %v1009
  %1011 = vmatmul.bf16.gmra.mxu0 %v584
  %v1012 = vpop.f32.mrf.mxu0
  %v1013 = vadd.f32 %v181, %v1012
  %v1014 = vpop.f32.mrf.mxu0
  %v1015 = vadd.f32 %v181, %v1014
  %1016 = vmatmul.bf16.gmra.mxu0 %v587
  %v1017 = vpop.f32.mrf.mxu0
  %v1018 = vadd.f32 %v181, %v1017
  %v1019 = vpop.f32.mrf.mxu0
  %v1020 = vadd.f32 %v181, %v1019
  %1021 = vmatmul.bf16.gmra.mxu0 %v590
  %v1022 = vpop.f32.mrf.mxu0
  %v1023 = vadd.f32 %v181, %v1022
  %v1024 = vpop.f32.mrf.mxu0
  %v1025 = vadd.f32 %v181, %v1024
  %1026 = vmatmul.bf16.gmra.mxu0 %v593
  %v1027 = vpop.f32.mrf.mxu0
  %v1028 = vadd.f32 %v181, %v1027
  %v1029 = vpop.f32.mrf.mxu0
  %v1030 = vadd.f32 %v181, %v1029
  %1031 = vmatmul.bf16.gmra.mxu0 %v596
  %v1032 = vpop.f32.mrf.mxu0
  %v1033 = vadd.f32 %v181, %v1032
  %v1034 = vpop.f32.mrf.mxu0
  %v1035 = vadd.f32 %v181, %v1034
  %1036 = vdwg.mxu0
  %1037 = vmatpush.bf16.msra.mxu0 %v750
  %1038 = vmatpush.bf16.msra.mxu0 %v749
  %1039 = vmatpush.bf16.msra.mxu0 %v748
  %1040 = vmatpush.bf16.msra.mxu0 %v747
  %1041 = vmatpush.bf16.msra.mxu0 %v746
  %1042 = vmatpush.bf16.msra.mxu0 %v745
  %1043 = vmatpush.bf16.msra.mxu0 %v744
  %1044 = vmatpush.bf16.msra.mxu0 %v743
  %1045 = vmatmul.bf16.gmra.mxu0 %v504
  %v1046 = vpop.f32.mrf.mxu0
  %v1047 = vadd.f32 %v878, %v1046
  %v1048 = vpop.f32.mrf.mxu0
  %v1049 = vadd.f32 %v880, %v1048
  %1050 = vmatmul.bf16.gmra.mxu0 %v507
  %v1051 = vpop.f32.mrf.mxu0
  %v1052 = vadd.f32 %v883, %v1051
  %v1053 = vpop.f32.mrf.mxu0
  %v1054 = vadd.f32 %v885, %v1053
  %1055 = vmatmul.bf16.gmra.mxu0 %v510
  %v1056 = vpop.f32.mrf.mxu0
  %v1057 = vadd.f32 %v888, %v1056
  %v1058 = vpop.f32.mrf.mxu0
  %v1059 = vadd.f32 %v890, %v1058
  %1060 = vmatmul.bf16.gmra.mxu0 %v513
  %v1061 = vpop.f32.mrf.mxu0
  %v1062 = vadd.f32 %v893, %v1061
  %v1063 = vpop.f32.mrf.mxu0
  %v1064 = vadd.f32 %v895, %v1063
  %1065 = vmatmul.bf16.gmra.mxu0 %v516
  %v1066 = vpop.f32.mrf.mxu0
  %v1067 = vadd.f32 %v898, %v1066
  %v1068 = vpop.f32.mrf.mxu0
  %v1069 = vadd.f32 %v900, %v1068
  %1070 = vmatmul.bf16.gmra.mxu0 %v519
  %v1071 = vpop.f32.mrf.mxu0
  %v1072 = vadd.f32 %v903, %v1071
  %v1073 = vpop.f32.mrf.mxu0
  %v1074 = vadd.f32 %v905, %v1073
  %1075 = vmatmul.bf16.gmra.mxu0 %v522
  %v1076 = vpop.f32.mrf.mxu0
  %v1077 = vadd.f32 %v908, %v1076
  %v1078 = vpop.f32.mrf.mxu0
  %v1079 = vadd.f32 %v910, %v1078
  %1080 = vmatmul.bf16.gmra.mxu0 %v525
  %v1081 = vpop.f32.mrf.mxu0
  %v1082 = vadd.f32 %v913, %v1081
  %v1083 = vpop.f32.mrf.mxu0
  %v1084 = vadd.f32 %v915, %v1083
  %1085 = vmatmul.bf16.gmra.mxu0 %v528
  %v1086 = vpop.f32.mrf.mxu0
  %v1087 = vadd.f32 %v918, %v1086
  %v1088 = vpop.f32.mrf.mxu0
  %v1089 = vadd.f32 %v920, %v1088
  %1090 = vmatmul.bf16.gmra.mxu0 %v531
  %v1091 = vpop.f32.mrf.mxu0
  %v1092 = vadd.f32 %v923, %v1091
  %v1093 = vpop.f32.mrf.mxu0
  %v1094 = vadd.f32 %v925, %v1093
  %1095 = vmatmul.bf16.gmra.mxu0 %v534
  %v1096 = vpop.f32.mrf.mxu0
  %v1097 = vadd.f32 %v928, %v1096
  %v1098 = vpop.f32.mrf.mxu0
  %v1099 = vadd.f32 %v930, %v1098
  %1100 = vmatmul.bf16.gmra.mxu0 %v537
  %v1101 = vpop.f32.mrf.mxu0
  %v1102 = vadd.f32 %v933, %v1101
  %v1103 = vpop.f32.mrf.mxu0
  %v1104 = vadd.f32 %v935, %v1103
  %1105 = vmatmul.bf16.gmra.mxu0 %v540
  %v1106 = vpop.f32.mrf.mxu0
  %v1107 = vadd.f32 %v938, %v1106
  %v1108 = vpop.f32.mrf.mxu0
  %v1109 = vadd.f32 %v940, %v1108
  %1110 = vmatmul.bf16.gmra.mxu0 %v543
  %v1111 = vpop.f32.mrf.mxu0
  %v1112 = vadd.f32 %v943, %v1111
  %v1113 = vpop.f32.mrf.mxu0
  %v1114 = vadd.f32 %v945, %v1113
  %1115 = vmatmul.bf16.gmra.mxu0 %v546
  %v1116 = vpop.f32.mrf.mxu0
  %v1117 = vadd.f32 %v948, %v1116
  %v1118 = vpop.f32.mrf.mxu0
  %v1119 = vadd.f32 %v950, %v1118
  %1120 = vmatmul.bf16.gmra.mxu0 %v549
  %v1121 = vpop.f32.mrf.mxu0
  %v1122 = vadd.f32 %v953, %v1121
  %v1123 = vpop.f32.mrf.mxu0
  %v1124 = vadd.f32 %v955, %v1123
  %1125 = vmatmul.bf16.gmra.mxu0 %v552
  %v1126 = vpop.f32.mrf.mxu0
  %v1127 = vadd.f32 %v958, %v1126
  %v1128 = vpop.f32.mrf.mxu0
  %v1129 = vadd.f32 %v960, %v1128
  %1130 = vmatmul.bf16.gmra.mxu0 %v555
  %v1131 = vpop.f32.mrf.mxu0
  %v1132 = vadd.f32 %v963, %v1131
  %v1133 = vpop.f32.mrf.mxu0
  %v1134 = vadd.f32 %v965, %v1133
  %1135 = vmatmul.bf16.gmra.mxu0 %v558
  %v1136 = vpop.f32.mrf.mxu0
  %v1137 = vadd.f32 %v968, %v1136
  %v1138 = vpop.f32.mrf.mxu0
  %v1139 = vadd.f32 %v970, %v1138
  %1140 = vmatmul.bf16.gmra.mxu0 %v561
  %v1141 = vpop.f32.mrf.mxu0
  %v1142 = vadd.f32 %v973, %v1141
  %v1143 = vpop.f32.mrf.mxu0
  %v1144 = vadd.f32 %v975, %v1143
  %1145 = vmatmul.bf16.gmra.mxu0 %v564
  %v1146 = vpop.f32.mrf.mxu0
  %v1147 = vadd.f32 %v978, %v1146
  %v1148 = vpop.f32.mrf.mxu0
  %v1149 = vadd.f32 %v980, %v1148
  %1150 = vmatmul.bf16.gmra.mxu0 %v567
  %v1151 = vpop.f32.mrf.mxu0
  %v1152 = vadd.f32 %v983, %v1151
  %v1153 = vpop.f32.mrf.mxu0
  %v1154 = vadd.f32 %v985, %v1153
  %1155 = vmatmul.bf16.gmra.mxu0 %v570
  %v1156 = vpop.f32.mrf.mxu0
  %v1157 = vadd.f32 %v988, %v1156
  %v1158 = vpop.f32.mrf.mxu0
  %v1159 = vadd.f32 %v990, %v1158
  %1160 = vmatmul.bf16.gmra.mxu0 %v573
  %v1161 = vpop.f32.mrf.mxu0
  %v1162 = vadd.f32 %v993, %v1161
  %v1163 = vpop.f32.mrf.mxu0
  %v1164 = vadd.f32 %v995, %v1163
  %1165 = vmatmul.bf16.gmra.mxu0 %v576
  %v1166 = vpop.f32.mrf.mxu0
  %v1167 = vadd.f32 %v998, %v1166
  %v1168 = vpop.f32.mrf.mxu0
  %v1169 = vadd.f32 %v1000, %v1168
  %1170 = vmatmul.bf16.gmra.mxu0 %v579
  %v1171 = vpop.f32.mrf.mxu0
  %v1172 = vadd.f32 %v1003, %v1171
  %v1173 = vpop.f32.mrf.mxu0
  %v1174 = vadd.f32 %v1005, %v1173
  %1175 = vmatmul.bf16.gmra.mxu0 %v582
  %v1176 = vpop.f32.mrf.mxu0
  %v1177 = vadd.f32 %v1008, %v1176
  %v1178 = vpop.f32.mrf.mxu0
  %v1179 = vadd.f32 %v1010, %v1178
  %1180 = vmatmul.bf16.gmra.mxu0 %v585
  %v1181 = vpop.f32.mrf.mxu0
  %v1182 = vadd.f32 %v1013, %v1181
  %v1183 = vpop.f32.mrf.mxu0
  %v1184 = vadd.f32 %v1015, %v1183
  %1185 = vmatmul.bf16.gmra.mxu0 %v588
  %v1186 = vpop.f32.mrf.mxu0
  %v1187 = vadd.f32 %v1018, %v1186
  %v1188 = vpop.f32.mrf.mxu0
  %v1189 = vadd.f32 %v1020, %v1188
  %1190 = vmatmul.bf16.gmra.mxu0 %v591
  %v1191 = vpop.f32.mrf.mxu0
  %v1192 = vadd.f32 %v1023, %v1191
  %v1193 = vpop.f32.mrf.mxu0
  %v1194 = vadd.f32 %v1025, %v1193
  %1195 = vmatmul.bf16.gmra.mxu0 %v594
  %v1196 = vpop.f32.mrf.mxu0
  %v1197 = vadd.f32 %v1028, %v1196
  %v1198 = vpop.f32.mrf.mxu0
  %v1199 = vadd.f32 %v1030, %v1198
  %1200 = vmatmul.bf16.gmra.mxu0 %v597
  %v1201 = vpop.f32.mrf.mxu0
  %v1202 = vadd.f32 %v1033, %v1201
  %v1203 = vpop.f32.mrf.mxu0
  %v1204 = vadd.f32 %v1035, %v1203
  %1205 = vdwg.mxu0
  %1206 = vmatpush.bf16.msra.mxu0 0
  %1207 = vmatpush.bf16.msra.mxu0 0
  %1208 = vmatpush.bf16.msra.mxu0 0
  %1209 = vmatpush.bf16.msra.mxu0 0
  %1210 = vmatpush.bf16.msra.mxu0 0
  %1211 = vmatpush.bf16.msra.mxu0 0
  %1212 = vmatpush.bf16.msra.mxu0 %v752
  %1213 = vmatpush.bf16.msra.mxu0 %v751
  %1214 = vmatmul.bf16.gmra.mxu0 %v773
  %v1215 = vpop.f32.mrf.mxu0
  %v1216 = vadd.f32 %v1047, %v1215
  %v1217 = vpop.f32.mrf.mxu0
  %v1218 = vadd.f32 %v1049, %v1217
  %1219 = vmatmul.bf16.gmra.mxu0 %v776
  %v1220 = vpop.f32.mrf.mxu0
  %v1221 = vadd.f32 %v1052, %v1220
  %v1222 = vpop.f32.mrf.mxu0
  %v1223 = vadd.f32 %v1054, %v1222
  %1224 = vmatmul.bf16.gmra.mxu0 %v779
  %v1225 = vpop.f32.mrf.mxu0
  %v1226 = vadd.f32 %v1057, %v1225
  %v1227 = vpop.f32.mrf.mxu0
  %v1228 = vadd.f32 %v1059, %v1227
  %1229 = vmatmul.bf16.gmra.mxu0 %v782
  %v1230 = vpop.f32.mrf.mxu0
  %v1231 = vadd.f32 %v1062, %v1230
  %v1232 = vpop.f32.mrf.mxu0
  %v1233 = vadd.f32 %v1064, %v1232
  %1234 = vmatmul.bf16.gmra.mxu0 %v785
  %v1235 = vpop.f32.mrf.mxu0
  %v1236 = vadd.f32 %v1067, %v1235
  %v1237 = vpop.f32.mrf.mxu0
  %v1238 = vadd.f32 %v1069, %v1237
  %1239 = vmatmul.bf16.gmra.mxu0 %v788
  %v1240 = vpop.f32.mrf.mxu0
  %v1241 = vadd.f32 %v1072, %v1240
  %v1242 = vpop.f32.mrf.mxu0
  %v1243 = vadd.f32 %v1074, %v1242
  %1244 = vmatmul.bf16.gmra.mxu0 %v791
  %v1245 = vpop.f32.mrf.mxu0
  %v1246 = vadd.f32 %v1077, %v1245
  %v1247 = vpop.f32.mrf.mxu0
  %v1248 = vadd.f32 %v1079, %v1247
  %1249 = vmatmul.bf16.gmra.mxu0 %v794
  %v1250 = vpop.f32.mrf.mxu0
  %v1251 = vadd.f32 %v1082, %v1250
  %v1252 = vpop.f32.mrf.mxu0
  %v1253 = vadd.f32 %v1084, %v1252
  %1254 = vmatmul.bf16.gmra.mxu0 %v797
  %v1255 = vpop.f32.mrf.mxu0
  %v1256 = vadd.f32 %v1087, %v1255
  %v1257 = vpop.f32.mrf.mxu0
  %v1258 = vadd.f32 %v1089, %v1257
  %1259 = vmatmul.bf16.gmra.mxu0 %v800
  %v1260 = vpop.f32.mrf.mxu0
  %v1261 = vadd.f32 %v1092, %v1260
  %v1262 = vpop.f32.mrf.mxu0
  %v1263 = vadd.f32 %v1094, %v1262
  %1264 = vmatmul.bf16.gmra.mxu0 %v803
  %v1265 = vpop.f32.mrf.mxu0
  %v1266 = vadd.f32 %v1097, %v1265
  %v1267 = vpop.f32.mrf.mxu0
  %v1268 = vadd.f32 %v1099, %v1267
  %1269 = vmatmul.bf16.gmra.mxu0 %v806
  %v1270 = vpop.f32.mrf.mxu0
  %v1271 = vadd.f32 %v1102, %v1270
  %v1272 = vpop.f32.mrf.mxu0
  %v1273 = vadd.f32 %v1104, %v1272
  %1274 = vmatmul.bf16.gmra.mxu0 %v809
  %v1275 = vpop.f32.mrf.mxu0
  %v1276 = vadd.f32 %v1107, %v1275
  %v1277 = vpop.f32.mrf.mxu0
  %v1278 = vadd.f32 %v1109, %v1277
  %1279 = vmatmul.bf16.gmra.mxu0 %v812
  %v1280 = vpop.f32.mrf.mxu0
  %v1281 = vadd.f32 %v1112, %v1280
  %v1282 = vpop.f32.mrf.mxu0
  %v1283 = vadd.f32 %v1114, %v1282
  %1284 = vmatmul.bf16.gmra.mxu0 %v815
  %v1285 = vpop.f32.mrf.mxu0
  %v1286 = vadd.f32 %v1117, %v1285
  %v1287 = vpop.f32.mrf.mxu0
  %v1288 = vadd.f32 %v1119, %v1287
  %1289 = vmatmul.bf16.gmra.mxu0 %v818
  %v1290 = vpop.f32.mrf.mxu0
  %v1291 = vadd.f32 %v1122, %v1290
  %v1292 = vpop.f32.mrf.mxu0
  %v1293 = vadd.f32 %v1124, %v1292
  %1294 = vmatmul.bf16.gmra.mxu0 %v821
  %v1295 = vpop.f32.mrf.mxu0
  %v1296 = vadd.f32 %v1127, %v1295
  %v1297 = vpop.f32.mrf.mxu0
  %v1298 = vadd.f32 %v1129, %v1297
  %1299 = vmatmul.bf16.gmra.mxu0 %v824
  %v1300 = vpop.f32.mrf.mxu0
  %v1301 = vadd.f32 %v1132, %v1300
  %v1302 = vpop.f32.mrf.mxu0
  %v1303 = vadd.f32 %v1134, %v1302
  %1304 = vmatmul.bf16.gmra.mxu0 %v827
  %v1305 = vpop.f32.mrf.mxu0
  %v1306 = vadd.f32 %v1137, %v1305
  %v1307 = vpop.f32.mrf.mxu0
  %v1308 = vadd.f32 %v1139, %v1307
  %1309 = vmatmul.bf16.gmra.mxu0 %v830
  %v1310 = vpop.f32.mrf.mxu0
  %v1311 = vadd.f32 %v1142, %v1310
  %v1312 = vpop.f32.mrf.mxu0
  %v1313 = vadd.f32 %v1144, %v1312
  %1314 = vmatmul.bf16.gmra.mxu0 %v833
  %v1315 = vpop.f32.mrf.mxu0
  %v1316 = vadd.f32 %v1147, %v1315
  %v1317 = vpop.f32.mrf.mxu0
  %v1318 = vadd.f32 %v1149, %v1317
  %1319 = vmatmul.bf16.gmra.mxu0 %v836
  %v1320 = vpop.f32.mrf.mxu0
  %v1321 = vadd.f32 %v1152, %v1320
  %v1322 = vpop.f32.mrf.mxu0
  %v1323 = vadd.f32 %v1154, %v1322
  %1324 = vmatmul.bf16.gmra.mxu0 %v839
  %v1325 = vpop.f32.mrf.mxu0
  %v1326 = vadd.f32 %v1157, %v1325
  %v1327 = vpop.f32.mrf.mxu0
  %v1328 = vadd.f32 %v1159, %v1327
  %1329 = vmatmul.bf16.gmra.mxu0 %v842
  %v1330 = vpop.f32.mrf.mxu0
  %v1331 = vadd.f32 %v1162, %v1330
  %v1332 = vpop.f32.mrf.mxu0
  %v1333 = vadd.f32 %v1164, %v1332
  %1334 = vmatmul.bf16.gmra.mxu0 %v845
  %v1335 = vpop.f32.mrf.mxu0
  %v1336 = vadd.f32 %v1167, %v1335
  %v1337 = vpop.f32.mrf.mxu0
  %v1338 = vadd.f32 %v1169, %v1337
  %1339 = vmatmul.bf16.gmra.mxu0 %v848
  %v1340 = vpop.f32.mrf.mxu0
  %v1341 = vadd.f32 %v1172, %v1340
  %v1342 = vpop.f32.mrf.mxu0
  %v1343 = vadd.f32 %v1174, %v1342
  %1344 = vmatmul.bf16.gmra.mxu0 %v851
  %v1345 = vpop.f32.mrf.mxu0
  %v1346 = vadd.f32 %v1177, %v1345
  %v1347 = vpop.f32.mrf.mxu0
  %v1348 = vadd.f32 %v1179, %v1347
  %1349 = vmatmul.bf16.gmra.mxu0 %v854
  %v1350 = vpop.f32.mrf.mxu0
  %v1351 = vadd.f32 %v1182, %v1350
  %v1352 = vpop.f32.mrf.mxu0
  %v1353 = vadd.f32 %v1184, %v1352
  %1354 = vmatmul.bf16.gmra.mxu0 %v857
  %v1355 = vpop.f32.mrf.mxu0
  %v1356 = vadd.f32 %v1187, %v1355
  %v1357 = vpop.f32.mrf.mxu0
  %v1358 = vadd.f32 %v1189, %v1357
  %1359 = vmatmul.bf16.gmra.mxu0 %v860
  %v1360 = vpop.f32.mrf.mxu0
  %v1361 = vadd.f32 %v1192, %v1360
  %v1362 = vpop.f32.mrf.mxu0
  %v1363 = vadd.f32 %v1194, %v1362
  %1364 = vmatmul.bf16.gmra.mxu0 %v863
  %v1365 = vpop.f32.mrf.mxu0
  %v1366 = vadd.f32 %v1197, %v1365
  %v1367 = vpop.f32.mrf.mxu0
  %v1368 = vadd.f32 %v1199, %v1367
  %1369 = vmatmul.bf16.gmra.mxu0 %v866
  %v1370 = vpop.f32.mrf.mxu0
  %v1371 = vadd.f32 %v1202, %v1370
  %v1372 = vpop.f32.mrf.mxu0
  %v1373 = vadd.f32 %v1204, %v1372
  %1374 = vdwg.mxu0
  %v1375 = vmax.f32 %v1216, 0.0
  %v1376 = vmax.f32 %v1218, 0.0
  %v1377 = vmax.f32 %v1221, 0.0
  %v1378 = vmax.f32 %v1223, 0.0
  %v1379 = vmax.f32 %v1226, 0.0
  %v1380 = vmax.f32 %v1228, 0.0
  %v1381 = vmax.f32 %v1231, 0.0
  %v1382 = vmax.f32 %v1233, 0.0
  %v1383 = vmax.f32 %v1236, 0.0
  %v1384 = vmax.f32 %v1238, 0.0
  %v1385 = vmax.f32 %v1241, 0.0
  %v1386 = vmax.f32 %v1243, 0.0
  %v1387 = vmax.f32 %v1246, 0.0
  %v1388 = vmax.f32 %v1248, 0.0
  %v1389 = vmax.f32 %v1251, 0.0
  %v1390 = vmax.f32 %v1253, 0.0
  %v1391 = vmax.f32 %v1256, 0.0
  %v1392 = vmax.f32 %v1258, 0.0
  %v1393 = vmax.f32 %v1261, 0.0
  %v1394 = vmax.f32 %v1263, 0.0
  %v1395 = vmax.f32 %v1266, 0.0
  %v1396 = vmax.f32 %v1268, 0.0
  %v1397 = vmax.f32 %v1271, 0.0
  %v1398 = vmax.f32 %v1273, 0.0
  %v1399 = vmax.f32 %v1276, 0.0
  %v1400 = vmax.f32 %v1278, 0.0
  %v1401 = vmax.f32 %v1281, 0.0
  %v1402 = vmax.f32 %v1283, 0.0
  %v1403 = vmax.f32 %v1286, 0.0
  %v1404 = vmax.f32 %v1288, 0.0
  %v1405 = vmax.f32 %v1291, 0.0
  %v1406 = vmax.f32 %v1293, 0.0
  %v1407 = vmax.f32 %v1296, 0.0
  %v1408 = vmax.f32 %v1298, 0.0
  %v1409 = vmax.f32 %v1301, 0.0
  %v1410 = vmax.f32 %v1303, 0.0
  %v1411 = vmax.f32 %v1306, 0.0
  %v1412 = vmax.f32 %v1308, 0.0
  %v1413 = vmax.f32 %v1311, 0.0
  %v1414 = vmax.f32 %v1313, 0.0
  %v1415 = vmax.f32 %v1316, 0.0
  %v1416 = vmax.f32 %v1318, 0.0
  %v1417 = vmax.f32 %v1321, 0.0
  %v1418 = vmax.f32 %v1323, 0.0
  %v1419 = vmax.f32 %v1326, 0.0
  %v1420 = vmax.f32 %v1328, 0.0
  %v1421 = vmax.f32 %v1331, 0.0
  %v1422 = vmax.f32 %v1333, 0.0
  %v1423 = vmax.f32 %v1336, 0.0
  %v1424 = vmax.f32 %v1338, 0.0
  %v1425 = vmax.f32 %v1341, 0.0
  %v1426 = vmax.f32 %v1343, 0.0
  %v1427 = vmax.f32 %v1346, 0.0
  %v1428 = vmax.f32 %v1348, 0.0
  %v1429 = vmax.f32 %v1351, 0.0
  %v1430 = vmax.f32 %v1353, 0.0
  %v1431 = vmax.f32 %v1356, 0.0
  %v1432 = vmax.f32 %v1358, 0.0
  %v1433 = vmax.f32 %v1361, 0.0
  %v1434 = vmax.f32 %v1363, 0.0
  %v1435 = vmax.f32 %v1366, 0.0
  %v1436 = vmax.f32 %v1368, 0.0
  %v1437 = vmax.f32 %v1371, 0.0
  %v1438 = vmax.f32 %v1373, 0.0
  %v1439 = vpack.c.bf16 %v1375, %v1375
  %v1440 = vpack.c.bf16 %v1376, %v1376
  %v1441 = vpack.c.bf16 %v1377, %v1377
  %v1442 = vpack.c.bf16 %v1378, %v1378
  %v1443 = vpack.c.bf16 %v1379, %v1379
  %v1444 = vpack.c.bf16 %v1380, %v1380
  %v1445 = vpack.c.bf16 %v1381, %v1381
  %v1446 = vpack.c.bf16 %v1382, %v1382
  %v1447 = vpack.c.bf16 %v1383, %v1383
  %v1448 = vpack.c.bf16 %v1384, %v1384
  %v1449 = vpack.c.bf16 %v1385, %v1385
  %v1450 = vpack.c.bf16 %v1386, %v1386
  %v1451 = vpack.c.bf16 %v1387, %v1387
  %v1452 = vpack.c.bf16 %v1388, %v1388
  %v1453 = vpack.c.bf16 %v1389, %v1389
  %v1454 = vpack.c.bf16 %v1390, %v1390
  %v1455 = vpack.c.bf16 %v1391, %v1391
  %v1456 = vpack.c.bf16 %v1392, %v1392
  %v1457 = vpack.c.bf16 %v1393, %v1393
  %v1458 = vpack.c.bf16 %v1394, %v1394
  %v1459 = vpack.c.bf16 %v1395, %v1395
  %v1460 = vpack.c.bf16 %v1396, %v1396
  %v1461 = vpack.c.bf16 %v1397, %v1397
  %v1462 = vpack.c.bf16 %v1398, %v1398
  %v1463 = vpack.c.bf16 %v1399, %v1399
  %v1464 = vpack.c.bf16 %v1400, %v1400
  %v1465 = vpack.c.bf16 %v1401, %v1401
  %v1466 = vpack.c.bf16 %v1402, %v1402
  %v1467 = vpack.c.bf16 %v1403, %v1403
  %v1468 = vpack.c.bf16 %v1404, %v1404
  %v1469 = vpack.c.bf16 %v1405, %v1405
  %v1470 = vpack.c.bf16 %v1406, %v1406
  %v1471 = vpack.c.bf16 %v1407, %v1407
  %v1472 = vpack.c.bf16 %v1408, %v1408
  %v1473 = vpack.c.bf16 %v1409, %v1409
  %v1474 = vpack.c.bf16 %v1410, %v1410
  %v1475 = vpack.c.bf16 %v1411, %v1411
  %v1476 = vpack.c.bf16 %v1412, %v1412
  %v1477 = vpack.c.bf16 %v1413, %v1413
  %v1478 = vpack.c.bf16 %v1414, %v1414
  %v1479 = vpack.c.bf16 %v1415, %v1415
  %v1480 = vpack.c.bf16 %v1416, %v1416
  %v1481 = vpack.c.bf16 %v1417, %v1417
  %v1482 = vpack.c.bf16 %v1418, %v1418
  %v1483 = vpack.c.bf16 %v1419, %v1419
  %v1484 = vpack.c.bf16 %v1420, %v1420
  %v1485 = vpack.c.bf16 %v1421, %v1421
  %v1486 = vpack.c.bf16 %v1422, %v1422
  %v1487 = vpack.c.bf16 %v1423, %v1423
  %v1488 = vpack.c.bf16 %v1424, %v1424
  %v1489 = vpack.c.bf16 %v1425, %v1425
  %v1490 = vpack.c.bf16 %v1426, %v1426
  %v1491 = vpack.c.bf16 %v1427, %v1427
  %v1492 = vpack.c.bf16 %v1428, %v1428
  %v1493 = vpack.c.bf16 %v1429, %v1429
  %v1494 = vpack.c.bf16 %v1430, %v1430
  %v1495 = vpack.c.bf16 %v1431, %v1431
  %v1496 = vpack.c.bf16 %v1432, %v1432
  %v1497 = vpack.c.bf16 %v1433, %v1433
  %v1498 = vpack.c.bf16 %v1434, %v1434
  %v1499 = vpack.c.bf16 %v1435, %v1435
  %v1500 = vpack.c.bf16 %v1436, %v1436
  %v1501 = vpack.c.bf16 %v1437, %v1437
  %v1502 = vpack.c.bf16 %v1438, %v1438
  %1503 = vst [vmem:[%s3] sm:$0xf] %v1439
  %1504 = vst [vmem:[%s3 + $0x4] sm:$0xf] %v1440
  %1505 = vst [vmem:[%s3 + $0x8] sm:$0xf] %v1441
  %1506 = vst [vmem:[%s3 + $0xc] sm:$0xf] %v1442
  %1507 = vst [vmem:[%s3 + $0x10] sm:$0xf] %v1443
  %1508 = vst [vmem:[%s3 + $0x14] sm:$0xf] %v1444
  %1509 = vst [vmem:[%s3 + $0x18] sm:$0xf] %v1445
  %1510 = vst [vmem:[%s3 + $0x1c] sm:$0xf] %v1446
  %1511 = vst [vmem:[%s3 + $0x20] sm:$0xf] %v1447
  %1512 = vst [vmem:[%s3 + $0x24] sm:$0xf] %v1448
  %1513 = vst [vmem:[%s3 + $0x28] sm:$0xf] %v1449
  %1514 = vst [vmem:[%s3 + $0x2c] sm:$0xf] %v1450
  %1515 = vst [vmem:[%s3 + $0x30] sm:$0xf] %v1451
  %1516 = vst [vmem:[%s3 + $0x34] sm:$0xf] %v1452
  %1517 = vst [vmem:[%s3 + $0x38] sm:$0xf] %v1453
  %1518 = vst [vmem:[%s3 + $0x3c] sm:$0xf] %v1454
  %1519 = vst [vmem:[%s3 + $0x40] sm:$0xf] %v1455
  %1520 = vst [vmem:[%s3 + $0x44] sm:$0xf] %v1456
  %1521 = vst [vmem:[%s3 + $0x48] sm:$0xf] %v1457
  %1522 = vst [vmem:[%s3 + $0x4c] sm:$0xf] %v1458
  %1523 = vst [vmem:[%s3 + $0x50] sm:$0xf] %v1459
  %1524 = vst [vmem:[%s3 + $0x54] sm:$0xf] %v1460
  %1525 = vst [vmem:[%s3 + $0x58] sm:$0xf] %v1461
  %1526 = vst [vmem:[%s3 + $0x5c] sm:$0xf] %v1462
  %1527 = vst [vmem:[%s3 + $0x60] sm:$0xf] %v1463
  %1528 = vst [vmem:[%s3 + $0x64] sm:$0xf] %v1464
  %1529 = vst [vmem:[%s3 + $0x68] sm:$0xf] %v1465
  %1530 = vst [vmem:[%s3 + $0x6c] sm:$0xf] %v1466
  %1531 = vst [vmem:[%s3 + $0x70] sm:$0xf] %v1467
  %1532 = vst [vmem:[%s3 + $0x74] sm:$0xf] %v1468
  %1533 = vst [vmem:[%s3 + $0x78] sm:$0xf] %v1469
  %1534 = vst [vmem:[%s3 + $0x7c] sm:$0xf] %v1470
  %1535 = vst [vmem:[%s3 + $0x80] sm:$0xf] %v1471
  %1536 = vst [vmem:[%s3 + $0x84] sm:$0xf] %v1472
  %1537 = vst [vmem:[%s3 + $0x88] sm:$0xf] %v1473
  %1538 = vst [vmem:[%s3 + $0x8c] sm:$0xf] %v1474
  %1539 = vst [vmem:[%s3 + $0x90] sm:$0xf] %v1475
  %1540 = vst [vmem:[%s3 + $0x94] sm:$0xf] %v1476
  %1541 = vst [vmem:[%s3 + $0x98] sm:$0xf] %v1477
  %1542 = vst [vmem:[%s3 + $0x9c] sm:$0xf] %v1478
  %1543 = vst [vmem:[%s3 + $0xa0] sm:$0xf] %v1479
  %1544 = vst [vmem:[%s3 + $0xa4] sm:$0xf] %v1480
  %1545 = vst [vmem:[%s3 + $0xa8] sm:$0xf] %v1481
  %1546 = vst [vmem:[%s3 + $0xac] sm:$0xf] %v1482
  %1547 = vst [vmem:[%s3 + $0xb0] sm:$0xf] %v1483
  %1548 = vst [vmem:[%s3 + $0xb4] sm:$0xf] %v1484
  %1549 = vst [vmem:[%s3 + $0xb8] sm:$0xf] %v1485
  %1550 = vst [vmem:[%s3 + $0xbc] sm:$0xf] %v1486
  %1551 = vst [vmem:[%s3 + $0xc0] sm:$0xf] %v1487
  %1552 = vst [vmem:[%s3 + $0xc4] sm:$0xf] %v1488
  %1553 = vst [vmem:[%s3 + $0xc8] sm:$0xf] %v1489
  %1554 = vst [vmem:[%s3 + $0xcc] sm:$0xf] %v1490
  %1555 = vst [vmem:[%s3 + $0xd0] sm:$0xf] %v1491
  %1556 = vst [vmem:[%s3 + $0xd4] sm:$0xf] %v1492
  %1557 = vst [vmem:[%s3 + $0xd8] sm:$0xf] %v1493
  %1558 = vst [vmem:[%s3 + $0xdc] sm:$0xf] %v1494
  %1559 = vst [vmem:[%s3 + $0xe0] sm:$0xf] %v1495
  %1560 = vst [vmem:[%s3 + $0xe4] sm:$0xf] %v1496
  %1561 = vst [vmem:[%s3 + $0xe8] sm:$0xf] %v1497
  %1562 = vst [vmem:[%s3 + $0xec] sm:$0xf] %v1498
  %1563 = vst [vmem:[%s3 + $0xf0] sm:$0xf] %v1499
  %1564 = vst [vmem:[%s3 + $0xf4] sm:$0xf] %v1500
  %1565 = vst [vmem:[%s3 + $0xf8] sm:$0xf] %v1501
  %1566 = vst [vmem:[%s3 + $0xfc] sm:$0xf] %v1502
  // Predicated region
  $region14: #{forward.16} parent=0 // pred_check
    _
  $region15: #{forward.16} parent=0 // pred_check_branch
    %1568 = sbr.rel (0) target = $region17
  $region16: #{forward.16} parent=0 // pred_region
    _
  $region17: #{forward.16} parent=0 // pred_fallthru
    _
  // Predicated region
  $region18: #{forward.16} parent=0 // pred_check
    _
  $region19: #{forward.16} parent=0 // pred_check_branch
    %1570 = sbr.rel (0) target = $region21
  $region20: #{forward.16} parent=0 // pred_region
    _
  $region21: #{forward.16} parent=0 // pred_fallthru
    _

// kernel: forward.17
$region0: #{forward.17}
  #allocation0 [shape = 'u32[]', space=smem, size = 0x4, offset = 0x4, fixed_abs, tag = 'smem constant byte address 0x4 - core index']
  #allocation1 [shape = 'u32[72,128]{1,0:T(1,128)}', space=vmem, size = 0x9000, scoped, tag = 'internal scratch']
  %s0 = inlined_call_operand.vmem [shape: bf16[2048,288], index: 0, kind: input, shape index: {}]
  %s1 = inlined_call_operand.vmem [shape: bf16[288,12], index: 1, kind: input, shape index: {}]
  %s2 = inlined_call_operand.vmem [shape: f32[1,12], index: 2, kind: input, shape index: {}]
  %s3 = inlined_call_operand.vmem [shape: f32[12,2048], index: 3, kind: output, shape index: {}]
  %s4 = sld [smem:[#allocation0]]
  $region64: #{forward.17} parent=0
    _
  %s6 = ssub.s32 1, %s4
  %s7 = scalar_select 0, %s6, %s4
  $region1: #{forward.17} parent=0
    #allocation2 [shape = 'u8[131072]{0}', space=vmem, size = 0x20000, scoped, tag = 'output window, operand 0']
    loop: start=0, step=1, limit=4
    $region2: #{forward.17} parent=1 // loop_pre_header
      _
    $region3: #{forward.17} parent=1 // loop_header
      %s9 = sphi 0, %s13
      %p10 = scmp.ge.s32.totalorder %s9, 4
      %s19 = sphi 0, %s21
      %s22 = sphi 0, %s19
      %s23 = sphi 0, %s22
      %s39 = sphi 0, %s23
      %s43 = sphi 0, %s43
      %s45 = sphi 0, %s43
      %s46 = sphi 0, %s45
      %s60 = sphi 0, %s46
      %s64 = sphi 0, %s64
      %s66 = sphi 0, %s64
      %s67 = sphi 0, %s66
      %s81 = sphi 0, %s67
      %s87 = sphi 0, %s89
      %s90 = sphi 0, %s87
      %s91 = sphi 0, %s90
      %s107 = sphi 0, %s91
    $region4: #{forward.17} parent=1 // loop_header_branch
      %12 = sbr.rel (%p10) target = $region8
    $region5: #{forward.17} parent=1 // loop_body
      %s14 = ssub.s32 %s9, 1
      %s15 = ssub.s32 %s9, 2
      %s16 = sadd.s32 %s9, 1
      %s17 = ssub.s32 %s9, %s16
      %p18 = scmp.eq.s32.totalorder %s17, 0
      %s20 = sadd.s32 %s19, 1
      %s21 = scalar_select %p18, %s19, %s20
      %p24 = pneg %p18
      %p25 = scmp.eq.s32.totalorder %s9, 1
      %p26 = por %p24, %p25
      %p27 = scmp.ne.s32.totalorder %s19, %s22
      %p28 = scmp.eq.s32.totalorder %s9, 0
      %p29 = por %p27, %p28
      %p30 = scmp.ne.s32.totalorder %s19, %s22
      %p31 = scmp.eq.s32.totalorder %s14, 1
      %p32 = por %p30, %p31
      %p33 = scmp.ne.s32.totalorder %s22, %s23
      %p34 = scmp.eq.s32.totalorder %s14, 0
      %p35 = por %p33, %p34
      %p36 = scmp.ne.s32.totalorder %s22, %s23
      %p37 = scmp.eq.s32.totalorder %s15, 1
      %p38 = por %p36, %p37
      %p40 = scmp.ne.s32.totalorder %s23, %s39
      %p41 = scmp.eq.s32.totalorder %s15, 0
      %p42 = por %p40, %p41
      %s44 = sadd.s32 %s43, 1
      %p47 = scmp.eq.s32.totalorder %s9, 1
      %p48 = scmp.ne.s32.totalorder %s43, %s45
      %p49 = scmp.eq.s32.totalorder %s9, 0
      %p50 = por %p48, %p49
      %p51 = scmp.ne.s32.totalorder %s43, %s45
      %p52 = scmp.eq.s32.totalorder %s14, 1
      %p53 = por %p51, %p52
      %p54 = scmp.ne.s32.totalorder %s45, %s46
      %p55 = scmp.eq.s32.totalorder %s14, 0
      %p56 = por %p54, %p55
      %p57 = scmp.ne.s32.totalorder %s45, %s46
      %p58 = scmp.eq.s32.totalorder %s15, 1
      %p59 = por %p57, %p58
      %p61 = scmp.ne.s32.totalorder %s46, %s60
      %p62 = scmp.eq.s32.totalorder %s15, 0
      %p63 = por %p61, %p62
      %s65 = sadd.s32 %s64, 1
      %p68 = scmp.eq.s32.totalorder %s9, 1
      %p69 = scmp.ne.s32.totalorder %s64, %s66
      %p70 = scmp.eq.s32.totalorder %s9, 0
      %p71 = por %p69, %p70
      %p72 = scmp.ne.s32.totalorder %s64, %s66
      %p73 = scmp.eq.s32.totalorder %s14, 1
      %p74 = por %p72, %p73
      %p75 = scmp.ne.s32.totalorder %s66, %s67
      %p76 = scmp.eq.s32.totalorder %s14, 0
      %p77 = por %p75, %p76
      %p78 = scmp.ne.s32.totalorder %s66, %s67
      %p79 = scmp.eq.s32.totalorder %s15, 1
      %p80 = por %p78, %p79
      %p82 = scmp.ne.s32.totalorder %s67, %s81
      %p83 = scmp.eq.s32.totalorder %s15, 0
      %p84 = por %p82, %p83
      %s85 = ssub.s32 %s9, %s16
      %p86 = scmp.eq.s32.totalorder %s85, 0
      %s88 = sadd.s32 %s87, 1
      %s89 = scalar_select %p86, %s87, %s88
      %p92 = pneg %p86
      %p93 = scmp.eq.s32.totalorder %s9, 1
      %p94 = por %p92, %p93
      %p95 = scmp.ne.s32.totalorder %s87, %s90
      %p96 = scmp.eq.s32.totalorder %s9, 0
      %p97 = por %p95, %p96
      %p98 = scmp.ne.s32.totalorder %s87, %s90
      %p99 = scmp.eq.s32.totalorder %s14, 1
      %p100 = por %p98, %p99
      %p101 = scmp.ne.s32.totalorder %s90, %s91
      %p102 = scmp.eq.s32.totalorder %s14, 0
      %p103 = por %p101, %p102
      %p104 = scmp.ne.s32.totalorder %s90, %s91
      %p105 = scmp.eq.s32.totalorder %s15, 1
      %p106 = por %p104, %p105
      %p108 = scmp.ne.s32.totalorder %s91, %s107
      %p109 = scmp.eq.s32.totalorder %s15, 0
      %p110 = por %p108, %p109
      %p111 = scmp.le.s32.totalorder 1, %s9
      %p112 = scmp.lt.s32.totalorder %s9, 3
      %p113 = pnand %p111, %p112
      %p114 = pneg %p113
      // Predicated region
      $region9: #{forward.17} parent=5 // pred_check
        _
      $region10: #{forward.17} parent=5 // pred_check_branch
        %116 = sbr.rel (%p113) target = $region12
      $region11: #{forward.17} parent=5 // pred_region
        %s117 = ssub.s32 %s9, 1
        // Predicated region
        $region13: #{forward.17} parent=11 // pred_check
          %p118 = pneg %p56
        $region14: #{forward.17} parent=11 // pred_check_branch
          %120 = sbr.rel (%p118) target = $region16
        $region15: #{forward.17} parent=11 // pred_region
          _
        $region16: #{forward.17} parent=11 // pred_fallthru
          _
        // Predicated region
        $region17: #{forward.17} parent=11 // pred_check
          %p121 = pneg %p77
        $region18: #{forward.17} parent=11 // pred_check_branch
          %123 = sbr.rel (%p121) target = $region20
        $region19: #{forward.17} parent=11 // pred_region
          _
        $region20: #{forward.17} parent=11 // pred_fallthru
          _
      $region12: #{forward.17} parent=5 // pred_fallthru
        _
      %p124 = scmp.lt.s32.totalorder %s9, 2
      // Predicated region
      $region21: #{forward.17} parent=5 // pred_check
        %p125 = pneg %p124
      $region22: #{forward.17} parent=5 // pred_check_branch
        %127 = sbr.rel (%p125) target = $region24
      $region23: #{forward.17} parent=5 // pred_region
        // Predicated region
        $region25: #{forward.17} parent=23 // pred_check
          %p128 = pneg %p29
        $region26: #{forward.17} parent=23 // pred_check_branch
          %130 = sbr.rel (%p128) target = $region28
        $region27: #{forward.17} parent=23 // pred_region
          %s131 = smul.u32 128, %s9
          %p132 = scmp.lt.s32.totalorder %s131, 255
          %s133 = scalar_select %p132, %s131, 255
          %s134 = smul.addr %s133, 3
          %s135 = smul.addr %s134, 4
          %s136 = scalar_lea.vmem %s0, %s135
          %s137 = smul.u32 128, %s9
        $region28: #{forward.17} parent=23 // pred_fallthru
          _
      $region24: #{forward.17} parent=5 // pred_fallthru
        _
      %p138 = scmp.le.s32.totalorder 1, %s9
      %p139 = scmp.lt.s32.totalorder %s9, 3
      %p140 = pnand %p138, %p139
      %p141 = pneg %p140
      // Predicated region
      $region29: #{forward.17} parent=5 // pred_check
        _
      $region30: #{forward.17} parent=5 // pred_check_branch
        %143 = sbr.rel (%p140) target = $region32
      $region31: #{forward.17} parent=5 // pred_region
        %s144 = ssub.s32 %s9, 1
        %s145 = smul.u32 128, %s14
        %p146 = scmp.lt.s32.totalorder %s145, 255
        %s147 = scalar_select %p146, %s145, 255
        %s148 = smul.addr %s147, 3
        %s149 = smul.addr %s148, 4
        %s150 = scalar_lea.vmem %s0, %s149
        %p151 = pneg %p35
        %p152 = pneg %p32
        %p153 = pneg %p56
        %p154 = pneg %p53
        %p155 = pneg %p77
        %p156 = pneg %p74
        %p157 = pneg %p103
        %p158 = pneg %p100
        %s159 = sand.u32 %s90, 1
        %s160 = sand.u32 %s90, 1
        %s161 = smul.addr %s160, 128
        %s162 = scalar_lea.vmem [#allocation2], %s161
        %s163 = smul.u32 128, %s14
        %p164 = scmp.lt.s32.totalorder %s163, 255
        %s165 = scalar_select %p164, %s163, 255
        %s166 = smul.addr %s165, 3
        %s167 = smul.addr %s166, 4
        %s168 = scalar_lea.vmem %s0, %s167
        %s169 = smul.u32 128, %s14
        %s170 = smul.u32 8, %s14
        %v172 = vld [vmem:[%s168] sm:$0xff]
        %v173 = vld [vmem:[%s168 + $0x8] sm:$0xf]
        %v174 = vld [vmem:[%s168 + $0xc] sm:$0xff]
        %v175 = vld [vmem:[%s168 + $0x14] sm:$0xf]
        %v176 = vld [vmem:[%s168 + $0x18] sm:$0xff]
        %v177 = vld [vmem:[%s168 + $0x20] sm:$0xf]
        %v178 = vld [vmem:[%s168 + $0x24] sm:$0xff]
        %v179 = vld [vmem:[%s168 + $0x2c] sm:$0xf]
        %v180 = vld [vmem:[%s168 + $0x30] sm:$0xff]
        %v181 = vld [vmem:[%s168 + $0x38] sm:$0xf]
        %v182 = vld [vmem:[%s168 + $0x3c] sm:$0xff]
        %v183 = vld [vmem:[%s168 + $0x44] sm:$0xf]
        %v184 = vld [vmem:[%s168 + $0x48] sm:$0xff]
        %v185 = vld [vmem:[%s168 + $0x50] sm:$0xf]
        %v186 = vld [vmem:[%s168 + $0x54] sm:$0xff]
        %v187 = vld [vmem:[%s168 + $0x5c] sm:$0xf]
        %v188 = vld [vmem:[%s168 + $0x60] sm:$0xff]
        %v189 = vld [vmem:[%s168 + $0x68] sm:$0xf]
        %v190 = vld [vmem:[%s168 + $0x6c] sm:$0xff]
        %v191 = vld [vmem:[%s168 + $0x74] sm:$0xf]
        %v192 = vld [vmem:[%s168 + $0x78] sm:$0xff]
        %v193 = vld [vmem:[%s168 + $0x80] sm:$0xf]
        %v194 = vld [vmem:[%s168 + $0x84] sm:$0xff]
        %v195 = vld [vmem:[%s168 + $0x8c] sm:$0xf]
        %v196 = vld [vmem:[%s168 + $0x90] sm:$0xff]
        %v197 = vld [vmem:[%s168 + $0x98] sm:$0xf]
        %v198 = vld [vmem:[%s168 + $0x9c] sm:$0xff]
        %v199 = vld [vmem:[%s168 + $0xa4] sm:$0xf]
        %v200 = vld [vmem:[%s168 + $0xa8] sm:$0xff]
        %v201 = vld [vmem:[%s168 + $0xb0] sm:$0xf]
        %v202 = vld [vmem:[%s168 + $0xb4] sm:$0xff]
        %v203 = vld [vmem:[%s168 + $0xbc] sm:$0xf]
        %v204 = vld [vmem:[%s168 + $0xc0] sm:$0xff]
        %v205 = vld [vmem:[%s168 + $0xc8] sm:$0xf]
        %v206 = vld [vmem:[%s168 + $0xcc] sm:$0xff]
        %v207 = vld [vmem:[%s168 + $0xd4] sm:$0xf]
        %v208 = vld [vmem:[%s168 + $0xd8] sm:$0xff]
        %v209 = vld [vmem:[%s168 + $0xe0] sm:$0xf]
        %v210 = vld [vmem:[%s168 + $0xe4] sm:$0xff]
        %v211 = vld [vmem:[%s168 + $0xec] sm:$0xf]
        %v212 = vld [vmem:[%s168 + $0xf0] sm:$0xff]
        %v213 = vld [vmem:[%s168 + $0xf8] sm:$0xf]
        %v214 = vld [vmem:[%s168 + $0xfc] sm:$0xff]
        %v215 = vld [vmem:[%s168 + $0x104] sm:$0xf]
        %v216 = vld [vmem:[%s168 + $0x108] sm:$0xff]
        %v217 = vld [vmem:[%s168 + $0x110] sm:$0xf]
        %v218 = vld [vmem:[%s168 + $0x114] sm:$0xff]
        %v219 = vld [vmem:[%s168 + $0x11c] sm:$0xf]
        %v220 = vld [vmem:[%s168 + $0x120] sm:$0xff]
        %v221 = vld [vmem:[%s168 + $0x128] sm:$0xf]
        %v222 = vld [vmem:[%s168 + $0x12c] sm:$0xff]
        %v223 = vld [vmem:[%s168 + $0x134] sm:$0xf]
        %v224 = vld [vmem:[%s168 + $0x138] sm:$0xff]
        %v225 = vld [vmem:[%s168 + $0x140] sm:$0xf]
        %v226 = vld [vmem:[%s168 + $0x144] sm:$0xff]
        %v227 = vld [vmem:[%s168 + $0x14c] sm:$0xf]
        %v228 = vld [vmem:[%s168 + $0x150] sm:$0xff]
        %v229 = vld [vmem:[%s168 + $0x158] sm:$0xf]
        %v230 = vld [vmem:[%s168 + $0x15c] sm:$0xff]
        %v231 = vld [vmem:[%s168 + $0x164] sm:$0xf]
        %v232 = vld [vmem:[%s168 + $0x168] sm:$0xff]
        %v233 = vld [vmem:[%s168 + $0x170] sm:$0xf]
        %v234 = vld [vmem:[%s168 + $0x174] sm:$0xff]
        %v235 = vld [vmem:[%s168 + $0x17c] sm:$0xf]
        %v236 = vld [vmem:[%s168 + $0x180] sm:$0xff]
        %v237 = vld [vmem:[%s168 + $0x188] sm:$0xf]
        %v238 = vld [vmem:[%s168 + $0x18c] sm:$0xff]
        %v239 = vld [vmem:[%s168 + $0x194] sm:$0xf]
        %v240 = vld [vmem:[%s168 + $0x198] sm:$0xff]
        %v241 = vld [vmem:[%s168 + $0x1a0] sm:$0xf]
        %v242 = vld [vmem:[%s168 + $0x1a4] sm:$0xff]
        %v243 = vld [vmem:[%s168 + $0x1ac] sm:$0xf]
        %v244 = vld [vmem:[%s168 + $0x1b0] sm:$0xff]
        %v245 = vld [vmem:[%s168 + $0x1b8] sm:$0xf]
        %v246 = vld [vmem:[%s168 + $0x1bc] sm:$0xff]
        %v247 = vld [vmem:[%s168 + $0x1c4] sm:$0xf]
        %v248 = vld [vmem:[%s168 + $0x1c8] sm:$0xff]
        %v249 = vld [vmem:[%s168 + $0x1d0] sm:$0xf]
        %v250 = vld [vmem:[%s168 + $0x1d4] sm:$0xff]
        %v251 = vld [vmem:[%s168 + $0x1dc] sm:$0xf]
        %v252 = vld [vmem:[%s168 + $0x1e0] sm:$0xff]
        %v253 = vld [vmem:[%s168 + $0x1e8] sm:$0xf]
        %v254 = vld [vmem:[%s168 + $0x1ec] sm:$0xff]
        %v255 = vld [vmem:[%s168 + $0x1f4] sm:$0xf]
        %v256 = vld [vmem:[%s168 + $0x1f8] sm:$0xff]
        %v257 = vld [vmem:[%s168 + $0x200] sm:$0xf]
        %v258 = vld [vmem:[%s168 + $0x204] sm:$0xff]
        %v259 = vld [vmem:[%s168 + $0x20c] sm:$0xf]
        %v260 = vld [vmem:[%s168 + $0x210] sm:$0xff]
        %v261 = vld [vmem:[%s168 + $0x218] sm:$0xf]
        %v262 = vld [vmem:[%s168 + $0x21c] sm:$0xff]
        %v263 = vld [vmem:[%s168 + $0x224] sm:$0xf]
        %v264 = vld [vmem:[%s168 + $0x228] sm:$0xff]
        %v265 = vld [vmem:[%s168 + $0x230] sm:$0xf]
        %v266 = vld [vmem:[%s168 + $0x234] sm:$0xff]
        %v267 = vld [vmem:[%s168 + $0x23c] sm:$0xf]
        %v268 = vld [vmem:[%s168 + $0x240] sm:$0xff]
        %v269 = vld [vmem:[%s168 + $0x248] sm:$0xf]
        %v270 = vld [vmem:[%s168 + $0x24c] sm:$0xff]
        %v271 = vld [vmem:[%s168 + $0x254] sm:$0xf]
        %v272 = vld [vmem:[%s168 + $0x258] sm:$0xff]
        %v273 = vld [vmem:[%s168 + $0x260] sm:$0xf]
        %v274 = vld [vmem:[%s168 + $0x264] sm:$0xff]
        %v275 = vld [vmem:[%s168 + $0x26c] sm:$0xf]
        %v276 = vld [vmem:[%s168 + $0x270] sm:$0xff]
        %v277 = vld [vmem:[%s168 + $0x278] sm:$0xf]
        %v278 = vld [vmem:[%s168 + $0x27c] sm:$0xff]
        %v279 = vld [vmem:[%s168 + $0x284] sm:$0xf]
        %v280 = vld [vmem:[%s168 + $0x288] sm:$0xff]
        %v281 = vld [vmem:[%s168 + $0x290] sm:$0xf]
        %v282 = vld [vmem:[%s168 + $0x294] sm:$0xff]
        %v283 = vld [vmem:[%s168 + $0x29c] sm:$0xf]
        %v284 = vld [vmem:[%s168 + $0x2a0] sm:$0xff]
        %v285 = vld [vmem:[%s168 + $0x2a8] sm:$0xf]
        %v286 = vld [vmem:[%s168 + $0x2ac] sm:$0xff]
        %v287 = vld [vmem:[%s168 + $0x2b4] sm:$0xf]
        %v288 = vld [vmem:[%s168 + $0x2b8] sm:$0xff]
        %v289 = vld [vmem:[%s168 + $0x2c0] sm:$0xf]
        %v290 = vld [vmem:[%s168 + $0x2c4] sm:$0xff]
        %v291 = vld [vmem:[%s168 + $0x2cc] sm:$0xf]
        %v292 = vld [vmem:[%s168 + $0x2d0] sm:$0xff]
        %v293 = vld [vmem:[%s168 + $0x2d8] sm:$0xf]
        %v294 = vld [vmem:[%s168 + $0x2dc] sm:$0xff]
        %v295 = vld [vmem:[%s168 + $0x2e4] sm:$0xf]
        %v296 = vld [vmem:[%s168 + $0x2e8] sm:$0xff]
        %v297 = vld [vmem:[%s168 + $0x2f0] sm:$0xf]
        %v298 = vld [vmem:[%s168 + $0x2f4] sm:$0xff]
        %v299 = vld [vmem:[%s168 + $0x2fc] sm:$0xf]
        %v300 = vld [vmem:[%s168 + $0x300] sm:$0xff]
        %v301 = vld [vmem:[%s168 + $0x308] sm:$0xf]
        %v302 = vld [vmem:[%s168 + $0x30c] sm:$0xff]
        %v303 = vld [vmem:[%s168 + $0x314] sm:$0xf]
        %v304 = vld [vmem:[%s168 + $0x318] sm:$0xff]
        %v305 = vld [vmem:[%s168 + $0x320] sm:$0xf]
        %v306 = vld [vmem:[%s168 + $0x324] sm:$0xff]
        %v307 = vld [vmem:[%s168 + $0x32c] sm:$0xf]
        %v308 = vld [vmem:[%s168 + $0x330] sm:$0xff]
        %v309 = vld [vmem:[%s168 + $0x338] sm:$0xf]
        %v310 = vld [vmem:[%s168 + $0x33c] sm:$0xff]
        %v311 = vld [vmem:[%s168 + $0x344] sm:$0xf]
        %v312 = vld [vmem:[%s168 + $0x348] sm:$0xff]
        %v313 = vld [vmem:[%s168 + $0x350] sm:$0xf]
        %v314 = vld [vmem:[%s168 + $0x354] sm:$0xff]
        %v315 = vld [vmem:[%s168 + $0x35c] sm:$0xf]
        %v316 = vld [vmem:[%s168 + $0x360] sm:$0xff]
        %v317 = vld [vmem:[%s168 + $0x368] sm:$0xf]
        %v318 = vld [vmem:[%s168 + $0x36c] sm:$0xff]
        %v319 = vld [vmem:[%s168 + $0x374] sm:$0xf]
        %v320 = vld [vmem:[%s168 + $0x378] sm:$0xff]
        %v321 = vld [vmem:[%s168 + $0x380] sm:$0xf]
        %v322 = vld [vmem:[%s168 + $0x384] sm:$0xff]
        %v323 = vld [vmem:[%s168 + $0x38c] sm:$0xf]
        %v324 = vld [vmem:[%s168 + $0x390] sm:$0xff]
        %v325 = vld [vmem:[%s168 + $0x398] sm:$0xf]
        %v326 = vld [vmem:[%s168 + $0x39c] sm:$0xff]
        %v327 = vld [vmem:[%s168 + $0x3a4] sm:$0xf]
        %v328 = vld [vmem:[%s168 + $0x3a8] sm:$0xff]
        %v329 = vld [vmem:[%s168 + $0x3b0] sm:$0xf]
        %v330 = vld [vmem:[%s168 + $0x3b4] sm:$0xff]
        %v331 = vld [vmem:[%s168 + $0x3bc] sm:$0xf]
        %v332 = vld [vmem:[%s168 + $0x3c0] sm:$0xff]
        %v333 = vld [vmem:[%s168 + $0x3c8] sm:$0xf]
        %v334 = vld [vmem:[%s168 + $0x3cc] sm:$0xff]
        %v335 = vld [vmem:[%s168 + $0x3d4] sm:$0xf]
        %v336 = vld [vmem:[%s168 + $0x3d8] sm:$0xff]
        %v337 = vld [vmem:[%s168 + $0x3e0] sm:$0xf]
        %v338 = vld [vmem:[%s168 + $0x3e4] sm:$0xff]
        %v339 = vld [vmem:[%s168 + $0x3ec] sm:$0xf]
        %v340 = vld [vmem:[%s168 + $0x3f0] sm:$0xff]
        %v341 = vld [vmem:[%s168 + $0x3f8] sm:$0xf]
        %v342 = vld [vmem:[%s168 + $0x3fc] sm:$0xff]
        %v343 = vld [vmem:[%s168 + $0x404] sm:$0xf]
        %v344 = vld [vmem:[%s168 + $0x408] sm:$0xff]
        %v345 = vld [vmem:[%s168 + $0x410] sm:$0xf]
        %v346 = vld [vmem:[%s168 + $0x414] sm:$0xff]
        %v347 = vld [vmem:[%s168 + $0x41c] sm:$0xf]
        %v348 = vld [vmem:[%s168 + $0x420] sm:$0xff]
        %v349 = vld [vmem:[%s168 + $0x428] sm:$0xf]
        %v350 = vld [vmem:[%s168 + $0x42c] sm:$0xff]
        %v351 = vld [vmem:[%s168 + $0x434] sm:$0xf]
        %v352 = vld [vmem:[%s168 + $0x438] sm:$0xff]
        %v353 = vld [vmem:[%s168 + $0x440] sm:$0xf]
        %v354 = vld [vmem:[%s168 + $0x444] sm:$0xff]
        %v355 = vld [vmem:[%s168 + $0x44c] sm:$0xf]
        %v356 = vld [vmem:[%s168 + $0x450] sm:$0xff]
        %v357 = vld [vmem:[%s168 + $0x458] sm:$0xf]
        %v358 = vld [vmem:[%s168 + $0x45c] sm:$0xff]
        %v359 = vld [vmem:[%s168 + $0x464] sm:$0xf]
        %v360 = vld [vmem:[%s168 + $0x468] sm:$0xff]
        %v361 = vld [vmem:[%s168 + $0x470] sm:$0xf]
        %v362 = vld [vmem:[%s168 + $0x474] sm:$0xff]
        %v363 = vld [vmem:[%s168 + $0x47c] sm:$0xf]
        %v364 = vld [vmem:[%s168 + $0x480] sm:$0xff]
        %v365 = vld [vmem:[%s168 + $0x488] sm:$0xf]
        %v366 = vld [vmem:[%s168 + $0x48c] sm:$0xff]
        %v367 = vld [vmem:[%s168 + $0x494] sm:$0xf]
        %v368 = vld [vmem:[%s168 + $0x498] sm:$0xff]
        %v369 = vld [vmem:[%s168 + $0x4a0] sm:$0xf]
        %v370 = vld [vmem:[%s168 + $0x4a4] sm:$0xff]
        %v371 = vld [vmem:[%s168 + $0x4ac] sm:$0xf]
        %v372 = vld [vmem:[%s168 + $0x4b0] sm:$0xff]
        %v373 = vld [vmem:[%s168 + $0x4b8] sm:$0xf]
        %v374 = vld [vmem:[%s168 + $0x4bc] sm:$0xff]
        %v375 = vld [vmem:[%s168 + $0x4c4] sm:$0xf]
        %v376 = vld [vmem:[%s168 + $0x4c8] sm:$0xff]
        %v377 = vld [vmem:[%s168 + $0x4d0] sm:$0xf]
        %v378 = vld [vmem:[%s168 + $0x4d4] sm:$0xff]
        %v379 = vld [vmem:[%s168 + $0x4dc] sm:$0xf]
        %v380 = vld [vmem:[%s168 + $0x4e0] sm:$0xff]
        %v381 = vld [vmem:[%s168 + $0x4e8] sm:$0xf]
        %v382 = vld [vmem:[%s168 + $0x4ec] sm:$0xff]
        %v383 = vld [vmem:[%s168 + $0x4f4] sm:$0xf]
        %v384 = vld [vmem:[%s168 + $0x4f8] sm:$0xff]
        %v385 = vld [vmem:[%s168 + $0x500] sm:$0xf]
        %v386 = vld [vmem:[%s168 + $0x504] sm:$0xff]
        %v387 = vld [vmem:[%s168 + $0x50c] sm:$0xf]
        %v388 = vld [vmem:[%s168 + $0x510] sm:$0xff]
        %v389 = vld [vmem:[%s168 + $0x518] sm:$0xf]
        %v390 = vld [vmem:[%s168 + $0x51c] sm:$0xff]
        %v391 = vld [vmem:[%s168 + $0x524] sm:$0xf]
        %v392 = vld [vmem:[%s168 + $0x528] sm:$0xff]
        %v393 = vld [vmem:[%s168 + $0x530] sm:$0xf]
        %v394 = vld [vmem:[%s168 + $0x534] sm:$0xff]
        %v395 = vld [vmem:[%s168 + $0x53c] sm:$0xf]
        %v396 = vld [vmem:[%s168 + $0x540] sm:$0xff]
        %v397 = vld [vmem:[%s168 + $0x548] sm:$0xf]
        %v398 = vld [vmem:[%s168 + $0x54c] sm:$0xff]
        %v399 = vld [vmem:[%s168 + $0x554] sm:$0xf]
        %v400 = vld [vmem:[%s168 + $0x558] sm:$0xff]
        %v401 = vld [vmem:[%s168 + $0x560] sm:$0xf]
        %v402 = vld [vmem:[%s168 + $0x564] sm:$0xff]
        %v403 = vld [vmem:[%s168 + $0x56c] sm:$0xf]
        %v404 = vld [vmem:[%s168 + $0x570] sm:$0xff]
        %v405 = vld [vmem:[%s168 + $0x578] sm:$0xf]
        %v406 = vld [vmem:[%s168 + $0x57c] sm:$0xff]
        %v407 = vld [vmem:[%s168 + $0x584] sm:$0xf]
        %v408 = vld [vmem:[%s168 + $0x588] sm:$0xff]
        %v409 = vld [vmem:[%s168 + $0x590] sm:$0xf]
        %v410 = vld [vmem:[%s168 + $0x594] sm:$0xff]
        %v411 = vld [vmem:[%s168 + $0x59c] sm:$0xf]
        %v412 = vld [vmem:[%s168 + $0x5a0] sm:$0xff]
        %v413 = vld [vmem:[%s168 + $0x5a8] sm:$0xf]
        %v414 = vld [vmem:[%s168 + $0x5ac] sm:$0xff]
        %v415 = vld [vmem:[%s168 + $0x5b4] sm:$0xf]
        %v416 = vld [vmem:[%s168 + $0x5b8] sm:$0xff]
        %v417 = vld [vmem:[%s168 + $0x5c0] sm:$0xf]
        %v418 = vld [vmem:[%s168 + $0x5c4] sm:$0xff]
        %v419 = vld [vmem:[%s168 + $0x5cc] sm:$0xf]
        %v420 = vld [vmem:[%s168 + $0x5d0] sm:$0xff]
        %v421 = vld [vmem:[%s168 + $0x5d8] sm:$0xf]
        %v422 = vld [vmem:[%s168 + $0x5dc] sm:$0xff]
        %v423 = vld [vmem:[%s168 + $0x5e4] sm:$0xf]
        %v424 = vld [vmem:[%s168 + $0x5e8] sm:$0xff]
        %v425 = vld [vmem:[%s168 + $0x5f0] sm:$0xf]
        %v426 = vld [vmem:[%s168 + $0x5f4] sm:$0xff]
        %v427 = vld [vmem:[%s168 + $0x5fc] sm:$0xf]
        %v428 = vld [vmem:[%s1] sm:$0xf]
        %v429 = vld [vmem:[%s1 + $0x4] sm:$0xf]
        %v430 = vld [vmem:[%s1 + $0x8] sm:$0xf]
        %v431 = vld [vmem:[%s1 + $0xc] sm:$0xf]
        %v432 = vld [vmem:[%s1 + $0x10] sm:$0xf]
        %v433 = vld [vmem:[%s1 + $0x14] sm:$0xf]
        %v434 = vld [vmem:[%s1 + $0x18] sm:$0xf]
        %v435 = vld [vmem:[%s1 + $0x1c] sm:$0xf]
        %v436 = vld [vmem:[%s1 + $0x20] sm:$0xf]
        %v437 = vld [vmem:[%s1 + $0x24] sm:$0xf]
        %v438 = vld [vmem:[%s1 + $0x28] sm:$0xf]
        %v439 = vld [vmem:[%s1 + $0x2c] sm:$0xf]
        %v440 = vld [vmem:[%s1 + $0x30] sm:$0xf]
        %v441 = vld [vmem:[%s1 + $0x34] sm:$0xf]
        %v442 = vld [vmem:[%s1 + $0x38] sm:$0xf]
        %v443 = vld [vmem:[%s1 + $0x3c] sm:$0xf]
        %v444 = vld [vmem:[%s1 + $0x40] sm:$0xf]
        %v445 = vld [vmem:[%s1 + $0x44] sm:$0xf]
        %v446 = vld [vmem:[%s1 + $0x48] sm:$0xf]
        %v447 = vld [vmem:[%s1 + $0x4c] sm:$0xf]
        %v448 = vld [vmem:[%s1 + $0x50] sm:$0xf]
        %v449 = vld [vmem:[%s1 + $0x54] sm:$0xf]
        %v450 = vld [vmem:[%s1 + $0x58] sm:$0xf]
        %v451 = vld [vmem:[%s1 + $0x5c] sm:$0xf]
        %v452 = vld [vmem:[%s1 + $0x60] sm:$0xf]
        %v453 = vld [vmem:[%s1 + $0x64] sm:$0xf]
        %v454 = vld [vmem:[%s1 + $0x68] sm:$0xf]
        %v455 = vld [vmem:[%s1 + $0x6c] sm:$0xf]
        %v456 = vld [vmem:[%s1 + $0x70] sm:$0xf]
        %v457 = vld [vmem:[%s1 + $0x74] sm:$0xf]
        %v458 = vld [vmem:[%s1 + $0x78] sm:$0xf]
        %v459 = vld [vmem:[%s1 + $0x7c] sm:$0xf]
        %v460 = vld [vmem:[%s1 + $0x80] sm:$0xf]
        %v461 = vld [vmem:[%s1 + $0x84] sm:$0xf]
        %v462 = vld [vmem:[%s1 + $0x88] sm:$0xf]
        %v463 = vld [vmem:[%s1 + $0x8c] sm:$0xf]
        %v464 = vld [vmem:[%s2] sm:$0x1]
        %v466 = vperm.slane %v464, 0
        %v724 = vunpack.c.l.b16 %v172
        %v725 = vunpack.c.h.b16 %v172
        %v726 = vunpack.c.l.b16 %v173
        %v727 = vunpack.c.l.b16 %v174
        %v728 = vunpack.c.h.b16 %v174
        %v729 = vunpack.c.l.b16 %v175
        %v730 = vunpack.c.l.b16 %v176
        %v731 = vunpack.c.h.b16 %v176
        %v732 = vunpack.c.l.b16 %v177
        %v733 = vunpack.c.l.b16 %v178
        %v734 = vunpack.c.h.b16 %v178
        %v735 = vunpack.c.l.b16 %v179
        %v736 = vunpack.c.l.b16 %v180
        %v737 = vunpack.c.h.b16 %v180
        %v738 = vunpack.c.l.b16 %v181
        %v739 = vunpack.c.l.b16 %v182
        %v740 = vunpack.c.h.b16 %v182
        %v741 = vunpack.c.l.b16 %v183
        %v742 = vunpack.c.l.b16 %v184
        %v743 = vunpack.c.h.b16 %v184
        %v744 = vunpack.c.l.b16 %v185
        %v745 = vunpack.c.l.b16 %v186
        %v746 = vunpack.c.h.b16 %v186
        %v747 = vunpack.c.l.b16 %v187
        %v748 = vunpack.c.l.b16 %v188
        %v749 = vunpack.c.h.b16 %v188
        %v750 = vunpack.c.l.b16 %v189
        %v751 = vunpack.c.l.b16 %v190
        %v752 = vunpack.c.h.b16 %v190
        %v753 = vunpack.c.l.b16 %v191
        %v754 = vunpack.c.l.b16 %v192
        %v755 = vunpack.c.h.b16 %v192
        %v756 = vunpack.c.l.b16 %v193
        %v757 = vunpack.c.l.b16 %v194
        %v758 = vunpack.c.h.b16 %v194
        %v759 = vunpack.c.l.b16 %v195
        %v760 = vunpack.c.l.b16 %v196
        %v761 = vunpack.c.h.b16 %v196
        %v762 = vunpack.c.l.b16 %v197
        %v763 = vunpack.c.l.b16 %v198
        %v764 = vunpack.c.h.b16 %v198
        %v765 = vunpack.c.l.b16 %v199
        %v766 = vunpack.c.l.b16 %v200
        %v767 = vunpack.c.h.b16 %v200
        %v768 = vunpack.c.l.b16 %v201
        %v769 = vunpack.c.l.b16 %v202
        %v770 = vunpack.c.h.b16 %v202
        %v771 = vunpack.c.l.b16 %v203
        %v772 = vunpack.c.l.b16 %v204
        %v773 = vunpack.c.h.b16 %v204
        %v774 = vunpack.c.l.b16 %v205
        %v775 = vunpack.c.l.b16 %v206
        %v776 = vunpack.c.h.b16 %v206
        %v777 = vunpack.c.l.b16 %v207
        %v778 = vunpack.c.l.b16 %v208
        %v779 = vunpack.c.h.b16 %v208
        %v780 = vunpack.c.l.b16 %v209
        %v781 = vunpack.c.l.b16 %v210
        %v782 = vunpack.c.h.b16 %v210
        %v783 = vunpack.c.l.b16 %v211
        %v784 = vunpack.c.l.b16 %v212
        %v785 = vunpack.c.h.b16 %v212
        %v786 = vunpack.c.l.b16 %v213
        %v787 = vunpack.c.l.b16 %v214
        %v788 = vunpack.c.h.b16 %v214
        %v789 = vunpack.c.l.b16 %v215
        %v790 = vunpack.c.l.b16 %v216
        %v791 = vunpack.c.h.b16 %v216
        %v792 = vunpack.c.l.b16 %v217
        %v793 = vunpack.c.l.b16 %v218
        %v794 = vunpack.c.h.b16 %v218
        %v795 = vunpack.c.l.b16 %v219
        %v796 = vunpack.c.l.b16 %v220
        %v797 = vunpack.c.h.b16 %v220
        %v798 = vunpack.c.l.b16 %v221
        %v799 = vunpack.c.l.b16 %v222
        %v800 = vunpack.c.h.b16 %v222
        %v801 = vunpack.c.l.b16 %v223
        %v802 = vunpack.c.l.b16 %v224
        %v803 = vunpack.c.h.b16 %v224
        %v804 = vunpack.c.l.b16 %v225
        %v805 = vunpack.c.l.b16 %v226
        %v806 = vunpack.c.h.b16 %v226
        %v807 = vunpack.c.l.b16 %v227
        %v808 = vunpack.c.l.b16 %v228
        %v809 = vunpack.c.h.b16 %v228
        %v810 = vunpack.c.l.b16 %v229
        %v811 = vunpack.c.l.b16 %v230
        %v812 = vunpack.c.h.b16 %v230
        %v813 = vunpack.c.l.b16 %v231
        %v814 = vunpack.c.l.b16 %v232
        %v815 = vunpack.c.h.b16 %v232
        %v816 = vunpack.c.l.b16 %v233
        %v817 = vunpack.c.l.b16 %v234
        %v818 = vunpack.c.h.b16 %v234
        %v819 = vunpack.c.l.b16 %v235
        %v820 = vunpack.c.l.b16 %v236
        %v821 = vunpack.c.h.b16 %v236
        %v822 = vunpack.c.l.b16 %v237
        %v823 = vunpack.c.l.b16 %v238
        %v824 = vunpack.c.h.b16 %v238
        %v825 = vunpack.c.l.b16 %v239
        %v826 = vunpack.c.l.b16 %v240
        %v827 = vunpack.c.h.b16 %v240
        %v828 = vunpack.c.l.b16 %v241
        %v829 = vunpack.c.l.b16 %v242
        %v830 = vunpack.c.h.b16 %v242
        %v831 = vunpack.c.l.b16 %v243
        %v832 = vunpack.c.l.b16 %v244
        %v833 = vunpack.c.h.b16 %v244
        %v834 = vunpack.c.l.b16 %v245
        %v835 = vunpack.c.l.b16 %v246
        %v836 = vunpack.c.h.b16 %v246
        %v837 = vunpack.c.l.b16 %v247
        %v838 = vunpack.c.l.b16 %v248
        %v839 = vunpack.c.h.b16 %v248
        %v840 = vunpack.c.l.b16 %v249
        %v841 = vunpack.c.l.b16 %v250
        %v842 = vunpack.c.h.b16 %v250
        %v843 = vunpack.c.l.b16 %v251
        %v844 = vunpack.c.l.b16 %v252
        %v845 = vunpack.c.h.b16 %v252
        %v846 = vunpack.c.l.b16 %v253
        %v847 = vunpack.c.l.b16 %v254
        %v848 = vunpack.c.h.b16 %v254
        %v849 = vunpack.c.l.b16 %v255
        %v850 = vunpack.c.l.b16 %v256
        %v851 = vunpack.c.h.b16 %v256
        %v852 = vunpack.c.l.b16 %v257
        %v853 = vunpack.c.l.b16 %v258
        %v854 = vunpack.c.h.b16 %v258
        %v855 = vunpack.c.l.b16 %v259
        %v856 = vunpack.c.l.b16 %v260
        %v857 = vunpack.c.h.b16 %v260
        %v858 = vunpack.c.l.b16 %v261
        %v859 = vunpack.c.l.b16 %v262
        %v860 = vunpack.c.h.b16 %v262
        %v861 = vunpack.c.l.b16 %v263
        %v862 = vunpack.c.l.b16 %v264
        %v863 = vunpack.c.h.b16 %v264
        %v864 = vunpack.c.l.b16 %v265
        %v865 = vunpack.c.l.b16 %v266
        %v866 = vunpack.c.h.b16 %v266
        %v867 = vunpack.c.l.b16 %v267
        %v868 = vunpack.c.l.b16 %v268
        %v869 = vunpack.c.h.b16 %v268
        %v870 = vunpack.c.l.b16 %v269
        %v871 = vunpack.c.l.b16 %v270
        %v872 = vunpack.c.h.b16 %v270
        %v873 = vunpack.c.l.b16 %v271
        %v874 = vunpack.c.l.b16 %v272
        %v875 = vunpack.c.h.b16 %v272
        %v876 = vunpack.c.l.b16 %v273
        %v877 = vunpack.c.l.b16 %v274
        %v878 = vunpack.c.h.b16 %v274
        %v879 = vunpack.c.l.b16 %v275
        %v880 = vunpack.c.l.b16 %v276
        %v881 = vunpack.c.h.b16 %v276
        %v882 = vunpack.c.l.b16 %v277
        %v883 = vunpack.c.l.b16 %v278
        %v884 = vunpack.c.h.b16 %v278
        %v885 = vunpack.c.l.b16 %v279
        %v886 = vunpack.c.l.b16 %v280
        %v887 = vunpack.c.h.b16 %v280
        %v888 = vunpack.c.l.b16 %v281
        %v889 = vunpack.c.l.b16 %v282
        %v890 = vunpack.c.h.b16 %v282
        %v891 = vunpack.c.l.b16 %v283
        %v892 = vunpack.c.l.b16 %v284
        %v893 = vunpack.c.h.b16 %v284
        %v894 = vunpack.c.l.b16 %v285
        %v895 = vunpack.c.l.b16 %v286
        %v896 = vunpack.c.h.b16 %v286
        %v897 = vunpack.c.l.b16 %v287
        %v898 = vunpack.c.l.b16 %v288
        %v899 = vunpack.c.h.b16 %v288
        %v900 = vunpack.c.l.b16 %v289
        %v901 = vunpack.c.l.b16 %v290
        %v902 = vunpack.c.h.b16 %v290
        %v903 = vunpack.c.l.b16 %v291
        %v904 = vunpack.c.l.b16 %v292
        %v905 = vunpack.c.h.b16 %v292
        %v906 = vunpack.c.l.b16 %v293
        %v907 = vunpack.c.l.b16 %v294
        %v908 = vunpack.c.h.b16 %v294
        %v909 = vunpack.c.l.b16 %v295
        %v910 = vunpack.c.l.b16 %v296
        %v911 = vunpack.c.h.b16 %v296
        %v912 = vunpack.c.l.b16 %v297
        %v913 = vunpack.c.l.b16 %v298
        %v914 = vunpack.c.h.b16 %v298
        %v915 = vunpack.c.l.b16 %v299
        %v916 = vunpack.c.l.b16 %v300
        %v917 = vunpack.c.h.b16 %v300
        %v918 = vunpack.c.l.b16 %v301
        %v919 = vunpack.c.l.b16 %v302
        %v920 = vunpack.c.h.b16 %v302
        %v921 = vunpack.c.l.b16 %v303
        %v922 = vunpack.c.l.b16 %v304
        %v923 = vunpack.c.h.b16 %v304
        %v924 = vunpack.c.l.b16 %v305
        %v925 = vunpack.c.l.b16 %v306
        %v926 = vunpack.c.h.b16 %v306
        %v927 = vunpack.c.l.b16 %v307
        %v928 = vunpack.c.l.b16 %v308
        %v929 = vunpack.c.h.b16 %v308
        %v930 = vunpack.c.l.b16 %v309
        %v931 = vunpack.c.l.b16 %v310
        %v932 = vunpack.c.h.b16 %v310
        %v933 = vunpack.c.l.b16 %v311
        %v934 = vunpack.c.l.b16 %v312
        %v935 = vunpack.c.h.b16 %v312
        %v936 = vunpack.c.l.b16 %v313
        %v937 = vunpack.c.l.b16 %v314
        %v938 = vunpack.c.h.b16 %v314
        %v939 = vunpack.c.l.b16 %v315
        %v940 = vunpack.c.l.b16 %v316
        %v941 = vunpack.c.h.b16 %v316
        %v942 = vunpack.c.l.b16 %v317
        %v943 = vunpack.c.l.b16 %v318
        %v944 = vunpack.c.h.b16 %v318
        %v945 = vunpack.c.l.b16 %v319
        %v946 = vunpack.c.l.b16 %v320
        %v947 = vunpack.c.h.b16 %v320
        %v948 = vunpack.c.l.b16 %v321
        %v949 = vunpack.c.l.b16 %v322
        %v950 = vunpack.c.h.b16 %v322
        %v951 = vunpack.c.l.b16 %v323
        %v952 = vunpack.c.l.b16 %v324
        %v953 = vunpack.c.h.b16 %v324
        %v954 = vunpack.c.l.b16 %v325
        %v955 = vunpack.c.l.b16 %v326
        %v956 = vunpack.c.h.b16 %v326
        %v957 = vunpack.c.l.b16 %v327
        %v958 = vunpack.c.l.b16 %v328
        %v959 = vunpack.c.h.b16 %v328
        %v960 = vunpack.c.l.b16 %v329
        %v961 = vunpack.c.l.b16 %v330
        %v962 = vunpack.c.h.b16 %v330
        %v963 = vunpack.c.l.b16 %v331
        %v964 = vunpack.c.l.b16 %v332
        %v965 = vunpack.c.h.b16 %v332
        %v966 = vunpack.c.l.b16 %v333
        %v967 = vunpack.c.l.b16 %v334
        %v968 = vunpack.c.h.b16 %v334
        %v969 = vunpack.c.l.b16 %v335
        %v970 = vunpack.c.l.b16 %v336
        %v971 = vunpack.c.h.b16 %v336
        %v972 = vunpack.c.l.b16 %v337
        %v973 = vunpack.c.l.b16 %v338
        %v974 = vunpack.c.h.b16 %v338
        %v975 = vunpack.c.l.b16 %v339
        %v976 = vunpack.c.l.b16 %v340
        %v977 = vunpack.c.h.b16 %v340
        %v978 = vunpack.c.l.b16 %v341
        %v979 = vunpack.c.l.b16 %v342
        %v980 = vunpack.c.h.b16 %v342
        %v981 = vunpack.c.l.b16 %v343
        %v982 = vunpack.c.l.b16 %v344
        %v983 = vunpack.c.h.b16 %v344
        %v984 = vunpack.c.l.b16 %v345
        %v985 = vunpack.c.l.b16 %v346
        %v986 = vunpack.c.h.b16 %v346
        %v987 = vunpack.c.l.b16 %v347
        %v988 = vunpack.c.l.b16 %v348
        %v989 = vunpack.c.h.b16 %v348
        %v990 = vunpack.c.l.b16 %v349
        %v991 = vunpack.c.l.b16 %v350
        %v992 = vunpack.c.h.b16 %v350
        %v993 = vunpack.c.l.b16 %v351
        %v994 = vunpack.c.l.b16 %v352
        %v995 = vunpack.c.h.b16 %v352
        %v996 = vunpack.c.l.b16 %v353
        %v997 = vunpack.c.l.b16 %v354
        %v998 = vunpack.c.h.b16 %v354
        %v999 = vunpack.c.l.b16 %v355
        %v1000 = vunpack.c.l.b16 %v356
        %v1001 = vunpack.c.h.b16 %v356
        %v1002 = vunpack.c.l.b16 %v357
        %v1003 = vunpack.c.l.b16 %v358
        %v1004 = vunpack.c.h.b16 %v358
        %v1005 = vunpack.c.l.b16 %v359
        %v1006 = vunpack.c.l.b16 %v360
        %v1007 = vunpack.c.h.b16 %v360
        %v1008 = vunpack.c.l.b16 %v361
        %v1009 = vunpack.c.l.b16 %v362
        %v1010 = vunpack.c.h.b16 %v362
        %v1011 = vunpack.c.l.b16 %v363
        %v1012 = vunpack.c.l.b16 %v364
        %v1013 = vunpack.c.h.b16 %v364
        %v1014 = vunpack.c.l.b16 %v365
        %v1015 = vunpack.c.l.b16 %v366
        %v1016 = vunpack.c.h.b16 %v366
        %v1017 = vunpack.c.l.b16 %v367
        %v1018 = vunpack.c.l.b16 %v368
        %v1019 = vunpack.c.h.b16 %v368
        %v1020 = vunpack.c.l.b16 %v369
        %v1021 = vunpack.c.l.b16 %v370
        %v1022 = vunpack.c.h.b16 %v370
        %v1023 = vunpack.c.l.b16 %v371
        %v1024 = vunpack.c.l.b16 %v372
        %v1025 = vunpack.c.h.b16 %v372
        %v1026 = vunpack.c.l.b16 %v373
        %v1027 = vunpack.c.l.b16 %v374
        %v1028 = vunpack.c.h.b16 %v374
        %v1029 = vunpack.c.l.b16 %v375
        %v1030 = vunpack.c.l.b16 %v376
        %v1031 = vunpack.c.h.b16 %v376
        %v1032 = vunpack.c.l.b16 %v377
        %v1033 = vunpack.c.l.b16 %v378
        %v1034 = vunpack.c.h.b16 %v378
        %v1035 = vunpack.c.l.b16 %v379
        %v1036 = vunpack.c.l.b16 %v380
        %v1037 = vunpack.c.h.b16 %v380
        %v1038 = vunpack.c.l.b16 %v381
        %v1039 = vunpack.c.l.b16 %v382
        %v1040 = vunpack.c.h.b16 %v382
        %v1041 = vunpack.c.l.b16 %v383
        %v1042 = vunpack.c.l.b16 %v384
        %v1043 = vunpack.c.h.b16 %v384
        %v1044 = vunpack.c.l.b16 %v385
        %v1045 = vunpack.c.l.b16 %v386
        %v1046 = vunpack.c.h.b16 %v386
        %v1047 = vunpack.c.l.b16 %v387
        %v1048 = vunpack.c.l.b16 %v388
        %v1049 = vunpack.c.h.b16 %v388
        %v1050 = vunpack.c.l.b16 %v389
        %v1051 = vunpack.c.l.b16 %v390
        %v1052 = vunpack.c.h.b16 %v390
        %v1053 = vunpack.c.l.b16 %v391
        %v1054 = vunpack.c.l.b16 %v392
        %v1055 = vunpack.c.h.b16 %v392
        %v1056 = vunpack.c.l.b16 %v393
        %v1057 = vunpack.c.l.b16 %v394
        %v1058 = vunpack.c.h.b16 %v394
        %v1059 = vunpack.c.l.b16 %v395
        %v1060 = vunpack.c.l.b16 %v396
        %v1061 = vunpack.c.h.b16 %v396
        %v1062 = vunpack.c.l.b16 %v397
        %v1063 = vunpack.c.l.b16 %v398
        %v1064 = vunpack.c.h.b16 %v398
        %v1065 = vunpack.c.l.b16 %v399
        %v1066 = vunpack.c.l.b16 %v400
        %v1067 = vunpack.c.h.b16 %v400
        %v1068 = vunpack.c.l.b16 %v401
        %v1069 = vunpack.c.l.b16 %v402
        %v1070 = vunpack.c.h.b16 %v402
        %v1071 = vunpack.c.l.b16 %v403
        %v1072 = vunpack.c.l.b16 %v404
        %v1073 = vunpack.c.h.b16 %v404
        %v1074 = vunpack.c.l.b16 %v405
        %v1075 = vunpack.c.l.b16 %v406
        %v1076 = vunpack.c.h.b16 %v406
        %v1077 = vunpack.c.l.b16 %v407
        %v1078 = vunpack.c.l.b16 %v408
        %v1079 = vunpack.c.h.b16 %v408
        %v1080 = vunpack.c.l.b16 %v409
        %v1081 = vunpack.c.l.b16 %v410
        %v1082 = vunpack.c.h.b16 %v410
        %v1083 = vunpack.c.l.b16 %v411
        %v1084 = vunpack.c.l.b16 %v412
        %v1085 = vunpack.c.h.b16 %v412
        %v1086 = vunpack.c.l.b16 %v413
        %v1087 = vunpack.c.l.b16 %v414
        %v1088 = vunpack.c.h.b16 %v414
        %v1089 = vunpack.c.l.b16 %v415
        %v1090 = vunpack.c.l.b16 %v416
        %v1091 = vunpack.c.h.b16 %v416
        %v1092 = vunpack.c.l.b16 %v417
        %v1093 = vunpack.c.l.b16 %v418
        %v1094 = vunpack.c.h.b16 %v418
        %v1095 = vunpack.c.l.b16 %v419
        %v1096 = vunpack.c.l.b16 %v420
        %v1097 = vunpack.c.h.b16 %v420
        %v1098 = vunpack.c.l.b16 %v421
        %v1099 = vunpack.c.l.b16 %v422
        %v1100 = vunpack.c.h.b16 %v422
        %v1101 = vunpack.c.l.b16 %v423
        %v1102 = vunpack.c.l.b16 %v424
        %v1103 = vunpack.c.h.b16 %v424
        %v1104 = vunpack.c.l.b16 %v425
        %v1105 = vunpack.c.l.b16 %v426
        %v1106 = vunpack.c.h.b16 %v426
        %v1107 = vunpack.c.l.b16 %v427
        %v1108 = vpack.c.b16 %v727, %v724
        %v1109 = vpack.c.b16 %v728, %v725
        %v1110 = vpack.c.b16 %v729, %v726
        %v1111 = vpack.c.b16 %v733, %v730
        %v1112 = vpack.c.b16 %v734, %v731
        %v1113 = vpack.c.b16 %v735, %v732
        %v1114 = vpack.c.b16 %v739, %v736
        %v1115 = vpack.c.b16 %v740, %v737
        %v1116 = vpack.c.b16 %v741, %v738
        %v1117 = vpack.c.b16 %v745, %v742
        %v1118 = vpack.c.b16 %v746, %v743
        %v1119 = vpack.c.b16 %v747, %v744
        %v1120 = vpack.c.b16 %v751, %v748
        %v1121 = vpack.c.b16 %v752, %v749
        %v1122 = vpack.c.b16 %v753, %v750
        %v1123 = vpack.c.b16 %v757, %v754
        %v1124 = vpack.c.b16 %v758, %v755
        %v1125 = vpack.c.b16 %v759, %v756
        %v1126 = vpack.c.b16 %v763, %v760
        %v1127 = vpack.c.b16 %v764, %v761
        %v1128 = vpack.c.b16 %v765, %v762
        %v1129 = vpack.c.b16 %v769, %v766
        %v1130 = vpack.c.b16 %v770, %v767
        %v1131 = vpack.c.b16 %v771, %v768
        %v1132 = vpack.c.b16 %v775, %v772
        %v1133 = vpack.c.b16 %v776, %v773
        %v1134 = vpack.c.b16 %v777, %v774
        %v1135 = vpack.c.b16 %v781, %v778
        %v1136 = vpack.c.b16 %v782, %v779
        %v1137 = vpack.c.b16 %v783, %v780
        %v1138 = vpack.c.b16 %v787, %v784
        %v1139 = vpack.c.b16 %v788, %v785
        %v1140 = vpack.c.b16 %v789, %v786
        %v1141 = vpack.c.b16 %v793, %v790
        %v1142 = vpack.c.b16 %v794, %v791
        %v1143 = vpack.c.b16 %v795, %v792
        %v1144 = vpack.c.b16 %v799, %v796
        %v1145 = vpack.c.b16 %v800, %v797
        %v1146 = vpack.c.b16 %v801, %v798
        %v1147 = vpack.c.b16 %v805, %v802
        %v1148 = vpack.c.b16 %v806, %v803
        %v1149 = vpack.c.b16 %v807, %v804
        %v1150 = vpack.c.b16 %v811, %v808
        %v1151 = vpack.c.b16 %v812, %v809
        %v1152 = vpack.c.b16 %v813, %v810
        %v1153 = vpack.c.b16 %v817, %v814
        %v1154 = vpack.c.b16 %v818, %v815
        %v1155 = vpack.c.b16 %v819, %v816
        %v1156 = vpack.c.b16 %v823, %v820
        %v1157 = vpack.c.b16 %v824, %v821
        %v1158 = vpack.c.b16 %v825, %v822
        %v1159 = vpack.c.b16 %v829, %v826
        %v1160 = vpack.c.b16 %v830, %v827
        %v1161 = vpack.c.b16 %v831, %v828
        %v1162 = vpack.c.b16 %v835, %v832
        %v1163 = vpack.c.b16 %v836, %v833
        %v1164 = vpack.c.b16 %v837, %v834
        %v1165 = vpack.c.b16 %v841, %v838
        %v1166 = vpack.c.b16 %v842, %v839
        %v1167 = vpack.c.b16 %v843, %v840
        %v1168 = vpack.c.b16 %v847, %v844
        %v1169 = vpack.c.b16 %v848, %v845
        %v1170 = vpack.c.b16 %v849, %v846
        %v1171 = vpack.c.b16 %v853, %v850
        %v1172 = vpack.c.b16 %v854, %v851
        %v1173 = vpack.c.b16 %v855, %v852
        %v1174 = vpack.c.b16 %v859, %v856
        %v1175 = vpack.c.b16 %v860, %v857
        %v1176 = vpack.c.b16 %v861, %v858
        %v1177 = vpack.c.b16 %v865, %v862
        %v1178 = vpack.c.b16 %v866, %v863
        %v1179 = vpack.c.b16 %v867, %v864
        %v1180 = vpack.c.b16 %v871, %v868
        %v1181 = vpack.c.b16 %v872, %v869
        %v1182 = vpack.c.b16 %v873, %v870
        %v1183 = vpack.c.b16 %v877, %v874
        %v1184 = vpack.c.b16 %v878, %v875
        %v1185 = vpack.c.b16 %v879, %v876
        %v1186 = vpack.c.b16 %v883, %v880
        %v1187 = vpack.c.b16 %v884, %v881
        %v1188 = vpack.c.b16 %v885, %v882
        %v1189 = vpack.c.b16 %v889, %v886
        %v1190 = vpack.c.b16 %v890, %v887
        %v1191 = vpack.c.b16 %v891, %v888
        %v1192 = vpack.c.b16 %v895, %v892
        %v1193 = vpack.c.b16 %v896, %v893
        %v1194 = vpack.c.b16 %v897, %v894
        %v1195 = vpack.c.b16 %v901, %v898
        %v1196 = vpack.c.b16 %v902, %v899
        %v1197 = vpack.c.b16 %v903, %v900
        %v1198 = vpack.c.b16 %v907, %v904
        %v1199 = vpack.c.b16 %v908, %v905
        %v1200 = vpack.c.b16 %v909, %v906
        %v1201 = vpack.c.b16 %v913, %v910
        %v1202 = vpack.c.b16 %v914, %v911
        %v1203 = vpack.c.b16 %v915, %v912
        %v1204 = vpack.c.b16 %v919, %v916
        %v1205 = vpack.c.b16 %v920, %v917
        %v1206 = vpack.c.b16 %v921, %v918
        %v1207 = vpack.c.b16 %v925, %v922
        %v1208 = vpack.c.b16 %v926, %v923
        %v1209 = vpack.c.b16 %v927, %v924
        %v1210 = vpack.c.b16 %v931, %v928
        %v1211 = vpack.c.b16 %v932, %v929
        %v1212 = vpack.c.b16 %v933, %v930
        %v1213 = vpack.c.b16 %v937, %v934
        %v1214 = vpack.c.b16 %v938, %v935
        %v1215 = vpack.c.b16 %v939, %v936
        %v1216 = vpack.c.b16 %v943, %v940
        %v1217 = vpack.c.b16 %v944, %v941
        %v1218 = vpack.c.b16 %v945, %v942
        %v1219 = vpack.c.b16 %v949, %v946
        %v1220 = vpack.c.b16 %v950, %v947
        %v1221 = vpack.c.b16 %v951, %v948
        %v1222 = vpack.c.b16 %v955, %v952
        %v1223 = vpack.c.b16 %v956, %v953
        %v1224 = vpack.c.b16 %v957, %v954
        %v1225 = vpack.c.b16 %v961, %v958
        %v1226 = vpack.c.b16 %v962, %v959
        %v1227 = vpack.c.b16 %v963, %v960
        %v1228 = vpack.c.b16 %v967, %v964
        %v1229 = vpack.c.b16 %v968, %v965
        %v1230 = vpack.c.b16 %v969, %v966
        %v1231 = vpack.c.b16 %v973, %v970
        %v1232 = vpack.c.b16 %v974, %v971
        %v1233 = vpack.c.b16 %v975, %v972
        %v1234 = vpack.c.b16 %v979, %v976
        %v1235 = vpack.c.b16 %v980, %v977
        %v1236 = vpack.c.b16 %v981, %v978
        %v1237 = vpack.c.b16 %v985, %v982
        %v1238 = vpack.c.b16 %v986, %v983
        %v1239 = vpack.c.b16 %v987, %v984
        %v1240 = vpack.c.b16 %v991, %v988
        %v1241 = vpack.c.b16 %v992, %v989
        %v1242 = vpack.c.b16 %v993, %v990
        %v1243 = vpack.c.b16 %v997, %v994
        %v1244 = vpack.c.b16 %v998, %v995
        %v1245 = vpack.c.b16 %v999, %v996
        %v1246 = vpack.c.b16 %v1003, %v1000
        %v1247 = vpack.c.b16 %v1004, %v1001
        %v1248 = vpack.c.b16 %v1005, %v1002
        %v1249 = vpack.c.b16 %v1009, %v1006
        %v1250 = vpack.c.b16 %v1010, %v1007
        %v1251 = vpack.c.b16 %v1011, %v1008
        %v1252 = vpack.c.b16 %v1015, %v1012
        %v1253 = vpack.c.b16 %v1016, %v1013
        %v1254 = vpack.c.b16 %v1017, %v1014
        %v1255 = vpack.c.b16 %v1021, %v1018
        %v1256 = vpack.c.b16 %v1022, %v1019
        %v1257 = vpack.c.b16 %v1023, %v1020
        %v1258 = vpack.c.b16 %v1027, %v1024
        %v1259 = vpack.c.b16 %v1028, %v1025
        %v1260 = vpack.c.b16 %v1029, %v1026
        %v1261 = vpack.c.b16 %v1033, %v1030
        %v1262 = vpack.c.b16 %v1034, %v1031
        %v1263 = vpack.c.b16 %v1035, %v1032
        %v1264 = vpack.c.b16 %v1039, %v1036
        %v1265 = vpack.c.b16 %v1040, %v1037
        %v1266 = vpack.c.b16 %v1041, %v1038
        %v1267 = vpack.c.b16 %v1045, %v1042
        %v1268 = vpack.c.b16 %v1046, %v1043
        %v1269 = vpack.c.b16 %v1047, %v1044
        %v1270 = vpack.c.b16 %v1051, %v1048
        %v1271 = vpack.c.b16 %v1052, %v1049
        %v1272 = vpack.c.b16 %v1053, %v1050
        %v1273 = vpack.c.b16 %v1057, %v1054
        %v1274 = vpack.c.b16 %v1058, %v1055
        %v1275 = vpack.c.b16 %v1059, %v1056
        %v1276 = vpack.c.b16 %v1063, %v1060
        %v1277 = vpack.c.b16 %v1064, %v1061
        %v1278 = vpack.c.b16 %v1065, %v1062
        %v1279 = vpack.c.b16 %v1069, %v1066
        %v1280 = vpack.c.b16 %v1070, %v1067
        %v1281 = vpack.c.b16 %v1071, %v1068
        %v1282 = vpack.c.b16 %v1075, %v1072
        %v1283 = vpack.c.b16 %v1076, %v1073
        %v1284 = vpack.c.b16 %v1077, %v1074
        %v1285 = vpack.c.b16 %v1081, %v1078
        %v1286 = vpack.c.b16 %v1082, %v1079
        %v1287 = vpack.c.b16 %v1083, %v1080
        %v1288 = vpack.c.b16 %v1087, %v1084
        %v1289 = vpack.c.b16 %v1088, %v1085
        %v1290 = vpack.c.b16 %v1089, %v1086
        %v1291 = vpack.c.b16 %v1093, %v1090
        %v1292 = vpack.c.b16 %v1094, %v1091
        %v1293 = vpack.c.b16 %v1095, %v1092
        %v1294 = vpack.c.b16 %v1099, %v1096
        %v1295 = vpack.c.b16 %v1100, %v1097
        %v1296 = vpack.c.b16 %v1101, %v1098
        %v1297 = vpack.c.b16 %v1105, %v1102
        %v1298 = vpack.c.b16 %v1106, %v1103
        %v1299 = vpack.c.b16 %v1107, %v1104
        %v1464 = vunpack.c.l.b16 %v428
        %v1465 = vunpack.c.l.b16 %v429
        %v1466 = vunpack.c.l.b16 %v430
        %v1467 = vunpack.c.l.b16 %v431
        %v1468 = vunpack.c.l.b16 %v432
        %v1469 = vunpack.c.l.b16 %v433
        %v1470 = vunpack.c.l.b16 %v434
        %v1471 = vunpack.c.l.b16 %v435
        %v1472 = vunpack.c.l.b16 %v436
        %v1473 = vunpack.c.l.b16 %v437
        %v1474 = vunpack.c.l.b16 %v438
        %v1475 = vunpack.c.l.b16 %v439
        %v1476 = vunpack.c.l.b16 %v440
        %v1477 = vunpack.c.l.b16 %v441
        %v1478 = vunpack.c.l.b16 %v442
        %v1479 = vunpack.c.l.b16 %v443
        %v1480 = vunpack.c.l.b16 %v444
        %v1481 = vunpack.c.l.b16 %v445
        %v1482 = vunpack.c.l.b16 %v446
        %v1483 = vunpack.c.l.b16 %v447
        %v1484 = vunpack.c.l.b16 %v448
        %v1485 = vunpack.c.l.b16 %v449
        %v1486 = vunpack.c.l.b16 %v450
        %v1487 = vunpack.c.l.b16 %v451
        %v1488 = vunpack.c.l.b16 %v452
        %v1489 = vunpack.c.l.b16 %v453
        %v1490 = vunpack.c.l.b16 %v454
        %v1491 = vunpack.c.l.b16 %v455
        %v1492 = vunpack.c.l.b16 %v456
        %v1493 = vunpack.c.l.b16 %v457
        %v1494 = vunpack.c.l.b16 %v458
        %v1495 = vunpack.c.l.b16 %v459
        %v1496 = vunpack.c.l.b16 %v460
        %v1497 = vunpack.c.l.b16 %v461
        %v1498 = vunpack.c.l.b16 %v462
        %v1499 = vunpack.c.l.b16 %v463
        %v1500 = vpack.c.b16 %v1465, %v1464
        %v1501 = vpack.c.b16 %v1467, %v1466
        %v1502 = vpack.c.b16 %v1469, %v1468
        %v1503 = vpack.c.b16 %v1471, %v1470
        %v1504 = vpack.c.b16 %v1473, %v1472
        %v1505 = vpack.c.b16 %v1475, %v1474
        %v1506 = vpack.c.b16 %v1477, %v1476
        %v1507 = vpack.c.b16 %v1479, %v1478
        %v1508 = vpack.c.b16 %v1481, %v1480
        %v1509 = vpack.c.b16 %v1483, %v1482
        %v1510 = vpack.c.b16 %v1485, %v1484
        %v1511 = vpack.c.b16 %v1487, %v1486
        %v1512 = vpack.c.b16 %v1489, %v1488
        %v1513 = vpack.c.b16 %v1491, %v1490
        %v1514 = vpack.c.b16 %v1493, %v1492
        %v1515 = vpack.c.b16 %v1495, %v1494
        %v1516 = vpack.c.b16 %v1497, %v1496
        %v1517 = vpack.c.b16 %v1499, %v1498
        %vm1536 = vcmask 261120
        %v1538 = vsel %vm1536, %v1110, 0
        %v1541 = vsel %vm1536, %v1113, 0
        %v1544 = vsel %vm1536, %v1116, 0
        %v1547 = vsel %vm1536, %v1119, 0
        %v1550 = vsel %vm1536, %v1122, 0
        %v1553 = vsel %vm1536, %v1125, 0
        %v1556 = vsel %vm1536, %v1128, 0
        %v1559 = vsel %vm1536, %v1131, 0
        %v1562 = vsel %vm1536, %v1134, 0
        %v1565 = vsel %vm1536, %v1137, 0
        %v1568 = vsel %vm1536, %v1140, 0
        %v1571 = vsel %vm1536, %v1143, 0
        %v1574 = vsel %vm1536, %v1146, 0
        %v1577 = vsel %vm1536, %v1149, 0
        %v1580 = vsel %vm1536, %v1152, 0
        %v1583 = vsel %vm1536, %v1155, 0
        %v1586 = vsel %vm1536, %v1158, 0
        %v1589 = vsel %vm1536, %v1161, 0
        %v1592 = vsel %vm1536, %v1164, 0
        %v1595 = vsel %vm1536, %v1167, 0
        %v1598 = vsel %vm1536, %v1170, 0
        %v1601 = vsel %vm1536, %v1173, 0
        %v1604 = vsel %vm1536, %v1176, 0
        %v1607 = vsel %vm1536, %v1179, 0
        %v1610 = vsel %vm1536, %v1182, 0
        %v1613 = vsel %vm1536, %v1185, 0
        %v1616 = vsel %vm1536, %v1188, 0
        %v1619 = vsel %vm1536, %v1191, 0
        %v1622 = vsel %vm1536, %v1194, 0
        %v1625 = vsel %vm1536, %v1197, 0
        %v1628 = vsel %vm1536, %v1200, 0
        %v1631 = vsel %vm1536, %v1203, 0
        %v1634 = vsel %vm1536, %v1206, 0
        %v1637 = vsel %vm1536, %v1209, 0
        %v1640 = vsel %vm1536, %v1212, 0
        %v1643 = vsel %vm1536, %v1215, 0
        %v1646 = vsel %vm1536, %v1218, 0
        %v1649 = vsel %vm1536, %v1221, 0
        %v1652 = vsel %vm1536, %v1224, 0
        %v1655 = vsel %vm1536, %v1227, 0
        %v1658 = vsel %vm1536, %v1230, 0
        %v1661 = vsel %vm1536, %v1233, 0
        %v1664 = vsel %vm1536, %v1236, 0
        %v1667 = vsel %vm1536, %v1239, 0
        %v1670 = vsel %vm1536, %v1242, 0
        %v1673 = vsel %vm1536, %v1245, 0
        %v1676 = vsel %vm1536, %v1248, 0
        %v1679 = vsel %vm1536, %v1251, 0
        %v1682 = vsel %vm1536, %v1254, 0
        %v1685 = vsel %vm1536, %v1257, 0
        %v1688 = vsel %vm1536, %v1260, 0
        %v1691 = vsel %vm1536, %v1263, 0
        %v1694 = vsel %vm1536, %v1266, 0
        %v1697 = vsel %vm1536, %v1269, 0
        %v1700 = vsel %vm1536, %v1272, 0
        %v1703 = vsel %vm1536, %v1275, 0
        %v1706 = vsel %vm1536, %v1278, 0
        %v1709 = vsel %vm1536, %v1281, 0
        %v1712 = vsel %vm1536, %v1284, 0
        %v1715 = vsel %vm1536, %v1287, 0
        %v1718 = vsel %vm1536, %v1290, 0
        %v1721 = vsel %vm1536, %v1293, 0
        %v1724 = vsel %vm1536, %v1296, 0
        %v1727 = vsel %vm1536, %v1299, 0
        %1729 = vmatpush.bf16.msra.mxu0 %v1507
        %1730 = vmatpush.bf16.msra.mxu0 %v1506
        %1731 = vmatpush.bf16.msra.mxu0 %v1505
        %1732 = vmatpush.bf16.msra.mxu0 %v1504
        %1733 = vmatpush.bf16.msra.mxu0 %v1503
        %1734 = vmatpush.bf16.msra.mxu0 %v1502
        %1735 = vmatpush.bf16.msra.mxu0 %v1501
        %1736 = vmatpush.bf16.msra.mxu0 %v1500
        %1737 = vmatmul.bf16.gmra.mxu0 %v1108
        %v1738 = vpop.f32.mrf.mxu0
        %v1739 = vadd.f32 %v466, %v1738
        %v1740 = vpop.f32.mrf.mxu0
        %v1741 = vadd.f32 %v466, %v1740
        %1742 = vmatmul.bf16.gmra.mxu0 %v1111
        %v1743 = vpop.f32.mrf.mxu0
        %v1744 = vadd.f32 %v466, %v1743
        %v1745 = vpop.f32.mrf.mxu0
        %v1746 = vadd.f32 %v466, %v1745
        %1747 = vmatmul.bf16.gmra.mxu0 %v1114
        %v1748 = vpop.f32.mrf.mxu0
        %v1749 = vadd.f32 %v466, %v1748
        %v1750 = vpop.f32.mrf.mxu0
        %v1751 = vadd.f32 %v466, %v1750
        %1752 = vmatmul.bf16.gmra.mxu0 %v1117
        %v1753 = vpop.f32.mrf.mxu0
        %v1754 = vadd.f32 %v466, %v1753
        %v1755 = vpop.f32.mrf.mxu0
        %v1756 = vadd.f32 %v466, %v1755
        %1757 = vmatmul.bf16.gmra.mxu0 %v1120
        %v1758 = vpop.f32.mrf.mxu0
        %v1759 = vadd.f32 %v466, %v1758
        %v1760 = vpop.f32.mrf.mxu0
        %v1761 = vadd.f32 %v466, %v1760
        %1762 = vmatmul.bf16.gmra.mxu0 %v1123
        %v1763 = vpop.f32.mrf.mxu0
        %v1764 = vadd.f32 %v466, %v1763
        %v1765 = vpop.f32.mrf.mxu0
        %v1766 = vadd.f32 %v466, %v1765
        %1767 = vmatmul.bf16.gmra.mxu0 %v1126
        %v1768 = vpop.f32.mrf.mxu0
        %v1769 = vadd.f32 %v466, %v1768
        %v1770 = vpop.f32.mrf.mxu0
        %v1771 = vadd.f32 %v466, %v1770
        %1772 = vmatmul.bf16.gmra.mxu0 %v1129
        %v1773 = vpop.f32.mrf.mxu0
        %v1774 = vadd.f32 %v466, %v1773
        %v1775 = vpop.f32.mrf.mxu0
        %v1776 = vadd.f32 %v466, %v1775
        %1777 = vmatmul.bf16.gmra.mxu0 %v1132
        %v1778 = vpop.f32.mrf.mxu0
        %v1779 = vadd.f32 %v466, %v1778
        %v1780 = vpop.f32.mrf.mxu0
        %v1781 = vadd.f32 %v466, %v1780
        %1782 = vmatmul.bf16.gmra.mxu0 %v1135
        %v1783 = vpop.f32.mrf.mxu0
        %v1784 = vadd.f32 %v466, %v1783
        %v1785 = vpop.f32.mrf.mxu0
        %v1786 = vadd.f32 %v466, %v1785
        %1787 = vmatmul.bf16.gmra.mxu0 %v1138
        %v1788 = vpop.f32.mrf.mxu0
        %v1789 = vadd.f32 %v466, %v1788
        %v1790 = vpop.f32.mrf.mxu0
        %v1791 = vadd.f32 %v466, %v1790
        %1792 = vmatmul.bf16.gmra.mxu0 %v1141
        %v1793 = vpop.f32.mrf.mxu0
        %v1794 = vadd.f32 %v466, %v1793
        %v1795 = vpop.f32.mrf.mxu0
        %v1796 = vadd.f32 %v466, %v1795
        %1797 = vmatmul.bf16.gmra.mxu0 %v1144
        %v1798 = vpop.f32.mrf.mxu0
        %v1799 = vadd.f32 %v466, %v1798
        %v1800 = vpop.f32.mrf.mxu0
        %v1801 = vadd.f32 %v466, %v1800
        %1802 = vmatmul.bf16.gmra.mxu0 %v1147
        %v1803 = vpop.f32.mrf.mxu0
        %v1804 = vadd.f32 %v466, %v1803
        %v1805 = vpop.f32.mrf.mxu0
        %v1806 = vadd.f32 %v466, %v1805
        %1807 = vmatmul.bf16.gmra.mxu0 %v1150
        %v1808 = vpop.f32.mrf.mxu0
        %v1809 = vadd.f32 %v466, %v1808
        %v1810 = vpop.f32.mrf.mxu0
        %v1811 = vadd.f32 %v466, %v1810
        %1812 = vmatmul.bf16.gmra.mxu0 %v1153
        %v1813 = vpop.f32.mrf.mxu0
        %v1814 = vadd.f32 %v466, %v1813
        %v1815 = vpop.f32.mrf.mxu0
        %v1816 = vadd.f32 %v466, %v1815
        %1817 = vmatmul.bf16.gmra.mxu0 %v1156
        %v1818 = vpop.f32.mrf.mxu0
        %v1819 = vadd.f32 %v466, %v1818
        %v1820 = vpop.f32.mrf.mxu0
        %v1821 = vadd.f32 %v466, %v1820
        %1822 = vmatmul.bf16.gmra.mxu0 %v1159
        %v1823 = vpop.f32.mrf.mxu0
        %v1824 = vadd.f32 %v466, %v1823
        %v1825 = vpop.f32.mrf.mxu0
        %v1826 = vadd.f32 %v466, %v1825
        %1827 = vmatmul.bf16.gmra.mxu0 %v1162
        %v1828 = vpop.f32.mrf.mxu0
        %v1829 = vadd.f32 %v466, %v1828
        %v1830 = vpop.f32.mrf.mxu0
        %v1831 = vadd.f32 %v466, %v1830
        %1832 = vmatmul.bf16.gmra.mxu0 %v1165
        %v1833 = vpop.f32.mrf.mxu0
        %v1834 = vadd.f32 %v466, %v1833
        %v1835 = vpop.f32.mrf.mxu0
        %v1836 = vadd.f32 %v466, %v1835
        %1837 = vmatmul.bf16.gmra.mxu0 %v1168
        %v1838 = vpop.f32.mrf.mxu0
        %v1839 = vadd.f32 %v466, %v1838
        %v1840 = vpop.f32.mrf.mxu0
        %v1841 = vadd.f32 %v466, %v1840
        %1842 = vmatmul.bf16.gmra.mxu0 %v1171
        %v1843 = vpop.f32.mrf.mxu0
        %v1844 = vadd.f32 %v466, %v1843
        %v1845 = vpop.f32.mrf.mxu0
        %v1846 = vadd.f32 %v466, %v1845
        %1847 = vmatmul.bf16.gmra.mxu0 %v1174
        %v1848 = vpop.f32.mrf.mxu0
        %v1849 = vadd.f32 %v466, %v1848
        %v1850 = vpop.f32.mrf.mxu0
        %v1851 = vadd.f32 %v466, %v1850
        %1852 = vmatmul.bf16.gmra.mxu0 %v1177
        %v1853 = vpop.f32.mrf.mxu0
        %v1854 = vadd.f32 %v466, %v1853
        %v1855 = vpop.f32.mrf.mxu0
        %v1856 = vadd.f32 %v466, %v1855
        %1857 = vmatmul.bf16.gmra.mxu0 %v1180
        %v1858 = vpop.f32.mrf.mxu0
        %v1859 = vadd.f32 %v466, %v1858
        %v1860 = vpop.f32.mrf.mxu0
        %v1861 = vadd.f32 %v466, %v1860
        %1862 = vmatmul.bf16.gmra.mxu0 %v1183
        %v1863 = vpop.f32.mrf.mxu0
        %v1864 = vadd.f32 %v466, %v1863
        %v1865 = vpop.f32.mrf.mxu0
        %v1866 = vadd.f32 %v466, %v1865
        %1867 = vmatmul.bf16.gmra.mxu0 %v1186
        %v1868 = vpop.f32.mrf.mxu0
        %v1869 = vadd.f32 %v466, %v1868
        %v1870 = vpop.f32.mrf.mxu0
        %v1871 = vadd.f32 %v466, %v1870
        %1872 = vmatmul.bf16.gmra.mxu0 %v1189
        %v1873 = vpop.f32.mrf.mxu0
        %v1874 = vadd.f32 %v466, %v1873
        %v1875 = vpop.f32.mrf.mxu0
        %v1876 = vadd.f32 %v466, %v1875
        %1877 = vmatmul.bf16.gmra.mxu0 %v1192
        %v1878 = vpop.f32.mrf.mxu0
        %v1879 = vadd.f32 %v466, %v1878
        %v1880 = vpop.f32.mrf.mxu0
        %v1881 = vadd.f32 %v466, %v1880
        %1882 = vmatmul.bf16.gmra.mxu0 %v1195
        %v1883 = vpop.f32.mrf.mxu0
        %v1884 = vadd.f32 %v466, %v1883
        %v1885 = vpop.f32.mrf.mxu0
        %v1886 = vadd.f32 %v466, %v1885
        %1887 = vmatmul.bf16.gmra.mxu0 %v1198
        %v1888 = vpop.f32.mrf.mxu0
        %v1889 = vadd.f32 %v466, %v1888
        %v1890 = vpop.f32.mrf.mxu0
        %v1891 = vadd.f32 %v466, %v1890
        %1892 = vmatmul.bf16.gmra.mxu0 %v1201
        %v1893 = vpop.f32.mrf.mxu0
        %v1894 = vadd.f32 %v466, %v1893
        %v1895 = vpop.f32.mrf.mxu0
        %v1896 = vadd.f32 %v466, %v1895
        %1897 = vmatmul.bf16.gmra.mxu0 %v1204
        %v1898 = vpop.f32.mrf.mxu0
        %v1899 = vadd.f32 %v466, %v1898
        %v1900 = vpop.f32.mrf.mxu0
        %v1901 = vadd.f32 %v466, %v1900
        %1902 = vmatmul.bf16.gmra.mxu0 %v1207
        %v1903 = vpop.f32.mrf.mxu0
        %v1904 = vadd.f32 %v466, %v1903
        %v1905 = vpop.f32.mrf.mxu0
        %v1906 = vadd.f32 %v466, %v1905
        %1907 = vmatmul.bf16.gmra.mxu0 %v1210
        %v1908 = vpop.f32.mrf.mxu0
        %v1909 = vadd.f32 %v466, %v1908
        %v1910 = vpop.f32.mrf.mxu0
        %v1911 = vadd.f32 %v466, %v1910
        %1912 = vmatmul.bf16.gmra.mxu0 %v1213
        %v1913 = vpop.f32.mrf.mxu0
        %v1914 = vadd.f32 %v466, %v1913
        %v1915 = vpop.f32.mrf.mxu0
        %v1916 = vadd.f32 %v466, %v1915
        %1917 = vmatmul.bf16.gmra.mxu0 %v1216
        %v1918 = vpop.f32.mrf.mxu0
        %v1919 = vadd.f32 %v466, %v1918
        %v1920 = vpop.f32.mrf.mxu0
        %v1921 = vadd.f32 %v466, %v1920
        %1922 = vmatmul.bf16.gmra.mxu0 %v1219
        %v1923 = vpop.f32.mrf.mxu0
        %v1924 = vadd.f32 %v466, %v1923
        %v1925 = vpop.f32.mrf.mxu0
        %v1926 = vadd.f32 %v466, %v1925
        %1927 = vmatmul.bf16.gmra.mxu0 %v1222
        %v1928 = vpop.f32.mrf.mxu0
        %v1929 = vadd.f32 %v466, %v1928
        %v1930 = vpop.f32.mrf.mxu0
        %v1931 = vadd.f32 %v466, %v1930
        %1932 = vmatmul.bf16.gmra.mxu0 %v1225
        %v1933 = vpop.f32.mrf.mxu0
        %v1934 = vadd.f32 %v466, %v1933
        %v1935 = vpop.f32.mrf.mxu0
        %v1936 = vadd.f32 %v466, %v1935
        %1937 = vmatmul.bf16.gmra.mxu0 %v1228
        %v1938 = vpop.f32.mrf.mxu0
        %v1939 = vadd.f32 %v466, %v1938
        %v1940 = vpop.f32.mrf.mxu0
        %v1941 = vadd.f32 %v466, %v1940
        %1942 = vmatmul.bf16.gmra.mxu0 %v1231
        %v1943 = vpop.f32.mrf.mxu0
        %v1944 = vadd.f32 %v466, %v1943
        %v1945 = vpop.f32.mrf.mxu0
        %v1946 = vadd.f32 %v466, %v1945
        %1947 = vmatmul.bf16.gmra.mxu0 %v1234
        %v1948 = vpop.f32.mrf.mxu0
        %v1949 = vadd.f32 %v466, %v1948
        %v1950 = vpop.f32.mrf.mxu0
        %v1951 = vadd.f32 %v466, %v1950
        %1952 = vmatmul.bf16.gmra.mxu0 %v1237
        %v1953 = vpop.f32.mrf.mxu0
        %v1954 = vadd.f32 %v466, %v1953
        %v1955 = vpop.f32.mrf.mxu0
        %v1956 = vadd.f32 %v466, %v1955
        %1957 = vmatmul.bf16.gmra.mxu0 %v1240
        %v1958 = vpop.f32.mrf.mxu0
        %v1959 = vadd.f32 %v466, %v1958
        %v1960 = vpop.f32.mrf.mxu0
        %v1961 = vadd.f32 %v466, %v1960
        %1962 = vmatmul.bf16.gmra.mxu0 %v1243
        %v1963 = vpop.f32.mrf.mxu0
        %v1964 = vadd.f32 %v466, %v1963
        %v1965 = vpop.f32.mrf.mxu0
        %v1966 = vadd.f32 %v466, %v1965
        %1967 = vmatmul.bf16.gmra.mxu0 %v1246
        %v1968 = vpop.f32.mrf.mxu0
        %v1969 = vadd.f32 %v466, %v1968
        %v1970 = vpop.f32.mrf.mxu0
        %v1971 = vadd.f32 %v466, %v1970
        %1972 = vmatmul.bf16.gmra.mxu0 %v1249
        %v1973 = vpop.f32.mrf.mxu0
        %v1974 = vadd.f32 %v466, %v1973
        %v1975 = vpop.f32.mrf.mxu0
        %v1976 = vadd.f32 %v466, %v1975
        %1977 = vmatmul.bf16.gmra.mxu0 %v1252
        %v1978 = vpop.f32.mrf.mxu0
        %v1979 = vadd.f32 %v466, %v1978
        %v1980 = vpop.f32.mrf.mxu0
        %v1981 = vadd.f32 %v466, %v1980
        %1982 = vmatmul.bf16.gmra.mxu0 %v1255
        %v1983 = vpop.f32.mrf.mxu0
        %v1984 = vadd.f32 %v466, %v1983
        %v1985 = vpop.f32.mrf.mxu0
        %v1986 = vadd.f32 %v466, %v1985
        %1987 = vmatmul.bf16.gmra.mxu0 %v1258
        %v1988 = vpop.f32.mrf.mxu0
        %v1989 = vadd.f32 %v466, %v1988
        %v1990 = vpop.f32.mrf.mxu0
        %v1991 = vadd.f32 %v466, %v1990
        %1992 = vmatmul.bf16.gmra.mxu0 %v1261
        %v1993 = vpop.f32.mrf.mxu0
        %v1994 = vadd.f32 %v466, %v1993
        %v1995 = vpop.f32.mrf.mxu0
        %v1996 = vadd.f32 %v466, %v1995
        %1997 = vmatmul.bf16.gmra.mxu0 %v1264
        %v1998 = vpop.f32.mrf.mxu0
        %v1999 = vadd.f32 %v466, %v1998
        %v2000 = vpop.f32.mrf.mxu0
        %v2001 = vadd.f32 %v466, %v2000
        %2002 = vmatmul.bf16.gmra.mxu0 %v1267
        %v2003 = vpop.f32.mrf.mxu0
        %v2004 = vadd.f32 %v466, %v2003
        %v2005 = vpop.f32.mrf.mxu0
        %v2006 = vadd.f32 %v466, %v2005
        %2007 = vmatmul.bf16.gmra.mxu0 %v1270
        %v2008 = vpop.f32.mrf.mxu0
        %v2009 = vadd.f32 %v466, %v2008
        %v2010 = vpop.f32.mrf.mxu0
        %v2011 = vadd.f32 %v466, %v2010
        %2012 = vmatmul.bf16.gmra.mxu0 %v1273
        %v2013 = vpop.f32.mrf.mxu0
        %v2014 = vadd.f32 %v466, %v2013
        %v2015 = vpop.f32.mrf.mxu0
        %v2016 = vadd.f32 %v466, %v2015
        %2017 = vmatmul.bf16.gmra.mxu0 %v1276
        %v2018 = vpop.f32.mrf.mxu0
        %v2019 = vadd.f32 %v466, %v2018
        %v2020 = vpop.f32.mrf.mxu0
        %v2021 = vadd.f32 %v466, %v2020
        %2022 = vmatmul.bf16.gmra.mxu0 %v1279
        %v2023 = vpop.f32.mrf.mxu0
        %v2024 = vadd.f32 %v466, %v2023
        %v2025 = vpop.f32.mrf.mxu0
        %v2026 = vadd.f32 %v466, %v2025
        %2027 = vmatmul.bf16.gmra.mxu0 %v1282
        %v2028 = vpop.f32.mrf.mxu0
        %v2029 = vadd.f32 %v466, %v2028
        %v2030 = vpop.f32.mrf.mxu0
        %v2031 = vadd.f32 %v466, %v2030
        %2032 = vmatmul.bf16.gmra.mxu0 %v1285
        %v2033 = vpop.f32.mrf.mxu0
        %v2034 = vadd.f32 %v466, %v2033
        %v2035 = vpop.f32.mrf.mxu0
        %v2036 = vadd.f32 %v466, %v2035
        %2037 = vmatmul.bf16.gmra.mxu0 %v1288
        %v2038 = vpop.f32.mrf.mxu0
        %v2039 = vadd.f32 %v466, %v2038
        %v2040 = vpop.f32.mrf.mxu0
        %v2041 = vadd.f32 %v466, %v2040
        %2042 = vmatmul.bf16.gmra.mxu0 %v1291
        %v2043 = vpop.f32.mrf.mxu0
        %v2044 = vadd.f32 %v466, %v2043
        %v2045 = vpop.f32.mrf.mxu0
        %v2046 = vadd.f32 %v466, %v2045
        %2047 = vmatmul.bf16.gmra.mxu0 %v1294
        %v2048 = vpop.f32.mrf.mxu0
        %v2049 = vadd.f32 %v466, %v2048
        %v2050 = vpop.f32.mrf.mxu0
        %v2051 = vadd.f32 %v466, %v2050
        %2052 = vmatmul.bf16.gmra.mxu0 %v1297
        %v2053 = vpop.f32.mrf.mxu0
        %v2054 = vadd.f32 %v466, %v2053
        %v2055 = vpop.f32.mrf.mxu0
        %v2056 = vadd.f32 %v466, %v2055
        %2057 = vdwg.mxu0
        %2058 = vmatpush.bf16.msra.mxu0 %v1515
        %2059 = vmatpush.bf16.msra.mxu0 %v1514
        %2060 = vmatpush.bf16.msra.mxu0 %v1513
        %2061 = vmatpush.bf16.msra.mxu0 %v1512
        %2062 = vmatpush.bf16.msra.mxu0 %v1511
        %2063 = vmatpush.bf16.msra.mxu0 %v1510
        %2064 = vmatpush.bf16.msra.mxu0 %v1509
        %2065 = vmatpush.bf16.msra.mxu0 %v1508
        %2066 = vmatmul.bf16.gmra.mxu0 %v1109
        %v2067 = vpop.f32.mrf.mxu0
        %v2068 = vadd.f32 %v1739, %v2067
        %v2069 = vpop.f32.mrf.mxu0
        %v2070 = vadd.f32 %v1741, %v2069
        %2071 = vmatmul.bf16.gmra.mxu0 %v1112
        %v2072 = vpop.f32.mrf.mxu0
        %v2073 = vadd.f32 %v1744, %v2072
        %v2074 = vpop.f32.mrf.mxu0
        %v2075 = vadd.f32 %v1746, %v2074
        %2076 = vmatmul.bf16.gmra.mxu0 %v1115
        %v2077 = vpop.f32.mrf.mxu0
        %v2078 = vadd.f32 %v1749, %v2077
        %v2079 = vpop.f32.mrf.mxu0
        %v2080 = vadd.f32 %v1751, %v2079
        %2081 = vmatmul.bf16.gmra.mxu0 %v1118
        %v2082 = vpop.f32.mrf.mxu0
        %v2083 = vadd.f32 %v1754, %v2082
        %v2084 = vpop.f32.mrf.mxu0
        %v2085 = vadd.f32 %v1756, %v2084
        %2086 = vmatmul.bf16.gmra.mxu0 %v1121
        %v2087 = vpop.f32.mrf.mxu0
        %v2088 = vadd.f32 %v1759, %v2087
        %v2089 = vpop.f32.mrf.mxu0
        %v2090 = vadd.f32 %v1761, %v2089
        %2091 = vmatmul.bf16.gmra.mxu0 %v1124
        %v2092 = vpop.f32.mrf.mxu0
        %v2093 = vadd.f32 %v1764, %v2092
        %v2094 = vpop.f32.mrf.mxu0
        %v2095 = vadd.f32 %v1766, %v2094
        %2096 = vmatmul.bf16.gmra.mxu0 %v1127
        %v2097 = vpop.f32.mrf.mxu0
        %v2098 = vadd.f32 %v1769, %v2097
        %v2099 = vpop.f32.mrf.mxu0
        %v2100 = vadd.f32 %v1771, %v2099
        %2101 = vmatmul.bf16.gmra.mxu0 %v1130
        %v2102 = vpop.f32.mrf.mxu0
        %v2103 = vadd.f32 %v1774, %v2102
        %v2104 = vpop.f32.mrf.mxu0
        %v2105 = vadd.f32 %v1776, %v2104
        %2106 = vmatmul.bf16.gmra.mxu0 %v1133
        %v2107 = vpop.f32.mrf.mxu0
        %v2108 = vadd.f32 %v1779, %v2107
        %v2109 = vpop.f32.mrf.mxu0
        %v2110 = vadd.f32 %v1781, %v2109
        %2111 = vmatmul.bf16.gmra.mxu0 %v1136
        %v2112 = vpop.f32.mrf.mxu0
        %v2113 = vadd.f32 %v1784, %v2112
        %v2114 = vpop.f32.mrf.mxu0
        %v2115 = vadd.f32 %v1786, %v2114
        %2116 = vmatmul.bf16.gmra.mxu0 %v1139
        %v2117 = vpop.f32.mrf.mxu0
        %v2118 = vadd.f32 %v1789, %v2117
        %v2119 = vpop.f32.mrf.mxu0
        %v2120 = vadd.f32 %v1791, %v2119
        %2121 = vmatmul.bf16.gmra.mxu0 %v1142
        %v2122 = vpop.f32.mrf.mxu0
        %v2123 = vadd.f32 %v1794, %v2122
        %v2124 = vpop.f32.mrf.mxu0
        %v2125 = vadd.f32 %v1796, %v2124
        %2126 = vmatmul.bf16.gmra.mxu0 %v1145
        %v2127 = vpop.f32.mrf.mxu0
        %v2128 = vadd.f32 %v1799, %v2127
        %v2129 = vpop.f32.mrf.mxu0
        %v2130 = vadd.f32 %v1801, %v2129
        %2131 = vmatmul.bf16.gmra.mxu0 %v1148
        %v2132 = vpop.f32.mrf.mxu0
        %v2133 = vadd.f32 %v1804, %v2132
        %v2134 = vpop.f32.mrf.mxu0
        %v2135 = vadd.f32 %v1806, %v2134
        %2136 = vmatmul.bf16.gmra.mxu0 %v1151
        %v2137 = vpop.f32.mrf.mxu0
        %v2138 = vadd.f32 %v1809, %v2137
        %v2139 = vpop.f32.mrf.mxu0
        %v2140 = vadd.f32 %v1811, %v2139
        %2141 = vmatmul.bf16.gmra.mxu0 %v1154
        %v2142 = vpop.f32.mrf.mxu0
        %v2143 = vadd.f32 %v1814, %v2142
        %v2144 = vpop.f32.mrf.mxu0
        %v2145 = vadd.f32 %v1816, %v2144
        %2146 = vmatmul.bf16.gmra.mxu0 %v1157
        %v2147 = vpop.f32.mrf.mxu0
        %v2148 = vadd.f32 %v1819, %v2147
        %v2149 = vpop.f32.mrf.mxu0
        %v2150 = vadd.f32 %v1821, %v2149
        %2151 = vmatmul.bf16.gmra.mxu0 %v1160
        %v2152 = vpop.f32.mrf.mxu0
        %v2153 = vadd.f32 %v1824, %v2152
        %v2154 = vpop.f32.mrf.mxu0
        %v2155 = vadd.f32 %v1826, %v2154
        %2156 = vmatmul.bf16.gmra.mxu0 %v1163
        %v2157 = vpop.f32.mrf.mxu0
        %v2158 = vadd.f32 %v1829, %v2157
        %v2159 = vpop.f32.mrf.mxu0
        %v2160 = vadd.f32 %v1831, %v2159
        %2161 = vmatmul.bf16.gmra.mxu0 %v1166
        %v2162 = vpop.f32.mrf.mxu0
        %v2163 = vadd.f32 %v1834, %v2162
        %v2164 = vpop.f32.mrf.mxu0
        %v2165 = vadd.f32 %v1836, %v2164
        %2166 = vmatmul.bf16.gmra.mxu0 %v1169
        %v2167 = vpop.f32.mrf.mxu0
        %v2168 = vadd.f32 %v1839, %v2167
        %v2169 = vpop.f32.mrf.mxu0
        %v2170 = vadd.f32 %v1841, %v2169
        %2171 = vmatmul.bf16.gmra.mxu0 %v1172
        %v2172 = vpop.f32.mrf.mxu0
        %v2173 = vadd.f32 %v1844, %v2172
        %v2174 = vpop.f32.mrf.mxu0
        %v2175 = vadd.f32 %v1846, %v2174
        %2176 = vmatmul.bf16.gmra.mxu0 %v1175
        %v2177 = vpop.f32.mrf.mxu0
        %v2178 = vadd.f32 %v1849, %v2177
        %v2179 = vpop.f32.mrf.mxu0
        %v2180 = vadd.f32 %v1851, %v2179
        %2181 = vmatmul.bf16.gmra.mxu0 %v1178
        %v2182 = vpop.f32.mrf.mxu0
        %v2183 = vadd.f32 %v1854, %v2182
        %v2184 = vpop.f32.mrf.mxu0
        %v2185 = vadd.f32 %v1856, %v2184
        %2186 = vmatmul.bf16.gmra.mxu0 %v1181
        %v2187 = vpop.f32.mrf.mxu0
        %v2188 = vadd.f32 %v1859, %v2187
        %v2189 = vpop.f32.mrf.mxu0
        %v2190 = vadd.f32 %v1861, %v2189
        %2191 = vmatmul.bf16.gmra.mxu0 %v1184
        %v2192 = vpop.f32.mrf.mxu0
        %v2193 = vadd.f32 %v1864, %v2192
        %v2194 = vpop.f32.mrf.mxu0
        %v2195 = vadd.f32 %v1866, %v2194
        %2196 = vmatmul.bf16.gmra.mxu0 %v1187
        %v2197 = vpop.f32.mrf.mxu0
        %v2198 = vadd.f32 %v1869, %v2197
        %v2199 = vpop.f32.mrf.mxu0
        %v2200 = vadd.f32 %v1871, %v2199
        %2201 = vmatmul.bf16.gmra.mxu0 %v1190
        %v2202 = vpop.f32.mrf.mxu0
        %v2203 = vadd.f32 %v1874, %v2202
        %v2204 = vpop.f32.mrf.mxu0
        %v2205 = vadd.f32 %v1876, %v2204
        %2206 = vmatmul.bf16.gmra.mxu0 %v1193
        %v2207 = vpop.f32.mrf.mxu0
        %v2208 = vadd.f32 %v1879, %v2207
        %v2209 = vpop.f32.mrf.mxu0
        %v2210 = vadd.f32 %v1881, %v2209
        %2211 = vmatmul.bf16.gmra.mxu0 %v1196
        %v2212 = vpop.f32.mrf.mxu0
        %v2213 = vadd.f32 %v1884, %v2212
        %v2214 = vpop.f32.mrf.mxu0
        %v2215 = vadd.f32 %v1886, %v2214
        %2216 = vmatmul.bf16.gmra.mxu0 %v1199
        %v2217 = vpop.f32.mrf.mxu0
        %v2218 = vadd.f32 %v1889, %v2217
        %v2219 = vpop.f32.mrf.mxu0
        %v2220 = vadd.f32 %v1891, %v2219
        %2221 = vmatmul.bf16.gmra.mxu0 %v1202
        %v2222 = vpop.f32.mrf.mxu0
        %v2223 = vadd.f32 %v1894, %v2222
        %v2224 = vpop.f32.mrf.mxu0
        %v2225 = vadd.f32 %v1896, %v2224
        %2226 = vmatmul.bf16.gmra.mxu0 %v1205
        %v2227 = vpop.f32.mrf.mxu0
        %v2228 = vadd.f32 %v1899, %v2227
        %v2229 = vpop.f32.mrf.mxu0
        %v2230 = vadd.f32 %v1901, %v2229
        %2231 = vmatmul.bf16.gmra.mxu0 %v1208
        %v2232 = vpop.f32.mrf.mxu0
        %v2233 = vadd.f32 %v1904, %v2232
        %v2234 = vpop.f32.mrf.mxu0
        %v2235 = vadd.f32 %v1906, %v2234
        %2236 = vmatmul.bf16.gmra.mxu0 %v1211
        %v2237 = vpop.f32.mrf.mxu0
        %v2238 = vadd.f32 %v1909, %v2237
        %v2239 = vpop.f32.mrf.mxu0
        %v2240 = vadd.f32 %v1911, %v2239
        %2241 = vmatmul.bf16.gmra.mxu0 %v1214
        %v2242 = vpop.f32.mrf.mxu0
        %v2243 = vadd.f32 %v1914, %v2242
        %v2244 = vpop.f32.mrf.mxu0
        %v2245 = vadd.f32 %v1916, %v2244
        %2246 = vmatmul.bf16.gmra.mxu0 %v1217
        %v2247 = vpop.f32.mrf.mxu0
        %v2248 = vadd.f32 %v1919, %v2247
        %v2249 = vpop.f32.mrf.mxu0
        %v2250 = vadd.f32 %v1921, %v2249
        %2251 = vmatmul.bf16.gmra.mxu0 %v1220
        %v2252 = vpop.f32.mrf.mxu0
        %v2253 = vadd.f32 %v1924, %v2252
        %v2254 = vpop.f32.mrf.mxu0
        %v2255 = vadd.f32 %v1926, %v2254
        %2256 = vmatmul.bf16.gmra.mxu0 %v1223
        %v2257 = vpop.f32.mrf.mxu0
        %v2258 = vadd.f32 %v1929, %v2257
        %v2259 = vpop.f32.mrf.mxu0
        %v2260 = vadd.f32 %v1931, %v2259
        %2261 = vmatmul.bf16.gmra.mxu0 %v1226
        %v2262 = vpop.f32.mrf.mxu0
        %v2263 = vadd.f32 %v1934, %v2262
        %v2264 = vpop.f32.mrf.mxu0
        %v2265 = vadd.f32 %v1936, %v2264
        %2266 = vmatmul.bf16.gmra.mxu0 %v1229
        %v2267 = vpop.f32.mrf.mxu0
        %v2268 = vadd.f32 %v1939, %v2267
        %v2269 = vpop.f32.mrf.mxu0
        %v2270 = vadd.f32 %v1941, %v2269
        %2271 = vmatmul.bf16.gmra.mxu0 %v1232
        %v2272 = vpop.f32.mrf.mxu0
        %v2273 = vadd.f32 %v1944, %v2272
        %v2274 = vpop.f32.mrf.mxu0
        %v2275 = vadd.f32 %v1946, %v2274
        %2276 = vmatmul.bf16.gmra.mxu0 %v1235
        %v2277 = vpop.f32.mrf.mxu0
        %v2278 = vadd.f32 %v1949, %v2277
        %v2279 = vpop.f32.mrf.mxu0
        %v2280 = vadd.f32 %v1951, %v2279
        %2281 = vmatmul.bf16.gmra.mxu0 %v1238
        %v2282 = vpop.f32.mrf.mxu0
        %v2283 = vadd.f32 %v1954, %v2282
        %v2284 = vpop.f32.mrf.mxu0
        %v2285 = vadd.f32 %v1956, %v2284
        %2286 = vmatmul.bf16.gmra.mxu0 %v1241
        %v2287 = vpop.f32.mrf.mxu0
        %v2288 = vadd.f32 %v1959, %v2287
        %v2289 = vpop.f32.mrf.mxu0
        %v2290 = vadd.f32 %v1961, %v2289
        %2291 = vmatmul.bf16.gmra.mxu0 %v1244
        %v2292 = vpop.f32.mrf.mxu0
        %v2293 = vadd.f32 %v1964, %v2292
        %v2294 = vpop.f32.mrf.mxu0
        %v2295 = vadd.f32 %v1966, %v2294
        %2296 = vmatmul.bf16.gmra.mxu0 %v1247
        %v2297 = vpop.f32.mrf.mxu0
        %v2298 = vadd.f32 %v1969, %v2297
        %v2299 = vpop.f32.mrf.mxu0
        %v2300 = vadd.f32 %v1971, %v2299
        %2301 = vmatmul.bf16.gmra.mxu0 %v1250
        %v2302 = vpop.f32.mrf.mxu0
        %v2303 = vadd.f32 %v1974, %v2302
        %v2304 = vpop.f32.mrf.mxu0
        %v2305 = vadd.f32 %v1976, %v2304
        %2306 = vmatmul.bf16.gmra.mxu0 %v1253
        %v2307 = vpop.f32.mrf.mxu0
        %v2308 = vadd.f32 %v1979, %v2307
        %v2309 = vpop.f32.mrf.mxu0
        %v2310 = vadd.f32 %v1981, %v2309
        %2311 = vmatmul.bf16.gmra.mxu0 %v1256
        %v2312 = vpop.f32.mrf.mxu0
        %v2313 = vadd.f32 %v1984, %v2312
        %v2314 = vpop.f32.mrf.mxu0
        %v2315 = vadd.f32 %v1986, %v2314
        %2316 = vmatmul.bf16.gmra.mxu0 %v1259
        %v2317 = vpop.f32.mrf.mxu0
        %v2318 = vadd.f32 %v1989, %v2317
        %v2319 = vpop.f32.mrf.mxu0
        %v2320 = vadd.f32 %v1991, %v2319
        %2321 = vmatmul.bf16.gmra.mxu0 %v1262
        %v2322 = vpop.f32.mrf.mxu0
        %v2323 = vadd.f32 %v1994, %v2322
        %v2324 = vpop.f32.mrf.mxu0
        %v2325 = vadd.f32 %v1996, %v2324
        %2326 = vmatmul.bf16.gmra.mxu0 %v1265
        %v2327 = vpop.f32.mrf.mxu0
        %v2328 = vadd.f32 %v1999, %v2327
        %v2329 = vpop.f32.mrf.mxu0
        %v2330 = vadd.f32 %v2001, %v2329
        %2331 = vmatmul.bf16.gmra.mxu0 %v1268
        %v2332 = vpop.f32.mrf.mxu0
        %v2333 = vadd.f32 %v2004, %v2332
        %v2334 = vpop.f32.mrf.mxu0
        %v2335 = vadd.f32 %v2006, %v2334
        %2336 = vmatmul.bf16.gmra.mxu0 %v1271
        %v2337 = vpop.f32.mrf.mxu0
        %v2338 = vadd.f32 %v2009, %v2337
        %v2339 = vpop.f32.mrf.mxu0
        %v2340 = vadd.f32 %v2011, %v2339
        %2341 = vmatmul.bf16.gmra.mxu0 %v1274
        %v2342 = vpop.f32.mrf.mxu0
        %v2343 = vadd.f32 %v2014, %v2342
        %v2344 = vpop.f32.mrf.mxu0
        %v2345 = vadd.f32 %v2016, %v2344
        %2346 = vmatmul.bf16.gmra.mxu0 %v1277
        %v2347 = vpop.f32.mrf.mxu0
        %v2348 = vadd.f32 %v2019, %v2347
        %v2349 = vpop.f32.mrf.mxu0
        %v2350 = vadd.f32 %v2021, %v2349
        %2351 = vmatmul.bf16.gmra.mxu0 %v1280
        %v2352 = vpop.f32.mrf.mxu0
        %v2353 = vadd.f32 %v2024, %v2352
        %v2354 = vpop.f32.mrf.mxu0
        %v2355 = vadd.f32 %v2026, %v2354
        %2356 = vmatmul.bf16.gmra.mxu0 %v1283
        %v2357 = vpop.f32.mrf.mxu0
        %v2358 = vadd.f32 %v2029, %v2357
        %v2359 = vpop.f32.mrf.mxu0
        %v2360 = vadd.f32 %v2031, %v2359
        %2361 = vmatmul.bf16.gmra.mxu0 %v1286
        %v2362 = vpop.f32.mrf.mxu0
        %v2363 = vadd.f32 %v2034, %v2362
        %v2364 = vpop.f32.mrf.mxu0
        %v2365 = vadd.f32 %v2036, %v2364
        %2366 = vmatmul.bf16.gmra.mxu0 %v1289
        %v2367 = vpop.f32.mrf.mxu0
        %v2368 = vadd.f32 %v2039, %v2367
        %v2369 = vpop.f32.mrf.mxu0
        %v2370 = vadd.f32 %v2041, %v2369
        %2371 = vmatmul.bf16.gmra.mxu0 %v1292
        %v2372 = vpop.f32.mrf.mxu0
        %v2373 = vadd.f32 %v2044, %v2372
        %v2374 = vpop.f32.mrf.mxu0
        %v2375 = vadd.f32 %v2046, %v2374
        %2376 = vmatmul.bf16.gmra.mxu0 %v1295
        %v2377 = vpop.f32.mrf.mxu0
        %v2378 = vadd.f32 %v2049, %v2377
        %v2379 = vpop.f32.mrf.mxu0
        %v2380 = vadd.f32 %v2051, %v2379
        %2381 = vmatmul.bf16.gmra.mxu0 %v1298
        %v2382 = vpop.f32.mrf.mxu0
        %v2383 = vadd.f32 %v2054, %v2382
        %v2384 = vpop.f32.mrf.mxu0
        %v2385 = vadd.f32 %v2056, %v2384
        %2386 = vdwg.mxu0
        %2387 = vmatpush.bf16.msra.mxu0 0
        %2388 = vmatpush.bf16.msra.mxu0 0
        %2389 = vmatpush.bf16.msra.mxu0 0
        %2390 = vmatpush.bf16.msra.mxu0 0
        %2391 = vmatpush.bf16.msra.mxu0 0
        %2392 = vmatpush.bf16.msra.mxu0 0
        %2393 = vmatpush.bf16.msra.mxu0 %v1517
        %2394 = vmatpush.bf16.msra.mxu0 %v1516
        %2395 = vmatmul.bf16.gmra.mxu0 %v1538
        %v2396 = vpop.f32.mrf.mxu0
        %v2397 = vadd.f32 %v2068, %v2396
        %v2398 = vpop.f32.mrf.mxu0
        %v2399 = vadd.f32 %v2070, %v2398
        %2400 = vmatmul.bf16.gmra.mxu0 %v1541
        %v2401 = vpop.f32.mrf.mxu0
        %v2402 = vadd.f32 %v2073, %v2401
        %v2403 = vpop.f32.mrf.mxu0
        %v2404 = vadd.f32 %v2075, %v2403
        %2405 = vmatmul.bf16.gmra.mxu0 %v1544
        %v2406 = vpop.f32.mrf.mxu0
        %v2407 = vadd.f32 %v2078, %v2406
        %v2408 = vpop.f32.mrf.mxu0
        %v2409 = vadd.f32 %v2080, %v2408
        %2410 = vmatmul.bf16.gmra.mxu0 %v1547
        %v2411 = vpop.f32.mrf.mxu0
        %v2412 = vadd.f32 %v2083, %v2411
        %v2413 = vpop.f32.mrf.mxu0
        %v2414 = vadd.f32 %v2085, %v2413
        %2415 = vmatmul.bf16.gmra.mxu0 %v1550
        %v2416 = vpop.f32.mrf.mxu0
        %v2417 = vadd.f32 %v2088, %v2416
        %v2418 = vpop.f32.mrf.mxu0
        %v2419 = vadd.f32 %v2090, %v2418
        %2420 = vmatmul.bf16.gmra.mxu0 %v1553
        %v2421 = vpop.f32.mrf.mxu0
        %v2422 = vadd.f32 %v2093, %v2421
        %v2423 = vpop.f32.mrf.mxu0
        %v2424 = vadd.f32 %v2095, %v2423
        %2425 = vmatmul.bf16.gmra.mxu0 %v1556
        %v2426 = vpop.f32.mrf.mxu0
        %v2427 = vadd.f32 %v2098, %v2426
        %v2428 = vpop.f32.mrf.mxu0
        %v2429 = vadd.f32 %v2100, %v2428
        %2430 = vmatmul.bf16.gmra.mxu0 %v1559
        %v2431 = vpop.f32.mrf.mxu0
        %v2432 = vadd.f32 %v2103, %v2431
        %v2433 = vpop.f32.mrf.mxu0
        %v2434 = vadd.f32 %v2105, %v2433
        %2435 = vmatmul.bf16.gmra.mxu0 %v1562
        %v2436 = vpop.f32.mrf.mxu0
        %v2437 = vadd.f32 %v2108, %v2436
        %v2438 = vpop.f32.mrf.mxu0
        %v2439 = vadd.f32 %v2110, %v2438
        %2440 = vmatmul.bf16.gmra.mxu0 %v1565
        %v2441 = vpop.f32.mrf.mxu0
        %v2442 = vadd.f32 %v2113, %v2441
        %v2443 = vpop.f32.mrf.mxu0
        %v2444 = vadd.f32 %v2115, %v2443
        %2445 = vmatmul.bf16.gmra.mxu0 %v1568
        %v2446 = vpop.f32.mrf.mxu0
        %v2447 = vadd.f32 %v2118, %v2446
        %v2448 = vpop.f32.mrf.mxu0
        %v2449 = vadd.f32 %v2120, %v2448
        %2450 = vmatmul.bf16.gmra.mxu0 %v1571
        %v2451 = vpop.f32.mrf.mxu0
        %v2452 = vadd.f32 %v2123, %v2451
        %v2453 = vpop.f32.mrf.mxu0
        %v2454 = vadd.f32 %v2125, %v2453
        %2455 = vmatmul.bf16.gmra.mxu0 %v1574
        %v2456 = vpop.f32.mrf.mxu0
        %v2457 = vadd.f32 %v2128, %v2456
        %v2458 = vpop.f32.mrf.mxu0
        %v2459 = vadd.f32 %v2130, %v2458
        %2460 = vmatmul.bf16.gmra.mxu0 %v1577
        %v2461 = vpop.f32.mrf.mxu0
        %v2462 = vadd.f32 %v2133, %v2461
        %v2463 = vpop.f32.mrf.mxu0
        %v2464 = vadd.f32 %v2135, %v2463
        %2465 = vmatmul.bf16.gmra.mxu0 %v1580
        %v2466 = vpop.f32.mrf.mxu0
        %v2467 = vadd.f32 %v2138, %v2466
        %v2468 = vpop.f32.mrf.mxu0
        %v2469 = vadd.f32 %v2140, %v2468
        %2470 = vmatmul.bf16.gmra.mxu0 %v1583
        %v2471 = vpop.f32.mrf.mxu0
        %v2472 = vadd.f32 %v2143, %v2471
        %v2473 = vpop.f32.mrf.mxu0
        %v2474 = vadd.f32 %v2145, %v2473
        %2475 = vmatmul.bf16.gmra.mxu0 %v1586
        %v2476 = vpop.f32.mrf.mxu0
        %v2477 = vadd.f32 %v2148, %v2476
        %v2478 = vpop.f32.mrf.mxu0
        %v2479 = vadd.f32 %v2150, %v2478
        %2480 = vmatmul.bf16.gmra.mxu0 %v1589
        %v2481 = vpop.f32.mrf.mxu0
        %v2482 = vadd.f32 %v2153, %v2481
        %v2483 = vpop.f32.mrf.mxu0
        %v2484 = vadd.f32 %v2155, %v2483
        %2485 = vmatmul.bf16.gmra.mxu0 %v1592
        %v2486 = vpop.f32.mrf.mxu0
        %v2487 = vadd.f32 %v2158, %v2486
        %v2488 = vpop.f32.mrf.mxu0
        %v2489 = vadd.f32 %v2160, %v2488
        %2490 = vmatmul.bf16.gmra.mxu0 %v1595
        %v2491 = vpop.f32.mrf.mxu0
        %v2492 = vadd.f32 %v2163, %v2491
        %v2493 = vpop.f32.mrf.mxu0
        %v2494 = vadd.f32 %v2165, %v2493
        %2495 = vmatmul.bf16.gmra.mxu0 %v1598
        %v2496 = vpop.f32.mrf.mxu0
        %v2497 = vadd.f32 %v2168, %v2496
        %v2498 = vpop.f32.mrf.mxu0
        %v2499 = vadd.f32 %v2170, %v2498
        %2500 = vmatmul.bf16.gmra.mxu0 %v1601
        %v2501 = vpop.f32.mrf.mxu0
        %v2502 = vadd.f32 %v2173, %v2501
        %v2503 = vpop.f32.mrf.mxu0
        %v2504 = vadd.f32 %v2175, %v2503
        %2505 = vmatmul.bf16.gmra.mxu0 %v1604
        %v2506 = vpop.f32.mrf.mxu0
        %v2507 = vadd.f32 %v2178, %v2506
        %v2508 = vpop.f32.mrf.mxu0
        %v2509 = vadd.f32 %v2180, %v2508
        %2510 = vmatmul.bf16.gmra.mxu0 %v1607
        %v2511 = vpop.f32.mrf.mxu0
        %v2512 = vadd.f32 %v2183, %v2511
        %v2513 = vpop.f32.mrf.mxu0
        %v2514 = vadd.f32 %v2185, %v2513
        %2515 = vmatmul.bf16.gmra.mxu0 %v1610
        %v2516 = vpop.f32.mrf.mxu0
        %v2517 = vadd.f32 %v2188, %v2516
        %v2518 = vpop.f32.mrf.mxu0
        %v2519 = vadd.f32 %v2190, %v2518
        %2520 = vmatmul.bf16.gmra.mxu0 %v1613
        %v2521 = vpop.f32.mrf.mxu0
        %v2522 = vadd.f32 %v2193, %v2521
        %v2523 = vpop.f32.mrf.mxu0
        %v2524 = vadd.f32 %v2195, %v2523
        %2525 = vmatmul.bf16.gmra.mxu0 %v1616
        %v2526 = vpop.f32.mrf.mxu0
        %v2527 = vadd.f32 %v2198, %v2526
        %v2528 = vpop.f32.mrf.mxu0
        %v2529 = vadd.f32 %v2200, %v2528
        %2530 = vmatmul.bf16.gmra.mxu0 %v1619
        %v2531 = vpop.f32.mrf.mxu0
        %v2532 = vadd.f32 %v2203, %v2531
        %v2533 = vpop.f32.mrf.mxu0
        %v2534 = vadd.f32 %v2205, %v2533
        %2535 = vmatmul.bf16.gmra.mxu0 %v1622
        %v2536 = vpop.f32.mrf.mxu0
        %v2537 = vadd.f32 %v2208, %v2536
        %v2538 = vpop.f32.mrf.mxu0
        %v2539 = vadd.f32 %v2210, %v2538
        %2540 = vmatmul.bf16.gmra.mxu0 %v1625
        %v2541 = vpop.f32.mrf.mxu0
        %v2542 = vadd.f32 %v2213, %v2541
        %v2543 = vpop.f32.mrf.mxu0
        %v2544 = vadd.f32 %v2215, %v2543
        %2545 = vmatmul.bf16.gmra.mxu0 %v1628
        %v2546 = vpop.f32.mrf.mxu0
        %v2547 = vadd.f32 %v2218, %v2546
        %v2548 = vpop.f32.mrf.mxu0
        %v2549 = vadd.f32 %v2220, %v2548
        %2550 = vmatmul.bf16.gmra.mxu0 %v1631
        %v2551 = vpop.f32.mrf.mxu0
        %v2552 = vadd.f32 %v2223, %v2551
        %v2553 = vpop.f32.mrf.mxu0
        %v2554 = vadd.f32 %v2225, %v2553
        %2555 = vmatmul.bf16.gmra.mxu0 %v1634
        %v2556 = vpop.f32.mrf.mxu0
        %v2557 = vadd.f32 %v2228, %v2556
        %v2558 = vpop.f32.mrf.mxu0
        %v2559 = vadd.f32 %v2230, %v2558
        %2560 = vmatmul.bf16.gmra.mxu0 %v1637
        %v2561 = vpop.f32.mrf.mxu0
        %v2562 = vadd.f32 %v2233, %v2561
        %v2563 = vpop.f32.mrf.mxu0
        %v2564 = vadd.f32 %v2235, %v2563
        %2565 = vmatmul.bf16.gmra.mxu0 %v1640
        %v2566 = vpop.f32.mrf.mxu0
        %v2567 = vadd.f32 %v2238, %v2566
        %v2568 = vpop.f32.mrf.mxu0
        %v2569 = vadd.f32 %v2240, %v2568
        %2570 = vmatmul.bf16.gmra.mxu0 %v1643
        %v2571 = vpop.f32.mrf.mxu0
        %v2572 = vadd.f32 %v2243, %v2571
        %v2573 = vpop.f32.mrf.mxu0
        %v2574 = vadd.f32 %v2245, %v2573
        %2575 = vmatmul.bf16.gmra.mxu0 %v1646
        %v2576 = vpop.f32.mrf.mxu0
        %v2577 = vadd.f32 %v2248, %v2576
        %v2578 = vpop.f32.mrf.mxu0
        %v2579 = vadd.f32 %v2250, %v2578
        %2580 = vmatmul.bf16.gmra.mxu0 %v1649
        %v2581 = vpop.f32.mrf.mxu0
        %v2582 = vadd.f32 %v2253, %v2581
        %v2583 = vpop.f32.mrf.mxu0
        %v2584 = vadd.f32 %v2255, %v2583
        %2585 = vmatmul.bf16.gmra.mxu0 %v1652
        %v2586 = vpop.f32.mrf.mxu0
        %v2587 = vadd.f32 %v2258, %v2586
        %v2588 = vpop.f32.mrf.mxu0
        %v2589 = vadd.f32 %v2260, %v2588
        %2590 = vmatmul.bf16.gmra.mxu0 %v1655
        %v2591 = vpop.f32.mrf.mxu0
        %v2592 = vadd.f32 %v2263, %v2591
        %v2593 = vpop.f32.mrf.mxu0
        %v2594 = vadd.f32 %v2265, %v2593
        %2595 = vmatmul.bf16.gmra.mxu0 %v1658
        %v2596 = vpop.f32.mrf.mxu0
        %v2597 = vadd.f32 %v2268, %v2596
        %v2598 = vpop.f32.mrf.mxu0
        %v2599 = vadd.f32 %v2270, %v2598
        %2600 = vmatmul.bf16.gmra.mxu0 %v1661
        %v2601 = vpop.f32.mrf.mxu0
        %v2602 = vadd.f32 %v2273, %v2601
        %v2603 = vpop.f32.mrf.mxu0
        %v2604 = vadd.f32 %v2275, %v2603
        %2605 = vmatmul.bf16.gmra.mxu0 %v1664
        %v2606 = vpop.f32.mrf.mxu0
        %v2607 = vadd.f32 %v2278, %v2606
        %v2608 = vpop.f32.mrf.mxu0
        %v2609 = vadd.f32 %v2280, %v2608
        %2610 = vmatmul.bf16.gmra.mxu0 %v1667
        %v2611 = vpop.f32.mrf.mxu0
        %v2612 = vadd.f32 %v2283, %v2611
        %v2613 = vpop.f32.mrf.mxu0
        %v2614 = vadd.f32 %v2285, %v2613
        %2615 = vmatmul.bf16.gmra.mxu0 %v1670
        %v2616 = vpop.f32.mrf.mxu0
        %v2617 = vadd.f32 %v2288, %v2616
        %v2618 = vpop.f32.mrf.mxu0
        %v2619 = vadd.f32 %v2290, %v2618
        %2620 = vmatmul.bf16.gmra.mxu0 %v1673
        %v2621 = vpop.f32.mrf.mxu0
        %v2622 = vadd.f32 %v2293, %v2621
        %v2623 = vpop.f32.mrf.mxu0
        %v2624 = vadd.f32 %v2295, %v2623
        %2625 = vmatmul.bf16.gmra.mxu0 %v1676
        %v2626 = vpop.f32.mrf.mxu0
        %v2627 = vadd.f32 %v2298, %v2626
        %v2628 = vpop.f32.mrf.mxu0
        %v2629 = vadd.f32 %v2300, %v2628
        %2630 = vmatmul.bf16.gmra.mxu0 %v1679
        %v2631 = vpop.f32.mrf.mxu0
        %v2632 = vadd.f32 %v2303, %v2631
        %v2633 = vpop.f32.mrf.mxu0
        %v2634 = vadd.f32 %v2305, %v2633
        %2635 = vmatmul.bf16.gmra.mxu0 %v1682
        %v2636 = vpop.f32.mrf.mxu0
        %v2637 = vadd.f32 %v2308, %v2636
        %v2638 = vpop.f32.mrf.mxu0
        %v2639 = vadd.f32 %v2310, %v2638
        %2640 = vmatmul.bf16.gmra.mxu0 %v1685
        %v2641 = vpop.f32.mrf.mxu0
        %v2642 = vadd.f32 %v2313, %v2641
        %v2643 = vpop.f32.mrf.mxu0
        %v2644 = vadd.f32 %v2315, %v2643
        %2645 = vmatmul.bf16.gmra.mxu0 %v1688
        %v2646 = vpop.f32.mrf.mxu0
        %v2647 = vadd.f32 %v2318, %v2646
        %v2648 = vpop.f32.mrf.mxu0
        %v2649 = vadd.f32 %v2320, %v2648
        %2650 = vmatmul.bf16.gmra.mxu0 %v1691
        %v2651 = vpop.f32.mrf.mxu0
        %v2652 = vadd.f32 %v2323, %v2651
        %v2653 = vpop.f32.mrf.mxu0
        %v2654 = vadd.f32 %v2325, %v2653
        %2655 = vmatmul.bf16.gmra.mxu0 %v1694
        %v2656 = vpop.f32.mrf.mxu0
        %v2657 = vadd.f32 %v2328, %v2656
        %v2658 = vpop.f32.mrf.mxu0
        %v2659 = vadd.f32 %v2330, %v2658
        %2660 = vmatmul.bf16.gmra.mxu0 %v1697
        %v2661 = vpop.f32.mrf.mxu0
        %v2662 = vadd.f32 %v2333, %v2661
        %v2663 = vpop.f32.mrf.mxu0
        %v2664 = vadd.f32 %v2335, %v2663
        %2665 = vmatmul.bf16.gmra.mxu0 %v1700
        %v2666 = vpop.f32.mrf.mxu0
        %v2667 = vadd.f32 %v2338, %v2666
        %v2668 = vpop.f32.mrf.mxu0
        %v2669 = vadd.f32 %v2340, %v2668
        %2670 = vmatmul.bf16.gmra.mxu0 %v1703
        %v2671 = vpop.f32.mrf.mxu0
        %v2672 = vadd.f32 %v2343, %v2671
        %v2673 = vpop.f32.mrf.mxu0
        %v2674 = vadd.f32 %v2345, %v2673
        %2675 = vmatmul.bf16.gmra.mxu0 %v1706
        %v2676 = vpop.f32.mrf.mxu0
        %v2677 = vadd.f32 %v2348, %v2676
        %v2678 = vpop.f32.mrf.mxu0
        %v2679 = vadd.f32 %v2350, %v2678
        %2680 = vmatmul.bf16.gmra.mxu0 %v1709
        %v2681 = vpop.f32.mrf.mxu0
        %v2682 = vadd.f32 %v2353, %v2681
        %v2683 = vpop.f32.mrf.mxu0
        %v2684 = vadd.f32 %v2355, %v2683
        %2685 = vmatmul.bf16.gmra.mxu0 %v1712
        %v2686 = vpop.f32.mrf.mxu0
        %v2687 = vadd.f32 %v2358, %v2686
        %v2688 = vpop.f32.mrf.mxu0
        %v2689 = vadd.f32 %v2360, %v2688
        %2690 = vmatmul.bf16.gmra.mxu0 %v1715
        %v2691 = vpop.f32.mrf.mxu0
        %v2692 = vadd.f32 %v2363, %v2691
        %v2693 = vpop.f32.mrf.mxu0
        %v2694 = vadd.f32 %v2365, %v2693
        %2695 = vmatmul.bf16.gmra.mxu0 %v1718
        %v2696 = vpop.f32.mrf.mxu0
        %v2697 = vadd.f32 %v2368, %v2696
        %v2698 = vpop.f32.mrf.mxu0
        %v2699 = vadd.f32 %v2370, %v2698
        %2700 = vmatmul.bf16.gmra.mxu0 %v1721
        %v2701 = vpop.f32.mrf.mxu0
        %v2702 = vadd.f32 %v2373, %v2701
        %v2703 = vpop.f32.mrf.mxu0
        %v2704 = vadd.f32 %v2375, %v2703
        %2705 = vmatmul.bf16.gmra.mxu0 %v1724
        %v2706 = vpop.f32.mrf.mxu0
        %v2707 = vadd.f32 %v2378, %v2706
        %v2708 = vpop.f32.mrf.mxu0
        %v2709 = vadd.f32 %v2380, %v2708
        %2710 = vmatmul.bf16.gmra.mxu0 %v1727
        %v2711 = vpop.f32.mrf.mxu0
        %v2712 = vadd.f32 %v2383, %v2711
        %v2713 = vpop.f32.mrf.mxu0
        %v2714 = vadd.f32 %v2385, %v2713
        %2715 = vdwg.mxu0
        %2716 = vxpose.xlu0.b32.start [1/16] %v2397, 128
        %2717 = vxpose.xlu0.b32.cont [2/16] %v2399, 128
        %2718 = vxpose.xlu0.b32.cont [3/16] %v2402, 128
        %2719 = vxpose.xlu0.b32.cont [4/16] %v2404, 128
        %2720 = vxpose.xlu0.b32.cont [5/16] %v2407, 128
        %2721 = vxpose.xlu0.b32.cont [6/16] %v2409, 128
        %2722 = vxpose.xlu0.b32.cont [7/16] %v2412, 128
        %2723 = vxpose.xlu0.b32.cont [8/16] %v2414, 128
        %2724 = vxpose.xlu0.b32.cont [9/16] %v2417, 128
        %2725 = vxpose.xlu0.b32.cont [10/16] %v2419, 128
        %2726 = vxpose.xlu0.b32.cont [11/16] %v2422, 128
        %2727 = vxpose.xlu0.b32.cont [12/16] %v2424, 128
        %2728 = vxpose.xlu0.b32.cont [13/16] %v2427, 128
        %2729 = vxpose.xlu0.b32.cont [14/16] %v2429, 128
        %2730 = vxpose.xlu0.b32.cont [15/16] %v2432, 128
        %2731 = vxpose.xlu0.b32.end [16/16] %v2434, 128
        %v2732 = vpop.trf.xlu0
        %v2733 = vpop.trf.xlu0
        %v2734 = vpop.trf.xlu0
        %v2735 = vpop.trf.xlu0
        %v2736 = vpop.trf.xlu0
        %v2737 = vpop.trf.xlu0
        %v2738 = vpop.trf.xlu0
        %v2739 = vpop.trf.xlu0
        %v2740 = vpop.trf.xlu0
        %v2741 = vpop.trf.xlu0
        %v2742 = vpop.trf.xlu0
        %v2743 = vpop.trf.xlu0
        %v2744 = vpop.trf.xlu0
        %v2745 = vpop.trf.xlu0
        %v2746 = vpop.trf.xlu0
        %v2747 = vpop.trf.xlu0
        %2748 = vxpose.xlu0.b32.start [1/16] %v2437, 128
        %2749 = vxpose.xlu0.b32.cont [2/16] %v2439, 128
        %2750 = vxpose.xlu0.b32.cont [3/16] %v2442, 128
        %2751 = vxpose.xlu0.b32.cont [4/16] %v2444, 128
        %2752 = vxpose.xlu0.b32.cont [5/16] %v2447, 128
        %2753 = vxpose.xlu0.b32.cont [6/16] %v2449, 128
        %2754 = vxpose.xlu0.b32.cont [7/16] %v2452, 128
        %2755 = vxpose.xlu0.b32.cont [8/16] %v2454, 128
        %2756 = vxpose.xlu0.b32.cont [9/16] %v2457, 128
        %2757 = vxpose.xlu0.b32.cont [10/16] %v2459, 128
        %2758 = vxpose.xlu0.b32.cont [11/16] %v2462, 128
        %2759 = vxpose.xlu0.b32.cont [12/16] %v2464, 128
        %2760 = vxpose.xlu0.b32.cont [13/16] %v2467, 128
        %2761 = vxpose.xlu0.b32.cont [14/16] %v2469, 128
        %2762 = vxpose.xlu0.b32.cont [15/16] %v2472, 128
        %2763 = vxpose.xlu0.b32.end [16/16] %v2474, 128
        %v2764 = vpop.trf.xlu0
        %v2765 = vpop.trf.xlu0
        %v2766 = vpop.trf.xlu0
        %v2767 = vpop.trf.xlu0
        %v2768 = vpop.trf.xlu0
        %v2769 = vpop.trf.xlu0
        %v2770 = vpop.trf.xlu0
        %v2771 = vpop.trf.xlu0
        %v2772 = vpop.trf.xlu0
        %v2773 = vpop.trf.xlu0
        %v2774 = vpop.trf.xlu0
        %v2775 = vpop.trf.xlu0
        %v2776 = vpop.trf.xlu0
        %v2777 = vpop.trf.xlu0
        %v2778 = vpop.trf.xlu0
        %v2779 = vpop.trf.xlu0
        %2780 = vxpose.xlu0.b32.start [1/16] %v2477, 128
        %2781 = vxpose.xlu0.b32.cont [2/16] %v2479, 128
        %2782 = vxpose.xlu0.b32.cont [3/16] %v2482, 128
        %2783 = vxpose.xlu0.b32.cont [4/16] %v2484, 128
        %2784 = vxpose.xlu0.b32.cont [5/16] %v2487, 128
        %2785 = vxpose.xlu0.b32.cont [6/16] %v2489, 128
        %2786 = vxpose.xlu0.b32.cont [7/16] %v2492, 128
        %2787 = vxpose.xlu0.b32.cont [8/16] %v2494, 128
        %2788 = vxpose.xlu0.b32.cont [9/16] %v2497, 128
        %2789 = vxpose.xlu0.b32.cont [10/16] %v2499, 128
        %2790 = vxpose.xlu0.b32.cont [11/16] %v2502, 128
        %2791 = vxpose.xlu0.b32.cont [12/16] %v2504, 128
        %2792 = vxpose.xlu0.b32.cont [13/16] %v2507, 128
        %2793 = vxpose.xlu0.b32.cont [14/16] %v2509, 128
        %2794 = vxpose.xlu0.b32.cont [15/16] %v2512, 128
        %2795 = vxpose.xlu0.b32.end [16/16] %v2514, 128
        %v2796 = vpop.trf.xlu0
        %v2797 = vpop.trf.xlu0
        %v2798 = vpop.trf.xlu0
        %v2799 = vpop.trf.xlu0
        %v2800 = vpop.trf.xlu0
        %v2801 = vpop.trf.xlu0
        %v2802 = vpop.trf.xlu0
        %v2803 = vpop.trf.xlu0
        %v2804 = vpop.trf.xlu0
        %v2805 = vpop.trf.xlu0
        %v2806 = vpop.trf.xlu0
        %v2807 = vpop.trf.xlu0
        %v2808 = vpop.trf.xlu0
        %v2809 = vpop.trf.xlu0
        %v2810 = vpop.trf.xlu0
        %v2811 = vpop.trf.xlu0
        %2812 = vxpose.xlu0.b32.start [1/16] %v2517, 128
        %2813 = vxpose.xlu0.b32.cont [2/16] %v2519, 128
        %2814 = vxpose.xlu0.b32.cont [3/16] %v2522, 128
        %2815 = vxpose.xlu0.b32.cont [4/16] %v2524, 128
        %2816 = vxpose.xlu0.b32.cont [5/16] %v2527, 128
        %2817 = vxpose.xlu0.b32.cont [6/16] %v2529, 128
        %2818 = vxpose.xlu0.b32.cont [7/16] %v2532, 128
        %2819 = vxpose.xlu0.b32.cont [8/16] %v2534, 128
        %2820 = vxpose.xlu0.b32.cont [9/16] %v2537, 128
        %2821 = vxpose.xlu0.b32.cont [10/16] %v2539, 128
        %2822 = vxpose.xlu0.b32.cont [11/16] %v2542, 128
        %2823 = vxpose.xlu0.b32.cont [12/16] %v2544, 128
        %2824 = vxpose.xlu0.b32.cont [13/16] %v2547, 128
        %2825 = vxpose.xlu0.b32.cont [14/16] %v2549, 128
        %2826 = vxpose.xlu0.b32.cont [15/16] %v2552, 128
        %2827 = vxpose.xlu0.b32.end [16/16] %v2554, 128
        %v2828 = vpop.trf.xlu0
        %v2829 = vpop.trf.xlu0
        %v2830 = vpop.trf.xlu0
        %v2831 = vpop.trf.xlu0
        %v2832 = vpop.trf.xlu0
        %v2833 = vpop.trf.xlu0
        %v2834 = vpop.trf.xlu0
        %v2835 = vpop.trf.xlu0
        %v2836 = vpop.trf.xlu0
        %v2837 = vpop.trf.xlu0
        %v2838 = vpop.trf.xlu0
        %v2839 = vpop.trf.xlu0
        %v2840 = vpop.trf.xlu0
        %v2841 = vpop.trf.xlu0
        %v2842 = vpop.trf.xlu0
        %v2843 = vpop.trf.xlu0
        %2844 = vxpose.xlu0.b32.start [1/16] %v2557, 128
        %2845 = vxpose.xlu0.b32.cont [2/16] %v2559, 128
        %2846 = vxpose.xlu0.b32.cont [3/16] %v2562, 128
        %2847 = vxpose.xlu0.b32.cont [4/16] %v2564, 128
        %2848 = vxpose.xlu0.b32.cont [5/16] %v2567, 128
        %2849 = vxpose.xlu0.b32.cont [6/16] %v2569, 128
        %2850 = vxpose.xlu0.b32.cont [7/16] %v2572, 128
        %2851 = vxpose.xlu0.b32.cont [8/16] %v2574, 128
        %2852 = vxpose.xlu0.b32.cont [9/16] %v2577, 128
        %2853 = vxpose.xlu0.b32.cont [10/16] %v2579, 128
        %2854 = vxpose.xlu0.b32.cont [11/16] %v2582, 128
        %2855 = vxpose.xlu0.b32.cont [12/16] %v2584, 128
        %2856 = vxpose.xlu0.b32.cont [13/16] %v2587, 128
        %2857 = vxpose.xlu0.b32.cont [14/16] %v2589, 128
        %2858 = vxpose.xlu0.b32.cont [15/16] %v2592, 128
        %2859 = vxpose.xlu0.b32.end [16/16] %v2594, 128
        %v2860 = vpop.trf.xlu0
        %v2861 = vpop.trf.xlu0
        %v2862 = vpop.trf.xlu0
        %v2863 = vpop.trf.xlu0
        %v2864 = vpop.trf.xlu0
        %v2865 = vpop.trf.xlu0
        %v2866 = vpop.trf.xlu0
        %v2867 = vpop.trf.xlu0
        %v2868 = vpop.trf.xlu0
        %v2869 = vpop.trf.xlu0
        %v2870 = vpop.trf.xlu0
        %v2871 = vpop.trf.xlu0
        %v2872 = vpop.trf.xlu0
        %v2873 = vpop.trf.xlu0
        %v2874 = vpop.trf.xlu0
        %v2875 = vpop.trf.xlu0
        %2876 = vxpose.xlu0.b32.start [1/16] %v2597, 128
        %2877 = vxpose.xlu0.b32.cont [2/16] %v2599, 128
        %2878 = vxpose.xlu0.b32.cont [3/16] %v2602, 128
        %2879 = vxpose.xlu0.b32.cont [4/16] %v2604, 128
        %2880 = vxpose.xlu0.b32.cont [5/16] %v2607, 128
        %2881 = vxpose.xlu0.b32.cont [6/16] %v2609, 128
        %2882 = vxpose.xlu0.b32.cont [7/16] %v2612, 128
        %2883 = vxpose.xlu0.b32.cont [8/16] %v2614, 128
        %2884 = vxpose.xlu0.b32.cont [9/16] %v2617, 128
        %2885 = vxpose.xlu0.b32.cont [10/16] %v2619, 128
        %2886 = vxpose.xlu0.b32.cont [11/16] %v2622, 128
        %2887 = vxpose.xlu0.b32.cont [12/16] %v2624, 128
        %2888 = vxpose.xlu0.b32.cont [13/16] %v2627, 128
        %2889 = vxpose.xlu0.b32.cont [14/16] %v2629, 128
        %2890 = vxpose.xlu0.b32.cont [15/16] %v2632, 128
        %2891 = vxpose.xlu0.b32.end [16/16] %v2634, 128
        %v2892 = vpop.trf.xlu0
        %v2893 = vpop.trf.xlu0
        %v2894 = vpop.trf.xlu0
        %v2895 = vpop.trf.xlu0
        %v2896 = vpop.trf.xlu0
        %v2897 = vpop.trf.xlu0
        %v2898 = vpop.trf.xlu0
        %v2899 = vpop.trf.xlu0
        %v2900 = vpop.trf.xlu0
        %v2901 = vpop.trf.xlu0
        %v2902 = vpop.trf.xlu0
        %v2903 = vpop.trf.xlu0
        %v2904 = vpop.trf.xlu0
        %v2905 = vpop.trf.xlu0
        %v2906 = vpop.trf.xlu0
        %v2907 = vpop.trf.xlu0
        %2908 = vxpose.xlu0.b32.start [1/16] %v2637, 128
        %2909 = vxpose.xlu0.b32.cont [2/16] %v2639, 128
        %2910 = vxpose.xlu0.b32.cont [3/16] %v2642, 128
        %2911 = vxpose.xlu0.b32.cont [4/16] %v2644, 128
        %2912 = vxpose.xlu0.b32.cont [5/16] %v2647, 128
        %2913 = vxpose.xlu0.b32.cont [6/16] %v2649, 128
        %2914 = vxpose.xlu0.b32.cont [7/16] %v2652, 128
        %2915 = vxpose.xlu0.b32.cont [8/16] %v2654, 128
        %2916 = vxpose.xlu0.b32.cont [9/16] %v2657, 128
        %2917 = vxpose.xlu0.b32.cont [10/16] %v2659, 128
        %2918 = vxpose.xlu0.b32.cont [11/16] %v2662, 128
        %2919 = vxpose.xlu0.b32.cont [12/16] %v2664, 128
        %2920 = vxpose.xlu0.b32.cont [13/16] %v2667, 128
        %2921 = vxpose.xlu0.b32.cont [14/16] %v2669, 128
        %2922 = vxpose.xlu0.b32.cont [15/16] %v2672, 128
        %2923 = vxpose.xlu0.b32.end [16/16] %v2674, 128
        %v2924 = vpop.trf.xlu0
        %v2925 = vpop.trf.xlu0
        %v2926 = vpop.trf.xlu0
        %v2927 = vpop.trf.xlu0
        %v2928 = vpop.trf.xlu0
        %v2929 = vpop.trf.xlu0
        %v2930 = vpop.trf.xlu0
        %v2931 = vpop.trf.xlu0
        %v2932 = vpop.trf.xlu0
        %v2933 = vpop.trf.xlu0
        %v2934 = vpop.trf.xlu0
        %v2935 = vpop.trf.xlu0
        %v2936 = vpop.trf.xlu0
        %v2937 = vpop.trf.xlu0
        %v2938 = vpop.trf.xlu0
        %v2939 = vpop.trf.xlu0
        %2940 = vxpose.xlu0.b32.start [1/16] %v2677, 128
        %2941 = vxpose.xlu0.b32.cont [2/16] %v2679, 128
        %2942 = vxpose.xlu0.b32.cont [3/16] %v2682, 128
        %2943 = vxpose.xlu0.b32.cont [4/16] %v2684, 128
        %2944 = vxpose.xlu0.b32.cont [5/16] %v2687, 128
        %2945 = vxpose.xlu0.b32.cont [6/16] %v2689, 128
        %2946 = vxpose.xlu0.b32.cont [7/16] %v2692, 128
        %2947 = vxpose.xlu0.b32.cont [8/16] %v2694, 128
        %2948 = vxpose.xlu0.b32.cont [9/16] %v2697, 128
        %2949 = vxpose.xlu0.b32.cont [10/16] %v2699, 128
        %2950 = vxpose.xlu0.b32.cont [11/16] %v2702, 128
        %2951 = vxpose.xlu0.b32.cont [12/16] %v2704, 128
        %2952 = vxpose.xlu0.b32.cont [13/16] %v2707, 128
        %2953 = vxpose.xlu0.b32.cont [14/16] %v2709, 128
        %2954 = vxpose.xlu0.b32.cont [15/16] %v2712, 128
        %2955 = vxpose.xlu0.b32.end [16/16] %v2714, 128
        %v2956 = vpop.trf.xlu0
        %v2957 = vpop.trf.xlu0
        %v2958 = vpop.trf.xlu0
        %v2959 = vpop.trf.xlu0
        %v2960 = vpop.trf.xlu0
        %v2961 = vpop.trf.xlu0
        %v2962 = vpop.trf.xlu0
        %v2963 = vpop.trf.xlu0
        %v2964 = vpop.trf.xlu0
        %v2965 = vpop.trf.xlu0
        %v2966 = vpop.trf.xlu0
        %v2967 = vpop.trf.xlu0
        %v2968 = vpop.trf.xlu0
        %v2969 = vpop.trf.xlu0
        %v2970 = vpop.trf.xlu0
        %v2971 = vpop.trf.xlu0
        %2972 = vst [vmem:[%s162] sm:$0xff] %v2732
        %2973 = vst [vmem:[%s162 + $0x8] sm:$0xff] %v2764
        %2974 = vst [vmem:[%s162 + $0x10] sm:$0xff] %v2796
        %2975 = vst [vmem:[%s162 + $0x18] sm:$0xff] %v2828
        %2976 = vst [vmem:[%s162 + $0x20] sm:$0xff] %v2860
        %2977 = vst [vmem:[%s162 + $0x28] sm:$0xff] %v2892
        %2978 = vst [vmem:[%s162 + $0x30] sm:$0xff] %v2924
        %2979 = vst [vmem:[%s162 + $0x38] sm:$0xff] %v2956
        %2980 = vst [vmem:[%s162 + $0x40] sm:$0xf] %v2733
        %2981 = vst [vmem:[%s162 + $0x48] sm:$0xf] %v2765
        %2982 = vst [vmem:[%s162 + $0x50] sm:$0xf] %v2797
        %2983 = vst [vmem:[%s162 + $0x58] sm:$0xf] %v2829
        %2984 = vst [vmem:[%s162 + $0x60] sm:$0xf] %v2861
        %2985 = vst [vmem:[%s162 + $0x68] sm:$0xf] %v2893
        %2986 = vst [vmem:[%s162 + $0x70] sm:$0xf] %v2925
        %2987 = vst [vmem:[%s162 + $0x78] sm:$0xf] %v2957
        %s2988 = sand.u32 %s90, 1
        %s2989 = sand.u32 %s90, 1
        %s2990 = smul.addr %s2989, 128
        %s2991 = scalar_lea.vmem [#allocation2], %s2990
        // Predicated region
        $region33: #{forward.17} parent=31 // pred_check
          %p2992 = pneg %p100
        $region34: #{forward.17} parent=31 // pred_check_branch
          %2994 = sbr.rel (%p2992) target = $region36
        $region35: #{forward.17} parent=31 // pred_region
          %s2995 = smul.u32 8, %s14
          %s2996 = smul.addr %s2995, 8
          %s2997 = scalar_lea.vmem %s3, %s2996
          // Predicated region
          $region37: #{forward.17} parent=35 // pred_check
            _
          $region38: #{forward.17} parent=35 // pred_check_branch
            %2999 = sbr.rel (0) target = $region40
          $region39: #{forward.17} parent=35 // pred_region
            // Predicated region
            $region41: #{forward.17} parent=39 // pred_check
              _
            $region42: #{forward.17} parent=39 // pred_check_branch
              %3001 = sbr.rel (0) target = $region44
            $region43: #{forward.17} parent=39 // pred_region
              loop: start=0, step=1, limit=1
              $region45: #{forward.17} parent=43 // loop_pre_header
                _
              $region46: #{forward.17} parent=43 // loop_header
                %s3003 = sphi 0, %s3007
                %p3004 = scmp.ge.s32.totalorder %s3003, 1
                %s3008 = sphi %s2991, %s2991
                %s3009 = sphi %s2997, %s2997
              $region47: #{forward.17} parent=43 // loop_header_branch
                %3006 = sbr.rel (%p3004) target = $region51
              $region48: #{forward.17} parent=43 // loop_body
                %v3010 = vld [vmem:[%s3008] sm:$0xff]
                %3011 = vst [vmem:[%s3009] sm:$0xff] %v3010
                %v3012 = vld [vmem:[%s3008 + $0x8] sm:$0xff]
                %3013 = vst [vmem:[%s3009 + $0x8] sm:$0xff] %v3012
                %v3014 = vld [vmem:[%s3008 + $0x10] sm:$0xff]
                %3015 = vst [vmem:[%s3009 + $0x10] sm:$0xff] %v3014
                %v3016 = vld [vmem:[%s3008 + $0x18] sm:$0xff]
                %3017 = vst [vmem:[%s3009 + $0x18] sm:$0xff] %v3016
                %v3018 = vld [vmem:[%s3008 + $0x20] sm:$0xff]
                %3019 = vst [vmem:[%s3009 + $0x20] sm:$0xff] %v3018
                %v3020 = vld [vmem:[%s3008 + $0x28] sm:$0xff]
                %3021 = vst [vmem:[%s3009 + $0x28] sm:$0xff] %v3020
                %v3022 = vld [vmem:[%s3008 + $0x30] sm:$0xff]
                %3023 = vst [vmem:[%s3009 + $0x30] sm:$0xff] %v3022
                %v3024 = vld [vmem:[%s3008 + $0x38] sm:$0xff]
                %3025 = vst [vmem:[%s3009 + $0x38] sm:$0xff] %v3024
                %v3026 = vld [vmem:[%s3008 + $0x40] sm:$0xff]
                %3027 = vst [vmem:[%s3009 + $0x80] sm:$0xff] %v3026
                %v3028 = vld [vmem:[%s3008 + $0x48] sm:$0xff]
                %3029 = vst [vmem:[%s3009 + $0x88] sm:$0xff] %v3028
                %v3030 = vld [vmem:[%s3008 + $0x50] sm:$0xff]
                %3031 = vst [vmem:[%s3009 + $0x90] sm:$0xff] %v3030
                %v3032 = vld [vmem:[%s3008 + $0x58] sm:$0xff]
                %3033 = vst [vmem:[%s3009 + $0x98] sm:$0xff] %v3032
                %v3034 = vld [vmem:[%s3008 + $0x60] sm:$0xff]
                %3035 = vst [vmem:[%s3009 + $0xa0] sm:$0xff] %v3034
                %v3036 = vld [vmem:[%s3008 + $0x68] sm:$0xff]
                %3037 = vst [vmem:[%s3009 + $0xa8] sm:$0xff] %v3036
                %v3038 = vld [vmem:[%s3008 + $0x70] sm:$0xff]
                %3039 = vst [vmem:[%s3009 + $0xb0] sm:$0xff] %v3038
                %v3040 = vld [vmem:[%s3008 + $0x78] sm:$0xff]
                %3041 = vst [vmem:[%s3009 + $0xb8] sm:$0xff] %v3040
              $region49: #{forward.17} parent=43 // loop_footer
                %s3007 = sadd.s32 1, %s3003
              $region50: #{forward.17} parent=43 // loop_footer_branch
                %3002 = sbr.rel target = $region46
              $region51: #{forward.17} parent=43 // loop_exit
                _
            $region44: #{forward.17} parent=39 // pred_fallthru
              _
            // Predicated region
            $region52: #{forward.17} parent=39 // pred_check
              _
            $region53: #{forward.17} parent=39 // pred_check_branch
              %3043 = sbr.rel target = $region55
            $region54: #{forward.17} parent=39 // pred_region
              _
            $region55: #{forward.17} parent=39 // pred_fallthru
              _
          $region40: #{forward.17} parent=35 // pred_fallthru
            _
          %3044 = vnop
        $region36: #{forward.17} parent=31 // pred_fallthru
          _
      $region32: #{forward.17} parent=5 // pred_fallthru
        _
      %p3045 = scmp.le.s32.totalorder 2, %s9
      // Predicated region
      $region56: #{forward.17} parent=5 // pred_check
        %p3046 = pneg %p3045
      $region57: #{forward.17} parent=5 // pred_check_branch
        %3048 = sbr.rel (%p3046) target = $region59
      $region58: #{forward.17} parent=5 // pred_region
        %s3049 = ssub.s32 %s9, 2
        // Predicated region
        $region60: #{forward.17} parent=58 // pred_check
          %p3050 = pneg %p106
        $region61: #{forward.17} parent=58 // pred_check_branch
          %3052 = sbr.rel (%p3050) target = $region63
        $region62: #{forward.17} parent=58 // pred_region
          %s3053 = sand.u32 %s91, 1
          %s3054 = sand.u32 %s91, 1
          %s3055 = smul.addr %s3054, 128
          %s3056 = scalar_lea.vmem [#allocation2], %s3055
        $region63: #{forward.17} parent=58 // pred_fallthru
          _
      $region59: #{forward.17} parent=5 // pred_fallthru
        _
    $region6: #{forward.17} parent=1 // loop_footer
      %s13 = sadd.s32 1, %s9
    $region7: #{forward.17} parent=1 // loop_footer_branch
      %8 = sbr.rel target = $region3
    $region8: #{forward.17} parent=1 // loop_exit
      _

</llo_original>
